<compile_context>
chip_gen: v5e
topology: v5e:2x2
jax: 0.10.0
libtpu: 0.0.40
codegen_flags: <defaults>
</compile_context>

<pallas_src>
import functools

import jax
import jax.numpy as jnp
from jax.experimental import pallas as pl
from jax.experimental.pallas import tpu as pltpu


C = 64  # hidden channel count of the body / ConvTranspose

# Shift offsets (dy, dx) whose border masks are precomputed in the wrapper.
_OFFSETS = [(dy, dx) for dy in (-1, 0, 1) for dx in (-1, 0, 1)
            if (dy, dx) != (0, 0)]

# Deduplicated tail-conv windows.  (vp, da): up-image row parity and low-res
# row shift with 2*da + vp == pi + kh - 1 (kh = 3x3 tap row, pi = output row
# parity); same for columns.  16 unique (phase image, da, db) windows cover
# all 36 (output phase, tap) combinations.
_ROW_COMBOS = [(1, -1), (0, 0), (1, 0), (0, 1)]
_COL_COMBOS = [(1, -1), (0, 0), (1, 0), (0, 1)]
_TAIL_WINDOWS = [(2 * vp + hp, da, db)
                 for (vp, da) in _ROW_COMBOS
                 for (hp, db) in _COL_COMBOS]


# --------------------------------------------------------------------------
# Fused kernel: conv1 -> conv2 -> conv3 (ReLU each) -> ConvT(s2) -> conv(->Cin)
# All activations are channels-major (C, H*W); H*W sits on lanes.
# --------------------------------------------------------------------------
def _conv_up_kernel(xpT_ref, masks_ref,
                    w1T_ref, b1_ref, w2T_ref, b2_ref, w3T_ref, b3_ref,
                    wtT_ref, btT_ref, w4T_ref, b4T_ref,
                    o_ref, *, H, W):
    f32, bf16 = jnp.float32, jnp.bfloat16
    HW = H * W

    # Border masks (1, HW) f32, precomputed in the wrapper, loaded once.
    m_all = masks_ref[...]
    mvals = {off: m_all[i:i + 1, :] for i, off in enumerate(_OFFSETS)}

    def tap(h, dy, dx):
        """tap[c, y*W+x] = h[c, (y+dy)*W + (x+dx)] with zero borders (bf16)."""
        s = dy * W + dx
        t = h if s == 0 else pltpu.roll(h, (-s) % HW, 1)   # lane roll (XLU)
        if (dy, dx) != (0, 0):
            t = t * mvals[(dy, dx)]                        # zero wrapped/border
        return t.astype(bf16)

    # ---- conv1: Cin -> 64, ReLU. im2col done in the wrapper -> one dot -----
    h = jnp.dot(w1T_ref[...], xpT_ref[0], preferred_element_type=f32)
    h = jnp.maximum(h + b1_ref[...], 0.0)

    # ---- body convs 2 & 3: 64 -> 64, ReLU (9 accumulated K=64 dots) --------
    def conv3x3(h_in, wT_ref, b_ref):
        acc = jnp.dot(wT_ref[4], h_in.astype(bf16),        # center tap
                      preferred_element_type=f32)
        for t_idx in range(9):
            if t_idx == 4:
                continue
            dy, dx = t_idx // 3 - 1, t_idx % 3 - 1
            acc = acc + jnp.dot(wT_ref[t_idx], tap(h_in, dy, dx),
                                preferred_element_type=f32)
        return jnp.maximum(acc + b_ref[...], 0.0)

    h = conv3x3(h, w2T_ref, b2_ref)
    h = conv3x3(h, w3T_ref, b3_ref)

    # ---- ConvTranspose2d(64,64,k3,s2,p1,op1): single subpixel matmul -------
    # patch rows = [h00; h01; h10; h11] (h shifted by (0,0),(0,1),(1,0),(1,1));
    # WtT packs all 4 output phases into 4 x 64 result rows.
    patch = jnp.concatenate([tap(h, 0, 0), tap(h, 0, 1),
                             tap(h, 1, 0), tap(h, 1, 1)], axis=0)   # (256, HW)
    y = jnp.dot(wtT_ref[...], patch, preferred_element_type=f32) + btT_ref[...]

    # ---- final conv 64 -> Cin over the 2x image: 16 dedup'd window dots ----
    out = jnp.zeros((o_ref.shape[1], HW), f32)             # (4*Cin, HW)
    for s_idx, (p, da, db) in enumerate(_TAIL_WINDOWS):
        win = tap(y[p * C:(p + 1) * C, :], da, db)
        out = out + jnp.dot(w4T_ref[s_idx], win, preferred_element_type=f32)
    o_ref[0] = out + b4T_ref[...]                          # lane-dense store


# --------------------------------------------------------------------------
# Wrapper: wrapper-side im2col for conv1, weight packing, pallas_call,
# depth-to-space back to NCHW.
# --------------------------------------------------------------------------
def conv_up_forward(x_nchw, p):
    """Conv_up.forward (up_factor=2): NCHW in, NCHW out (spatial 2x)."""
    N, Cin, H, W = x_nchw.shape
    HW = H * W
    assert HW % 128 == 0, "H*W must be lane-tile aligned at this tiling"
    bf16 = jnp.bfloat16

    # conv1 im2col in XLA (touches ~9*Cin*HW values: effectively free).
    xp = jnp.pad(x_nchw, ((0, 0), (0, 0), (1, 1), (1, 1)))
    cols = [xp[:, :, kh:kh + H, kw:kw + W].reshape(N, Cin, HW)
            for kh in range(3) for kw in range(3)]
    K1, K1p = 9 * Cin, 64                                   # zero-pad K -> 64
    x_patchT = jnp.concatenate(cols, axis=1)                # (N, 9*Cin, HW)
    x_patchT = jnp.pad(x_patchT, ((0, 0), (0, K1p - K1), (0, 0))).astype(bf16)

    # Border masks for the in-kernel shifted taps.
    yy, xx = jnp.meshgrid(jnp.arange(H), jnp.arange(W), indexing="ij")
    yy, xx = yy.reshape(HW), xx.reshape(HW)
    masks = jnp.stack([((xx + dx >= 0) & (xx + dx < W) &
                        (yy + dy >= 0) & (yy + dy < H)).astype(jnp.float32)
                       for (dy, dx) in _OFFSETS])           # (8, HW)

    # Transposed weights / column biases for the channels-major layout.
    w1T = jnp.pad(p["w1"].reshape(K1, C).T,
                  ((0, 0), (0, K1p - K1))).astype(bf16)     # (64, 64)
    w2T = jnp.transpose(p["w2"], (0, 2, 1)).astype(bf16)    # (9, 64, 64)
    w3T = jnp.transpose(p["w3"], (0, 2, 1)).astype(bf16)
    b1 = p["b1"].reshape(C, 1)
    b2 = p["b2"].reshape(C, 1)
    b3 = p["b3"].reshape(C, 1)

    # ConvTranspose2d as one block weight: rows = [h00;h01;h10;h11] blocks,
    # cols = output phases (0,0),(0,1),(1,0),(1,1).
    wt = p["wt"]
    Wt = jnp.zeros((4 * C, 4 * C), jnp.float32)
    Wt = Wt.at[0:C, 0:C].set(wt[4])                          # (0,0): h00 w11
    Wt = Wt.at[0:C, C:2 * C].set(wt[3])                      # (0,1): h00 w10
    Wt = Wt.at[C:2 * C, C:2 * C].set(wt[5])                  #       + h01 w12
    Wt = Wt.at[0:C, 2 * C:3 * C].set(wt[1])                  # (1,0): h00 w01
    Wt = Wt.at[2 * C:3 * C, 2 * C:3 * C].set(wt[7])          #       + h10 w21
    Wt = Wt.at[0:C, 3 * C:4 * C].set(wt[0])                  # (1,1): h00 w00
    Wt = Wt.at[C:2 * C, 3 * C:4 * C].set(wt[2])              #       + h01 w02
    Wt = Wt.at[2 * C:3 * C, 3 * C:4 * C].set(wt[6])          #       + h10 w20
    Wt = Wt.at[3 * C:4 * C, 3 * C:4 * C].set(wt[8])          #       + h11 w22
    WtT = Wt.T.astype(bf16)                                  # (256, 256)
    btT = jnp.tile(p["bt"].reshape(C, 1), (4, 1))            # (256, 1)

    # Final conv weights packed per unique tail window (zero where a given
    # output phase does not use that window).
    w4 = p["w4"]
    blocks = []
    for vp, da in _ROW_COMBOS:
        for hp, db in _COL_COMBOS:
            blk = jnp.zeros((C, 4 * Cin), jnp.float32)
            for pi in range(2):
                for pj in range(2):
                    kh = 2 * da + vp + 1 - pi
                    kw = 2 * db + hp + 1 - pj
                    if 0 <= kh < 3 and 0 <= kw < 3:
                        ph = 2 * pi + pj
                        blk = blk.at[:, ph * Cin:(ph + 1) * Cin].set(
                            w4[kh * 3 + kw])
            blocks.append(blk.T)                             # (4*Cin, 64)
    w4T = jnp.stack(blocks).astype(bf16)                     # (16, 4*Cin, 64)
    b4T = jnp.tile(p["b4"].reshape(Cin, 1), (4, 1))          # (4*Cin, 1)

    const2 = lambda n: (0, 0)
    const3 = lambda n: (0, 0, 0)
    in_specs = [
        pl.BlockSpec((1, K1p, HW), lambda n: (n, 0, 0)),     # conv1 im2col
        pl.BlockSpec((len(_OFFSETS), HW), const2),           # border masks
        pl.BlockSpec((C, K1p), const2), pl.BlockSpec((C, 1), const2),
        pl.BlockSpec((9, C, C), const3), pl.BlockSpec((C, 1), const2),
        pl.BlockSpec((9, C, C), const3), pl.BlockSpec((C, 1), const2),
        pl.BlockSpec((4 * C, 4 * C), const2), pl.BlockSpec((4 * C, 1), const2),
        pl.BlockSpec((16, 4 * Cin, C), const3),
        pl.BlockSpec((4 * Cin, 1), const2),
    ]
    out_specs = pl.BlockSpec((1, 4 * Cin, HW), lambda n: (n, 0, 0))

    out_ph = pl.pallas_call(
        functools.partial(_conv_up_kernel, H=H, W=W),
        out_shape=jax.ShapeDtypeStruct((N, 4 * Cin, HW), jnp.float32),
        grid_spec=pltpu.PrefetchScalarGridSpec(
            num_scalar_prefetch=0,
            grid=(N,),
            in_specs=in_specs,
            out_specs=out_specs),
        compiler_params=pltpu.CompilerParams(
            dimension_semantics=("parallel",)),
    )(x_patchT, masks, w1T, b1, w2T, b2, w3T, b3, WtT, btT, w4T, b4T)

    # Depth-to-space over the 4 phases + channels-major -> NCHW (tiny, XLA).
    out = out_ph.reshape(N, 2, 2, Cin, H, W)                 # (n,pi,pj,c,y,x)
    out = jnp.transpose(out, (0, 3, 4, 1, 5, 2))             # (n,c,y,pi,x,pj)
    return out.reshape(N, Cin, 2 * H, 2 * W)


# --------------------------------------------------------------------------
# Deterministic synthetic parameters (shapes from Conv_up.__init__)
# --------------------------------------------------------------------------
def init_params(key, c_in):
    ks = jax.random.split(key, 10)

    def w(k, cin, cout):
        return jax.random.normal(k, (9, cin, cout), jnp.float32) * 0.05

    def b(k, cout):
        return jax.random.normal(k, (1, cout), jnp.float32) * 0.05

    return {
        # body: Conv(c_in->64), Conv(64->64), Conv(64->64), each + ReLU
        "w1": w(ks[0], c_in, 64), "b1": b(ks[1], 64),
        "w2": w(ks[2], 64, 64),   "b2": b(ks[3], 64),
        "w3": w(ks[4], 64, 64),   "b3": b(ks[5], 64),
        # tail: ConvTranspose2d(64,64) stored as its equivalent (flipped) conv
        "wt": w(ks[6], 64, 64),   "bt": b(ks[7], 64),
        # tail: default_conv(64, c_in, 3)  (padding = 1)
        "w4": w(ks[8], 64, c_in), "b4": b(ks[9], c_in),
    }


# --------------------------------------------------------------------------
# Pure-JAX reference (f32, HIGHEST precision) for correctness checking
# --------------------------------------------------------------------------
def _ref_forward(x_nchw, p):
    dn = ("NHWC", "HWIO", "NHWC")

    def conv(h, w, b, relu, lhs_dil=(1, 1), pad=((1, 1), (1, 1))):
        w4 = w.reshape(3, 3, w.shape[1], w.shape[2])
        o = jax.lax.conv_general_dilated(
            h, w4, window_strides=(1, 1), padding=pad,
            lhs_dilation=lhs_dil, dimension_numbers=dn,
            precision=jax.lax.Precision.HIGHEST)
        o = o + b[0]
        return jnp.maximum(o, 0.0) if relu else o

    x = jnp.transpose(x_nchw, (0, 2, 3, 1))
    h = conv(x, p["w1"], p["b1"], True)
    h = conv(h, p["w2"], p["b2"], True)
    h = conv(h, p["w3"], p["b3"], True)
    h = conv(h, p["wt"], p["bt"], False, lhs_dil=(2, 2), pad=((1, 2), (1, 2)))
    h = conv(h, p["w4"], p["b4"], False)
    return jnp.transpose(h, (0, 3, 1, 2))


if __name__ == "__main__":
    c_in, up_factor = 4, 2
    N, H, W = 2, 16, 16

    key = jax.random.PRNGKey(0)
    k_x, k_p = jax.random.split(key)
    x = jax.random.normal(k_x, (N, c_in, H, W), jnp.float32)
    params = init_params(k_p, c_in)

    fwd = jax.jit(conv_up_forward)
    out = jax.block_until_ready(fwd(x, params))
    assert out.shape == (N, c_in, H * up_factor, W * up_factor), out.shape

    ref = jax.block_until_ready(_ref_forward(x, params))
    err = float(jnp.max(jnp.abs(out - ref)))
    # bf16 MXU operands (f32 accumulation, f32 intermediates) vs f32 HIGHEST
    # reference -> loosened tolerance.
    assert jnp.allclose(out, ref, rtol=5e-2, atol=5e-2), f"max abs err {err}"

    print("KERNEL_OK")
</pallas_src>

<mosaic_0001>
module attributes {stable_mosaic.version = 11 : i64} {
  func.func @_conv_up_kernel(%arg0: i32, %arg1: memref<1x64x256xbf16, #tpu.memory_space<vmem>>, %arg2: memref<8x256xf32, #tpu.memory_space<vmem>>, %arg3: memref<64x64xbf16, #tpu.memory_space<vmem>>, %arg4: memref<64x1xf32, #tpu.memory_space<vmem>>, %arg5: memref<9x64x64xbf16, #tpu.memory_space<vmem>>, %arg6: memref<64x1xf32, #tpu.memory_space<vmem>>, %arg7: memref<9x64x64xbf16, #tpu.memory_space<vmem>>, %arg8: memref<64x1xf32, #tpu.memory_space<vmem>>, %arg9: memref<256x256xbf16, #tpu.memory_space<vmem>>, %arg10: memref<256x1xf32, #tpu.memory_space<vmem>>, %arg11: memref<16x16x64xbf16, #tpu.memory_space<vmem>>, %arg12: memref<16x1xf32, #tpu.memory_space<vmem>>, %arg13: memref<1x16x256xf32, #tpu.memory_space<vmem>>) attributes {dimension_semantics = [#tpu.dimension_semantics<parallel>], iteration_bounds = array<i64: 2>, scalar_prefetch = 0 : i64, scratch_operands = 0 : i64, tpu.core_type = #tpu.core_type<tc>, window_params = [{transform_indices = @transform_0, window_bounds = array<i64: 1, 64, 256>}, {pipeline_mode = #tpu.pipeline_mode<synchronous>, transform_indices = @transform_1, window_bounds = array<i64: 8, 256>}, {pipeline_mode = #tpu.pipeline_mode<synchronous>, transform_indices = @transform_2, window_bounds = array<i64: 64, 64>}, {pipeline_mode = #tpu.pipeline_mode<synchronous>, transform_indices = @transform_3, window_bounds = array<i64: 64, 1>}, {pipeline_mode = #tpu.pipeline_mode<synchronous>, transform_indices = @transform_4, window_bounds = array<i64: 9, 64, 64>}, {pipeline_mode = #tpu.pipeline_mode<synchronous>, transform_indices = @transform_5, window_bounds = array<i64: 64, 1>}, {pipeline_mode = #tpu.pipeline_mode<synchronous>, transform_indices = @transform_6, window_bounds = array<i64: 9, 64, 64>}, {pipeline_mode = #tpu.pipeline_mode<synchronous>, transform_indices = @transform_7, window_bounds = array<i64: 64, 1>}, {pipeline_mode = #tpu.pipeline_mode<synchronous>, transform_indices = @transform_8, window_bounds = array<i64: 256, 256>}, {pipeline_mode = #tpu.pipeline_mode<synchronous>, transform_indices = @transform_9, window_bounds = array<i64: 256, 1>}, {pipeline_mode = #tpu.pipeline_mode<synchronous>, transform_indices = @transform_10, window_bounds = array<i64: 16, 16, 64>}, {pipeline_mode = #tpu.pipeline_mode<synchronous>, transform_indices = @transform_11, window_bounds = array<i64: 16, 1>}, {transform_indices = @transform_12, window_bounds = array<i64: 1, 16, 256>}]} {
    %c0 = arith.constant 0 : index
    %c0_0 = arith.constant 0 : index
    %0 = vector.load %arg2[%c0, %c0_0] : memref<8x256xf32, #tpu.memory_space<vmem>>, vector<8x256xf32>
    %1 = vector.extract_strided_slice %0 {offsets = [0, 0], sizes = [1, 256], strides = [1, 1]} : vector<8x256xf32> to vector<1x256xf32>
    %2 = vector.extract_strided_slice %0 {offsets = [1, 0], sizes = [1, 256], strides = [1, 1]} : vector<8x256xf32> to vector<1x256xf32>
    %3 = vector.extract_strided_slice %0 {offsets = [2, 0], sizes = [1, 256], strides = [1, 1]} : vector<8x256xf32> to vector<1x256xf32>
    %4 = vector.extract_strided_slice %0 {offsets = [3, 0], sizes = [1, 256], strides = [1, 1]} : vector<8x256xf32> to vector<1x256xf32>
    %5 = vector.extract_strided_slice %0 {offsets = [4, 0], sizes = [1, 256], strides = [1, 1]} : vector<8x256xf32> to vector<1x256xf32>
    %6 = vector.extract_strided_slice %0 {offsets = [5, 0], sizes = [1, 256], strides = [1, 1]} : vector<8x256xf32> to vector<1x256xf32>
    %7 = vector.extract_strided_slice %0 {offsets = [6, 0], sizes = [1, 256], strides = [1, 1]} : vector<8x256xf32> to vector<1x256xf32>
    %8 = vector.extract_strided_slice %0 {offsets = [7, 0], sizes = [1, 256], strides = [1, 1]} : vector<8x256xf32> to vector<1x256xf32>
    %c0_1 = arith.constant 0 : index
    %c0_2 = arith.constant 0 : index
    %9 = vector.load %arg3[%c0_1, %c0_2] : memref<64x64xbf16, #tpu.memory_space<vmem>>, vector<64x64xbf16>
    %c0_3 = arith.constant 0 : index
    %c0_4 = arith.constant 0 : index
    %c0_5 = arith.constant 0 : index
    %10 = vector.load %arg1[%c0_3, %c0_4, %c0_5] : memref<1x64x256xbf16, #tpu.memory_space<vmem>>, vector<1x64x256xbf16>
    %11 = vector.shape_cast %10 : vector<1x64x256xbf16> to vector<64x256xbf16>
    %cst = arith.constant dense<0.000000e+00> : vector<64x256xf32>
    %12 = tpu.matmul %9, %11, %cst {dimension_numbers = #tpu.dot_dimension_numbers<[1], [0], [0], [1], [0, 0, 1, 1], [], []>} : vector<64x64xbf16>, vector<64x256xbf16>, vector<64x256xf32> -> vector<64x256xf32>
    %c0_6 = arith.constant 0 : index
    %c0_7 = arith.constant 0 : index
    %13 = vector.load %arg4[%c0_6, %c0_7] : memref<64x1xf32, #tpu.memory_space<vmem>>, vector<64x1xf32>
    %14 = vector.broadcast %13 : vector<64x1xf32> to vector<64x256xf32>
    %15 = arith.addf %12, %14 : vector<64x256xf32>
    %cst_8 = arith.constant 0.000000e+00 : f32
    %16 = vector.broadcast %cst_8 : f32 to vector<64x256xf32>
    %17 = arith.maximumf %15, %16 : vector<64x256xf32>
    %c4 = arith.constant 4 : index
    %c0_9 = arith.constant 0 : index
    %c0_10 = arith.constant 0 : index
    %18 = vector.load %arg5[%c4, %c0_9, %c0_10] : memref<9x64x64xbf16, #tpu.memory_space<vmem>>, vector<1x64x64xbf16>
    %19 = vector.shape_cast %18 : vector<1x64x64xbf16> to vector<64x64xbf16>
    %20 = arith.truncf %17 : vector<64x256xf32> to vector<64x256xbf16>
    %cst_11 = arith.constant dense<0.000000e+00> : vector<64x256xf32>
    %21 = tpu.matmul %19, %20, %cst_11 {dimension_numbers = #tpu.dot_dimension_numbers<[1], [0], [0], [1], [0, 0, 1, 1], [], []>} : vector<64x64xbf16>, vector<64x256xbf16>, vector<64x256xf32> -> vector<64x256xf32>
    %c0_12 = arith.constant 0 : index
    %c0_13 = arith.constant 0 : index
    %c0_14 = arith.constant 0 : index
    %22 = vector.load %arg5[%c0_12, %c0_13, %c0_14] : memref<9x64x64xbf16, #tpu.memory_space<vmem>>, vector<1x64x64xbf16>
    %23 = vector.shape_cast %22 : vector<1x64x64xbf16> to vector<64x64xbf16>
    %c17_i32 = arith.constant 17 : i32
    %24 = tpu.dynamic_rotate %17 by %c17_i32 dim 1 : vector<64x256xf32>, i32 -> vector<64x256xf32>
    %25 = vector.broadcast %1 : vector<1x256xf32> to vector<64x256xf32>
    %26 = arith.mulf %24, %25 : vector<64x256xf32>
    %27 = arith.truncf %26 : vector<64x256xf32> to vector<64x256xbf16>
    %cst_15 = arith.constant dense<0.000000e+00> : vector<64x256xf32>
    %28 = tpu.matmul %23, %27, %cst_15 {dimension_numbers = #tpu.dot_dimension_numbers<[1], [0], [0], [1], [0, 0, 1, 1], [], []>} : vector<64x64xbf16>, vector<64x256xbf16>, vector<64x256xf32> -> vector<64x256xf32>
    %29 = arith.addf %21, %28 : vector<64x256xf32>
    %c1 = arith.constant 1 : index
    %c0_16 = arith.constant 0 : index
    %c0_17 = arith.constant 0 : index
    %30 = vector.load %arg5[%c1, %c0_16, %c0_17] : memref<9x64x64xbf16, #tpu.memory_space<vmem>>, vector<1x64x64xbf16>
    %31 = vector.shape_cast %30 : vector<1x64x64xbf16> to vector<64x64xbf16>
    %c16_i32 = arith.constant 16 : i32
    %32 = tpu.dynamic_rotate %17 by %c16_i32 dim 1 : vector<64x256xf32>, i32 -> vector<64x256xf32>
    %33 = vector.broadcast %2 : vector<1x256xf32> to vector<64x256xf32>
    %34 = arith.mulf %32, %33 : vector<64x256xf32>
    %35 = arith.truncf %34 : vector<64x256xf32> to vector<64x256xbf16>
    %cst_18 = arith.constant dense<0.000000e+00> : vector<64x256xf32>
    %36 = tpu.matmul %31, %35, %cst_18 {dimension_numbers = #tpu.dot_dimension_numbers<[1], [0], [0], [1], [0, 0, 1, 1], [], []>} : vector<64x64xbf16>, vector<64x256xbf16>, vector<64x256xf32> -> vector<64x256xf32>
    %37 = arith.addf %29, %36 : vector<64x256xf32>
    %c2 = arith.constant 2 : index
    %c0_19 = arith.constant 0 : index
    %c0_20 = arith.constant 0 : index
    %38 = vector.load %arg5[%c2, %c0_19, %c0_20] : memref<9x64x64xbf16, #tpu.memory_space<vmem>>, vector<1x64x64xbf16>
    %39 = vector.shape_cast %38 : vector<1x64x64xbf16> to vector<64x64xbf16>
    %c15_i32 = arith.constant 15 : i32
    %40 = tpu.dynamic_rotate %17 by %c15_i32 dim 1 : vector<64x256xf32>, i32 -> vector<64x256xf32>
    %41 = vector.broadcast %3 : vector<1x256xf32> to vector<64x256xf32>
    %42 = arith.mulf %40, %41 : vector<64x256xf32>
    %43 = arith.truncf %42 : vector<64x256xf32> to vector<64x256xbf16>
    %cst_21 = arith.constant dense<0.000000e+00> : vector<64x256xf32>
    %44 = tpu.matmul %39, %43, %cst_21 {dimension_numbers = #tpu.dot_dimension_numbers<[1], [0], [0], [1], [0, 0, 1, 1], [], []>} : vector<64x64xbf16>, vector<64x256xbf16>, vector<64x256xf32> -> vector<64x256xf32>
    %45 = arith.addf %37, %44 : vector<64x256xf32>
    %c3 = arith.constant 3 : index
    %c0_22 = arith.constant 0 : index
    %c0_23 = arith.constant 0 : index
    %46 = vector.load %arg5[%c3, %c0_22, %c0_23] : memref<9x64x64xbf16, #tpu.memory_space<vmem>>, vector<1x64x64xbf16>
    %47 = vector.shape_cast %46 : vector<1x64x64xbf16> to vector<64x64xbf16>
    %c1_i32 = arith.constant 1 : i32
    %48 = tpu.dynamic_rotate %17 by %c1_i32 dim 1 : vector<64x256xf32>, i32 -> vector<64x256xf32>
    %49 = vector.broadcast %4 : vector<1x256xf32> to vector<64x256xf32>
    %50 = arith.mulf %48, %49 : vector<64x256xf32>
    %51 = arith.truncf %50 : vector<64x256xf32> to vector<64x256xbf16>
    %cst_24 = arith.constant dense<0.000000e+00> : vector<64x256xf32>
    %52 = tpu.matmul %47, %51, %cst_24 {dimension_numbers = #tpu.dot_dimension_numbers<[1], [0], [0], [1], [0, 0, 1, 1], [], []>} : vector<64x64xbf16>, vector<64x256xbf16>, vector<64x256xf32> -> vector<64x256xf32>
    %53 = arith.addf %45, %52 : vector<64x256xf32>
    %c5 = arith.constant 5 : index
    %c0_25 = arith.constant 0 : index
    %c0_26 = arith.constant 0 : index
    %54 = vector.load %arg5[%c5, %c0_25, %c0_26] : memref<9x64x64xbf16, #tpu.memory_space<vmem>>, vector<1x64x64xbf16>
    %55 = vector.shape_cast %54 : vector<1x64x64xbf16> to vector<64x64xbf16>
    %c255_i32 = arith.constant 255 : i32
    %56 = tpu.dynamic_rotate %17 by %c255_i32 dim 1 : vector<64x256xf32>, i32 -> vector<64x256xf32>
    %57 = vector.broadcast %5 : vector<1x256xf32> to vector<64x256xf32>
    %58 = arith.mulf %56, %57 : vector<64x256xf32>
    %59 = arith.truncf %58 : vector<64x256xf32> to vector<64x256xbf16>
    %cst_27 = arith.constant dense<0.000000e+00> : vector<64x256xf32>
    %60 = tpu.matmul %55, %59, %cst_27 {dimension_numbers = #tpu.dot_dimension_numbers<[1], [0], [0], [1], [0, 0, 1, 1], [], []>} : vector<64x64xbf16>, vector<64x256xbf16>, vector<64x256xf32> -> vector<64x256xf32>
    %61 = arith.addf %53, %60 : vector<64x256xf32>
    %c6 = arith.constant 6 : index
    %c0_28 = arith.constant 0 : index
    %c0_29 = arith.constant 0 : index
    %62 = vector.load %arg5[%c6, %c0_28, %c0_29] : memref<9x64x64xbf16, #tpu.memory_space<vmem>>, vector<1x64x64xbf16>
    %63 = vector.shape_cast %62 : vector<1x64x64xbf16> to vector<64x64xbf16>
    %c241_i32 = arith.constant 241 : i32
    %64 = tpu.dynamic_rotate %17 by %c241_i32 dim 1 : vector<64x256xf32>, i32 -> vector<64x256xf32>
    %65 = vector.broadcast %6 : vector<1x256xf32> to vector<64x256xf32>
    %66 = arith.mulf %64, %65 : vector<64x256xf32>
    %67 = arith.truncf %66 : vector<64x256xf32> to vector<64x256xbf16>
    %cst_30 = arith.constant dense<0.000000e+00> : vector<64x256xf32>
    %68 = tpu.matmul %63, %67, %cst_30 {dimension_numbers = #tpu.dot_dimension_numbers<[1], [0], [0], [1], [0, 0, 1, 1], [], []>} : vector<64x64xbf16>, vector<64x256xbf16>, vector<64x256xf32> -> vector<64x256xf32>
    %69 = arith.addf %61, %68 : vector<64x256xf32>
    %c7 = arith.constant 7 : index
    %c0_31 = arith.constant 0 : index
    %c0_32 = arith.constant 0 : index
    %70 = vector.load %arg5[%c7, %c0_31, %c0_32] : memref<9x64x64xbf16, #tpu.memory_space<vmem>>, vector<1x64x64xbf16>
    %71 = vector.shape_cast %70 : vector<1x64x64xbf16> to vector<64x64xbf16>
    %c240_i32 = arith.constant 240 : i32
    %72 = tpu.dynamic_rotate %17 by %c240_i32 dim 1 : vector<64x256xf32>, i32 -> vector<64x256xf32>
    %73 = vector.broadcast %7 : vector<1x256xf32> to vector<64x256xf32>
    %74 = arith.mulf %72, %73 : vector<64x256xf32>
    %75 = arith.truncf %74 : vector<64x256xf32> to vector<64x256xbf16>
    %cst_33 = arith.constant dense<0.000000e+00> : vector<64x256xf32>
    %76 = tpu.matmul %71, %75, %cst_33 {dimension_numbers = #tpu.dot_dimension_numbers<[1], [0], [0], [1], [0, 0, 1, 1], [], []>} : vector<64x64xbf16>, vector<64x256xbf16>, vector<64x256xf32> -> vector<64x256xf32>
    %77 = arith.addf %69, %76 : vector<64x256xf32>
    %c8 = arith.constant 8 : index
    %c0_34 = arith.constant 0 : index
    %c0_35 = arith.constant 0 : index
    %78 = vector.load %arg5[%c8, %c0_34, %c0_35] : memref<9x64x64xbf16, #tpu.memory_space<vmem>>, vector<1x64x64xbf16>
    %79 = vector.shape_cast %78 : vector<1x64x64xbf16> to vector<64x64xbf16>
    %c239_i32 = arith.constant 239 : i32
    %80 = tpu.dynamic_rotate %17 by %c239_i32 dim 1 : vector<64x256xf32>, i32 -> vector<64x256xf32>
    %81 = vector.broadcast %8 : vector<1x256xf32> to vector<64x256xf32>
    %82 = arith.mulf %80, %81 : vector<64x256xf32>
    %83 = arith.truncf %82 : vector<64x256xf32> to vector<64x256xbf16>
    %cst_36 = arith.constant dense<0.000000e+00> : vector<64x256xf32>
    %84 = tpu.matmul %79, %83, %cst_36 {dimension_numbers = #tpu.dot_dimension_numbers<[1], [0], [0], [1], [0, 0, 1, 1], [], []>} : vector<64x64xbf16>, vector<64x256xbf16>, vector<64x256xf32> -> vector<64x256xf32>
    %85 = arith.addf %77, %84 : vector<64x256xf32>
    %c0_37 = arith.constant 0 : index
    %c0_38 = arith.constant 0 : index
    %86 = vector.load %arg6[%c0_37, %c0_38] : memref<64x1xf32, #tpu.memory_space<vmem>>, vector<64x1xf32>
    %87 = vector.broadcast %86 : vector<64x1xf32> to vector<64x256xf32>
    %88 = arith.addf %85, %87 : vector<64x256xf32>
    %cst_39 = arith.constant 0.000000e+00 : f32
    %89 = vector.broadcast %cst_39 : f32 to vector<64x256xf32>
    %90 = arith.maximumf %88, %89 : vector<64x256xf32>
    %c4_40 = arith.constant 4 : index
    %c0_41 = arith.constant 0 : index
    %c0_42 = arith.constant 0 : index
    %91 = vector.load %arg7[%c4_40, %c0_41, %c0_42] : memref<9x64x64xbf16, #tpu.memory_space<vmem>>, vector<1x64x64xbf16>
    %92 = vector.shape_cast %91 : vector<1x64x64xbf16> to vector<64x64xbf16>
    %93 = arith.truncf %90 : vector<64x256xf32> to vector<64x256xbf16>
    %cst_43 = arith.constant dense<0.000000e+00> : vector<64x256xf32>
    %94 = tpu.matmul %92, %93, %cst_43 {dimension_numbers = #tpu.dot_dimension_numbers<[1], [0], [0], [1], [0, 0, 1, 1], [], []>} : vector<64x64xbf16>, vector<64x256xbf16>, vector<64x256xf32> -> vector<64x256xf32>
    %c0_44 = arith.constant 0 : index
    %c0_45 = arith.constant 0 : index
    %c0_46 = arith.constant 0 : index
    %95 = vector.load %arg7[%c0_44, %c0_45, %c0_46] : memref<9x64x64xbf16, #tpu.memory_space<vmem>>, vector<1x64x64xbf16>
    %96 = vector.shape_cast %95 : vector<1x64x64xbf16> to vector<64x64xbf16>
    %c17_i32_47 = arith.constant 17 : i32
    %97 = tpu.dynamic_rotate %90 by %c17_i32_47 dim 1 : vector<64x256xf32>, i32 -> vector<64x256xf32>
    %98 = vector.broadcast %1 : vector<1x256xf32> to vector<64x256xf32>
    %99 = arith.mulf %97, %98 : vector<64x256xf32>
    %100 = arith.truncf %99 : vector<64x256xf32> to vector<64x256xbf16>
    %cst_48 = arith.constant dense<0.000000e+00> : vector<64x256xf32>
    %101 = tpu.matmul %96, %100, %cst_48 {dimension_numbers = #tpu.dot_dimension_numbers<[1], [0], [0], [1], [0, 0, 1, 1], [], []>} : vector<64x64xbf16>, vector<64x256xbf16>, vector<64x256xf32> -> vector<64x256xf32>
    %102 = arith.addf %94, %101 : vector<64x256xf32>
    %c1_49 = arith.constant 1 : index
    %c0_50 = arith.constant 0 : index
    %c0_51 = arith.constant 0 : index
    %103 = vector.load %arg7[%c1_49, %c0_50, %c0_51] : memref<9x64x64xbf16, #tpu.memory_space<vmem>>, vector<1x64x64xbf16>
    %104 = vector.shape_cast %103 : vector<1x64x64xbf16> to vector<64x64xbf16>
    %c16_i32_52 = arith.constant 16 : i32
    %105 = tpu.dynamic_rotate %90 by %c16_i32_52 dim 1 : vector<64x256xf32>, i32 -> vector<64x256xf32>
    %106 = vector.broadcast %2 : vector<1x256xf32> to vector<64x256xf32>
    %107 = arith.mulf %105, %106 : vector<64x256xf32>
    %108 = arith.truncf %107 : vector<64x256xf32> to vector<64x256xbf16>
    %cst_53 = arith.constant dense<0.000000e+00> : vector<64x256xf32>
    %109 = tpu.matmul %104, %108, %cst_53 {dimension_numbers = #tpu.dot_dimension_numbers<[1], [0], [0], [1], [0, 0, 1, 1], [], []>} : vector<64x64xbf16>, vector<64x256xbf16>, vector<64x256xf32> -> vector<64x256xf32>
    %110 = arith.addf %102, %109 : vector<64x256xf32>
    %c2_54 = arith.constant 2 : index
    %c0_55 = arith.constant 0 : index
    %c0_56 = arith.constant 0 : index
    %111 = vector.load %arg7[%c2_54, %c0_55, %c0_56] : memref<9x64x64xbf16, #tpu.memory_space<vmem>>, vector<1x64x64xbf16>
    %112 = vector.shape_cast %111 : vector<1x64x64xbf16> to vector<64x64xbf16>
    %c15_i32_57 = arith.constant 15 : i32
    %113 = tpu.dynamic_rotate %90 by %c15_i32_57 dim 1 : vector<64x256xf32>, i32 -> vector<64x256xf32>
    %114 = vector.broadcast %3 : vector<1x256xf32> to vector<64x256xf32>
    %115 = arith.mulf %113, %114 : vector<64x256xf32>
    %116 = arith.truncf %115 : vector<64x256xf32> to vector<64x256xbf16>
    %cst_58 = arith.constant dense<0.000000e+00> : vector<64x256xf32>
    %117 = tpu.matmul %112, %116, %cst_58 {dimension_numbers = #tpu.dot_dimension_numbers<[1], [0], [0], [1], [0, 0, 1, 1], [], []>} : vector<64x64xbf16>, vector<64x256xbf16>, vector<64x256xf32> -> vector<64x256xf32>
    %118 = arith.addf %110, %117 : vector<64x256xf32>
    %c3_59 = arith.constant 3 : index
    %c0_60 = arith.constant 0 : index
    %c0_61 = arith.constant 0 : index
    %119 = vector.load %arg7[%c3_59, %c0_60, %c0_61] : memref<9x64x64xbf16, #tpu.memory_space<vmem>>, vector<1x64x64xbf16>
    %120 = vector.shape_cast %119 : vector<1x64x64xbf16> to vector<64x64xbf16>
    %c1_i32_62 = arith.constant 1 : i32
    %121 = tpu.dynamic_rotate %90 by %c1_i32_62 dim 1 : vector<64x256xf32>, i32 -> vector<64x256xf32>
    %122 = vector.broadcast %4 : vector<1x256xf32> to vector<64x256xf32>
    %123 = arith.mulf %121, %122 : vector<64x256xf32>
    %124 = arith.truncf %123 : vector<64x256xf32> to vector<64x256xbf16>
    %cst_63 = arith.constant dense<0.000000e+00> : vector<64x256xf32>
    %125 = tpu.matmul %120, %124, %cst_63 {dimension_numbers = #tpu.dot_dimension_numbers<[1], [0], [0], [1], [0, 0, 1, 1], [], []>} : vector<64x64xbf16>, vector<64x256xbf16>, vector<64x256xf32> -> vector<64x256xf32>
    %126 = arith.addf %118, %125 : vector<64x256xf32>
    %c5_64 = arith.constant 5 : index
    %c0_65 = arith.constant 0 : index
    %c0_66 = arith.constant 0 : index
    %127 = vector.load %arg7[%c5_64, %c0_65, %c0_66] : memref<9x64x64xbf16, #tpu.memory_space<vmem>>, vector<1x64x64xbf16>
    %128 = vector.shape_cast %127 : vector<1x64x64xbf16> to vector<64x64xbf16>
    %c255_i32_67 = arith.constant 255 : i32
    %129 = tpu.dynamic_rotate %90 by %c255_i32_67 dim 1 : vector<64x256xf32>, i32 -> vector<64x256xf32>
    %130 = vector.broadcast %5 : vector<1x256xf32> to vector<64x256xf32>
    %131 = arith.mulf %129, %130 : vector<64x256xf32>
    %132 = arith.truncf %131 : vector<64x256xf32> to vector<64x256xbf16>
    %cst_68 = arith.constant dense<0.000000e+00> : vector<64x256xf32>
    %133 = tpu.matmul %128, %132, %cst_68 {dimension_numbers = #tpu.dot_dimension_numbers<[1], [0], [0], [1], [0, 0, 1, 1], [], []>} : vector<64x64xbf16>, vector<64x256xbf16>, vector<64x256xf32> -> vector<64x256xf32>
    %134 = arith.addf %126, %133 : vector<64x256xf32>
    %c6_69 = arith.constant 6 : index
    %c0_70 = arith.constant 0 : index
    %c0_71 = arith.constant 0 : index
    %135 = vector.load %arg7[%c6_69, %c0_70, %c0_71] : memref<9x64x64xbf16, #tpu.memory_space<vmem>>, vector<1x64x64xbf16>
    %136 = vector.shape_cast %135 : vector<1x64x64xbf16> to vector<64x64xbf16>
    %c241_i32_72 = arith.constant 241 : i32
    %137 = tpu.dynamic_rotate %90 by %c241_i32_72 dim 1 : vector<64x256xf32>, i32 -> vector<64x256xf32>
    %138 = vector.broadcast %6 : vector<1x256xf32> to vector<64x256xf32>
    %139 = arith.mulf %137, %138 : vector<64x256xf32>
    %140 = arith.truncf %139 : vector<64x256xf32> to vector<64x256xbf16>
    %cst_73 = arith.constant dense<0.000000e+00> : vector<64x256xf32>
    %141 = tpu.matmul %136, %140, %cst_73 {dimension_numbers = #tpu.dot_dimension_numbers<[1], [0], [0], [1], [0, 0, 1, 1], [], []>} : vector<64x64xbf16>, vector<64x256xbf16>, vector<64x256xf32> -> vector<64x256xf32>
    %142 = arith.addf %134, %141 : vector<64x256xf32>
    %c7_74 = arith.constant 7 : index
    %c0_75 = arith.constant 0 : index
    %c0_76 = arith.constant 0 : index
    %143 = vector.load %arg7[%c7_74, %c0_75, %c0_76] : memref<9x64x64xbf16, #tpu.memory_space<vmem>>, vector<1x64x64xbf16>
    %144 = vector.shape_cast %143 : vector<1x64x64xbf16> to vector<64x64xbf16>
    %c240_i32_77 = arith.constant 240 : i32
    %145 = tpu.dynamic_rotate %90 by %c240_i32_77 dim 1 : vector<64x256xf32>, i32 -> vector<64x256xf32>
    %146 = vector.broadcast %7 : vector<1x256xf32> to vector<64x256xf32>
    %147 = arith.mulf %145, %146 : vector<64x256xf32>
    %148 = arith.truncf %147 : vector<64x256xf32> to vector<64x256xbf16>
    %cst_78 = arith.constant dense<0.000000e+00> : vector<64x256xf32>
    %149 = tpu.matmul %144, %148, %cst_78 {dimension_numbers = #tpu.dot_dimension_numbers<[1], [0], [0], [1], [0, 0, 1, 1], [], []>} : vector<64x64xbf16>, vector<64x256xbf16>, vector<64x256xf32> -> vector<64x256xf32>
    %150 = arith.addf %142, %149 : vector<64x256xf32>
    %c8_79 = arith.constant 8 : index
    %c0_80 = arith.constant 0 : index
    %c0_81 = arith.constant 0 : index
    %151 = vector.load %arg7[%c8_79, %c0_80, %c0_81] : memref<9x64x64xbf16, #tpu.memory_space<vmem>>, vector<1x64x64xbf16>
    %152 = vector.shape_cast %151 : vector<1x64x64xbf16> to vector<64x64xbf16>
    %c239_i32_82 = arith.constant 239 : i32
    %153 = tpu.dynamic_rotate %90 by %c239_i32_82 dim 1 : vector<64x256xf32>, i32 -> vector<64x256xf32>
    %154 = vector.broadcast %8 : vector<1x256xf32> to vector<64x256xf32>
    %155 = arith.mulf %153, %154 : vector<64x256xf32>
    %156 = arith.truncf %155 : vector<64x256xf32> to vector<64x256xbf16>
    %cst_83 = arith.constant dense<0.000000e+00> : vector<64x256xf32>
    %157 = tpu.matmul %152, %156, %cst_83 {dimension_numbers = #tpu.dot_dimension_numbers<[1], [0], [0], [1], [0, 0, 1, 1], [], []>} : vector<64x64xbf16>, vector<64x256xbf16>, vector<64x256xf32> -> vector<64x256xf32>
    %158 = arith.addf %150, %157 : vector<64x256xf32>
    %c0_84 = arith.constant 0 : index
    %c0_85 = arith.constant 0 : index
    %159 = vector.load %arg8[%c0_84, %c0_85] : memref<64x1xf32, #tpu.memory_space<vmem>>, vector<64x1xf32>
    %160 = vector.broadcast %159 : vector<64x1xf32> to vector<64x256xf32>
    %161 = arith.addf %158, %160 : vector<64x256xf32>
    %cst_86 = arith.constant 0.000000e+00 : f32
    %162 = vector.broadcast %cst_86 : f32 to vector<64x256xf32>
    %163 = arith.maximumf %161, %162 : vector<64x256xf32>
    %164 = arith.truncf %163 : vector<64x256xf32> to vector<64x256xbf16>
    %c255_i32_87 = arith.constant 255 : i32
    %165 = tpu.dynamic_rotate %163 by %c255_i32_87 dim 1 : vector<64x256xf32>, i32 -> vector<64x256xf32>
    %166 = vector.broadcast %5 : vector<1x256xf32> to vector<64x256xf32>
    %167 = arith.mulf %165, %166 : vector<64x256xf32>
    %168 = arith.truncf %167 : vector<64x256xf32> to vector<64x256xbf16>
    %c240_i32_88 = arith.constant 240 : i32
    %169 = tpu.dynamic_rotate %163 by %c240_i32_88 dim 1 : vector<64x256xf32>, i32 -> vector<64x256xf32>
    %170 = vector.broadcast %7 : vector<1x256xf32> to vector<64x256xf32>
    %171 = arith.mulf %169, %170 : vector<64x256xf32>
    %172 = arith.truncf %171 : vector<64x256xf32> to vector<64x256xbf16>
    %c239_i32_89 = arith.constant 239 : i32
    %173 = tpu.dynamic_rotate %163 by %c239_i32_89 dim 1 : vector<64x256xf32>, i32 -> vector<64x256xf32>
    %174 = vector.broadcast %8 : vector<1x256xf32> to vector<64x256xf32>
    %175 = arith.mulf %173, %174 : vector<64x256xf32>
    %176 = arith.truncf %175 : vector<64x256xf32> to vector<64x256xbf16>
    %177 = tpu.concatenate %164, %168, %172, %176 in 0 : vector<64x256xbf16>, vector<64x256xbf16>, vector<64x256xbf16>, vector<64x256xbf16> -> vector<256x256xbf16>
    %c0_90 = arith.constant 0 : index
    %c0_91 = arith.constant 0 : index
    %178 = vector.load %arg9[%c0_90, %c0_91] : memref<256x256xbf16, #tpu.memory_space<vmem>>, vector<256x256xbf16>
    %cst_92 = arith.constant dense<0.000000e+00> : vector<256x256xf32>
    %179 = tpu.matmul %178, %177, %cst_92 {dimension_numbers = #tpu.dot_dimension_numbers<[1], [0], [0], [1], [0, 0, 1, 1], [], []>} : vector<256x256xbf16>, vector<256x256xbf16>, vector<256x256xf32> -> vector<256x256xf32>
    %c0_93 = arith.constant 0 : index
    %c0_94 = arith.constant 0 : index
    %180 = vector.load %arg10[%c0_93, %c0_94] : memref<256x1xf32, #tpu.memory_space<vmem>>, vector<256x1xf32>
    %181 = vector.broadcast %180 : vector<256x1xf32> to vector<256x256xf32>
    %182 = arith.addf %179, %181 : vector<256x256xf32>
    %cst_95 = arith.constant 0.000000e+00 : f32
    %183 = vector.broadcast %cst_95 : f32 to vector<16x256xf32>
    %184 = vector.extract_strided_slice %182 {offsets = [192, 0], sizes = [64, 256], strides = [1, 1]} : vector<256x256xf32> to vector<64x256xf32>
    %c17_i32_96 = arith.constant 17 : i32
    %185 = tpu.dynamic_rotate %184 by %c17_i32_96 dim 1 : vector<64x256xf32>, i32 -> vector<64x256xf32>
    %186 = vector.broadcast %1 : vector<1x256xf32> to vector<64x256xf32>
    %187 = arith.mulf %185, %186 : vector<64x256xf32>
    %188 = arith.truncf %187 : vector<64x256xf32> to vector<64x256xbf16>
    %c0_97 = arith.constant 0 : index
    %c0_98 = arith.constant 0 : index
    %c0_99 = arith.constant 0 : index
    %189 = vector.load %arg11[%c0_97, %c0_98, %c0_99] : memref<16x16x64xbf16, #tpu.memory_space<vmem>>, vector<1x16x64xbf16>
    %190 = vector.shape_cast %189 : vector<1x16x64xbf16> to vector<16x64xbf16>
    %cst_100 = arith.constant dense<0.000000e+00> : vector<16x256xf32>
    %191 = tpu.matmul %190, %188, %cst_100 {dimension_numbers = #tpu.dot_dimension_numbers<[1], [0], [0], [1], [0, 0, 1, 1], [], []>} : vector<16x64xbf16>, vector<64x256xbf16>, vector<16x256xf32> -> vector<16x256xf32>
    %192 = arith.addf %183, %191 : vector<16x256xf32>
    %193 = vector.extract_strided_slice %182 {offsets = [128, 0], sizes = [64, 256], strides = [1, 1]} : vector<256x256xf32> to vector<64x256xf32>
    %c16_i32_101 = arith.constant 16 : i32
    %194 = tpu.dynamic_rotate %193 by %c16_i32_101 dim 1 : vector<64x256xf32>, i32 -> vector<64x256xf32>
    %195 = vector.broadcast %2 : vector<1x256xf32> to vector<64x256xf32>
    %196 = arith.mulf %194, %195 : vector<64x256xf32>
    %197 = arith.truncf %196 : vector<64x256xf32> to vector<64x256xbf16>
    %c1_102 = arith.constant 1 : index
    %c0_103 = arith.constant 0 : index
    %c0_104 = arith.constant 0 : index
    %198 = vector.load %arg11[%c1_102, %c0_103, %c0_104] : memref<16x16x64xbf16, #tpu.memory_space<vmem>>, vector<1x16x64xbf16>
    %199 = vector.shape_cast %198 : vector<1x16x64xbf16> to vector<16x64xbf16>
    %cst_105 = arith.constant dense<0.000000e+00> : vector<16x256xf32>
    %200 = tpu.matmul %199, %197, %cst_105 {dimension_numbers = #tpu.dot_dimension_numbers<[1], [0], [0], [1], [0, 0, 1, 1], [], []>} : vector<16x64xbf16>, vector<64x256xbf16>, vector<16x256xf32> -> vector<16x256xf32>
    %201 = arith.addf %192, %200 : vector<16x256xf32>
    %202 = vector.extract_strided_slice %182 {offsets = [192, 0], sizes = [64, 256], strides = [1, 1]} : vector<256x256xf32> to vector<64x256xf32>
    %c16_i32_106 = arith.constant 16 : i32
    %203 = tpu.dynamic_rotate %202 by %c16_i32_106 dim 1 : vector<64x256xf32>, i32 -> vector<64x256xf32>
    %204 = vector.broadcast %2 : vector<1x256xf32> to vector<64x256xf32>
    %205 = arith.mulf %203, %204 : vector<64x256xf32>
    %206 = arith.truncf %205 : vector<64x256xf32> to vector<64x256xbf16>
    %c2_107 = arith.constant 2 : index
    %c0_108 = arith.constant 0 : index
    %c0_109 = arith.constant 0 : index
    %207 = vector.load %arg11[%c2_107, %c0_108, %c0_109] : memref<16x16x64xbf16, #tpu.memory_space<vmem>>, vector<1x16x64xbf16>
    %208 = vector.shape_cast %207 : vector<1x16x64xbf16> to vector<16x64xbf16>
    %cst_110 = arith.constant dense<0.000000e+00> : vector<16x256xf32>
    %209 = tpu.matmul %208, %206, %cst_110 {dimension_numbers = #tpu.dot_dimension_numbers<[1], [0], [0], [1], [0, 0, 1, 1], [], []>} : vector<16x64xbf16>, vector<64x256xbf16>, vector<16x256xf32> -> vector<16x256xf32>
    %210 = arith.addf %201, %209 : vector<16x256xf32>
    %211 = vector.extract_strided_slice %182 {offsets = [128, 0], sizes = [64, 256], strides = [1, 1]} : vector<256x256xf32> to vector<64x256xf32>
    %c15_i32_111 = arith.constant 15 : i32
    %212 = tpu.dynamic_rotate %211 by %c15_i32_111 dim 1 : vector<64x256xf32>, i32 -> vector<64x256xf32>
    %213 = vector.broadcast %3 : vector<1x256xf32> to vector<64x256xf32>
    %214 = arith.mulf %212, %213 : vector<64x256xf32>
    %215 = arith.truncf %214 : vector<64x256xf32> to vector<64x256xbf16>
    %c3_112 = arith.constant 3 : index
    %c0_113 = arith.constant 0 : index
    %c0_114 = arith.constant 0 : index
    %216 = vector.load %arg11[%c3_112, %c0_113, %c0_114] : memref<16x16x64xbf16, #tpu.memory_space<vmem>>, vector<1x16x64xbf16>
    %217 = vector.shape_cast %216 : vector<1x16x64xbf16> to vector<16x64xbf16>
    %cst_115 = arith.constant dense<0.000000e+00> : vector<16x256xf32>
    %218 = tpu.matmul %217, %215, %cst_115 {dimension_numbers = #tpu.dot_dimension_numbers<[1], [0], [0], [1], [0, 0, 1, 1], [], []>} : vector<16x64xbf16>, vector<64x256xbf16>, vector<16x256xf32> -> vector<16x256xf32>
    %219 = arith.addf %210, %218 : vector<16x256xf32>
    %220 = vector.extract_strided_slice %182 {offsets = [64, 0], sizes = [64, 256], strides = [1, 1]} : vector<256x256xf32> to vector<64x256xf32>
    %c1_i32_116 = arith.constant 1 : i32
    %221 = tpu.dynamic_rotate %220 by %c1_i32_116 dim 1 : vector<64x256xf32>, i32 -> vector<64x256xf32>
    %222 = vector.broadcast %4 : vector<1x256xf32> to vector<64x256xf32>
    %223 = arith.mulf %221, %222 : vector<64x256xf32>
    %224 = arith.truncf %223 : vector<64x256xf32> to vector<64x256xbf16>
    %c4_117 = arith.constant 4 : index
    %c0_118 = arith.constant 0 : index
    %c0_119 = arith.constant 0 : index
    %225 = vector.load %arg11[%c4_117, %c0_118, %c0_119] : memref<16x16x64xbf16, #tpu.memory_space<vmem>>, vector<1x16x64xbf16>
    %226 = vector.shape_cast %225 : vector<1x16x64xbf16> to vector<16x64xbf16>
    %cst_120 = arith.constant dense<0.000000e+00> : vector<16x256xf32>
    %227 = tpu.matmul %226, %224, %cst_120 {dimension_numbers = #tpu.dot_dimension_numbers<[1], [0], [0], [1], [0, 0, 1, 1], [], []>} : vector<16x64xbf16>, vector<64x256xbf16>, vector<16x256xf32> -> vector<16x256xf32>
    %228 = arith.addf %219, %227 : vector<16x256xf32>
    %229 = vector.extract_strided_slice %182 {offsets = [0, 0], sizes = [64, 256], strides = [1, 1]} : vector<256x256xf32> to vector<64x256xf32>
    %230 = arith.truncf %229 : vector<64x256xf32> to vector<64x256xbf16>
    %c5_121 = arith.constant 5 : index
    %c0_122 = arith.constant 0 : index
    %c0_123 = arith.constant 0 : index
    %231 = vector.load %arg11[%c5_121, %c0_122, %c0_123] : memref<16x16x64xbf16, #tpu.memory_space<vmem>>, vector<1x16x64xbf16>
    %232 = vector.shape_cast %231 : vector<1x16x64xbf16> to vector<16x64xbf16>
    %cst_124 = arith.constant dense<0.000000e+00> : vector<16x256xf32>
    %233 = tpu.matmul %232, %230, %cst_124 {dimension_numbers = #tpu.dot_dimension_numbers<[1], [0], [0], [1], [0, 0, 1, 1], [], []>} : vector<16x64xbf16>, vector<64x256xbf16>, vector<16x256xf32> -> vector<16x256xf32>
    %234 = arith.addf %228, %233 : vector<16x256xf32>
    %235 = vector.extract_strided_slice %182 {offsets = [64, 0], sizes = [64, 256], strides = [1, 1]} : vector<256x256xf32> to vector<64x256xf32>
    %236 = arith.truncf %235 : vector<64x256xf32> to vector<64x256xbf16>
    %c6_125 = arith.constant 6 : index
    %c0_126 = arith.constant 0 : index
    %c0_127 = arith.constant 0 : index
    %237 = vector.load %arg11[%c6_125, %c0_126, %c0_127] : memref<16x16x64xbf16, #tpu.memory_space<vmem>>, vector<1x16x64xbf16>
    %238 = vector.shape_cast %237 : vector<1x16x64xbf16> to vector<16x64xbf16>
    %cst_128 = arith.constant dense<0.000000e+00> : vector<16x256xf32>
    %239 = tpu.matmul %238, %236, %cst_128 {dimension_numbers = #tpu.dot_dimension_numbers<[1], [0], [0], [1], [0, 0, 1, 1], [], []>} : vector<16x64xbf16>, vector<64x256xbf16>, vector<16x256xf32> -> vector<16x256xf32>
    %240 = arith.addf %234, %239 : vector<16x256xf32>
    %241 = vector.extract_strided_slice %182 {offsets = [0, 0], sizes = [64, 256], strides = [1, 1]} : vector<256x256xf32> to vector<64x256xf32>
    %c255_i32_129 = arith.constant 255 : i32
    %242 = tpu.dynamic_rotate %241 by %c255_i32_129 dim 1 : vector<64x256xf32>, i32 -> vector<64x256xf32>
    %243 = vector.broadcast %5 : vector<1x256xf32> to vector<64x256xf32>
    %244 = arith.mulf %242, %243 : vector<64x256xf32>
    %245 = arith.truncf %244 : vector<64x256xf32> to vector<64x256xbf16>
    %c7_130 = arith.constant 7 : index
    %c0_131 = arith.constant 0 : index
    %c0_132 = arith.constant 0 : index
    %246 = vector.load %arg11[%c7_130, %c0_131, %c0_132] : memref<16x16x64xbf16, #tpu.memory_space<vmem>>, vector<1x16x64xbf16>
    %247 = vector.shape_cast %246 : vector<1x16x64xbf16> to vector<16x64xbf16>
    %cst_133 = arith.constant dense<0.000000e+00> : vector<16x256xf32>
    %248 = tpu.matmul %247, %245, %cst_133 {dimension_numbers = #tpu.dot_dimension_numbers<[1], [0], [0], [1], [0, 0, 1, 1], [], []>} : vector<16x64xbf16>, vector<64x256xbf16>, vector<16x256xf32> -> vector<16x256xf32>
    %249 = arith.addf %240, %248 : vector<16x256xf32>
    %250 = vector.extract_strided_slice %182 {offsets = [192, 0], sizes = [64, 256], strides = [1, 1]} : vector<256x256xf32> to vector<64x256xf32>
    %c1_i32_134 = arith.constant 1 : i32
    %251 = tpu.dynamic_rotate %250 by %c1_i32_134 dim 1 : vector<64x256xf32>, i32 -> vector<64x256xf32>
    %252 = vector.broadcast %4 : vector<1x256xf32> to vector<64x256xf32>
    %253 = arith.mulf %251, %252 : vector<64x256xf32>
    %254 = arith.truncf %253 : vector<64x256xf32> to vector<64x256xbf16>
    %c8_135 = arith.constant 8 : index
    %c0_136 = arith.constant 0 : index
    %c0_137 = arith.constant 0 : index
    %255 = vector.load %arg11[%c8_135, %c0_136, %c0_137] : memref<16x16x64xbf16, #tpu.memory_space<vmem>>, vector<1x16x64xbf16>
    %256 = vector.shape_cast %255 : vector<1x16x64xbf16> to vector<16x64xbf16>
    %cst_138 = arith.constant dense<0.000000e+00> : vector<16x256xf32>
    %257 = tpu.matmul %256, %254, %cst_138 {dimension_numbers = #tpu.dot_dimension_numbers<[1], [0], [0], [1], [0, 0, 1, 1], [], []>} : vector<16x64xbf16>, vector<64x256xbf16>, vector<16x256xf32> -> vector<16x256xf32>
    %258 = arith.addf %249, %257 : vector<16x256xf32>
    %259 = vector.extract_strided_slice %182 {offsets = [128, 0], sizes = [64, 256], strides = [1, 1]} : vector<256x256xf32> to vector<64x256xf32>
    %260 = arith.truncf %259 : vector<64x256xf32> to vector<64x256xbf16>
    %c9 = arith.constant 9 : index
    %c0_139 = arith.constant 0 : index
    %c0_140 = arith.constant 0 : index
    %261 = vector.load %arg11[%c9, %c0_139, %c0_140] : memref<16x16x64xbf16, #tpu.memory_space<vmem>>, vector<1x16x64xbf16>
    %262 = vector.shape_cast %261 : vector<1x16x64xbf16> to vector<16x64xbf16>
    %cst_141 = arith.constant dense<0.000000e+00> : vector<16x256xf32>
    %263 = tpu.matmul %262, %260, %cst_141 {dimension_numbers = #tpu.dot_dimension_numbers<[1], [0], [0], [1], [0, 0, 1, 1], [], []>} : vector<16x64xbf16>, vector<64x256xbf16>, vector<16x256xf32> -> vector<16x256xf32>
    %264 = arith.addf %258, %263 : vector<16x256xf32>
    %265 = vector.extract_strided_slice %182 {offsets = [192, 0], sizes = [64, 256], strides = [1, 1]} : vector<256x256xf32> to vector<64x256xf32>
    %266 = arith.truncf %265 : vector<64x256xf32> to vector<64x256xbf16>
    %c10 = arith.constant 10 : index
    %c0_142 = arith.constant 0 : index
    %c0_143 = arith.constant 0 : index
    %267 = vector.load %arg11[%c10, %c0_142, %c0_143] : memref<16x16x64xbf16, #tpu.memory_space<vmem>>, vector<1x16x64xbf16>
    %268 = vector.shape_cast %267 : vector<1x16x64xbf16> to vector<16x64xbf16>
    %cst_144 = arith.constant dense<0.000000e+00> : vector<16x256xf32>
    %269 = tpu.matmul %268, %266, %cst_144 {dimension_numbers = #tpu.dot_dimension_numbers<[1], [0], [0], [1], [0, 0, 1, 1], [], []>} : vector<16x64xbf16>, vector<64x256xbf16>, vector<16x256xf32> -> vector<16x256xf32>
    %270 = arith.addf %264, %269 : vector<16x256xf32>
    %271 = vector.extract_strided_slice %182 {offsets = [128, 0], sizes = [64, 256], strides = [1, 1]} : vector<256x256xf32> to vector<64x256xf32>
    %c255_i32_145 = arith.constant 255 : i32
    %272 = tpu.dynamic_rotate %271 by %c255_i32_145 dim 1 : vector<64x256xf32>, i32 -> vector<64x256xf32>
    %273 = vector.broadcast %5 : vector<1x256xf32> to vector<64x256xf32>
    %274 = arith.mulf %272, %273 : vector<64x256xf32>
    %275 = arith.truncf %274 : vector<64x256xf32> to vector<64x256xbf16>
    %c11 = arith.constant 11 : index
    %c0_146 = arith.constant 0 : index
    %c0_147 = arith.constant 0 : index
    %276 = vector.load %arg11[%c11, %c0_146, %c0_147] : memref<16x16x64xbf16, #tpu.memory_space<vmem>>, vector<1x16x64xbf16>
    %277 = vector.shape_cast %276 : vector<1x16x64xbf16> to vector<16x64xbf16>
    %cst_148 = arith.constant dense<0.000000e+00> : vector<16x256xf32>
    %278 = tpu.matmul %277, %275, %cst_148 {dimension_numbers = #tpu.dot_dimension_numbers<[1], [0], [0], [1], [0, 0, 1, 1], [], []>} : vector<16x64xbf16>, vector<64x256xbf16>, vector<16x256xf32> -> vector<16x256xf32>
    %279 = arith.addf %270, %278 : vector<16x256xf32>
    %280 = vector.extract_strided_slice %182 {offsets = [64, 0], sizes = [64, 256], strides = [1, 1]} : vector<256x256xf32> to vector<64x256xf32>
    %c241_i32_149 = arith.constant 241 : i32
    %281 = tpu.dynamic_rotate %280 by %c241_i32_149 dim 1 : vector<64x256xf32>, i32 -> vector<64x256xf32>
    %282 = vector.broadcast %6 : vector<1x256xf32> to vector<64x256xf32>
    %283 = arith.mulf %281, %282 : vector<64x256xf32>
    %284 = arith.truncf %283 : vector<64x256xf32> to vector<64x256xbf16>
    %c12 = arith.constant 12 : index
    %c0_150 = arith.constant 0 : index
    %c0_151 = arith.constant 0 : index
    %285 = vector.load %arg11[%c12, %c0_150, %c0_151] : memref<16x16x64xbf16, #tpu.memory_space<vmem>>, vector<1x16x64xbf16>
    %286 = vector.shape_cast %285 : vector<1x16x64xbf16> to vector<16x64xbf16>
    %cst_152 = arith.constant dense<0.000000e+00> : vector<16x256xf32>
    %287 = tpu.matmul %286, %284, %cst_152 {dimension_numbers = #tpu.dot_dimension_numbers<[1], [0], [0], [1], [0, 0, 1, 1], [], []>} : vector<16x64xbf16>, vector<64x256xbf16>, vector<16x256xf32> -> vector<16x256xf32>
    %288 = arith.addf %279, %287 : vector<16x256xf32>
    %289 = vector.extract_strided_slice %182 {offsets = [0, 0], sizes = [64, 256], strides = [1, 1]} : vector<256x256xf32> to vector<64x256xf32>
    %c240_i32_153 = arith.constant 240 : i32
    %290 = tpu.dynamic_rotate %289 by %c240_i32_153 dim 1 : vector<64x256xf32>, i32 -> vector<64x256xf32>
    %291 = vector.broadcast %7 : vector<1x256xf32> to vector<64x256xf32>
    %292 = arith.mulf %290, %291 : vector<64x256xf32>
    %293 = arith.truncf %292 : vector<64x256xf32> to vector<64x256xbf16>
    %c13 = arith.constant 13 : index
    %c0_154 = arith.constant 0 : index
    %c0_155 = arith.constant 0 : index
    %294 = vector.load %arg11[%c13, %c0_154, %c0_155] : memref<16x16x64xbf16, #tpu.memory_space<vmem>>, vector<1x16x64xbf16>
    %295 = vector.shape_cast %294 : vector<1x16x64xbf16> to vector<16x64xbf16>
    %cst_156 = arith.constant dense<0.000000e+00> : vector<16x256xf32>
    %296 = tpu.matmul %295, %293, %cst_156 {dimension_numbers = #tpu.dot_dimension_numbers<[1], [0], [0], [1], [0, 0, 1, 1], [], []>} : vector<16x64xbf16>, vector<64x256xbf16>, vector<16x256xf32> -> vector<16x256xf32>
    %297 = arith.addf %288, %296 : vector<16x256xf32>
    %298 = vector.extract_strided_slice %182 {offsets = [64, 0], sizes = [64, 256], strides = [1, 1]} : vector<256x256xf32> to vector<64x256xf32>
    %c240_i32_157 = arith.constant 240 : i32
    %299 = tpu.dynamic_rotate %298 by %c240_i32_157 dim 1 : vector<64x256xf32>, i32 -> vector<64x256xf32>
    %300 = vector.broadcast %7 : vector<1x256xf32> to vector<64x256xf32>
    %301 = arith.mulf %299, %300 : vector<64x256xf32>
    %302 = arith.truncf %301 : vector<64x256xf32> to vector<64x256xbf16>
    %c14 = arith.constant 14 : index
    %c0_158 = arith.constant 0 : index
    %c0_159 = arith.constant 0 : index
    %303 = vector.load %arg11[%c14, %c0_158, %c0_159] : memref<16x16x64xbf16, #tpu.memory_space<vmem>>, vector<1x16x64xbf16>
    %304 = vector.shape_cast %303 : vector<1x16x64xbf16> to vector<16x64xbf16>
    %cst_160 = arith.constant dense<0.000000e+00> : vector<16x256xf32>
    %305 = tpu.matmul %304, %302, %cst_160 {dimension_numbers = #tpu.dot_dimension_numbers<[1], [0], [0], [1], [0, 0, 1, 1], [], []>} : vector<16x64xbf16>, vector<64x256xbf16>, vector<16x256xf32> -> vector<16x256xf32>
    %306 = arith.addf %297, %305 : vector<16x256xf32>
    %307 = vector.extract_strided_slice %182 {offsets = [0, 0], sizes = [64, 256], strides = [1, 1]} : vector<256x256xf32> to vector<64x256xf32>
    %c239_i32_161 = arith.constant 239 : i32
    %308 = tpu.dynamic_rotate %307 by %c239_i32_161 dim 1 : vector<64x256xf32>, i32 -> vector<64x256xf32>
    %309 = vector.broadcast %8 : vector<1x256xf32> to vector<64x256xf32>
    %310 = arith.mulf %308, %309 : vector<64x256xf32>
    %311 = arith.truncf %310 : vector<64x256xf32> to vector<64x256xbf16>
    %c15 = arith.constant 15 : index
    %c0_162 = arith.constant 0 : index
    %c0_163 = arith.constant 0 : index
    %312 = vector.load %arg11[%c15, %c0_162, %c0_163] : memref<16x16x64xbf16, #tpu.memory_space<vmem>>, vector<1x16x64xbf16>
    %313 = vector.shape_cast %312 : vector<1x16x64xbf16> to vector<16x64xbf16>
    %cst_164 = arith.constant dense<0.000000e+00> : vector<16x256xf32>
    %314 = tpu.matmul %313, %311, %cst_164 {dimension_numbers = #tpu.dot_dimension_numbers<[1], [0], [0], [1], [0, 0, 1, 1], [], []>} : vector<16x64xbf16>, vector<64x256xbf16>, vector<16x256xf32> -> vector<16x256xf32>
    %315 = arith.addf %306, %314 : vector<16x256xf32>
    %c0_165 = arith.constant 0 : index
    %c0_166 = arith.constant 0 : index
    %316 = vector.load %arg12[%c0_165, %c0_166] : memref<16x1xf32, #tpu.memory_space<vmem>>, vector<16x1xf32>
    %317 = vector.broadcast %316 : vector<16x1xf32> to vector<16x256xf32>
    %318 = arith.addf %315, %317 : vector<16x256xf32>
    %c0_167 = arith.constant 0 : index
    %c0_168 = arith.constant 0 : index
    %c0_169 = arith.constant 0 : index
    %319 = vector.load %arg13[%c0_167, %c0_168, %c0_169] : memref<1x16x256xf32, #tpu.memory_space<vmem>>, vector<1x16x256xf32>
    %320 = vector.shape_cast %319 : vector<1x16x256xf32> to vector<16x256xf32>
    %321 = vector.shape_cast %318 : vector<16x256xf32> to vector<1x16x256xf32>
    tpu.vector_store %arg13[%c0_167, %c0_168, %c0_169], %321 {strides = array<i32>} : memref<1x16x256xf32, #tpu.memory_space<vmem>>, vector<1x16x256xf32>,
    return
  }
  func.func @transform_0(%arg0: i32) -> (i32, i32, i32) {
    %c0_i32 = arith.constant 0 : i32
    %c0_i32_0 = arith.constant 0 : i32
    %c0_i32_1 = arith.constant 0 : i32
    return %arg0, %c0_i32, %c0_i32_0 : i32, i32, i32
  }
  func.func @transform_1(%arg0: i32) -> (i32, i32) {
    %c0_i32 = arith.constant 0 : i32
    %c0_i32_0 = arith.constant 0 : i32
    %c0_i32_1 = arith.constant 0 : i32
    return %c0_i32, %c0_i32_0 : i32, i32
  }
  func.func @transform_2(%arg0: i32) -> (i32, i32) {
    %c0_i32 = arith.constant 0 : i32
    %c0_i32_0 = arith.constant 0 : i32
    %c0_i32_1 = arith.constant 0 : i32
    return %c0_i32, %c0_i32_0 : i32, i32
  }
  func.func @transform_3(%arg0: i32) -> (i32, i32) {
    %c0_i32 = arith.constant 0 : i32
    %c0_i32_0 = arith.constant 0 : i32
    %c0_i32_1 = arith.constant 0 : i32
    return %c0_i32, %c0_i32_0 : i32, i32
  }
  func.func @transform_4(%arg0: i32) -> (i32, i32, i32) {
    %c0_i32 = arith.constant 0 : i32
    %c0_i32_0 = arith.constant 0 : i32
    %c0_i32_1 = arith.constant 0 : i32
    %c0_i32_2 = arith.constant 0 : i32
    return %c0_i32, %c0_i32_0, %c0_i32_1 : i32, i32, i32
  }
  func.func @transform_5(%arg0: i32) -> (i32, i32) {
    %c0_i32 = arith.constant 0 : i32
    %c0_i32_0 = arith.constant 0 : i32
    %c0_i32_1 = arith.constant 0 : i32
    return %c0_i32, %c0_i32_0 : i32, i32
  }
  func.func @transform_6(%arg0: i32) -> (i32, i32, i32) {
    %c0_i32 = arith.constant 0 : i32
    %c0_i32_0 = arith.constant 0 : i32
    %c0_i32_1 = arith.constant 0 : i32
    %c0_i32_2 = arith.constant 0 : i32
    return %c0_i32, %c0_i32_0, %c0_i32_1 : i32, i32, i32
  }
  func.func @transform_7(%arg0: i32) -> (i32, i32) {
    %c0_i32 = arith.constant 0 : i32
    %c0_i32_0 = arith.constant 0 : i32
    %c0_i32_1 = arith.constant 0 : i32
    return %c0_i32, %c0_i32_0 : i32, i32
  }
  func.func @transform_8(%arg0: i32) -> (i32, i32) {
    %c0_i32 = arith.constant 0 : i32
    %c0_i32_0 = arith.constant 0 : i32
    %c0_i32_1 = arith.constant 0 : i32
    return %c0_i32, %c0_i32_0 : i32, i32
  }
  func.func @transform_9(%arg0: i32) -> (i32, i32) {
    %c0_i32 = arith.constant 0 : i32
    %c0_i32_0 = arith.constant 0 : i32
    %c0_i32_1 = arith.constant 0 : i32
    return %c0_i32, %c0_i32_0 : i32, i32
  }
  func.func @transform_10(%arg0: i32) -> (i32, i32, i32) {
    %c0_i32 = arith.constant 0 : i32
    %c0_i32_0 = arith.constant 0 : i32
    %c0_i32_1 = arith.constant 0 : i32
    %c0_i32_2 = arith.constant 0 : i32
    return %c0_i32, %c0_i32_0, %c0_i32_1 : i32, i32, i32
  }
  func.func @transform_11(%arg0: i32) -> (i32, i32) {
    %c0_i32 = arith.constant 0 : i32
    %c0_i32_0 = arith.constant 0 : i32
    %c0_i32_1 = arith.constant 0 : i32
    return %c0_i32, %c0_i32_0 : i32, i32
  }
  func.func @transform_12(%arg0: i32) -> (i32, i32, i32) {
    %c0_i32 = arith.constant 0 : i32
    %c0_i32_0 = arith.constant 0 : i32
    %c0_i32_1 = arith.constant 0 : i32
    return %arg0, %c0_i32, %c0_i32_0 : i32, i32, i32
  }
}

</mosaic_0001>

<llo_original>
// kernel: conv_up_forward.1
$region0: #{conv_up_forward.1}
  #allocation0 [shape = 'u32[]', space=smem, size = 0x4, offset = 0x4, fixed_abs, tag = 'smem constant byte address 0x4 - core index']
  #allocation1 [shape = 'u32[72,128]{1,0:T(1,128)}', space=vmem, size = 0x9000, scoped, tag = 'internal scratch']
  %s0 = inlined_call_operand.vmem [shape: bf16[2,64,256], index: 0, kind: input, shape index: {}]
  %s1 = inlined_call_operand.vmem [shape: f32[8,256], index: 1, kind: input, shape index: {}]
  %s2 = inlined_call_operand.vmem [shape: bf16[64,64], index: 2, kind: input, shape index: {}]
  %s3 = inlined_call_operand.vmem [shape: f32[64,1], index: 3, kind: input, shape index: {}]
  %s4 = inlined_call_operand.vmem [shape: bf16[9,64,64], index: 4, kind: input, shape index: {}]
  %s5 = inlined_call_operand.vmem [shape: f32[64,1], index: 5, kind: input, shape index: {}]
  %s6 = inlined_call_operand.vmem [shape: bf16[9,64,64], index: 6, kind: input, shape index: {}]
  %s7 = inlined_call_operand.vmem [shape: f32[64,1], index: 7, kind: input, shape index: {}]
  %s8 = inlined_call_operand.vmem [shape: bf16[256,256], index: 8, kind: input, shape index: {}]
  %s9 = inlined_call_operand.vmem [shape: f32[256,1], index: 9, kind: input, shape index: {}]
  %s10 = inlined_call_operand.vmem [shape: bf16[16,16,64], index: 10, kind: input, shape index: {}]
  %s11 = inlined_call_operand.vmem [shape: f32[16,1], index: 11, kind: input, shape index: {}]
  %s12 = inlined_call_operand.vmem [shape: f32[2,16,256], index: 12, kind: output, shape index: {}]
  %s13 = sld [smem:[#allocation0]]
  $region81: #{conv_up_forward.1} parent=0
    _
  %s15 = ssub.s32 1, %s13
  %s16 = scalar_select 0, %s15, %s13
  loop: start=0, step=1, limit=4
  $region2: #{conv_up_forward.1} parent=0 // loop_pre_header
    _
  $region3: #{conv_up_forward.1} parent=0 // loop_header
    %s18 = sphi 0, %s22
    %p19 = scmp.ge.s32.totalorder %s18, 4
    %s28 = sphi 0, %s30
    %s31 = sphi 0, %s28
    %s32 = sphi 0, %s31
    %s48 = sphi 0, %s32
    %s52 = sphi 0, %s52
    %s54 = sphi 0, %s52
    %s55 = sphi 0, %s54
    %s69 = sphi 0, %s55
    %s73 = sphi 0, %s73
    %s75 = sphi 0, %s73
    %s76 = sphi 0, %s75
    %s90 = sphi 0, %s76
    %s94 = sphi 0, %s94
    %s96 = sphi 0, %s94
    %s97 = sphi 0, %s96
    %s111 = sphi 0, %s97
    %s115 = sphi 0, %s115
    %s117 = sphi 0, %s115
    %s118 = sphi 0, %s117
    %s132 = sphi 0, %s118
    %s136 = sphi 0, %s136
    %s138 = sphi 0, %s136
    %s139 = sphi 0, %s138
    %s153 = sphi 0, %s139
    %s157 = sphi 0, %s157
    %s159 = sphi 0, %s157
    %s160 = sphi 0, %s159
    %s174 = sphi 0, %s160
    %s178 = sphi 0, %s178
    %s180 = sphi 0, %s178
    %s181 = sphi 0, %s180
    %s195 = sphi 0, %s181
    %s199 = sphi 0, %s199
    %s201 = sphi 0, %s199
    %s202 = sphi 0, %s201
    %s216 = sphi 0, %s202
    %s220 = sphi 0, %s220
    %s222 = sphi 0, %s220
    %s223 = sphi 0, %s222
    %s237 = sphi 0, %s223
    %s241 = sphi 0, %s241
    %s243 = sphi 0, %s241
    %s244 = sphi 0, %s243
    %s258 = sphi 0, %s244
    %s262 = sphi 0, %s262
    %s264 = sphi 0, %s262
    %s265 = sphi 0, %s264
    %s279 = sphi 0, %s265
    %s285 = sphi 0, %s287
    %s288 = sphi 0, %s285
    %s289 = sphi 0, %s288
    %s305 = sphi 0, %s289
  $region4: #{conv_up_forward.1} parent=0 // loop_header_branch
    %21 = sbr.rel (%p19) target = $region8
  $region5: #{conv_up_forward.1} parent=0 // loop_body
    %s23 = ssub.s32 %s18, 1
    %s24 = ssub.s32 %s18, 2
    %s25 = sadd.s32 %s18, 1
    %s26 = ssub.s32 %s18, %s25
    %p27 = scmp.eq.s32.totalorder %s26, 0
    %s29 = sadd.s32 %s28, 1
    %s30 = scalar_select %p27, %s28, %s29
    %p33 = pneg %p27
    %p34 = scmp.eq.s32.totalorder %s18, 1
    %p35 = por %p33, %p34
    %p36 = scmp.ne.s32.totalorder %s28, %s31
    %p37 = scmp.eq.s32.totalorder %s18, 0
    %p38 = por %p36, %p37
    %p39 = scmp.ne.s32.totalorder %s28, %s31
    %p40 = scmp.eq.s32.totalorder %s23, 1
    %p41 = por %p39, %p40
    %p42 = scmp.ne.s32.totalorder %s31, %s32
    %p43 = scmp.eq.s32.totalorder %s23, 0
    %p44 = por %p42, %p43
    %p45 = scmp.ne.s32.totalorder %s31, %s32
    %p46 = scmp.eq.s32.totalorder %s24, 1
    %p47 = por %p45, %p46
    %p49 = scmp.ne.s32.totalorder %s32, %s48
    %p50 = scmp.eq.s32.totalorder %s24, 0
    %p51 = por %p49, %p50
    %s53 = sadd.s32 %s52, 1
    %p56 = scmp.eq.s32.totalorder %s18, 1
    %p57 = scmp.ne.s32.totalorder %s52, %s54
    %p58 = scmp.eq.s32.totalorder %s18, 0
    %p59 = por %p57, %p58
    %p60 = scmp.ne.s32.totalorder %s52, %s54
    %p61 = scmp.eq.s32.totalorder %s23, 1
    %p62 = por %p60, %p61
    %p63 = scmp.ne.s32.totalorder %s54, %s55
    %p64 = scmp.eq.s32.totalorder %s23, 0
    %p65 = por %p63, %p64
    %p66 = scmp.ne.s32.totalorder %s54, %s55
    %p67 = scmp.eq.s32.totalorder %s24, 1
    %p68 = por %p66, %p67
    %p70 = scmp.ne.s32.totalorder %s55, %s69
    %p71 = scmp.eq.s32.totalorder %s24, 0
    %p72 = por %p70, %p71
    %s74 = sadd.s32 %s73, 1
    %p77 = scmp.eq.s32.totalorder %s18, 1
    %p78 = scmp.ne.s32.totalorder %s73, %s75
    %p79 = scmp.eq.s32.totalorder %s18, 0
    %p80 = por %p78, %p79
    %p81 = scmp.ne.s32.totalorder %s73, %s75
    %p82 = scmp.eq.s32.totalorder %s23, 1
    %p83 = por %p81, %p82
    %p84 = scmp.ne.s32.totalorder %s75, %s76
    %p85 = scmp.eq.s32.totalorder %s23, 0
    %p86 = por %p84, %p85
    %p87 = scmp.ne.s32.totalorder %s75, %s76
    %p88 = scmp.eq.s32.totalorder %s24, 1
    %p89 = por %p87, %p88
    %p91 = scmp.ne.s32.totalorder %s76, %s90
    %p92 = scmp.eq.s32.totalorder %s24, 0
    %p93 = por %p91, %p92
    %s95 = sadd.s32 %s94, 1
    %p98 = scmp.eq.s32.totalorder %s18, 1
    %p99 = scmp.ne.s32.totalorder %s94, %s96
    %p100 = scmp.eq.s32.totalorder %s18, 0
    %p101 = por %p99, %p100
    %p102 = scmp.ne.s32.totalorder %s94, %s96
    %p103 = scmp.eq.s32.totalorder %s23, 1
    %p104 = por %p102, %p103
    %p105 = scmp.ne.s32.totalorder %s96, %s97
    %p106 = scmp.eq.s32.totalorder %s23, 0
    %p107 = por %p105, %p106
    %p108 = scmp.ne.s32.totalorder %s96, %s97
    %p109 = scmp.eq.s32.totalorder %s24, 1
    %p110 = por %p108, %p109
    %p112 = scmp.ne.s32.totalorder %s97, %s111
    %p113 = scmp.eq.s32.totalorder %s24, 0
    %p114 = por %p112, %p113
    %s116 = sadd.s32 %s115, 1
    %p119 = scmp.eq.s32.totalorder %s18, 1
    %p120 = scmp.ne.s32.totalorder %s115, %s117
    %p121 = scmp.eq.s32.totalorder %s18, 0
    %p122 = por %p120, %p121
    %p123 = scmp.ne.s32.totalorder %s115, %s117
    %p124 = scmp.eq.s32.totalorder %s23, 1
    %p125 = por %p123, %p124
    %p126 = scmp.ne.s32.totalorder %s117, %s118
    %p127 = scmp.eq.s32.totalorder %s23, 0
    %p128 = por %p126, %p127
    %p129 = scmp.ne.s32.totalorder %s117, %s118
    %p130 = scmp.eq.s32.totalorder %s24, 1
    %p131 = por %p129, %p130
    %p133 = scmp.ne.s32.totalorder %s118, %s132
    %p134 = scmp.eq.s32.totalorder %s24, 0
    %p135 = por %p133, %p134
    %s137 = sadd.s32 %s136, 1
    %p140 = scmp.eq.s32.totalorder %s18, 1
    %p141 = scmp.ne.s32.totalorder %s136, %s138
    %p142 = scmp.eq.s32.totalorder %s18, 0
    %p143 = por %p141, %p142
    %p144 = scmp.ne.s32.totalorder %s136, %s138
    %p145 = scmp.eq.s32.totalorder %s23, 1
    %p146 = por %p144, %p145
    %p147 = scmp.ne.s32.totalorder %s138, %s139
    %p148 = scmp.eq.s32.totalorder %s23, 0
    %p149 = por %p147, %p148
    %p150 = scmp.ne.s32.totalorder %s138, %s139
    %p151 = scmp.eq.s32.totalorder %s24, 1
    %p152 = por %p150, %p151
    %p154 = scmp.ne.s32.totalorder %s139, %s153
    %p155 = scmp.eq.s32.totalorder %s24, 0
    %p156 = por %p154, %p155
    %s158 = sadd.s32 %s157, 1
    %p161 = scmp.eq.s32.totalorder %s18, 1
    %p162 = scmp.ne.s32.totalorder %s157, %s159
    %p163 = scmp.eq.s32.totalorder %s18, 0
    %p164 = por %p162, %p163
    %p165 = scmp.ne.s32.totalorder %s157, %s159
    %p166 = scmp.eq.s32.totalorder %s23, 1
    %p167 = por %p165, %p166
    %p168 = scmp.ne.s32.totalorder %s159, %s160
    %p169 = scmp.eq.s32.totalorder %s23, 0
    %p170 = por %p168, %p169
    %p171 = scmp.ne.s32.totalorder %s159, %s160
    %p172 = scmp.eq.s32.totalorder %s24, 1
    %p173 = por %p171, %p172
    %p175 = scmp.ne.s32.totalorder %s160, %s174
    %p176 = scmp.eq.s32.totalorder %s24, 0
    %p177 = por %p175, %p176
    %s179 = sadd.s32 %s178, 1
    %p182 = scmp.eq.s32.totalorder %s18, 1
    %p183 = scmp.ne.s32.totalorder %s178, %s180
    %p184 = scmp.eq.s32.totalorder %s18, 0
    %p185 = por %p183, %p184
    %p186 = scmp.ne.s32.totalorder %s178, %s180
    %p187 = scmp.eq.s32.totalorder %s23, 1
    %p188 = por %p186, %p187
    %p189 = scmp.ne.s32.totalorder %s180, %s181
    %p190 = scmp.eq.s32.totalorder %s23, 0
    %p191 = por %p189, %p190
    %p192 = scmp.ne.s32.totalorder %s180, %s181
    %p193 = scmp.eq.s32.totalorder %s24, 1
    %p194 = por %p192, %p193
    %p196 = scmp.ne.s32.totalorder %s181, %s195
    %p197 = scmp.eq.s32.totalorder %s24, 0
    %p198 = por %p196, %p197
    %s200 = sadd.s32 %s199, 1
    %p203 = scmp.eq.s32.totalorder %s18, 1
    %p204 = scmp.ne.s32.totalorder %s199, %s201
    %p205 = scmp.eq.s32.totalorder %s18, 0
    %p206 = por %p204, %p205
    %p207 = scmp.ne.s32.totalorder %s199, %s201
    %p208 = scmp.eq.s32.totalorder %s23, 1
    %p209 = por %p207, %p208
    %p210 = scmp.ne.s32.totalorder %s201, %s202
    %p211 = scmp.eq.s32.totalorder %s23, 0
    %p212 = por %p210, %p211
    %p213 = scmp.ne.s32.totalorder %s201, %s202
    %p214 = scmp.eq.s32.totalorder %s24, 1
    %p215 = por %p213, %p214
    %p217 = scmp.ne.s32.totalorder %s202, %s216
    %p218 = scmp.eq.s32.totalorder %s24, 0
    %p219 = por %p217, %p218
    %s221 = sadd.s32 %s220, 1
    %p224 = scmp.eq.s32.totalorder %s18, 1
    %p225 = scmp.ne.s32.totalorder %s220, %s222
    %p226 = scmp.eq.s32.totalorder %s18, 0
    %p227 = por %p225, %p226
    %p228 = scmp.ne.s32.totalorder %s220, %s222
    %p229 = scmp.eq.s32.totalorder %s23, 1
    %p230 = por %p228, %p229
    %p231 = scmp.ne.s32.totalorder %s222, %s223
    %p232 = scmp.eq.s32.totalorder %s23, 0
    %p233 = por %p231, %p232
    %p234 = scmp.ne.s32.totalorder %s222, %s223
    %p235 = scmp.eq.s32.totalorder %s24, 1
    %p236 = por %p234, %p235
    %p238 = scmp.ne.s32.totalorder %s223, %s237
    %p239 = scmp.eq.s32.totalorder %s24, 0
    %p240 = por %p238, %p239
    %s242 = sadd.s32 %s241, 1
    %p245 = scmp.eq.s32.totalorder %s18, 1
    %p246 = scmp.ne.s32.totalorder %s241, %s243
    %p247 = scmp.eq.s32.totalorder %s18, 0
    %p248 = por %p246, %p247
    %p249 = scmp.ne.s32.totalorder %s241, %s243
    %p250 = scmp.eq.s32.totalorder %s23, 1
    %p251 = por %p249, %p250
    %p252 = scmp.ne.s32.totalorder %s243, %s244
    %p253 = scmp.eq.s32.totalorder %s23, 0
    %p254 = por %p252, %p253
    %p255 = scmp.ne.s32.totalorder %s243, %s244
    %p256 = scmp.eq.s32.totalorder %s24, 1
    %p257 = por %p255, %p256
    %p259 = scmp.ne.s32.totalorder %s244, %s258
    %p260 = scmp.eq.s32.totalorder %s24, 0
    %p261 = por %p259, %p260
    %s263 = sadd.s32 %s262, 1
    %p266 = scmp.eq.s32.totalorder %s18, 1
    %p267 = scmp.ne.s32.totalorder %s262, %s264
    %p268 = scmp.eq.s32.totalorder %s18, 0
    %p269 = por %p267, %p268
    %p270 = scmp.ne.s32.totalorder %s262, %s264
    %p271 = scmp.eq.s32.totalorder %s23, 1
    %p272 = por %p270, %p271
    %p273 = scmp.ne.s32.totalorder %s264, %s265
    %p274 = scmp.eq.s32.totalorder %s23, 0
    %p275 = por %p273, %p274
    %p276 = scmp.ne.s32.totalorder %s264, %s265
    %p277 = scmp.eq.s32.totalorder %s24, 1
    %p278 = por %p276, %p277
    %p280 = scmp.ne.s32.totalorder %s265, %s279
    %p281 = scmp.eq.s32.totalorder %s24, 0
    %p282 = por %p280, %p281
    %s283 = ssub.s32 %s18, %s25
    %p284 = scmp.eq.s32.totalorder %s283, 0
    %s286 = sadd.s32 %s285, 1
    %s287 = scalar_select %p284, %s285, %s286
    %p290 = pneg %p284
    %p291 = scmp.eq.s32.totalorder %s18, 1
    %p292 = por %p290, %p291
    %p293 = scmp.ne.s32.totalorder %s285, %s288
    %p294 = scmp.eq.s32.totalorder %s18, 0
    %p295 = por %p293, %p294
    %p296 = scmp.ne.s32.totalorder %s285, %s288
    %p297 = scmp.eq.s32.totalorder %s23, 1
    %p298 = por %p296, %p297
    %p299 = scmp.ne.s32.totalorder %s288, %s289
    %p300 = scmp.eq.s32.totalorder %s23, 0
    %p301 = por %p299, %p300
    %p302 = scmp.ne.s32.totalorder %s288, %s289
    %p303 = scmp.eq.s32.totalorder %s24, 1
    %p304 = por %p302, %p303
    %p306 = scmp.ne.s32.totalorder %s289, %s305
    %p307 = scmp.eq.s32.totalorder %s24, 0
    %p308 = por %p306, %p307
    %p309 = scmp.le.s32.totalorder 1, %s18
    %p310 = scmp.lt.s32.totalorder %s18, 3
    %p311 = pnand %p309, %p310
    %p312 = pneg %p311
    // Predicated region
    $region9: #{conv_up_forward.1} parent=5 // pred_check
      _
    $region10: #{conv_up_forward.1} parent=5 // pred_check_branch
      %314 = sbr.rel (%p311) target = $region12
    $region11: #{conv_up_forward.1} parent=5 // pred_region
      %s315 = ssub.s32 %s18, 1
      // Predicated region
      $region13: #{conv_up_forward.1} parent=11 // pred_check
        %p316 = pneg %p65
      $region14: #{conv_up_forward.1} parent=11 // pred_check_branch
        %318 = sbr.rel (%p316) target = $region16
      $region15: #{conv_up_forward.1} parent=11 // pred_region
        _
      $region16: #{conv_up_forward.1} parent=11 // pred_fallthru
        _
      // Predicated region
      $region17: #{conv_up_forward.1} parent=11 // pred_check
        %p319 = pneg %p86
      $region18: #{conv_up_forward.1} parent=11 // pred_check_branch
        %321 = sbr.rel (%p319) target = $region20
      $region19: #{conv_up_forward.1} parent=11 // pred_region
        _
      $region20: #{conv_up_forward.1} parent=11 // pred_fallthru
        _
      // Predicated region
      $region21: #{conv_up_forward.1} parent=11 // pred_check
        %p322 = pneg %p107
      $region22: #{conv_up_forward.1} parent=11 // pred_check_branch
        %324 = sbr.rel (%p322) target = $region24
      $region23: #{conv_up_forward.1} parent=11 // pred_region
        _
      $region24: #{conv_up_forward.1} parent=11 // pred_fallthru
        _
      // Predicated region
      $region25: #{conv_up_forward.1} parent=11 // pred_check
        %p325 = pneg %p128
      $region26: #{conv_up_forward.1} parent=11 // pred_check_branch
        %327 = sbr.rel (%p325) target = $region28
      $region27: #{conv_up_forward.1} parent=11 // pred_region
        _
      $region28: #{conv_up_forward.1} parent=11 // pred_fallthru
        _
      // Predicated region
      $region29: #{conv_up_forward.1} parent=11 // pred_check
        %p328 = pneg %p149
      $region30: #{conv_up_forward.1} parent=11 // pred_check_branch
        %330 = sbr.rel (%p328) target = $region32
      $region31: #{conv_up_forward.1} parent=11 // pred_region
        _
      $region32: #{conv_up_forward.1} parent=11 // pred_fallthru
        _
      // Predicated region
      $region33: #{conv_up_forward.1} parent=11 // pred_check
        %p331 = pneg %p170
      $region34: #{conv_up_forward.1} parent=11 // pred_check_branch
        %333 = sbr.rel (%p331) target = $region36
      $region35: #{conv_up_forward.1} parent=11 // pred_region
        _
      $region36: #{conv_up_forward.1} parent=11 // pred_fallthru
        _
      // Predicated region
      $region37: #{conv_up_forward.1} parent=11 // pred_check
        %p334 = pneg %p191
      $region38: #{conv_up_forward.1} parent=11 // pred_check_branch
        %336 = sbr.rel (%p334) target = $region40
      $region39: #{conv_up_forward.1} parent=11 // pred_region
        _
      $region40: #{conv_up_forward.1} parent=11 // pred_fallthru
        _
      // Predicated region
      $region41: #{conv_up_forward.1} parent=11 // pred_check
        %p337 = pneg %p212
      $region42: #{conv_up_forward.1} parent=11 // pred_check_branch
        %339 = sbr.rel (%p337) target = $region44
      $region43: #{conv_up_forward.1} parent=11 // pred_region
        _
      $region44: #{conv_up_forward.1} parent=11 // pred_fallthru
        _
      // Predicated region
      $region45: #{conv_up_forward.1} parent=11 // pred_check
        %p340 = pneg %p233
      $region46: #{conv_up_forward.1} parent=11 // pred_check_branch
        %342 = sbr.rel (%p340) target = $region48
      $region47: #{conv_up_forward.1} parent=11 // pred_region
        _
      $region48: #{conv_up_forward.1} parent=11 // pred_fallthru
        _
      // Predicated region
      $region49: #{conv_up_forward.1} parent=11 // pred_check
        %p343 = pneg %p254
      $region50: #{conv_up_forward.1} parent=11 // pred_check_branch
        %345 = sbr.rel (%p343) target = $region52
      $region51: #{conv_up_forward.1} parent=11 // pred_region
        _
      $region52: #{conv_up_forward.1} parent=11 // pred_fallthru
        _
      // Predicated region
      $region53: #{conv_up_forward.1} parent=11 // pred_check
        %p346 = pneg %p275
      $region54: #{conv_up_forward.1} parent=11 // pred_check_branch
        %348 = sbr.rel (%p346) target = $region56
      $region55: #{conv_up_forward.1} parent=11 // pred_region
        _
      $region56: #{conv_up_forward.1} parent=11 // pred_fallthru
        _
    $region12: #{conv_up_forward.1} parent=5 // pred_fallthru
      _
    %p349 = scmp.lt.s32.totalorder %s18, 2
    // Predicated region
    $region57: #{conv_up_forward.1} parent=5 // pred_check
      %p350 = pneg %p349
    $region58: #{conv_up_forward.1} parent=5 // pred_check_branch
      %352 = sbr.rel (%p350) target = $region60
    $region59: #{conv_up_forward.1} parent=5 // pred_region
      // Predicated region
      $region61: #{conv_up_forward.1} parent=59 // pred_check
        %p353 = pneg %p38
      $region62: #{conv_up_forward.1} parent=59 // pred_check_branch
        %355 = sbr.rel (%p353) target = $region64
      $region63: #{conv_up_forward.1} parent=59 // pred_region
        %p356 = scmp.lt.s32.totalorder %s18, 1
        %s357 = scalar_select %p356, %s18, 1
        %s358 = smul.addr %s357, 16
        %s359 = smul.addr %s358, 4
        %s360 = scalar_lea.vmem %s0, %s359
      $region64: #{conv_up_forward.1} parent=59 // pred_fallthru
        _
    $region60: #{conv_up_forward.1} parent=5 // pred_fallthru
      _
    %p361 = scmp.le.s32.totalorder 1, %s18
    %p362 = scmp.lt.s32.totalorder %s18, 3
    %p363 = pnand %p361, %p362
    %p364 = pneg %p363
    // Predicated region
    $region65: #{conv_up_forward.1} parent=5 // pred_check
      _
    $region66: #{conv_up_forward.1} parent=5 // pred_check_branch
      %366 = sbr.rel (%p363) target = $region68
    $region67: #{conv_up_forward.1} parent=5 // pred_region
      %s367 = ssub.s32 %s18, 1
      %p368 = scmp.lt.s32.totalorder %s23, 1
      %s369 = scalar_select %p368, %s23, 1
      %s370 = smul.addr %s369, 16
      %s371 = smul.addr %s370, 4
      %s372 = scalar_lea.vmem %s0, %s371
      %p373 = pneg %p44
      %p374 = pneg %p41
      %p375 = pneg %p65
      %p376 = pneg %p62
      %p377 = pneg %p86
      %p378 = pneg %p83
      %p379 = pneg %p107
      %p380 = pneg %p104
      %p381 = pneg %p128
      %p382 = pneg %p125
      %p383 = pneg %p149
      %p384 = pneg %p146
      %p385 = pneg %p170
      %p386 = pneg %p167
      %p387 = pneg %p191
      %p388 = pneg %p188
      %p389 = pneg %p212
      %p390 = pneg %p209
      %p391 = pneg %p233
      %p392 = pneg %p230
      %p393 = pneg %p254
      %p394 = pneg %p251
      %p395 = pneg %p275
      %p396 = pneg %p272
      %p397 = pneg %p301
      %p398 = pneg %p298
      %p399 = scmp.lt.s32.totalorder %s23, 1
      %s400 = scalar_select %p399, %s23, 1
      %s401 = smul.addr %s400, 4
      %s402 = smul.addr %s401, 8
      %s403 = scalar_lea.vmem %s12, %s402
      %p404 = scmp.lt.s32.totalorder %s23, 1
      %s405 = scalar_select %p404, %s23, 1
      %s406 = smul.addr %s405, 16
      %s407 = smul.addr %s406, 4
      %s408 = scalar_lea.vmem %s0, %s407
      %p409 = scmp.lt.s32.totalorder %s23, 1
      %s410 = scalar_select %p409, %s23, 1
      %s411 = smul.addr %s410, 4
      %s412 = smul.addr %s411, 8
      %s413 = scalar_lea.vmem %s12, %s412
      %v415 = vld [vmem:[%s1] sm:$0xff]
      %v416 = vld [vmem:[%s1 + $0x8] sm:$0xff]
      %v417 = vld [vmem:[%s2] sm:$0xf]
      %v418 = vld [vmem:[%s2 + $0x4] sm:$0xf]
      %v419 = vld [vmem:[%s2 + $0x8] sm:$0xf]
      %v420 = vld [vmem:[%s2 + $0xc] sm:$0xf]
      %v421 = vld [vmem:[%s2 + $0x10] sm:$0xf]
      %v422 = vld [vmem:[%s2 + $0x14] sm:$0xf]
      %v423 = vld [vmem:[%s2 + $0x18] sm:$0xf]
      %v424 = vld [vmem:[%s2 + $0x1c] sm:$0xf]
      %v425 = vld [vmem:[%s408] sm:$0xff]
      %v426 = vld [vmem:[%s408 + $0x8] sm:$0xff]
      %v427 = vld [vmem:[%s408 + $0x10] sm:$0xff]
      %v428 = vld [vmem:[%s408 + $0x18] sm:$0xff]
      %v429 = vld [vmem:[%s408 + $0x20] sm:$0xff]
      %v430 = vld [vmem:[%s408 + $0x28] sm:$0xff]
      %v431 = vld [vmem:[%s408 + $0x30] sm:$0xff]
      %v432 = vld [vmem:[%s408 + $0x38] sm:$0xff]
      %v433 = vld [vmem:[%s3] sm:$0xff]
      %v434 = vld [vmem:[%s3 + $0x8] sm:$0xff]
      %v435 = vld [vmem:[%s3 + $0x10] sm:$0xff]
      %v436 = vld [vmem:[%s3 + $0x18] sm:$0xff]
      %v437 = vld [vmem:[%s3 + $0x20] sm:$0xff]
      %v438 = vld [vmem:[%s3 + $0x28] sm:$0xff]
      %v439 = vld [vmem:[%s3 + $0x30] sm:$0xff]
      %v440 = vld [vmem:[%s3 + $0x38] sm:$0xff]
      %442 = vset.pattern.permute.xlu0 0
      %443 = vperm.xlu0 %442, %v433
      %v444 = vpop.permute.xlu0 %443
      %447 = vset.pattern.permute.xlu0 0
      %448 = vperm.xlu0 %447, %v434
      %v449 = vpop.permute.xlu0 %448
      %452 = vset.pattern.permute.xlu0 0
      %453 = vperm.xlu0 %452, %v435
      %v454 = vpop.permute.xlu0 %453
      %457 = vset.pattern.permute.xlu0 0
      %458 = vperm.xlu0 %457, %v436
      %v459 = vpop.permute.xlu0 %458
      %462 = vset.pattern.permute.xlu0 0
      %463 = vperm.xlu0 %462, %v437
      %v464 = vpop.permute.xlu0 %463
      %467 = vset.pattern.permute.xlu0 0
      %468 = vperm.xlu0 %467, %v438
      %v469 = vpop.permute.xlu0 %468
      %472 = vset.pattern.permute.xlu0 0
      %473 = vperm.xlu0 %472, %v439
      %v474 = vpop.permute.xlu0 %473
      %477 = vset.pattern.permute.xlu0 0
      %478 = vperm.xlu0 %477, %v440
      %v479 = vpop.permute.xlu0 %478
      %v489 = vunpack.c.l.b16 %v417
      %v490 = vunpack.c.l.b16 %v418
      %v491 = vunpack.c.l.b16 %v419
      %v492 = vunpack.c.l.b16 %v420
      %v493 = vunpack.c.l.b16 %v421
      %v494 = vunpack.c.l.b16 %v422
      %v495 = vunpack.c.l.b16 %v423
      %v496 = vunpack.c.l.b16 %v424
      %v497 = vpack.c.b16 %v490, %v489
      %v498 = vpack.c.b16 %v492, %v491
      %v499 = vpack.c.b16 %v494, %v493
      %v500 = vpack.c.b16 %v496, %v495
      %v509 = vunpack.c.l.b16 %v425
      %v510 = vunpack.c.h.b16 %v425
      %v511 = vunpack.c.l.b16 %v426
      %v512 = vunpack.c.h.b16 %v426
      %v513 = vunpack.c.l.b16 %v427
      %v514 = vunpack.c.h.b16 %v427
      %v515 = vunpack.c.l.b16 %v428
      %v516 = vunpack.c.h.b16 %v428
      %v517 = vunpack.c.l.b16 %v429
      %v518 = vunpack.c.h.b16 %v429
      %v519 = vunpack.c.l.b16 %v430
      %v520 = vunpack.c.h.b16 %v430
      %v521 = vunpack.c.l.b16 %v431
      %v522 = vunpack.c.h.b16 %v431
      %v523 = vunpack.c.l.b16 %v432
      %v524 = vunpack.c.h.b16 %v432
      %v525 = vpack.c.b16 %v511, %v509
      %v526 = vpack.c.b16 %v512, %v510
      %v527 = vpack.c.b16 %v515, %v513
      %v528 = vpack.c.b16 %v516, %v514
      %v529 = vpack.c.b16 %v519, %v517
      %v530 = vpack.c.b16 %v520, %v518
      %v531 = vpack.c.b16 %v523, %v521
      %v532 = vpack.c.b16 %v524, %v522
      %vm541 = vcmask 523264
      %v543 = vsel %vm541, %v497, 0
      %v546 = vsel %vm541, %v498, 0
      %v549 = vsel %vm541, %v499, 0
      %v552 = vsel %vm541, %v500, 0
      %554 = vmatpush.bf16.msra.mxu0 0
      %555 = vmatpush.bf16.msra.mxu0 0
      %556 = vmatpush.bf16.msra.mxu0 0
      %557 = vmatpush.bf16.msra.mxu0 0
      %558 = vmatpush.bf16.msra.mxu0 %v531
      %559 = vmatpush.bf16.msra.mxu0 %v529
      %560 = vmatpush.bf16.msra.mxu0 %v527
      %561 = vmatpush.bf16.msra.mxu0 %v525
      %562 = vmatmul.bf16.gmra.mxu0 %v543
      %v563 = vpop.f32.mrf.mxu0
      %v564 = vadd.f32 %v444, %v563
      %v565 = vpop.f32.mrf.mxu0
      %v566 = vadd.f32 %v449, %v565
      %567 = vmatmul.bf16.gmra.mxu0 %v546
      %v568 = vpop.f32.mrf.mxu0
      %v569 = vadd.f32 %v454, %v568
      %v570 = vpop.f32.mrf.mxu0
      %v571 = vadd.f32 %v459, %v570
      %572 = vmatmul.bf16.gmra.mxu0 %v549
      %v573 = vpop.f32.mrf.mxu0
      %v574 = vadd.f32 %v464, %v573
      %v575 = vpop.f32.mrf.mxu0
      %v576 = vadd.f32 %v469, %v575
      %577 = vmatmul.bf16.gmra.mxu0 %v552
      %v578 = vpop.f32.mrf.mxu0
      %v579 = vadd.f32 %v474, %v578
      %v580 = vpop.f32.mrf.mxu0
      %v581 = vadd.f32 %v479, %v580
      %582 = vdwg.mxu0
      %583 = vmatpush.bf16.msra.mxu0 0
      %584 = vmatpush.bf16.msra.mxu0 0
      %585 = vmatpush.bf16.msra.mxu0 0
      %586 = vmatpush.bf16.msra.mxu0 0
      %587 = vmatpush.bf16.msra.mxu0 %v532
      %588 = vmatpush.bf16.msra.mxu0 %v530
      %589 = vmatpush.bf16.msra.mxu0 %v528
      %590 = vmatpush.bf16.msra.mxu0 %v526
      %591 = vmatmul.bf16.gmra.mxu0 %v543
      %v592 = vpop.f32.mrf.mxu0
      %v593 = vadd.f32 %v444, %v592
      %v594 = vpop.f32.mrf.mxu0
      %v595 = vadd.f32 %v449, %v594
      %596 = vmatmul.bf16.gmra.mxu0 %v546
      %v597 = vpop.f32.mrf.mxu0
      %v598 = vadd.f32 %v454, %v597
      %v599 = vpop.f32.mrf.mxu0
      %v600 = vadd.f32 %v459, %v599
      %601 = vmatmul.bf16.gmra.mxu0 %v549
      %v602 = vpop.f32.mrf.mxu0
      %v603 = vadd.f32 %v464, %v602
      %v604 = vpop.f32.mrf.mxu0
      %v605 = vadd.f32 %v469, %v604
      %606 = vmatmul.bf16.gmra.mxu0 %v552
      %v607 = vpop.f32.mrf.mxu0
      %v608 = vadd.f32 %v474, %v607
      %v609 = vpop.f32.mrf.mxu0
      %v610 = vadd.f32 %v479, %v609
      %611 = vdwg.mxu0
      %v612 = vmax.f32 %v564, 0.0
      %v613 = vmax.f32 %v593, 0.0
      %v614 = vmax.f32 %v566, 0.0
      %v615 = vmax.f32 %v595, 0.0
      %v616 = vmax.f32 %v569, 0.0
      %v617 = vmax.f32 %v598, 0.0
      %v618 = vmax.f32 %v571, 0.0
      %v619 = vmax.f32 %v600, 0.0
      %v620 = vmax.f32 %v574, 0.0
      %v621 = vmax.f32 %v603, 0.0
      %v622 = vmax.f32 %v576, 0.0
      %v623 = vmax.f32 %v605, 0.0
      %v624 = vmax.f32 %v579, 0.0
      %v625 = vmax.f32 %v608, 0.0
      %v626 = vmax.f32 %v581, 0.0
      %v627 = vmax.f32 %v610, 0.0
      %s628 = scalar_lea.vmem %s4, 128
      %v629 = vld [vmem:[%s628] sm:$0xf]
      %v630 = vld [vmem:[%s628 + $0x4] sm:$0xf]
      %v631 = vld [vmem:[%s628 + $0x8] sm:$0xf]
      %v632 = vld [vmem:[%s628 + $0xc] sm:$0xf]
      %v633 = vld [vmem:[%s628 + $0x10] sm:$0xf]
      %v634 = vld [vmem:[%s628 + $0x14] sm:$0xf]
      %v635 = vld [vmem:[%s628 + $0x18] sm:$0xf]
      %v636 = vld [vmem:[%s628 + $0x1c] sm:$0xf]
      %v637 = vpack.c.bf16 %v614, %v612
      %v638 = vpack.c.bf16 %v615, %v613
      %v639 = vpack.c.bf16 %v618, %v616
      %v640 = vpack.c.bf16 %v619, %v617
      %v641 = vpack.c.bf16 %v622, %v620
      %v642 = vpack.c.bf16 %v623, %v621
      %v643 = vpack.c.bf16 %v626, %v624
      %v644 = vpack.c.bf16 %v627, %v625
      %v645 = vld [vmem:[%s4] sm:$0xf]
      %v646 = vld [vmem:[%s4 + $0x4] sm:$0xf]
      %v647 = vld [vmem:[%s4 + $0x8] sm:$0xf]
      %v648 = vld [vmem:[%s4 + $0xc] sm:$0xf]
      %v649 = vld [vmem:[%s4 + $0x10] sm:$0xf]
      %v650 = vld [vmem:[%s4 + $0x14] sm:$0xf]
      %v651 = vld [vmem:[%s4 + $0x18] sm:$0xf]
      %v652 = vld [vmem:[%s4 + $0x1c] sm:$0xf]
      %653 = vrot.lane.b32.xlu0 %v612, 17
      %v654 = vpop.permute.xlu0 %653
      %655 = vrot.lane.b32.xlu0 %v614, 17
      %v656 = vpop.permute.xlu0 %655
      %657 = vrot.lane.b32.xlu0 %v616, 17
      %v658 = vpop.permute.xlu0 %657
      %659 = vrot.lane.b32.xlu0 %v618, 17
      %v660 = vpop.permute.xlu0 %659
      %661 = vrot.lane.b32.xlu0 %v620, 17
      %v662 = vpop.permute.xlu0 %661
      %663 = vrot.lane.b32.xlu0 %v622, 17
      %v664 = vpop.permute.xlu0 %663
      %665 = vrot.lane.b32.xlu0 %v624, 17
      %v666 = vpop.permute.xlu0 %665
      %667 = vrot.lane.b32.xlu0 %v626, 17
      %v668 = vpop.permute.xlu0 %667
      %669 = vrot.lane.b32.xlu0 %v613, 17
      %v670 = vpop.permute.xlu0 %669
      %671 = vrot.lane.b32.xlu0 %v615, 17
      %v672 = vpop.permute.xlu0 %671
      %673 = vrot.lane.b32.xlu0 %v617, 17
      %v674 = vpop.permute.xlu0 %673
      %675 = vrot.lane.b32.xlu0 %v619, 17
      %v676 = vpop.permute.xlu0 %675
      %677 = vrot.lane.b32.xlu0 %v621, 17
      %v678 = vpop.permute.xlu0 %677
      %679 = vrot.lane.b32.xlu0 %v623, 17
      %v680 = vpop.permute.xlu0 %679
      %681 = vrot.lane.b32.xlu0 %v625, 17
      %v682 = vpop.permute.xlu0 %681
      %683 = vrot.lane.b32.xlu0 %v627, 17
      %v684 = vpop.permute.xlu0 %683
      %v685 = vlaneseq
      %v686 = vand.u32 %v685, 127
      %vm687 = vcmp.lt.s32.totalorder %v686, 17
      %v688 = vsel %vm687, %v654, %v670
      %v689 = vsel %vm687, %v656, %v672
      %v690 = vsel %vm687, %v658, %v674
      %v691 = vsel %vm687, %v660, %v676
      %v692 = vsel %vm687, %v662, %v678
      %v693 = vsel %vm687, %v664, %v680
      %v694 = vsel %vm687, %v666, %v682
      %v695 = vsel %vm687, %v668, %v684
      %v696 = vsel %vm687, %v670, %v654
      %v697 = vsel %vm687, %v672, %v656
      %v698 = vsel %vm687, %v674, %v658
      %v699 = vsel %vm687, %v676, %v660
      %v700 = vsel %vm687, %v678, %v662
      %v701 = vsel %vm687, %v680, %v664
      %v702 = vsel %vm687, %v682, %v666
      %v703 = vsel %vm687, %v684, %v668
      %v704 = vperm.slane %v415, 0
      %v705 = vperm.slane %v416, 0
      %v706 = vmul.f32 %v696, %v704
      %v707 = vmul.f32 %v688, %v705
      %v708 = vmul.f32 %v697, %v704
      %v709 = vmul.f32 %v689, %v705
      %v710 = vmul.f32 %v698, %v704
      %v711 = vmul.f32 %v690, %v705
      %v712 = vmul.f32 %v699, %v704
      %v713 = vmul.f32 %v691, %v705
      %v714 = vmul.f32 %v700, %v704
      %v715 = vmul.f32 %v692, %v705
      %v716 = vmul.f32 %v701, %v704
      %v717 = vmul.f32 %v693, %v705
      %v718 = vmul.f32 %v702, %v704
      %v719 = vmul.f32 %v694, %v705
      %v720 = vmul.f32 %v703, %v704
      %v721 = vmul.f32 %v695, %v705
      %v722 = vpack.c.bf16 %v708, %v706
      %v723 = vpack.c.bf16 %v709, %v707
      %v724 = vpack.c.bf16 %v712, %v710
      %v725 = vpack.c.bf16 %v713, %v711
      %v726 = vpack.c.bf16 %v716, %v714
      %v727 = vpack.c.bf16 %v717, %v715
      %v728 = vpack.c.bf16 %v720, %v718
      %v729 = vpack.c.bf16 %v721, %v719
      %v738 = vunpack.c.l.b16 %v645
      %v739 = vunpack.c.l.b16 %v646
      %v740 = vunpack.c.l.b16 %v647
      %v741 = vunpack.c.l.b16 %v648
      %v742 = vunpack.c.l.b16 %v649
      %v743 = vunpack.c.l.b16 %v650
      %v744 = vunpack.c.l.b16 %v651
      %v745 = vunpack.c.l.b16 %v652
      %v746 = vpack.c.b16 %v739, %v738
      %v747 = vpack.c.b16 %v741, %v740
      %v748 = vpack.c.b16 %v743, %v742
      %v749 = vpack.c.b16 %v745, %v744
      %v751 = vsel %vm541, %v746, 0
      %v754 = vsel %vm541, %v747, 0
      %v757 = vsel %vm541, %v748, 0
      %v760 = vsel %vm541, %v749, 0
      %762 = vmatpush.bf16.msra.mxu0 0
      %763 = vmatpush.bf16.msra.mxu0 0
      %764 = vmatpush.bf16.msra.mxu0 0
      %765 = vmatpush.bf16.msra.mxu0 0
      %766 = vmatpush.bf16.msra.mxu0 %v728
      %767 = vmatpush.bf16.msra.mxu0 %v726
      %768 = vmatpush.bf16.msra.mxu0 %v724
      %769 = vmatpush.bf16.msra.mxu0 %v722
      %770 = vmatmul.bf16.gmra.mxu0 %v751
      %v771 = vpop.f32.mrf.mxu0
      %v772 = vadd.f32 0.0, %v771
      %v773 = vpop.f32.mrf.mxu0
      %v774 = vadd.f32 0.0, %v773
      %775 = vmatmul.bf16.gmra.mxu0 %v754
      %v776 = vpop.f32.mrf.mxu0
      %v777 = vadd.f32 0.0, %v776
      %v778 = vpop.f32.mrf.mxu0
      %v779 = vadd.f32 0.0, %v778
      %780 = vmatmul.bf16.gmra.mxu0 %v757
      %v781 = vpop.f32.mrf.mxu0
      %v782 = vadd.f32 0.0, %v781
      %v783 = vpop.f32.mrf.mxu0
      %v784 = vadd.f32 0.0, %v783
      %785 = vmatmul.bf16.gmra.mxu0 %v760
      %v786 = vpop.f32.mrf.mxu0
      %v787 = vadd.f32 0.0, %v786
      %v788 = vpop.f32.mrf.mxu0
      %v789 = vadd.f32 0.0, %v788
      %790 = vdwg.mxu0
      %791 = vmatpush.bf16.msra.mxu0 0
      %792 = vmatpush.bf16.msra.mxu0 0
      %793 = vmatpush.bf16.msra.mxu0 0
      %794 = vmatpush.bf16.msra.mxu0 0
      %795 = vmatpush.bf16.msra.mxu0 %v729
      %796 = vmatpush.bf16.msra.mxu0 %v727
      %797 = vmatpush.bf16.msra.mxu0 %v725
      %798 = vmatpush.bf16.msra.mxu0 %v723
      %799 = vmatmul.bf16.gmra.mxu0 %v751
      %v800 = vpop.f32.mrf.mxu0
      %v801 = vadd.f32 0.0, %v800
      %v802 = vpop.f32.mrf.mxu0
      %v803 = vadd.f32 0.0, %v802
      %804 = vmatmul.bf16.gmra.mxu0 %v754
      %v805 = vpop.f32.mrf.mxu0
      %v806 = vadd.f32 0.0, %v805
      %v807 = vpop.f32.mrf.mxu0
      %v808 = vadd.f32 0.0, %v807
      %809 = vmatmul.bf16.gmra.mxu0 %v757
      %v810 = vpop.f32.mrf.mxu0
      %v811 = vadd.f32 0.0, %v810
      %v812 = vpop.f32.mrf.mxu0
      %v813 = vadd.f32 0.0, %v812
      %814 = vmatmul.bf16.gmra.mxu0 %v760
      %v815 = vpop.f32.mrf.mxu0
      %v816 = vadd.f32 0.0, %v815
      %v817 = vpop.f32.mrf.mxu0
      %v818 = vadd.f32 0.0, %v817
      %819 = vdwg.mxu0
      %v828 = vunpack.c.l.b16 %v629
      %v829 = vunpack.c.l.b16 %v630
      %v830 = vunpack.c.l.b16 %v631
      %v831 = vunpack.c.l.b16 %v632
      %v832 = vunpack.c.l.b16 %v633
      %v833 = vunpack.c.l.b16 %v634
      %v834 = vunpack.c.l.b16 %v635
      %v835 = vunpack.c.l.b16 %v636
      %v836 = vpack.c.b16 %v829, %v828
      %v837 = vpack.c.b16 %v831, %v830
      %v838 = vpack.c.b16 %v833, %v832
      %v839 = vpack.c.b16 %v835, %v834
      %v841 = vsel %vm541, %v836, 0
      %v844 = vsel %vm541, %v837, 0
      %v847 = vsel %vm541, %v838, 0
      %v850 = vsel %vm541, %v839, 0
      %852 = vmatpush.bf16.msra.mxu0 0
      %853 = vmatpush.bf16.msra.mxu0 0
      %854 = vmatpush.bf16.msra.mxu0 0
      %855 = vmatpush.bf16.msra.mxu0 0
      %856 = vmatpush.bf16.msra.mxu0 %v643
      %857 = vmatpush.bf16.msra.mxu0 %v641
      %858 = vmatpush.bf16.msra.mxu0 %v639
      %859 = vmatpush.bf16.msra.mxu0 %v637
      %860 = vmatmul.bf16.gmra.mxu0 %v841
      %v861 = vpop.f32.mrf.mxu0
      %v862 = vadd.f32 %v772, %v861
      %v863 = vpop.f32.mrf.mxu0
      %v864 = vadd.f32 %v774, %v863
      %865 = vmatmul.bf16.gmra.mxu0 %v844
      %v866 = vpop.f32.mrf.mxu0
      %v867 = vadd.f32 %v777, %v866
      %v868 = vpop.f32.mrf.mxu0
      %v869 = vadd.f32 %v779, %v868
      %870 = vmatmul.bf16.gmra.mxu0 %v847
      %v871 = vpop.f32.mrf.mxu0
      %v872 = vadd.f32 %v782, %v871
      %v873 = vpop.f32.mrf.mxu0
      %v874 = vadd.f32 %v784, %v873
      %875 = vmatmul.bf16.gmra.mxu0 %v850
      %v876 = vpop.f32.mrf.mxu0
      %v877 = vadd.f32 %v787, %v876
      %v878 = vpop.f32.mrf.mxu0
      %v879 = vadd.f32 %v789, %v878
      %880 = vdwg.mxu0
      %881 = vmatpush.bf16.msra.mxu0 0
      %882 = vmatpush.bf16.msra.mxu0 0
      %883 = vmatpush.bf16.msra.mxu0 0
      %884 = vmatpush.bf16.msra.mxu0 0
      %885 = vmatpush.bf16.msra.mxu0 %v644
      %886 = vmatpush.bf16.msra.mxu0 %v642
      %887 = vmatpush.bf16.msra.mxu0 %v640
      %888 = vmatpush.bf16.msra.mxu0 %v638
      %889 = vmatmul.bf16.gmra.mxu0 %v841
      %v890 = vpop.f32.mrf.mxu0
      %v891 = vadd.f32 %v801, %v890
      %v892 = vpop.f32.mrf.mxu0
      %v893 = vadd.f32 %v803, %v892
      %894 = vmatmul.bf16.gmra.mxu0 %v844
      %v895 = vpop.f32.mrf.mxu0
      %v896 = vadd.f32 %v806, %v895
      %v897 = vpop.f32.mrf.mxu0
      %v898 = vadd.f32 %v808, %v897
      %899 = vmatmul.bf16.gmra.mxu0 %v847
      %v900 = vpop.f32.mrf.mxu0
      %v901 = vadd.f32 %v811, %v900
      %v902 = vpop.f32.mrf.mxu0
      %v903 = vadd.f32 %v813, %v902
      %904 = vmatmul.bf16.gmra.mxu0 %v850
      %v905 = vpop.f32.mrf.mxu0
      %v906 = vadd.f32 %v816, %v905
      %v907 = vpop.f32.mrf.mxu0
      %v908 = vadd.f32 %v818, %v907
      %909 = vdwg.mxu0
      %s910 = scalar_lea.vmem %s4, 32
      %v911 = vld [vmem:[%s910] sm:$0xf]
      %v912 = vld [vmem:[%s910 + $0x4] sm:$0xf]
      %v913 = vld [vmem:[%s910 + $0x8] sm:$0xf]
      %v914 = vld [vmem:[%s910 + $0xc] sm:$0xf]
      %v915 = vld [vmem:[%s910 + $0x10] sm:$0xf]
      %v916 = vld [vmem:[%s910 + $0x14] sm:$0xf]
      %v917 = vld [vmem:[%s910 + $0x18] sm:$0xf]
      %v918 = vld [vmem:[%s910 + $0x1c] sm:$0xf]
      %919 = vrot.lane.b32.xlu0 %v612, 16
      %v920 = vpop.permute.xlu0 %919
      %921 = vrot.lane.b32.xlu0 %v614, 16
      %v922 = vpop.permute.xlu0 %921
      %923 = vrot.lane.b32.xlu0 %v616, 16
      %v924 = vpop.permute.xlu0 %923
      %925 = vrot.lane.b32.xlu0 %v618, 16
      %v926 = vpop.permute.xlu0 %925
      %927 = vrot.lane.b32.xlu0 %v620, 16
      %v928 = vpop.permute.xlu0 %927
      %929 = vrot.lane.b32.xlu0 %v622, 16
      %v930 = vpop.permute.xlu0 %929
      %931 = vrot.lane.b32.xlu0 %v624, 16
      %v932 = vpop.permute.xlu0 %931
      %933 = vrot.lane.b32.xlu0 %v626, 16
      %v934 = vpop.permute.xlu0 %933
      %935 = vrot.lane.b32.xlu0 %v613, 16
      %v936 = vpop.permute.xlu0 %935
      %937 = vrot.lane.b32.xlu0 %v615, 16
      %v938 = vpop.permute.xlu0 %937
      %939 = vrot.lane.b32.xlu0 %v617, 16
      %v940 = vpop.permute.xlu0 %939
      %941 = vrot.lane.b32.xlu0 %v619, 16
      %v942 = vpop.permute.xlu0 %941
      %943 = vrot.lane.b32.xlu0 %v621, 16
      %v944 = vpop.permute.xlu0 %943
      %945 = vrot.lane.b32.xlu0 %v623, 16
      %v946 = vpop.permute.xlu0 %945
      %947 = vrot.lane.b32.xlu0 %v625, 16
      %v948 = vpop.permute.xlu0 %947
      %949 = vrot.lane.b32.xlu0 %v627, 16
      %v950 = vpop.permute.xlu0 %949
      %vm951 = vcmp.lt.s32.totalorder %v686, 16
      %v952 = vsel %vm951, %v920, %v936
      %v953 = vsel %vm951, %v922, %v938
      %v954 = vsel %vm951, %v924, %v940
      %v955 = vsel %vm951, %v926, %v942
      %v956 = vsel %vm951, %v928, %v944
      %v957 = vsel %vm951, %v930, %v946
      %v958 = vsel %vm951, %v932, %v948
      %v959 = vsel %vm951, %v934, %v950
      %v960 = vsel %vm951, %v936, %v920
      %v961 = vsel %vm951, %v938, %v922
      %v962 = vsel %vm951, %v940, %v924
      %v963 = vsel %vm951, %v942, %v926
      %v964 = vsel %vm951, %v944, %v928
      %v965 = vsel %vm951, %v946, %v930
      %v966 = vsel %vm951, %v948, %v932
      %v967 = vsel %vm951, %v950, %v934
      %v968 = vperm.slane %v415, 1
      %v969 = vperm.slane %v416, 1
      %v970 = vmul.f32 %v960, %v968
      %v971 = vmul.f32 %v952, %v969
      %v972 = vmul.f32 %v961, %v968
      %v973 = vmul.f32 %v953, %v969
      %v974 = vmul.f32 %v962, %v968
      %v975 = vmul.f32 %v954, %v969
      %v976 = vmul.f32 %v963, %v968
      %v977 = vmul.f32 %v955, %v969
      %v978 = vmul.f32 %v964, %v968
      %v979 = vmul.f32 %v956, %v969
      %v980 = vmul.f32 %v965, %v968
      %v981 = vmul.f32 %v957, %v969
      %v982 = vmul.f32 %v966, %v968
      %v983 = vmul.f32 %v958, %v969
      %v984 = vmul.f32 %v967, %v968
      %v985 = vmul.f32 %v959, %v969
      %v986 = vpack.c.bf16 %v972, %v970
      %v987 = vpack.c.bf16 %v973, %v971
      %v988 = vpack.c.bf16 %v976, %v974
      %v989 = vpack.c.bf16 %v977, %v975
      %v990 = vpack.c.bf16 %v980, %v978
      %v991 = vpack.c.bf16 %v981, %v979
      %v992 = vpack.c.bf16 %v984, %v982
      %v993 = vpack.c.bf16 %v985, %v983
      %v1002 = vunpack.c.l.b16 %v911
      %v1003 = vunpack.c.l.b16 %v912
      %v1004 = vunpack.c.l.b16 %v913
      %v1005 = vunpack.c.l.b16 %v914
      %v1006 = vunpack.c.l.b16 %v915
      %v1007 = vunpack.c.l.b16 %v916
      %v1008 = vunpack.c.l.b16 %v917
      %v1009 = vunpack.c.l.b16 %v918
      %v1010 = vpack.c.b16 %v1003, %v1002
      %v1011 = vpack.c.b16 %v1005, %v1004
      %v1012 = vpack.c.b16 %v1007, %v1006
      %v1013 = vpack.c.b16 %v1009, %v1008
      %v1015 = vsel %vm541, %v1010, 0
      %v1018 = vsel %vm541, %v1011, 0
      %v1021 = vsel %vm541, %v1012, 0
      %v1024 = vsel %vm541, %v1013, 0
      %1026 = vmatpush.bf16.msra.mxu0 0
      %1027 = vmatpush.bf16.msra.mxu0 0
      %1028 = vmatpush.bf16.msra.mxu0 0
      %1029 = vmatpush.bf16.msra.mxu0 0
      %1030 = vmatpush.bf16.msra.mxu0 %v992
      %1031 = vmatpush.bf16.msra.mxu0 %v990
      %1032 = vmatpush.bf16.msra.mxu0 %v988
      %1033 = vmatpush.bf16.msra.mxu0 %v986
      %1034 = vmatmul.bf16.gmra.mxu0 %v1015
      %v1035 = vpop.f32.mrf.mxu0
      %v1036 = vadd.f32 0.0, %v1035
      %v1037 = vpop.f32.mrf.mxu0
      %v1038 = vadd.f32 0.0, %v1037
      %1039 = vmatmul.bf16.gmra.mxu0 %v1018
      %v1040 = vpop.f32.mrf.mxu0
      %v1041 = vadd.f32 0.0, %v1040
      %v1042 = vpop.f32.mrf.mxu0
      %v1043 = vadd.f32 0.0, %v1042
      %1044 = vmatmul.bf16.gmra.mxu0 %v1021
      %v1045 = vpop.f32.mrf.mxu0
      %v1046 = vadd.f32 0.0, %v1045
      %v1047 = vpop.f32.mrf.mxu0
      %v1048 = vadd.f32 0.0, %v1047
      %1049 = vmatmul.bf16.gmra.mxu0 %v1024
      %v1050 = vpop.f32.mrf.mxu0
      %v1051 = vadd.f32 0.0, %v1050
      %v1052 = vpop.f32.mrf.mxu0
      %v1053 = vadd.f32 0.0, %v1052
      %1054 = vdwg.mxu0
      %1055 = vmatpush.bf16.msra.mxu0 0
      %1056 = vmatpush.bf16.msra.mxu0 0
      %1057 = vmatpush.bf16.msra.mxu0 0
      %1058 = vmatpush.bf16.msra.mxu0 0
      %1059 = vmatpush.bf16.msra.mxu0 %v993
      %1060 = vmatpush.bf16.msra.mxu0 %v991
      %1061 = vmatpush.bf16.msra.mxu0 %v989
      %1062 = vmatpush.bf16.msra.mxu0 %v987
      %1063 = vmatmul.bf16.gmra.mxu0 %v1015
      %v1064 = vpop.f32.mrf.mxu0
      %v1065 = vadd.f32 0.0, %v1064
      %v1066 = vpop.f32.mrf.mxu0
      %v1067 = vadd.f32 0.0, %v1066
      %1068 = vmatmul.bf16.gmra.mxu0 %v1018
      %v1069 = vpop.f32.mrf.mxu0
      %v1070 = vadd.f32 0.0, %v1069
      %v1071 = vpop.f32.mrf.mxu0
      %v1072 = vadd.f32 0.0, %v1071
      %1073 = vmatmul.bf16.gmra.mxu0 %v1021
      %v1074 = vpop.f32.mrf.mxu0
      %v1075 = vadd.f32 0.0, %v1074
      %v1076 = vpop.f32.mrf.mxu0
      %v1077 = vadd.f32 0.0, %v1076
      %1078 = vmatmul.bf16.gmra.mxu0 %v1024
      %v1079 = vpop.f32.mrf.mxu0
      %v1080 = vadd.f32 0.0, %v1079
      %v1081 = vpop.f32.mrf.mxu0
      %v1082 = vadd.f32 0.0, %v1081
      %1083 = vdwg.mxu0
      %v1084 = vadd.f32 %v862, %v1036
      %v1085 = vadd.f32 %v891, %v1065
      %v1086 = vadd.f32 %v864, %v1038
      %v1087 = vadd.f32 %v893, %v1067
      %v1088 = vadd.f32 %v867, %v1041
      %v1089 = vadd.f32 %v896, %v1070
      %v1090 = vadd.f32 %v869, %v1043
      %v1091 = vadd.f32 %v898, %v1072
      %v1092 = vadd.f32 %v872, %v1046
      %v1093 = vadd.f32 %v901, %v1075
      %v1094 = vadd.f32 %v874, %v1048
      %v1095 = vadd.f32 %v903, %v1077
      %v1096 = vadd.f32 %v877, %v1051
      %v1097 = vadd.f32 %v906, %v1080
      %v1098 = vadd.f32 %v879, %v1053
      %v1099 = vadd.f32 %v908, %v1082
      %s1100 = scalar_lea.vmem %s4, 64
      %v1101 = vld [vmem:[%s1100] sm:$0xf]
      %v1102 = vld [vmem:[%s1100 + $0x4] sm:$0xf]
      %v1103 = vld [vmem:[%s1100 + $0x8] sm:$0xf]
      %v1104 = vld [vmem:[%s1100 + $0xc] sm:$0xf]
      %v1105 = vld [vmem:[%s1100 + $0x10] sm:$0xf]
      %v1106 = vld [vmem:[%s1100 + $0x14] sm:$0xf]
      %v1107 = vld [vmem:[%s1100 + $0x18] sm:$0xf]
      %v1108 = vld [vmem:[%s1100 + $0x1c] sm:$0xf]
      %1109 = vrot.lane.b32.xlu0 %v612, 15
      %v1110 = vpop.permute.xlu0 %1109
      %1111 = vrot.lane.b32.xlu0 %v614, 15
      %v1112 = vpop.permute.xlu0 %1111
      %1113 = vrot.lane.b32.xlu0 %v616, 15
      %v1114 = vpop.permute.xlu0 %1113
      %1115 = vrot.lane.b32.xlu0 %v618, 15
      %v1116 = vpop.permute.xlu0 %1115
      %1117 = vrot.lane.b32.xlu0 %v620, 15
      %v1118 = vpop.permute.xlu0 %1117
      %1119 = vrot.lane.b32.xlu0 %v622, 15
      %v1120 = vpop.permute.xlu0 %1119
      %1121 = vrot.lane.b32.xlu0 %v624, 15
      %v1122 = vpop.permute.xlu0 %1121
      %1123 = vrot.lane.b32.xlu0 %v626, 15
      %v1124 = vpop.permute.xlu0 %1123
      %1125 = vrot.lane.b32.xlu0 %v613, 15
      %v1126 = vpop.permute.xlu0 %1125
      %1127 = vrot.lane.b32.xlu0 %v615, 15
      %v1128 = vpop.permute.xlu0 %1127
      %1129 = vrot.lane.b32.xlu0 %v617, 15
      %v1130 = vpop.permute.xlu0 %1129
      %1131 = vrot.lane.b32.xlu0 %v619, 15
      %v1132 = vpop.permute.xlu0 %1131
      %1133 = vrot.lane.b32.xlu0 %v621, 15
      %v1134 = vpop.permute.xlu0 %1133
      %1135 = vrot.lane.b32.xlu0 %v623, 15
      %v1136 = vpop.permute.xlu0 %1135
      %1137 = vrot.lane.b32.xlu0 %v625, 15
      %v1138 = vpop.permute.xlu0 %1137
      %1139 = vrot.lane.b32.xlu0 %v627, 15
      %v1140 = vpop.permute.xlu0 %1139
      %vm1141 = vcmp.lt.s32.totalorder %v686, 15
      %v1142 = vsel %vm1141, %v1110, %v1126
      %v1143 = vsel %vm1141, %v1112, %v1128
      %v1144 = vsel %vm1141, %v1114, %v1130
      %v1145 = vsel %vm1141, %v1116, %v1132
      %v1146 = vsel %vm1141, %v1118, %v1134
      %v1147 = vsel %vm1141, %v1120, %v1136
      %v1148 = vsel %vm1141, %v1122, %v1138
      %v1149 = vsel %vm1141, %v1124, %v1140
      %v1150 = vsel %vm1141, %v1126, %v1110
      %v1151 = vsel %vm1141, %v1128, %v1112
      %v1152 = vsel %vm1141, %v1130, %v1114
      %v1153 = vsel %vm1141, %v1132, %v1116
      %v1154 = vsel %vm1141, %v1134, %v1118
      %v1155 = vsel %vm1141, %v1136, %v1120
      %v1156 = vsel %vm1141, %v1138, %v1122
      %v1157 = vsel %vm1141, %v1140, %v1124
      %v1158 = vperm.slane %v415, 2
      %v1159 = vperm.slane %v416, 2
      %v1160 = vmul.f32 %v1150, %v1158
      %v1161 = vmul.f32 %v1142, %v1159
      %v1162 = vmul.f32 %v1151, %v1158
      %v1163 = vmul.f32 %v1143, %v1159
      %v1164 = vmul.f32 %v1152, %v1158
      %v1165 = vmul.f32 %v1144, %v1159
      %v1166 = vmul.f32 %v1153, %v1158
      %v1167 = vmul.f32 %v1145, %v1159
      %v1168 = vmul.f32 %v1154, %v1158
      %v1169 = vmul.f32 %v1146, %v1159
      %v1170 = vmul.f32 %v1155, %v1158
      %v1171 = vmul.f32 %v1147, %v1159
      %v1172 = vmul.f32 %v1156, %v1158
      %v1173 = vmul.f32 %v1148, %v1159
      %v1174 = vmul.f32 %v1157, %v1158
      %v1175 = vmul.f32 %v1149, %v1159
      %v1176 = vpack.c.bf16 %v1162, %v1160
      %v1177 = vpack.c.bf16 %v1163, %v1161
      %v1178 = vpack.c.bf16 %v1166, %v1164
      %v1179 = vpack.c.bf16 %v1167, %v1165
      %v1180 = vpack.c.bf16 %v1170, %v1168
      %v1181 = vpack.c.bf16 %v1171, %v1169
      %v1182 = vpack.c.bf16 %v1174, %v1172
      %v1183 = vpack.c.bf16 %v1175, %v1173
      %v1192 = vunpack.c.l.b16 %v1101
      %v1193 = vunpack.c.l.b16 %v1102
      %v1194 = vunpack.c.l.b16 %v1103
      %v1195 = vunpack.c.l.b16 %v1104
      %v1196 = vunpack.c.l.b16 %v1105
      %v1197 = vunpack.c.l.b16 %v1106
      %v1198 = vunpack.c.l.b16 %v1107
      %v1199 = vunpack.c.l.b16 %v1108
      %v1200 = vpack.c.b16 %v1193, %v1192
      %v1201 = vpack.c.b16 %v1195, %v1194
      %v1202 = vpack.c.b16 %v1197, %v1196
      %v1203 = vpack.c.b16 %v1199, %v1198
      %v1205 = vsel %vm541, %v1200, 0
      %v1208 = vsel %vm541, %v1201, 0
      %v1211 = vsel %vm541, %v1202, 0
      %v1214 = vsel %vm541, %v1203, 0
      %1216 = vmatpush.bf16.msra.mxu0 0
      %1217 = vmatpush.bf16.msra.mxu0 0
      %1218 = vmatpush.bf16.msra.mxu0 0
      %1219 = vmatpush.bf16.msra.mxu0 0
      %1220 = vmatpush.bf16.msra.mxu0 %v1182
      %1221 = vmatpush.bf16.msra.mxu0 %v1180
      %1222 = vmatpush.bf16.msra.mxu0 %v1178
      %1223 = vmatpush.bf16.msra.mxu0 %v1176
      %1224 = vmatmul.bf16.gmra.mxu0 %v1205
      %v1225 = vpop.f32.mrf.mxu0
      %v1226 = vadd.f32 0.0, %v1225
      %v1227 = vpop.f32.mrf.mxu0
      %v1228 = vadd.f32 0.0, %v1227
      %1229 = vmatmul.bf16.gmra.mxu0 %v1208
      %v1230 = vpop.f32.mrf.mxu0
      %v1231 = vadd.f32 0.0, %v1230
      %v1232 = vpop.f32.mrf.mxu0
      %v1233 = vadd.f32 0.0, %v1232
      %1234 = vmatmul.bf16.gmra.mxu0 %v1211
      %v1235 = vpop.f32.mrf.mxu0
      %v1236 = vadd.f32 0.0, %v1235
      %v1237 = vpop.f32.mrf.mxu0
      %v1238 = vadd.f32 0.0, %v1237
      %1239 = vmatmul.bf16.gmra.mxu0 %v1214
      %v1240 = vpop.f32.mrf.mxu0
      %v1241 = vadd.f32 0.0, %v1240
      %v1242 = vpop.f32.mrf.mxu0
      %v1243 = vadd.f32 0.0, %v1242
      %1244 = vdwg.mxu0
      %1245 = vmatpush.bf16.msra.mxu0 0
      %1246 = vmatpush.bf16.msra.mxu0 0
      %1247 = vmatpush.bf16.msra.mxu0 0
      %1248 = vmatpush.bf16.msra.mxu0 0
      %1249 = vmatpush.bf16.msra.mxu0 %v1183
      %1250 = vmatpush.bf16.msra.mxu0 %v1181
      %1251 = vmatpush.bf16.msra.mxu0 %v1179
      %1252 = vmatpush.bf16.msra.mxu0 %v1177
      %1253 = vmatmul.bf16.gmra.mxu0 %v1205
      %v1254 = vpop.f32.mrf.mxu0
      %v1255 = vadd.f32 0.0, %v1254
      %v1256 = vpop.f32.mrf.mxu0
      %v1257 = vadd.f32 0.0, %v1256
      %1258 = vmatmul.bf16.gmra.mxu0 %v1208
      %v1259 = vpop.f32.mrf.mxu0
      %v1260 = vadd.f32 0.0, %v1259
      %v1261 = vpop.f32.mrf.mxu0
      %v1262 = vadd.f32 0.0, %v1261
      %1263 = vmatmul.bf16.gmra.mxu0 %v1211
      %v1264 = vpop.f32.mrf.mxu0
      %v1265 = vadd.f32 0.0, %v1264
      %v1266 = vpop.f32.mrf.mxu0
      %v1267 = vadd.f32 0.0, %v1266
      %1268 = vmatmul.bf16.gmra.mxu0 %v1214
      %v1269 = vpop.f32.mrf.mxu0
      %v1270 = vadd.f32 0.0, %v1269
      %v1271 = vpop.f32.mrf.mxu0
      %v1272 = vadd.f32 0.0, %v1271
      %1273 = vdwg.mxu0
      %v1274 = vadd.f32 %v1084, %v1226
      %v1275 = vadd.f32 %v1085, %v1255
      %v1276 = vadd.f32 %v1086, %v1228
      %v1277 = vadd.f32 %v1087, %v1257
      %v1278 = vadd.f32 %v1088, %v1231
      %v1279 = vadd.f32 %v1089, %v1260
      %v1280 = vadd.f32 %v1090, %v1233
      %v1281 = vadd.f32 %v1091, %v1262
      %v1282 = vadd.f32 %v1092, %v1236
      %v1283 = vadd.f32 %v1093, %v1265
      %v1284 = vadd.f32 %v1094, %v1238
      %v1285 = vadd.f32 %v1095, %v1267
      %v1286 = vadd.f32 %v1096, %v1241
      %v1287 = vadd.f32 %v1097, %v1270
      %v1288 = vadd.f32 %v1098, %v1243
      %v1289 = vadd.f32 %v1099, %v1272
      %s1290 = scalar_lea.vmem %s4, 96
      %v1291 = vld [vmem:[%s1290] sm:$0xf]
      %v1292 = vld [vmem:[%s1290 + $0x4] sm:$0xf]
      %v1293 = vld [vmem:[%s1290 + $0x8] sm:$0xf]
      %v1294 = vld [vmem:[%s1290 + $0xc] sm:$0xf]
      %v1295 = vld [vmem:[%s1290 + $0x10] sm:$0xf]
      %v1296 = vld [vmem:[%s1290 + $0x14] sm:$0xf]
      %v1297 = vld [vmem:[%s1290 + $0x18] sm:$0xf]
      %v1298 = vld [vmem:[%s1290 + $0x1c] sm:$0xf]
      %1299 = vrot.lane.b32.xlu0 %v612, 1
      %v1300 = vpop.permute.xlu0 %1299
      %1301 = vrot.lane.b32.xlu0 %v614, 1
      %v1302 = vpop.permute.xlu0 %1301
      %1303 = vrot.lane.b32.xlu0 %v616, 1
      %v1304 = vpop.permute.xlu0 %1303
      %1305 = vrot.lane.b32.xlu0 %v618, 1
      %v1306 = vpop.permute.xlu0 %1305
      %1307 = vrot.lane.b32.xlu0 %v620, 1
      %v1308 = vpop.permute.xlu0 %1307
      %1309 = vrot.lane.b32.xlu0 %v622, 1
      %v1310 = vpop.permute.xlu0 %1309
      %1311 = vrot.lane.b32.xlu0 %v624, 1
      %v1312 = vpop.permute.xlu0 %1311
      %1313 = vrot.lane.b32.xlu0 %v626, 1
      %v1314 = vpop.permute.xlu0 %1313
      %1315 = vrot.lane.b32.xlu0 %v613, 1
      %v1316 = vpop.permute.xlu0 %1315
      %1317 = vrot.lane.b32.xlu0 %v615, 1
      %v1318 = vpop.permute.xlu0 %1317
      %1319 = vrot.lane.b32.xlu0 %v617, 1
      %v1320 = vpop.permute.xlu0 %1319
      %1321 = vrot.lane.b32.xlu0 %v619, 1
      %v1322 = vpop.permute.xlu0 %1321
      %1323 = vrot.lane.b32.xlu0 %v621, 1
      %v1324 = vpop.permute.xlu0 %1323
      %1325 = vrot.lane.b32.xlu0 %v623, 1
      %v1326 = vpop.permute.xlu0 %1325
      %1327 = vrot.lane.b32.xlu0 %v625, 1
      %v1328 = vpop.permute.xlu0 %1327
      %1329 = vrot.lane.b32.xlu0 %v627, 1
      %v1330 = vpop.permute.xlu0 %1329
      %vm1331 = vcmp.lt.s32.totalorder %v686, 1
      %v1332 = vsel %vm1331, %v1300, %v1316
      %v1333 = vsel %vm1331, %v1302, %v1318
      %v1334 = vsel %vm1331, %v1304, %v1320
      %v1335 = vsel %vm1331, %v1306, %v1322
      %v1336 = vsel %vm1331, %v1308, %v1324
      %v1337 = vsel %vm1331, %v1310, %v1326
      %v1338 = vsel %vm1331, %v1312, %v1328
      %v1339 = vsel %vm1331, %v1314, %v1330
      %v1340 = vsel %vm1331, %v1316, %v1300
      %v1341 = vsel %vm1331, %v1318, %v1302
      %v1342 = vsel %vm1331, %v1320, %v1304
      %v1343 = vsel %vm1331, %v1322, %v1306
      %v1344 = vsel %vm1331, %v1324, %v1308
      %v1345 = vsel %vm1331, %v1326, %v1310
      %v1346 = vsel %vm1331, %v1328, %v1312
      %v1347 = vsel %vm1331, %v1330, %v1314
      %v1348 = vperm.slane %v415, 3
      %v1349 = vperm.slane %v416, 3
      %v1350 = vmul.f32 %v1340, %v1348
      %v1351 = vmul.f32 %v1332, %v1349
      %v1352 = vmul.f32 %v1341, %v1348
      %v1353 = vmul.f32 %v1333, %v1349
      %v1354 = vmul.f32 %v1342, %v1348
      %v1355 = vmul.f32 %v1334, %v1349
      %v1356 = vmul.f32 %v1343, %v1348
      %v1357 = vmul.f32 %v1335, %v1349
      %v1358 = vmul.f32 %v1344, %v1348
      %v1359 = vmul.f32 %v1336, %v1349
      %v1360 = vmul.f32 %v1345, %v1348
      %v1361 = vmul.f32 %v1337, %v1349
      %v1362 = vmul.f32 %v1346, %v1348
      %v1363 = vmul.f32 %v1338, %v1349
      %v1364 = vmul.f32 %v1347, %v1348
      %v1365 = vmul.f32 %v1339, %v1349
      %v1366 = vpack.c.bf16 %v1352, %v1350
      %v1367 = vpack.c.bf16 %v1353, %v1351
      %v1368 = vpack.c.bf16 %v1356, %v1354
      %v1369 = vpack.c.bf16 %v1357, %v1355
      %v1370 = vpack.c.bf16 %v1360, %v1358
      %v1371 = vpack.c.bf16 %v1361, %v1359
      %v1372 = vpack.c.bf16 %v1364, %v1362
      %v1373 = vpack.c.bf16 %v1365, %v1363
      %v1382 = vunpack.c.l.b16 %v1291
      %v1383 = vunpack.c.l.b16 %v1292
      %v1384 = vunpack.c.l.b16 %v1293
      %v1385 = vunpack.c.l.b16 %v1294
      %v1386 = vunpack.c.l.b16 %v1295
      %v1387 = vunpack.c.l.b16 %v1296
      %v1388 = vunpack.c.l.b16 %v1297
      %v1389 = vunpack.c.l.b16 %v1298
      %v1390 = vpack.c.b16 %v1383, %v1382
      %v1391 = vpack.c.b16 %v1385, %v1384
      %v1392 = vpack.c.b16 %v1387, %v1386
      %v1393 = vpack.c.b16 %v1389, %v1388
      %v1395 = vsel %vm541, %v1390, 0
      %v1398 = vsel %vm541, %v1391, 0
      %v1401 = vsel %vm541, %v1392, 0
      %v1404 = vsel %vm541, %v1393, 0
      %1406 = vmatpush.bf16.msra.mxu0 0
      %1407 = vmatpush.bf16.msra.mxu0 0
      %1408 = vmatpush.bf16.msra.mxu0 0
      %1409 = vmatpush.bf16.msra.mxu0 0
      %1410 = vmatpush.bf16.msra.mxu0 %v1372
      %1411 = vmatpush.bf16.msra.mxu0 %v1370
      %1412 = vmatpush.bf16.msra.mxu0 %v1368
      %1413 = vmatpush.bf16.msra.mxu0 %v1366
      %1414 = vmatmul.bf16.gmra.mxu0 %v1395
      %v1415 = vpop.f32.mrf.mxu0
      %v1416 = vadd.f32 0.0, %v1415
      %v1417 = vpop.f32.mrf.mxu0
      %v1418 = vadd.f32 0.0, %v1417
      %1419 = vmatmul.bf16.gmra.mxu0 %v1398
      %v1420 = vpop.f32.mrf.mxu0
      %v1421 = vadd.f32 0.0, %v1420
      %v1422 = vpop.f32.mrf.mxu0
      %v1423 = vadd.f32 0.0, %v1422
      %1424 = vmatmul.bf16.gmra.mxu0 %v1401
      %v1425 = vpop.f32.mrf.mxu0
      %v1426 = vadd.f32 0.0, %v1425
      %v1427 = vpop.f32.mrf.mxu0
      %v1428 = vadd.f32 0.0, %v1427
      %1429 = vmatmul.bf16.gmra.mxu0 %v1404
      %v1430 = vpop.f32.mrf.mxu0
      %v1431 = vadd.f32 0.0, %v1430
      %v1432 = vpop.f32.mrf.mxu0
      %v1433 = vadd.f32 0.0, %v1432
      %1434 = vdwg.mxu0
      %1435 = vmatpush.bf16.msra.mxu0 0
      %1436 = vmatpush.bf16.msra.mxu0 0
      %1437 = vmatpush.bf16.msra.mxu0 0
      %1438 = vmatpush.bf16.msra.mxu0 0
      %1439 = vmatpush.bf16.msra.mxu0 %v1373
      %1440 = vmatpush.bf16.msra.mxu0 %v1371
      %1441 = vmatpush.bf16.msra.mxu0 %v1369
      %1442 = vmatpush.bf16.msra.mxu0 %v1367
      %1443 = vmatmul.bf16.gmra.mxu0 %v1395
      %v1444 = vpop.f32.mrf.mxu0
      %v1445 = vadd.f32 0.0, %v1444
      %v1446 = vpop.f32.mrf.mxu0
      %v1447 = vadd.f32 0.0, %v1446
      %1448 = vmatmul.bf16.gmra.mxu0 %v1398
      %v1449 = vpop.f32.mrf.mxu0
      %v1450 = vadd.f32 0.0, %v1449
      %v1451 = vpop.f32.mrf.mxu0
      %v1452 = vadd.f32 0.0, %v1451
      %1453 = vmatmul.bf16.gmra.mxu0 %v1401
      %v1454 = vpop.f32.mrf.mxu0
      %v1455 = vadd.f32 0.0, %v1454
      %v1456 = vpop.f32.mrf.mxu0
      %v1457 = vadd.f32 0.0, %v1456
      %1458 = vmatmul.bf16.gmra.mxu0 %v1404
      %v1459 = vpop.f32.mrf.mxu0
      %v1460 = vadd.f32 0.0, %v1459
      %v1461 = vpop.f32.mrf.mxu0
      %v1462 = vadd.f32 0.0, %v1461
      %1463 = vdwg.mxu0
      %v1464 = vadd.f32 %v1274, %v1416
      %v1465 = vadd.f32 %v1275, %v1445
      %v1466 = vadd.f32 %v1276, %v1418
      %v1467 = vadd.f32 %v1277, %v1447
      %v1468 = vadd.f32 %v1278, %v1421
      %v1469 = vadd.f32 %v1279, %v1450
      %v1470 = vadd.f32 %v1280, %v1423
      %v1471 = vadd.f32 %v1281, %v1452
      %v1472 = vadd.f32 %v1282, %v1426
      %v1473 = vadd.f32 %v1283, %v1455
      %v1474 = vadd.f32 %v1284, %v1428
      %v1475 = vadd.f32 %v1285, %v1457
      %v1476 = vadd.f32 %v1286, %v1431
      %v1477 = vadd.f32 %v1287, %v1460
      %v1478 = vadd.f32 %v1288, %v1433
      %v1479 = vadd.f32 %v1289, %v1462
      %s1480 = scalar_lea.vmem %s4, 160
      %v1481 = vld [vmem:[%s1480] sm:$0xf]
      %v1482 = vld [vmem:[%s1480 + $0x4] sm:$0xf]
      %v1483 = vld [vmem:[%s1480 + $0x8] sm:$0xf]
      %v1484 = vld [vmem:[%s1480 + $0xc] sm:$0xf]
      %v1485 = vld [vmem:[%s1480 + $0x10] sm:$0xf]
      %v1486 = vld [vmem:[%s1480 + $0x14] sm:$0xf]
      %v1487 = vld [vmem:[%s1480 + $0x18] sm:$0xf]
      %v1488 = vld [vmem:[%s1480 + $0x1c] sm:$0xf]
      %1489 = vrot.lane.b32.xlu0 %v612, 127
      %v1490 = vpop.permute.xlu0 %1489
      %1491 = vrot.lane.b32.xlu0 %v614, 127
      %v1492 = vpop.permute.xlu0 %1491
      %1493 = vrot.lane.b32.xlu0 %v616, 127
      %v1494 = vpop.permute.xlu0 %1493
      %1495 = vrot.lane.b32.xlu0 %v618, 127
      %v1496 = vpop.permute.xlu0 %1495
      %1497 = vrot.lane.b32.xlu0 %v620, 127
      %v1498 = vpop.permute.xlu0 %1497
      %1499 = vrot.lane.b32.xlu0 %v622, 127
      %v1500 = vpop.permute.xlu0 %1499
      %1501 = vrot.lane.b32.xlu0 %v624, 127
      %v1502 = vpop.permute.xlu0 %1501
      %1503 = vrot.lane.b32.xlu0 %v626, 127
      %v1504 = vpop.permute.xlu0 %1503
      %1505 = vrot.lane.b32.xlu0 %v613, 127
      %v1506 = vpop.permute.xlu0 %1505
      %1507 = vrot.lane.b32.xlu0 %v615, 127
      %v1508 = vpop.permute.xlu0 %1507
      %1509 = vrot.lane.b32.xlu0 %v617, 127
      %v1510 = vpop.permute.xlu0 %1509
      %1511 = vrot.lane.b32.xlu0 %v619, 127
      %v1512 = vpop.permute.xlu0 %1511
      %1513 = vrot.lane.b32.xlu0 %v621, 127
      %v1514 = vpop.permute.xlu0 %1513
      %1515 = vrot.lane.b32.xlu0 %v623, 127
      %v1516 = vpop.permute.xlu0 %1515
      %1517 = vrot.lane.b32.xlu0 %v625, 127
      %v1518 = vpop.permute.xlu0 %1517
      %1519 = vrot.lane.b32.xlu0 %v627, 127
      %v1520 = vpop.permute.xlu0 %1519
      %vm1521 = vcmp.lt.s32.totalorder %v686, 127
      %v1522 = vsel %vm1521, %v1490, %v1506
      %v1523 = vsel %vm1521, %v1492, %v1508
      %v1524 = vsel %vm1521, %v1494, %v1510
      %v1525 = vsel %vm1521, %v1496, %v1512
      %v1526 = vsel %vm1521, %v1498, %v1514
      %v1527 = vsel %vm1521, %v1500, %v1516
      %v1528 = vsel %vm1521, %v1502, %v1518
      %v1529 = vsel %vm1521, %v1504, %v1520
      %v1530 = vsel %vm1521, %v1506, %v1490
      %v1531 = vsel %vm1521, %v1508, %v1492
      %v1532 = vsel %vm1521, %v1510, %v1494
      %v1533 = vsel %vm1521, %v1512, %v1496
      %v1534 = vsel %vm1521, %v1514, %v1498
      %v1535 = vsel %vm1521, %v1516, %v1500
      %v1536 = vsel %vm1521, %v1518, %v1502
      %v1537 = vsel %vm1521, %v1520, %v1504
      %v1538 = vperm.slane %v415, 4
      %v1539 = vperm.slane %v416, 4
      %v1540 = vmul.f32 %v1522, %v1538
      %v1541 = vmul.f32 %v1530, %v1539
      %v1542 = vmul.f32 %v1523, %v1538
      %v1543 = vmul.f32 %v1531, %v1539
      %v1544 = vmul.f32 %v1524, %v1538
      %v1545 = vmul.f32 %v1532, %v1539
      %v1546 = vmul.f32 %v1525, %v1538
      %v1547 = vmul.f32 %v1533, %v1539
      %v1548 = vmul.f32 %v1526, %v1538
      %v1549 = vmul.f32 %v1534, %v1539
      %v1550 = vmul.f32 %v1527, %v1538
      %v1551 = vmul.f32 %v1535, %v1539
      %v1552 = vmul.f32 %v1528, %v1538
      %v1553 = vmul.f32 %v1536, %v1539
      %v1554 = vmul.f32 %v1529, %v1538
      %v1555 = vmul.f32 %v1537, %v1539
      %v1556 = vpack.c.bf16 %v1542, %v1540
      %v1557 = vpack.c.bf16 %v1543, %v1541
      %v1558 = vpack.c.bf16 %v1546, %v1544
      %v1559 = vpack.c.bf16 %v1547, %v1545
      %v1560 = vpack.c.bf16 %v1550, %v1548
      %v1561 = vpack.c.bf16 %v1551, %v1549
      %v1562 = vpack.c.bf16 %v1554, %v1552
      %v1563 = vpack.c.bf16 %v1555, %v1553
      %v1572 = vunpack.c.l.b16 %v1481
      %v1573 = vunpack.c.l.b16 %v1482
      %v1574 = vunpack.c.l.b16 %v1483
      %v1575 = vunpack.c.l.b16 %v1484
      %v1576 = vunpack.c.l.b16 %v1485
      %v1577 = vunpack.c.l.b16 %v1486
      %v1578 = vunpack.c.l.b16 %v1487
      %v1579 = vunpack.c.l.b16 %v1488
      %v1580 = vpack.c.b16 %v1573, %v1572
      %v1581 = vpack.c.b16 %v1575, %v1574
      %v1582 = vpack.c.b16 %v1577, %v1576
      %v1583 = vpack.c.b16 %v1579, %v1578
      %v1585 = vsel %vm541, %v1580, 0
      %v1588 = vsel %vm541, %v1581, 0
      %v1591 = vsel %vm541, %v1582, 0
      %v1594 = vsel %vm541, %v1583, 0
      %1596 = vmatpush.bf16.msra.mxu0 0
      %1597 = vmatpush.bf16.msra.mxu0 0
      %1598 = vmatpush.bf16.msra.mxu0 0
      %1599 = vmatpush.bf16.msra.mxu0 0
      %1600 = vmatpush.bf16.msra.mxu0 %v1562
      %1601 = vmatpush.bf16.msra.mxu0 %v1560
      %1602 = vmatpush.bf16.msra.mxu0 %v1558
      %1603 = vmatpush.bf16.msra.mxu0 %v1556
      %1604 = vmatmul.bf16.gmra.mxu0 %v1585
      %v1605 = vpop.f32.mrf.mxu0
      %v1606 = vadd.f32 0.0, %v1605
      %v1607 = vpop.f32.mrf.mxu0
      %v1608 = vadd.f32 0.0, %v1607
      %1609 = vmatmul.bf16.gmra.mxu0 %v1588
      %v1610 = vpop.f32.mrf.mxu0
      %v1611 = vadd.f32 0.0, %v1610
      %v1612 = vpop.f32.mrf.mxu0
      %v1613 = vadd.f32 0.0, %v1612
      %1614 = vmatmul.bf16.gmra.mxu0 %v1591
      %v1615 = vpop.f32.mrf.mxu0
      %v1616 = vadd.f32 0.0, %v1615
      %v1617 = vpop.f32.mrf.mxu0
      %v1618 = vadd.f32 0.0, %v1617
      %1619 = vmatmul.bf16.gmra.mxu0 %v1594
      %v1620 = vpop.f32.mrf.mxu0
      %v1621 = vadd.f32 0.0, %v1620
      %v1622 = vpop.f32.mrf.mxu0
      %v1623 = vadd.f32 0.0, %v1622
      %1624 = vdwg.mxu0
      %1625 = vmatpush.bf16.msra.mxu0 0
      %1626 = vmatpush.bf16.msra.mxu0 0
      %1627 = vmatpush.bf16.msra.mxu0 0
      %1628 = vmatpush.bf16.msra.mxu0 0
      %1629 = vmatpush.bf16.msra.mxu0 %v1563
      %1630 = vmatpush.bf16.msra.mxu0 %v1561
      %1631 = vmatpush.bf16.msra.mxu0 %v1559
      %1632 = vmatpush.bf16.msra.mxu0 %v1557
      %1633 = vmatmul.bf16.gmra.mxu0 %v1585
      %v1634 = vpop.f32.mrf.mxu0
      %v1635 = vadd.f32 0.0, %v1634
      %v1636 = vpop.f32.mrf.mxu0
      %v1637 = vadd.f32 0.0, %v1636
      %1638 = vmatmul.bf16.gmra.mxu0 %v1588
      %v1639 = vpop.f32.mrf.mxu0
      %v1640 = vadd.f32 0.0, %v1639
      %v1641 = vpop.f32.mrf.mxu0
      %v1642 = vadd.f32 0.0, %v1641
      %1643 = vmatmul.bf16.gmra.mxu0 %v1591
      %v1644 = vpop.f32.mrf.mxu0
      %v1645 = vadd.f32 0.0, %v1644
      %v1646 = vpop.f32.mrf.mxu0
      %v1647 = vadd.f32 0.0, %v1646
      %1648 = vmatmul.bf16.gmra.mxu0 %v1594
      %v1649 = vpop.f32.mrf.mxu0
      %v1650 = vadd.f32 0.0, %v1649
      %v1651 = vpop.f32.mrf.mxu0
      %v1652 = vadd.f32 0.0, %v1651
      %1653 = vdwg.mxu0
      %v1654 = vadd.f32 %v1464, %v1606
      %v1655 = vadd.f32 %v1465, %v1635
      %v1656 = vadd.f32 %v1466, %v1608
      %v1657 = vadd.f32 %v1467, %v1637
      %v1658 = vadd.f32 %v1468, %v1611
      %v1659 = vadd.f32 %v1469, %v1640
      %v1660 = vadd.f32 %v1470, %v1613
      %v1661 = vadd.f32 %v1471, %v1642
      %v1662 = vadd.f32 %v1472, %v1616
      %v1663 = vadd.f32 %v1473, %v1645
      %v1664 = vadd.f32 %v1474, %v1618
      %v1665 = vadd.f32 %v1475, %v1647
      %v1666 = vadd.f32 %v1476, %v1621
      %v1667 = vadd.f32 %v1477, %v1650
      %v1668 = vadd.f32 %v1478, %v1623
      %v1669 = vadd.f32 %v1479, %v1652
      %s1670 = scalar_lea.vmem %s4, 192
      %v1671 = vld [vmem:[%s1670] sm:$0xf]
      %v1672 = vld [vmem:[%s1670 + $0x4] sm:$0xf]
      %v1673 = vld [vmem:[%s1670 + $0x8] sm:$0xf]
      %v1674 = vld [vmem:[%s1670 + $0xc] sm:$0xf]
      %v1675 = vld [vmem:[%s1670 + $0x10] sm:$0xf]
      %v1676 = vld [vmem:[%s1670 + $0x14] sm:$0xf]
      %v1677 = vld [vmem:[%s1670 + $0x18] sm:$0xf]
      %v1678 = vld [vmem:[%s1670 + $0x1c] sm:$0xf]
      %1679 = vrot.lane.b32.xlu0 %v612, 113
      %v1680 = vpop.permute.xlu0 %1679
      %1681 = vrot.lane.b32.xlu0 %v614, 113
      %v1682 = vpop.permute.xlu0 %1681
      %1683 = vrot.lane.b32.xlu0 %v616, 113
      %v1684 = vpop.permute.xlu0 %1683
      %1685 = vrot.lane.b32.xlu0 %v618, 113
      %v1686 = vpop.permute.xlu0 %1685
      %1687 = vrot.lane.b32.xlu0 %v620, 113
      %v1688 = vpop.permute.xlu0 %1687
      %1689 = vrot.lane.b32.xlu0 %v622, 113
      %v1690 = vpop.permute.xlu0 %1689
      %1691 = vrot.lane.b32.xlu0 %v624, 113
      %v1692 = vpop.permute.xlu0 %1691
      %1693 = vrot.lane.b32.xlu0 %v626, 113
      %v1694 = vpop.permute.xlu0 %1693
      %1695 = vrot.lane.b32.xlu0 %v613, 113
      %v1696 = vpop.permute.xlu0 %1695
      %1697 = vrot.lane.b32.xlu0 %v615, 113
      %v1698 = vpop.permute.xlu0 %1697
      %1699 = vrot.lane.b32.xlu0 %v617, 113
      %v1700 = vpop.permute.xlu0 %1699
      %1701 = vrot.lane.b32.xlu0 %v619, 113
      %v1702 = vpop.permute.xlu0 %1701
      %1703 = vrot.lane.b32.xlu0 %v621, 113
      %v1704 = vpop.permute.xlu0 %1703
      %1705 = vrot.lane.b32.xlu0 %v623, 113
      %v1706 = vpop.permute.xlu0 %1705
      %1707 = vrot.lane.b32.xlu0 %v625, 113
      %v1708 = vpop.permute.xlu0 %1707
      %1709 = vrot.lane.b32.xlu0 %v627, 113
      %v1710 = vpop.permute.xlu0 %1709
      %vm1711 = vcmp.lt.s32.totalorder %v686, 113
      %v1712 = vsel %vm1711, %v1680, %v1696
      %v1713 = vsel %vm1711, %v1682, %v1698
      %v1714 = vsel %vm1711, %v1684, %v1700
      %v1715 = vsel %vm1711, %v1686, %v1702
      %v1716 = vsel %vm1711, %v1688, %v1704
      %v1717 = vsel %vm1711, %v1690, %v1706
      %v1718 = vsel %vm1711, %v1692, %v1708
      %v1719 = vsel %vm1711, %v1694, %v1710
      %v1720 = vsel %vm1711, %v1696, %v1680
      %v1721 = vsel %vm1711, %v1698, %v1682
      %v1722 = vsel %vm1711, %v1700, %v1684
      %v1723 = vsel %vm1711, %v1702, %v1686
      %v1724 = vsel %vm1711, %v1704, %v1688
      %v1725 = vsel %vm1711, %v1706, %v1690
      %v1726 = vsel %vm1711, %v1708, %v1692
      %v1727 = vsel %vm1711, %v1710, %v1694
      %v1728 = vperm.slane %v415, 5
      %v1729 = vperm.slane %v416, 5
      %v1730 = vmul.f32 %v1712, %v1728
      %v1731 = vmul.f32 %v1720, %v1729
      %v1732 = vmul.f32 %v1713, %v1728
      %v1733 = vmul.f32 %v1721, %v1729
      %v1734 = vmul.f32 %v1714, %v1728
      %v1735 = vmul.f32 %v1722, %v1729
      %v1736 = vmul.f32 %v1715, %v1728
      %v1737 = vmul.f32 %v1723, %v1729
      %v1738 = vmul.f32 %v1716, %v1728
      %v1739 = vmul.f32 %v1724, %v1729
      %v1740 = vmul.f32 %v1717, %v1728
      %v1741 = vmul.f32 %v1725, %v1729
      %v1742 = vmul.f32 %v1718, %v1728
      %v1743 = vmul.f32 %v1726, %v1729
      %v1744 = vmul.f32 %v1719, %v1728
      %v1745 = vmul.f32 %v1727, %v1729
      %v1746 = vpack.c.bf16 %v1732, %v1730
      %v1747 = vpack.c.bf16 %v1733, %v1731
      %v1748 = vpack.c.bf16 %v1736, %v1734
      %v1749 = vpack.c.bf16 %v1737, %v1735
      %v1750 = vpack.c.bf16 %v1740, %v1738
      %v1751 = vpack.c.bf16 %v1741, %v1739
      %v1752 = vpack.c.bf16 %v1744, %v1742
      %v1753 = vpack.c.bf16 %v1745, %v1743
      %v1762 = vunpack.c.l.b16 %v1671
      %v1763 = vunpack.c.l.b16 %v1672
      %v1764 = vunpack.c.l.b16 %v1673
      %v1765 = vunpack.c.l.b16 %v1674
      %v1766 = vunpack.c.l.b16 %v1675
      %v1767 = vunpack.c.l.b16 %v1676
      %v1768 = vunpack.c.l.b16 %v1677
      %v1769 = vunpack.c.l.b16 %v1678
      %v1770 = vpack.c.b16 %v1763, %v1762
      %v1771 = vpack.c.b16 %v1765, %v1764
      %v1772 = vpack.c.b16 %v1767, %v1766
      %v1773 = vpack.c.b16 %v1769, %v1768
      %v1775 = vsel %vm541, %v1770, 0
      %v1778 = vsel %vm541, %v1771, 0
      %v1781 = vsel %vm541, %v1772, 0
      %v1784 = vsel %vm541, %v1773, 0
      %1786 = vmatpush.bf16.msra.mxu0 0
      %1787 = vmatpush.bf16.msra.mxu0 0
      %1788 = vmatpush.bf16.msra.mxu0 0
      %1789 = vmatpush.bf16.msra.mxu0 0
      %1790 = vmatpush.bf16.msra.mxu0 %v1752
      %1791 = vmatpush.bf16.msra.mxu0 %v1750
      %1792 = vmatpush.bf16.msra.mxu0 %v1748
      %1793 = vmatpush.bf16.msra.mxu0 %v1746
      %1794 = vmatmul.bf16.gmra.mxu0 %v1775
      %v1795 = vpop.f32.mrf.mxu0
      %v1796 = vadd.f32 0.0, %v1795
      %v1797 = vpop.f32.mrf.mxu0
      %v1798 = vadd.f32 0.0, %v1797
      %1799 = vmatmul.bf16.gmra.mxu0 %v1778
      %v1800 = vpop.f32.mrf.mxu0
      %v1801 = vadd.f32 0.0, %v1800
      %v1802 = vpop.f32.mrf.mxu0
      %v1803 = vadd.f32 0.0, %v1802
      %1804 = vmatmul.bf16.gmra.mxu0 %v1781
      %v1805 = vpop.f32.mrf.mxu0
      %v1806 = vadd.f32 0.0, %v1805
      %v1807 = vpop.f32.mrf.mxu0
      %v1808 = vadd.f32 0.0, %v1807
      %1809 = vmatmul.bf16.gmra.mxu0 %v1784
      %v1810 = vpop.f32.mrf.mxu0
      %v1811 = vadd.f32 0.0, %v1810
      %v1812 = vpop.f32.mrf.mxu0
      %v1813 = vadd.f32 0.0, %v1812
      %1814 = vdwg.mxu0
      %1815 = vmatpush.bf16.msra.mxu0 0
      %1816 = vmatpush.bf16.msra.mxu0 0
      %1817 = vmatpush.bf16.msra.mxu0 0
      %1818 = vmatpush.bf16.msra.mxu0 0
      %1819 = vmatpush.bf16.msra.mxu0 %v1753
      %1820 = vmatpush.bf16.msra.mxu0 %v1751
      %1821 = vmatpush.bf16.msra.mxu0 %v1749
      %1822 = vmatpush.bf16.msra.mxu0 %v1747
      %1823 = vmatmul.bf16.gmra.mxu0 %v1775
      %v1824 = vpop.f32.mrf.mxu0
      %v1825 = vadd.f32 0.0, %v1824
      %v1826 = vpop.f32.mrf.mxu0
      %v1827 = vadd.f32 0.0, %v1826
      %1828 = vmatmul.bf16.gmra.mxu0 %v1778
      %v1829 = vpop.f32.mrf.mxu0
      %v1830 = vadd.f32 0.0, %v1829
      %v1831 = vpop.f32.mrf.mxu0
      %v1832 = vadd.f32 0.0, %v1831
      %1833 = vmatmul.bf16.gmra.mxu0 %v1781
      %v1834 = vpop.f32.mrf.mxu0
      %v1835 = vadd.f32 0.0, %v1834
      %v1836 = vpop.f32.mrf.mxu0
      %v1837 = vadd.f32 0.0, %v1836
      %1838 = vmatmul.bf16.gmra.mxu0 %v1784
      %v1839 = vpop.f32.mrf.mxu0
      %v1840 = vadd.f32 0.0, %v1839
      %v1841 = vpop.f32.mrf.mxu0
      %v1842 = vadd.f32 0.0, %v1841
      %1843 = vdwg.mxu0
      %v1844 = vadd.f32 %v1654, %v1796
      %v1845 = vadd.f32 %v1655, %v1825
      %v1846 = vadd.f32 %v1656, %v1798
      %v1847 = vadd.f32 %v1657, %v1827
      %v1848 = vadd.f32 %v1658, %v1801
      %v1849 = vadd.f32 %v1659, %v1830
      %v1850 = vadd.f32 %v1660, %v1803
      %v1851 = vadd.f32 %v1661, %v1832
      %v1852 = vadd.f32 %v1662, %v1806
      %v1853 = vadd.f32 %v1663, %v1835
      %v1854 = vadd.f32 %v1664, %v1808
      %v1855 = vadd.f32 %v1665, %v1837
      %v1856 = vadd.f32 %v1666, %v1811
      %v1857 = vadd.f32 %v1667, %v1840
      %v1858 = vadd.f32 %v1668, %v1813
      %v1859 = vadd.f32 %v1669, %v1842
      %s1860 = scalar_lea.vmem %s4, 224
      %v1861 = vld [vmem:[%s1860] sm:$0xf]
      %v1862 = vld [vmem:[%s1860 + $0x4] sm:$0xf]
      %v1863 = vld [vmem:[%s1860 + $0x8] sm:$0xf]
      %v1864 = vld [vmem:[%s1860 + $0xc] sm:$0xf]
      %v1865 = vld [vmem:[%s1860 + $0x10] sm:$0xf]
      %v1866 = vld [vmem:[%s1860 + $0x14] sm:$0xf]
      %v1867 = vld [vmem:[%s1860 + $0x18] sm:$0xf]
      %v1868 = vld [vmem:[%s1860 + $0x1c] sm:$0xf]
      %1869 = vrot.lane.b32.xlu0 %v612, 112
      %v1870 = vpop.permute.xlu0 %1869
      %1871 = vrot.lane.b32.xlu0 %v614, 112
      %v1872 = vpop.permute.xlu0 %1871
      %1873 = vrot.lane.b32.xlu0 %v616, 112
      %v1874 = vpop.permute.xlu0 %1873
      %1875 = vrot.lane.b32.xlu0 %v618, 112
      %v1876 = vpop.permute.xlu0 %1875
      %1877 = vrot.lane.b32.xlu0 %v620, 112
      %v1878 = vpop.permute.xlu0 %1877
      %1879 = vrot.lane.b32.xlu0 %v622, 112
      %v1880 = vpop.permute.xlu0 %1879
      %1881 = vrot.lane.b32.xlu0 %v624, 112
      %v1882 = vpop.permute.xlu0 %1881
      %1883 = vrot.lane.b32.xlu0 %v626, 112
      %v1884 = vpop.permute.xlu0 %1883
      %1885 = vrot.lane.b32.xlu0 %v613, 112
      %v1886 = vpop.permute.xlu0 %1885
      %1887 = vrot.lane.b32.xlu0 %v615, 112
      %v1888 = vpop.permute.xlu0 %1887
      %1889 = vrot.lane.b32.xlu0 %v617, 112
      %v1890 = vpop.permute.xlu0 %1889
      %1891 = vrot.lane.b32.xlu0 %v619, 112
      %v1892 = vpop.permute.xlu0 %1891
      %1893 = vrot.lane.b32.xlu0 %v621, 112
      %v1894 = vpop.permute.xlu0 %1893
      %1895 = vrot.lane.b32.xlu0 %v623, 112
      %v1896 = vpop.permute.xlu0 %1895
      %1897 = vrot.lane.b32.xlu0 %v625, 112
      %v1898 = vpop.permute.xlu0 %1897
      %1899 = vrot.lane.b32.xlu0 %v627, 112
      %v1900 = vpop.permute.xlu0 %1899
      %vm1901 = vcmp.lt.s32.totalorder %v686, 112
      %v1902 = vsel %vm1901, %v1870, %v1886
      %v1903 = vsel %vm1901, %v1872, %v1888
      %v1904 = vsel %vm1901, %v1874, %v1890
      %v1905 = vsel %vm1901, %v1876, %v1892
      %v1906 = vsel %vm1901, %v1878, %v1894
      %v1907 = vsel %vm1901, %v1880, %v1896
      %v1908 = vsel %vm1901, %v1882, %v1898
      %v1909 = vsel %vm1901, %v1884, %v1900
      %v1910 = vsel %vm1901, %v1886, %v1870
      %v1911 = vsel %vm1901, %v1888, %v1872
      %v1912 = vsel %vm1901, %v1890, %v1874
      %v1913 = vsel %vm1901, %v1892, %v1876
      %v1914 = vsel %vm1901, %v1894, %v1878
      %v1915 = vsel %vm1901, %v1896, %v1880
      %v1916 = vsel %vm1901, %v1898, %v1882
      %v1917 = vsel %vm1901, %v1900, %v1884
      %v1918 = vperm.slane %v415, 6
      %v1919 = vperm.slane %v416, 6
      %v1920 = vmul.f32 %v1902, %v1918
      %v1921 = vmul.f32 %v1910, %v1919
      %v1922 = vmul.f32 %v1903, %v1918
      %v1923 = vmul.f32 %v1911, %v1919
      %v1924 = vmul.f32 %v1904, %v1918
      %v1925 = vmul.f32 %v1912, %v1919
      %v1926 = vmul.f32 %v1905, %v1918
      %v1927 = vmul.f32 %v1913, %v1919
      %v1928 = vmul.f32 %v1906, %v1918
      %v1929 = vmul.f32 %v1914, %v1919
      %v1930 = vmul.f32 %v1907, %v1918
      %v1931 = vmul.f32 %v1915, %v1919
      %v1932 = vmul.f32 %v1908, %v1918
      %v1933 = vmul.f32 %v1916, %v1919
      %v1934 = vmul.f32 %v1909, %v1918
      %v1935 = vmul.f32 %v1917, %v1919
      %v1936 = vpack.c.bf16 %v1922, %v1920
      %v1937 = vpack.c.bf16 %v1923, %v1921
      %v1938 = vpack.c.bf16 %v1926, %v1924
      %v1939 = vpack.c.bf16 %v1927, %v1925
      %v1940 = vpack.c.bf16 %v1930, %v1928
      %v1941 = vpack.c.bf16 %v1931, %v1929
      %v1942 = vpack.c.bf16 %v1934, %v1932
      %v1943 = vpack.c.bf16 %v1935, %v1933
      %v1952 = vunpack.c.l.b16 %v1861
      %v1953 = vunpack.c.l.b16 %v1862
      %v1954 = vunpack.c.l.b16 %v1863
      %v1955 = vunpack.c.l.b16 %v1864
      %v1956 = vunpack.c.l.b16 %v1865
      %v1957 = vunpack.c.l.b16 %v1866
      %v1958 = vunpack.c.l.b16 %v1867
      %v1959 = vunpack.c.l.b16 %v1868
      %v1960 = vpack.c.b16 %v1953, %v1952
      %v1961 = vpack.c.b16 %v1955, %v1954
      %v1962 = vpack.c.b16 %v1957, %v1956
      %v1963 = vpack.c.b16 %v1959, %v1958
      %v1965 = vsel %vm541, %v1960, 0
      %v1968 = vsel %vm541, %v1961, 0
      %v1971 = vsel %vm541, %v1962, 0
      %v1974 = vsel %vm541, %v1963, 0
      %1976 = vmatpush.bf16.msra.mxu0 0
      %1977 = vmatpush.bf16.msra.mxu0 0
      %1978 = vmatpush.bf16.msra.mxu0 0
      %1979 = vmatpush.bf16.msra.mxu0 0
      %1980 = vmatpush.bf16.msra.mxu0 %v1942
      %1981 = vmatpush.bf16.msra.mxu0 %v1940
      %1982 = vmatpush.bf16.msra.mxu0 %v1938
      %1983 = vmatpush.bf16.msra.mxu0 %v1936
      %1984 = vmatmul.bf16.gmra.mxu0 %v1965
      %v1985 = vpop.f32.mrf.mxu0
      %v1986 = vadd.f32 0.0, %v1985
      %v1987 = vpop.f32.mrf.mxu0
      %v1988 = vadd.f32 0.0, %v1987
      %1989 = vmatmul.bf16.gmra.mxu0 %v1968
      %v1990 = vpop.f32.mrf.mxu0
      %v1991 = vadd.f32 0.0, %v1990
      %v1992 = vpop.f32.mrf.mxu0
      %v1993 = vadd.f32 0.0, %v1992
      %1994 = vmatmul.bf16.gmra.mxu0 %v1971
      %v1995 = vpop.f32.mrf.mxu0
      %v1996 = vadd.f32 0.0, %v1995
      %v1997 = vpop.f32.mrf.mxu0
      %v1998 = vadd.f32 0.0, %v1997
      %1999 = vmatmul.bf16.gmra.mxu0 %v1974
      %v2000 = vpop.f32.mrf.mxu0
      %v2001 = vadd.f32 0.0, %v2000
      %v2002 = vpop.f32.mrf.mxu0
      %v2003 = vadd.f32 0.0, %v2002
      %2004 = vdwg.mxu0
      %2005 = vmatpush.bf16.msra.mxu0 0
      %2006 = vmatpush.bf16.msra.mxu0 0
      %2007 = vmatpush.bf16.msra.mxu0 0
      %2008 = vmatpush.bf16.msra.mxu0 0
      %2009 = vmatpush.bf16.msra.mxu0 %v1943
      %2010 = vmatpush.bf16.msra.mxu0 %v1941
      %2011 = vmatpush.bf16.msra.mxu0 %v1939
      %2012 = vmatpush.bf16.msra.mxu0 %v1937
      %2013 = vmatmul.bf16.gmra.mxu0 %v1965
      %v2014 = vpop.f32.mrf.mxu0
      %v2015 = vadd.f32 0.0, %v2014
      %v2016 = vpop.f32.mrf.mxu0
      %v2017 = vadd.f32 0.0, %v2016
      %2018 = vmatmul.bf16.gmra.mxu0 %v1968
      %v2019 = vpop.f32.mrf.mxu0
      %v2020 = vadd.f32 0.0, %v2019
      %v2021 = vpop.f32.mrf.mxu0
      %v2022 = vadd.f32 0.0, %v2021
      %2023 = vmatmul.bf16.gmra.mxu0 %v1971
      %v2024 = vpop.f32.mrf.mxu0
      %v2025 = vadd.f32 0.0, %v2024
      %v2026 = vpop.f32.mrf.mxu0
      %v2027 = vadd.f32 0.0, %v2026
      %2028 = vmatmul.bf16.gmra.mxu0 %v1974
      %v2029 = vpop.f32.mrf.mxu0
      %v2030 = vadd.f32 0.0, %v2029
      %v2031 = vpop.f32.mrf.mxu0
      %v2032 = vadd.f32 0.0, %v2031
      %2033 = vdwg.mxu0
      %v2034 = vadd.f32 %v1844, %v1986
      %v2035 = vadd.f32 %v1845, %v2015
      %v2036 = vadd.f32 %v1846, %v1988
      %v2037 = vadd.f32 %v1847, %v2017
      %v2038 = vadd.f32 %v1848, %v1991
      %v2039 = vadd.f32 %v1849, %v2020
      %v2040 = vadd.f32 %v1850, %v1993
      %v2041 = vadd.f32 %v1851, %v2022
      %v2042 = vadd.f32 %v1852, %v1996
      %v2043 = vadd.f32 %v1853, %v2025
      %v2044 = vadd.f32 %v1854, %v1998
      %v2045 = vadd.f32 %v1855, %v2027
      %v2046 = vadd.f32 %v1856, %v2001
      %v2047 = vadd.f32 %v1857, %v2030
      %v2048 = vadd.f32 %v1858, %v2003
      %v2049 = vadd.f32 %v1859, %v2032
      %s2050 = scalar_lea.vmem %s4, 256
      %v2051 = vld [vmem:[%s2050] sm:$0xf]
      %v2052 = vld [vmem:[%s2050 + $0x4] sm:$0xf]
      %v2053 = vld [vmem:[%s2050 + $0x8] sm:$0xf]
      %v2054 = vld [vmem:[%s2050 + $0xc] sm:$0xf]
      %v2055 = vld [vmem:[%s2050 + $0x10] sm:$0xf]
      %v2056 = vld [vmem:[%s2050 + $0x14] sm:$0xf]
      %v2057 = vld [vmem:[%s2050 + $0x18] sm:$0xf]
      %v2058 = vld [vmem:[%s2050 + $0x1c] sm:$0xf]
      %2059 = vrot.lane.b32.xlu0 %v612, 111
      %v2060 = vpop.permute.xlu0 %2059
      %2061 = vrot.lane.b32.xlu0 %v614, 111
      %v2062 = vpop.permute.xlu0 %2061
      %2063 = vrot.lane.b32.xlu0 %v616, 111
      %v2064 = vpop.permute.xlu0 %2063
      %2065 = vrot.lane.b32.xlu0 %v618, 111
      %v2066 = vpop.permute.xlu0 %2065
      %2067 = vrot.lane.b32.xlu0 %v620, 111
      %v2068 = vpop.permute.xlu0 %2067
      %2069 = vrot.lane.b32.xlu0 %v622, 111
      %v2070 = vpop.permute.xlu0 %2069
      %2071 = vrot.lane.b32.xlu0 %v624, 111
      %v2072 = vpop.permute.xlu0 %2071
      %2073 = vrot.lane.b32.xlu0 %v626, 111
      %v2074 = vpop.permute.xlu0 %2073
      %2075 = vrot.lane.b32.xlu0 %v613, 111
      %v2076 = vpop.permute.xlu0 %2075
      %2077 = vrot.lane.b32.xlu0 %v615, 111
      %v2078 = vpop.permute.xlu0 %2077
      %2079 = vrot.lane.b32.xlu0 %v617, 111
      %v2080 = vpop.permute.xlu0 %2079
      %2081 = vrot.lane.b32.xlu0 %v619, 111
      %v2082 = vpop.permute.xlu0 %2081
      %2083 = vrot.lane.b32.xlu0 %v621, 111
      %v2084 = vpop.permute.xlu0 %2083
      %2085 = vrot.lane.b32.xlu0 %v623, 111
      %v2086 = vpop.permute.xlu0 %2085
      %2087 = vrot.lane.b32.xlu0 %v625, 111
      %v2088 = vpop.permute.xlu0 %2087
      %2089 = vrot.lane.b32.xlu0 %v627, 111
      %v2090 = vpop.permute.xlu0 %2089
      %vm2091 = vcmp.lt.s32.totalorder %v686, 111
      %v2092 = vsel %vm2091, %v2060, %v2076
      %v2093 = vsel %vm2091, %v2062, %v2078
      %v2094 = vsel %vm2091, %v2064, %v2080
      %v2095 = vsel %vm2091, %v2066, %v2082
      %v2096 = vsel %vm2091, %v2068, %v2084
      %v2097 = vsel %vm2091, %v2070, %v2086
      %v2098 = vsel %vm2091, %v2072, %v2088
      %v2099 = vsel %vm2091, %v2074, %v2090
      %v2100 = vsel %vm2091, %v2076, %v2060
      %v2101 = vsel %vm2091, %v2078, %v2062
      %v2102 = vsel %vm2091, %v2080, %v2064
      %v2103 = vsel %vm2091, %v2082, %v2066
      %v2104 = vsel %vm2091, %v2084, %v2068
      %v2105 = vsel %vm2091, %v2086, %v2070
      %v2106 = vsel %vm2091, %v2088, %v2072
      %v2107 = vsel %vm2091, %v2090, %v2074
      %v2108 = vperm.slane %v415, 7
      %v2109 = vperm.slane %v416, 7
      %v2110 = vmul.f32 %v2092, %v2108
      %v2111 = vmul.f32 %v2100, %v2109
      %v2112 = vmul.f32 %v2093, %v2108
      %v2113 = vmul.f32 %v2101, %v2109
      %v2114 = vmul.f32 %v2094, %v2108
      %v2115 = vmul.f32 %v2102, %v2109
      %v2116 = vmul.f32 %v2095, %v2108
      %v2117 = vmul.f32 %v2103, %v2109
      %v2118 = vmul.f32 %v2096, %v2108
      %v2119 = vmul.f32 %v2104, %v2109
      %v2120 = vmul.f32 %v2097, %v2108
      %v2121 = vmul.f32 %v2105, %v2109
      %v2122 = vmul.f32 %v2098, %v2108
      %v2123 = vmul.f32 %v2106, %v2109
      %v2124 = vmul.f32 %v2099, %v2108
      %v2125 = vmul.f32 %v2107, %v2109
      %v2126 = vpack.c.bf16 %v2112, %v2110
      %v2127 = vpack.c.bf16 %v2113, %v2111
      %v2128 = vpack.c.bf16 %v2116, %v2114
      %v2129 = vpack.c.bf16 %v2117, %v2115
      %v2130 = vpack.c.bf16 %v2120, %v2118
      %v2131 = vpack.c.bf16 %v2121, %v2119
      %v2132 = vpack.c.bf16 %v2124, %v2122
      %v2133 = vpack.c.bf16 %v2125, %v2123
      %v2142 = vunpack.c.l.b16 %v2051
      %v2143 = vunpack.c.l.b16 %v2052
      %v2144 = vunpack.c.l.b16 %v2053
      %v2145 = vunpack.c.l.b16 %v2054
      %v2146 = vunpack.c.l.b16 %v2055
      %v2147 = vunpack.c.l.b16 %v2056
      %v2148 = vunpack.c.l.b16 %v2057
      %v2149 = vunpack.c.l.b16 %v2058
      %v2150 = vpack.c.b16 %v2143, %v2142
      %v2151 = vpack.c.b16 %v2145, %v2144
      %v2152 = vpack.c.b16 %v2147, %v2146
      %v2153 = vpack.c.b16 %v2149, %v2148
      %v2155 = vsel %vm541, %v2150, 0
      %v2158 = vsel %vm541, %v2151, 0
      %v2161 = vsel %vm541, %v2152, 0
      %v2164 = vsel %vm541, %v2153, 0
      %2166 = vmatpush.bf16.msra.mxu0 0
      %2167 = vmatpush.bf16.msra.mxu0 0
      %2168 = vmatpush.bf16.msra.mxu0 0
      %2169 = vmatpush.bf16.msra.mxu0 0
      %2170 = vmatpush.bf16.msra.mxu0 %v2132
      %2171 = vmatpush.bf16.msra.mxu0 %v2130
      %2172 = vmatpush.bf16.msra.mxu0 %v2128
      %2173 = vmatpush.bf16.msra.mxu0 %v2126
      %2174 = vmatmul.bf16.gmra.mxu0 %v2155
      %v2175 = vpop.f32.mrf.mxu0
      %v2176 = vadd.f32 0.0, %v2175
      %v2177 = vpop.f32.mrf.mxu0
      %v2178 = vadd.f32 0.0, %v2177
      %2179 = vmatmul.bf16.gmra.mxu0 %v2158
      %v2180 = vpop.f32.mrf.mxu0
      %v2181 = vadd.f32 0.0, %v2180
      %v2182 = vpop.f32.mrf.mxu0
      %v2183 = vadd.f32 0.0, %v2182
      %2184 = vmatmul.bf16.gmra.mxu0 %v2161
      %v2185 = vpop.f32.mrf.mxu0
      %v2186 = vadd.f32 0.0, %v2185
      %v2187 = vpop.f32.mrf.mxu0
      %v2188 = vadd.f32 0.0, %v2187
      %2189 = vmatmul.bf16.gmra.mxu0 %v2164
      %v2190 = vpop.f32.mrf.mxu0
      %v2191 = vadd.f32 0.0, %v2190
      %v2192 = vpop.f32.mrf.mxu0
      %v2193 = vadd.f32 0.0, %v2192
      %2194 = vdwg.mxu0
      %2195 = vmatpush.bf16.msra.mxu0 0
      %2196 = vmatpush.bf16.msra.mxu0 0
      %2197 = vmatpush.bf16.msra.mxu0 0
      %2198 = vmatpush.bf16.msra.mxu0 0
      %2199 = vmatpush.bf16.msra.mxu0 %v2133
      %2200 = vmatpush.bf16.msra.mxu0 %v2131
      %2201 = vmatpush.bf16.msra.mxu0 %v2129
      %2202 = vmatpush.bf16.msra.mxu0 %v2127
      %2203 = vmatmul.bf16.gmra.mxu0 %v2155
      %v2204 = vpop.f32.mrf.mxu0
      %v2205 = vadd.f32 0.0, %v2204
      %v2206 = vpop.f32.mrf.mxu0
      %v2207 = vadd.f32 0.0, %v2206
      %2208 = vmatmul.bf16.gmra.mxu0 %v2158
      %v2209 = vpop.f32.mrf.mxu0
      %v2210 = vadd.f32 0.0, %v2209
      %v2211 = vpop.f32.mrf.mxu0
      %v2212 = vadd.f32 0.0, %v2211
      %2213 = vmatmul.bf16.gmra.mxu0 %v2161
      %v2214 = vpop.f32.mrf.mxu0
      %v2215 = vadd.f32 0.0, %v2214
      %v2216 = vpop.f32.mrf.mxu0
      %v2217 = vadd.f32 0.0, %v2216
      %2218 = vmatmul.bf16.gmra.mxu0 %v2164
      %v2219 = vpop.f32.mrf.mxu0
      %v2220 = vadd.f32 0.0, %v2219
      %v2221 = vpop.f32.mrf.mxu0
      %v2222 = vadd.f32 0.0, %v2221
      %2223 = vdwg.mxu0
      %v2224 = vadd.f32 %v2034, %v2176
      %v2225 = vadd.f32 %v2035, %v2205
      %v2226 = vadd.f32 %v2036, %v2178
      %v2227 = vadd.f32 %v2037, %v2207
      %v2228 = vadd.f32 %v2038, %v2181
      %v2229 = vadd.f32 %v2039, %v2210
      %v2230 = vadd.f32 %v2040, %v2183
      %v2231 = vadd.f32 %v2041, %v2212
      %v2232 = vadd.f32 %v2042, %v2186
      %v2233 = vadd.f32 %v2043, %v2215
      %v2234 = vadd.f32 %v2044, %v2188
      %v2235 = vadd.f32 %v2045, %v2217
      %v2236 = vadd.f32 %v2046, %v2191
      %v2237 = vadd.f32 %v2047, %v2220
      %v2238 = vadd.f32 %v2048, %v2193
      %v2239 = vadd.f32 %v2049, %v2222
      %v2240 = vld [vmem:[%s5] sm:$0xff]
      %v2241 = vld [vmem:[%s5 + $0x8] sm:$0xff]
      %v2242 = vld [vmem:[%s5 + $0x10] sm:$0xff]
      %v2243 = vld [vmem:[%s5 + $0x18] sm:$0xff]
      %v2244 = vld [vmem:[%s5 + $0x20] sm:$0xff]
      %v2245 = vld [vmem:[%s5 + $0x28] sm:$0xff]
      %v2246 = vld [vmem:[%s5 + $0x30] sm:$0xff]
      %v2247 = vld [vmem:[%s5 + $0x38] sm:$0xff]
      %2249 = vset.pattern.permute.xlu0 0
      %2250 = vperm.xlu0 %2249, %v2240
      %v2251 = vpop.permute.xlu0 %2250
      %2254 = vset.pattern.permute.xlu0 0
      %2255 = vperm.xlu0 %2254, %v2241
      %v2256 = vpop.permute.xlu0 %2255
      %2259 = vset.pattern.permute.xlu0 0
      %2260 = vperm.xlu0 %2259, %v2242
      %v2261 = vpop.permute.xlu0 %2260
      %2264 = vset.pattern.permute.xlu0 0
      %2265 = vperm.xlu0 %2264, %v2243
      %v2266 = vpop.permute.xlu0 %2265
      %2269 = vset.pattern.permute.xlu0 0
      %2270 = vperm.xlu0 %2269, %v2244
      %v2271 = vpop.permute.xlu0 %2270
      %2274 = vset.pattern.permute.xlu0 0
      %2275 = vperm.xlu0 %2274, %v2245
      %v2276 = vpop.permute.xlu0 %2275
      %2279 = vset.pattern.permute.xlu0 0
      %2280 = vperm.xlu0 %2279, %v2246
      %v2281 = vpop.permute.xlu0 %2280
      %2284 = vset.pattern.permute.xlu0 0
      %2285 = vperm.xlu0 %2284, %v2247
      %v2286 = vpop.permute.xlu0 %2285
      %v2288 = vadd.f32 %v2224, %v2251
      %v2289 = vadd.f32 %v2225, %v2251
      %v2290 = vadd.f32 %v2226, %v2256
      %v2291 = vadd.f32 %v2227, %v2256
      %v2292 = vadd.f32 %v2228, %v2261
      %v2293 = vadd.f32 %v2229, %v2261
      %v2294 = vadd.f32 %v2230, %v2266
      %v2295 = vadd.f32 %v2231, %v2266
      %v2296 = vadd.f32 %v2232, %v2271
      %v2297 = vadd.f32 %v2233, %v2271
      %v2298 = vadd.f32 %v2234, %v2276
      %v2299 = vadd.f32 %v2235, %v2276
      %v2300 = vadd.f32 %v2236, %v2281
      %v2301 = vadd.f32 %v2237, %v2281
      %v2302 = vadd.f32 %v2238, %v2286
      %v2303 = vadd.f32 %v2239, %v2286
      %v2304 = vmax.f32 %v2288, 0.0
      %v2305 = vmax.f32 %v2289, 0.0
      %v2306 = vmax.f32 %v2290, 0.0
      %v2307 = vmax.f32 %v2291, 0.0
      %v2308 = vmax.f32 %v2292, 0.0
      %v2309 = vmax.f32 %v2293, 0.0
      %v2310 = vmax.f32 %v2294, 0.0
      %v2311 = vmax.f32 %v2295, 0.0
      %v2312 = vmax.f32 %v2296, 0.0
      %v2313 = vmax.f32 %v2297, 0.0
      %v2314 = vmax.f32 %v2298, 0.0
      %v2315 = vmax.f32 %v2299, 0.0
      %v2316 = vmax.f32 %v2300, 0.0
      %v2317 = vmax.f32 %v2301, 0.0
      %v2318 = vmax.f32 %v2302, 0.0
      %v2319 = vmax.f32 %v2303, 0.0
      %s2320 = scalar_lea.vmem %s6, 128
      %v2321 = vld [vmem:[%s2320] sm:$0xf]
      %v2322 = vld [vmem:[%s2320 + $0x4] sm:$0xf]
      %v2323 = vld [vmem:[%s2320 + $0x8] sm:$0xf]
      %v2324 = vld [vmem:[%s2320 + $0xc] sm:$0xf]
      %v2325 = vld [vmem:[%s2320 + $0x10] sm:$0xf]
      %v2326 = vld [vmem:[%s2320 + $0x14] sm:$0xf]
      %v2327 = vld [vmem:[%s2320 + $0x18] sm:$0xf]
      %v2328 = vld [vmem:[%s2320 + $0x1c] sm:$0xf]
      %v2329 = vpack.c.bf16 %v2306, %v2304
      %v2330 = vpack.c.bf16 %v2307, %v2305
      %v2331 = vpack.c.bf16 %v2310, %v2308
      %v2332 = vpack.c.bf16 %v2311, %v2309
      %v2333 = vpack.c.bf16 %v2314, %v2312
      %v2334 = vpack.c.bf16 %v2315, %v2313
      %v2335 = vpack.c.bf16 %v2318, %v2316
      %v2336 = vpack.c.bf16 %v2319, %v2317
      %v2337 = vld [vmem:[%s6] sm:$0xf]
      %v2338 = vld [vmem:[%s6 + $0x4] sm:$0xf]
      %v2339 = vld [vmem:[%s6 + $0x8] sm:$0xf]
      %v2340 = vld [vmem:[%s6 + $0xc] sm:$0xf]
      %v2341 = vld [vmem:[%s6 + $0x10] sm:$0xf]
      %v2342 = vld [vmem:[%s6 + $0x14] sm:$0xf]
      %v2343 = vld [vmem:[%s6 + $0x18] sm:$0xf]
      %v2344 = vld [vmem:[%s6 + $0x1c] sm:$0xf]
      %2345 = vrot.lane.b32.xlu0 %v2304, 17
      %v2346 = vpop.permute.xlu0 %2345
      %2347 = vrot.lane.b32.xlu0 %v2306, 17
      %v2348 = vpop.permute.xlu0 %2347
      %2349 = vrot.lane.b32.xlu0 %v2308, 17
      %v2350 = vpop.permute.xlu0 %2349
      %2351 = vrot.lane.b32.xlu0 %v2310, 17
      %v2352 = vpop.permute.xlu0 %2351
      %2353 = vrot.lane.b32.xlu0 %v2312, 17
      %v2354 = vpop.permute.xlu0 %2353
      %2355 = vrot.lane.b32.xlu0 %v2314, 17
      %v2356 = vpop.permute.xlu0 %2355
      %2357 = vrot.lane.b32.xlu0 %v2316, 17
      %v2358 = vpop.permute.xlu0 %2357
      %2359 = vrot.lane.b32.xlu0 %v2318, 17
      %v2360 = vpop.permute.xlu0 %2359
      %2361 = vrot.lane.b32.xlu0 %v2305, 17
      %v2362 = vpop.permute.xlu0 %2361
      %2363 = vrot.lane.b32.xlu0 %v2307, 17
      %v2364 = vpop.permute.xlu0 %2363
      %2365 = vrot.lane.b32.xlu0 %v2309, 17
      %v2366 = vpop.permute.xlu0 %2365
      %2367 = vrot.lane.b32.xlu0 %v2311, 17
      %v2368 = vpop.permute.xlu0 %2367
      %2369 = vrot.lane.b32.xlu0 %v2313, 17
      %v2370 = vpop.permute.xlu0 %2369
      %2371 = vrot.lane.b32.xlu0 %v2315, 17
      %v2372 = vpop.permute.xlu0 %2371
      %2373 = vrot.lane.b32.xlu0 %v2317, 17
      %v2374 = vpop.permute.xlu0 %2373
      %2375 = vrot.lane.b32.xlu0 %v2319, 17
      %v2376 = vpop.permute.xlu0 %2375
      %v2377 = vsel %vm687, %v2346, %v2362
      %v2378 = vsel %vm687, %v2348, %v2364
      %v2379 = vsel %vm687, %v2350, %v2366
      %v2380 = vsel %vm687, %v2352, %v2368
      %v2381 = vsel %vm687, %v2354, %v2370
      %v2382 = vsel %vm687, %v2356, %v2372
      %v2383 = vsel %vm687, %v2358, %v2374
      %v2384 = vsel %vm687, %v2360, %v2376
      %v2385 = vsel %vm687, %v2362, %v2346
      %v2386 = vsel %vm687, %v2364, %v2348
      %v2387 = vsel %vm687, %v2366, %v2350
      %v2388 = vsel %vm687, %v2368, %v2352
      %v2389 = vsel %vm687, %v2370, %v2354
      %v2390 = vsel %vm687, %v2372, %v2356
      %v2391 = vsel %vm687, %v2374, %v2358
      %v2392 = vsel %vm687, %v2376, %v2360
      %v2393 = vmul.f32 %v2385, %v704
      %v2394 = vmul.f32 %v2377, %v705
      %v2395 = vmul.f32 %v2386, %v704
      %v2396 = vmul.f32 %v2378, %v705
      %v2397 = vmul.f32 %v2387, %v704
      %v2398 = vmul.f32 %v2379, %v705
      %v2399 = vmul.f32 %v2388, %v704
      %v2400 = vmul.f32 %v2380, %v705
      %v2401 = vmul.f32 %v2389, %v704
      %v2402 = vmul.f32 %v2381, %v705
      %v2403 = vmul.f32 %v2390, %v704
      %v2404 = vmul.f32 %v2382, %v705
      %v2405 = vmul.f32 %v2391, %v704
      %v2406 = vmul.f32 %v2383, %v705
      %v2407 = vmul.f32 %v2392, %v704
      %v2408 = vmul.f32 %v2384, %v705
      %v2409 = vpack.c.bf16 %v2395, %v2393
      %v2410 = vpack.c.bf16 %v2396, %v2394
      %v2411 = vpack.c.bf16 %v2399, %v2397
      %v2412 = vpack.c.bf16 %v2400, %v2398
      %v2413 = vpack.c.bf16 %v2403, %v2401
      %v2414 = vpack.c.bf16 %v2404, %v2402
      %v2415 = vpack.c.bf16 %v2407, %v2405
      %v2416 = vpack.c.bf16 %v2408, %v2406
      %v2425 = vunpack.c.l.b16 %v2337
      %v2426 = vunpack.c.l.b16 %v2338
      %v2427 = vunpack.c.l.b16 %v2339
      %v2428 = vunpack.c.l.b16 %v2340
      %v2429 = vunpack.c.l.b16 %v2341
      %v2430 = vunpack.c.l.b16 %v2342
      %v2431 = vunpack.c.l.b16 %v2343
      %v2432 = vunpack.c.l.b16 %v2344
      %v2433 = vpack.c.b16 %v2426, %v2425
      %v2434 = vpack.c.b16 %v2428, %v2427
      %v2435 = vpack.c.b16 %v2430, %v2429
      %v2436 = vpack.c.b16 %v2432, %v2431
      %v2438 = vsel %vm541, %v2433, 0
      %v2441 = vsel %vm541, %v2434, 0
      %v2444 = vsel %vm541, %v2435, 0
      %v2447 = vsel %vm541, %v2436, 0
      %2449 = vmatpush.bf16.msra.mxu0 0
      %2450 = vmatpush.bf16.msra.mxu0 0
      %2451 = vmatpush.bf16.msra.mxu0 0
      %2452 = vmatpush.bf16.msra.mxu0 0
      %2453 = vmatpush.bf16.msra.mxu0 %v2415
      %2454 = vmatpush.bf16.msra.mxu0 %v2413
      %2455 = vmatpush.bf16.msra.mxu0 %v2411
      %2456 = vmatpush.bf16.msra.mxu0 %v2409
      %2457 = vmatmul.bf16.gmra.mxu0 %v2438
      %v2458 = vpop.f32.mrf.mxu0
      %v2459 = vadd.f32 0.0, %v2458
      %v2460 = vpop.f32.mrf.mxu0
      %v2461 = vadd.f32 0.0, %v2460
      %2462 = vmatmul.bf16.gmra.mxu0 %v2441
      %v2463 = vpop.f32.mrf.mxu0
      %v2464 = vadd.f32 0.0, %v2463
      %v2465 = vpop.f32.mrf.mxu0
      %v2466 = vadd.f32 0.0, %v2465
      %2467 = vmatmul.bf16.gmra.mxu0 %v2444
      %v2468 = vpop.f32.mrf.mxu0
      %v2469 = vadd.f32 0.0, %v2468
      %v2470 = vpop.f32.mrf.mxu0
      %v2471 = vadd.f32 0.0, %v2470
      %2472 = vmatmul.bf16.gmra.mxu0 %v2447
      %v2473 = vpop.f32.mrf.mxu0
      %v2474 = vadd.f32 0.0, %v2473
      %v2475 = vpop.f32.mrf.mxu0
      %v2476 = vadd.f32 0.0, %v2475
      %2477 = vdwg.mxu0
      %2478 = vmatpush.bf16.msra.mxu0 0
      %2479 = vmatpush.bf16.msra.mxu0 0
      %2480 = vmatpush.bf16.msra.mxu0 0
      %2481 = vmatpush.bf16.msra.mxu0 0
      %2482 = vmatpush.bf16.msra.mxu0 %v2416
      %2483 = vmatpush.bf16.msra.mxu0 %v2414
      %2484 = vmatpush.bf16.msra.mxu0 %v2412
      %2485 = vmatpush.bf16.msra.mxu0 %v2410
      %2486 = vmatmul.bf16.gmra.mxu0 %v2438
      %v2487 = vpop.f32.mrf.mxu0
      %v2488 = vadd.f32 0.0, %v2487
      %v2489 = vpop.f32.mrf.mxu0
      %v2490 = vadd.f32 0.0, %v2489
      %2491 = vmatmul.bf16.gmra.mxu0 %v2441
      %v2492 = vpop.f32.mrf.mxu0
      %v2493 = vadd.f32 0.0, %v2492
      %v2494 = vpop.f32.mrf.mxu0
      %v2495 = vadd.f32 0.0, %v2494
      %2496 = vmatmul.bf16.gmra.mxu0 %v2444
      %v2497 = vpop.f32.mrf.mxu0
      %v2498 = vadd.f32 0.0, %v2497
      %v2499 = vpop.f32.mrf.mxu0
      %v2500 = vadd.f32 0.0, %v2499
      %2501 = vmatmul.bf16.gmra.mxu0 %v2447
      %v2502 = vpop.f32.mrf.mxu0
      %v2503 = vadd.f32 0.0, %v2502
      %v2504 = vpop.f32.mrf.mxu0
      %v2505 = vadd.f32 0.0, %v2504
      %2506 = vdwg.mxu0
      %v2515 = vunpack.c.l.b16 %v2321
      %v2516 = vunpack.c.l.b16 %v2322
      %v2517 = vunpack.c.l.b16 %v2323
      %v2518 = vunpack.c.l.b16 %v2324
      %v2519 = vunpack.c.l.b16 %v2325
      %v2520 = vunpack.c.l.b16 %v2326
      %v2521 = vunpack.c.l.b16 %v2327
      %v2522 = vunpack.c.l.b16 %v2328
      %v2523 = vpack.c.b16 %v2516, %v2515
      %v2524 = vpack.c.b16 %v2518, %v2517
      %v2525 = vpack.c.b16 %v2520, %v2519
      %v2526 = vpack.c.b16 %v2522, %v2521
      %v2528 = vsel %vm541, %v2523, 0
      %v2531 = vsel %vm541, %v2524, 0
      %v2534 = vsel %vm541, %v2525, 0
      %v2537 = vsel %vm541, %v2526, 0
      %2539 = vmatpush.bf16.msra.mxu0 0
      %2540 = vmatpush.bf16.msra.mxu0 0
      %2541 = vmatpush.bf16.msra.mxu0 0
      %2542 = vmatpush.bf16.msra.mxu0 0
      %2543 = vmatpush.bf16.msra.mxu0 %v2335
      %2544 = vmatpush.bf16.msra.mxu0 %v2333
      %2545 = vmatpush.bf16.msra.mxu0 %v2331
      %2546 = vmatpush.bf16.msra.mxu0 %v2329
      %2547 = vmatmul.bf16.gmra.mxu0 %v2528
      %v2548 = vpop.f32.mrf.mxu0
      %v2549 = vadd.f32 %v2459, %v2548
      %v2550 = vpop.f32.mrf.mxu0
      %v2551 = vadd.f32 %v2461, %v2550
      %2552 = vmatmul.bf16.gmra.mxu0 %v2531
      %v2553 = vpop.f32.mrf.mxu0
      %v2554 = vadd.f32 %v2464, %v2553
      %v2555 = vpop.f32.mrf.mxu0
      %v2556 = vadd.f32 %v2466, %v2555
      %2557 = vmatmul.bf16.gmra.mxu0 %v2534
      %v2558 = vpop.f32.mrf.mxu0
      %v2559 = vadd.f32 %v2469, %v2558
      %v2560 = vpop.f32.mrf.mxu0
      %v2561 = vadd.f32 %v2471, %v2560
      %2562 = vmatmul.bf16.gmra.mxu0 %v2537
      %v2563 = vpop.f32.mrf.mxu0
      %v2564 = vadd.f32 %v2474, %v2563
      %v2565 = vpop.f32.mrf.mxu0
      %v2566 = vadd.f32 %v2476, %v2565
      %2567 = vdwg.mxu0
      %2568 = vmatpush.bf16.msra.mxu0 0
      %2569 = vmatpush.bf16.msra.mxu0 0
      %2570 = vmatpush.bf16.msra.mxu0 0
      %2571 = vmatpush.bf16.msra.mxu0 0
      %2572 = vmatpush.bf16.msra.mxu0 %v2336
      %2573 = vmatpush.bf16.msra.mxu0 %v2334
      %2574 = vmatpush.bf16.msra.mxu0 %v2332
      %2575 = vmatpush.bf16.msra.mxu0 %v2330
      %2576 = vmatmul.bf16.gmra.mxu0 %v2528
      %v2577 = vpop.f32.mrf.mxu0
      %v2578 = vadd.f32 %v2488, %v2577
      %v2579 = vpop.f32.mrf.mxu0
      %v2580 = vadd.f32 %v2490, %v2579
      %2581 = vmatmul.bf16.gmra.mxu0 %v2531
      %v2582 = vpop.f32.mrf.mxu0
      %v2583 = vadd.f32 %v2493, %v2582
      %v2584 = vpop.f32.mrf.mxu0
      %v2585 = vadd.f32 %v2495, %v2584
      %2586 = vmatmul.bf16.gmra.mxu0 %v2534
      %v2587 = vpop.f32.mrf.mxu0
      %v2588 = vadd.f32 %v2498, %v2587
      %v2589 = vpop.f32.mrf.mxu0
      %v2590 = vadd.f32 %v2500, %v2589
      %2591 = vmatmul.bf16.gmra.mxu0 %v2537
      %v2592 = vpop.f32.mrf.mxu0
      %v2593 = vadd.f32 %v2503, %v2592
      %v2594 = vpop.f32.mrf.mxu0
      %v2595 = vadd.f32 %v2505, %v2594
      %2596 = vdwg.mxu0
      %s2597 = scalar_lea.vmem %s6, 32
      %v2598 = vld [vmem:[%s2597] sm:$0xf]
      %v2599 = vld [vmem:[%s2597 + $0x4] sm:$0xf]
      %v2600 = vld [vmem:[%s2597 + $0x8] sm:$0xf]
      %v2601 = vld [vmem:[%s2597 + $0xc] sm:$0xf]
      %v2602 = vld [vmem:[%s2597 + $0x10] sm:$0xf]
      %v2603 = vld [vmem:[%s2597 + $0x14] sm:$0xf]
      %v2604 = vld [vmem:[%s2597 + $0x18] sm:$0xf]
      %v2605 = vld [vmem:[%s2597 + $0x1c] sm:$0xf]
      %2606 = vrot.lane.b32.xlu0 %v2304, 16
      %v2607 = vpop.permute.xlu0 %2606
      %2608 = vrot.lane.b32.xlu0 %v2306, 16
      %v2609 = vpop.permute.xlu0 %2608
      %2610 = vrot.lane.b32.xlu0 %v2308, 16
      %v2611 = vpop.permute.xlu0 %2610
      %2612 = vrot.lane.b32.xlu0 %v2310, 16
      %v2613 = vpop.permute.xlu0 %2612
      %2614 = vrot.lane.b32.xlu0 %v2312, 16
      %v2615 = vpop.permute.xlu0 %2614
      %2616 = vrot.lane.b32.xlu0 %v2314, 16
      %v2617 = vpop.permute.xlu0 %2616
      %2618 = vrot.lane.b32.xlu0 %v2316, 16
      %v2619 = vpop.permute.xlu0 %2618
      %2620 = vrot.lane.b32.xlu0 %v2318, 16
      %v2621 = vpop.permute.xlu0 %2620
      %2622 = vrot.lane.b32.xlu0 %v2305, 16
      %v2623 = vpop.permute.xlu0 %2622
      %2624 = vrot.lane.b32.xlu0 %v2307, 16
      %v2625 = vpop.permute.xlu0 %2624
      %2626 = vrot.lane.b32.xlu0 %v2309, 16
      %v2627 = vpop.permute.xlu0 %2626
      %2628 = vrot.lane.b32.xlu0 %v2311, 16
      %v2629 = vpop.permute.xlu0 %2628
      %2630 = vrot.lane.b32.xlu0 %v2313, 16
      %v2631 = vpop.permute.xlu0 %2630
      %2632 = vrot.lane.b32.xlu0 %v2315, 16
      %v2633 = vpop.permute.xlu0 %2632
      %2634 = vrot.lane.b32.xlu0 %v2317, 16
      %v2635 = vpop.permute.xlu0 %2634
      %2636 = vrot.lane.b32.xlu0 %v2319, 16
      %v2637 = vpop.permute.xlu0 %2636
      %v2638 = vsel %vm951, %v2607, %v2623
      %v2639 = vsel %vm951, %v2609, %v2625
      %v2640 = vsel %vm951, %v2611, %v2627
      %v2641 = vsel %vm951, %v2613, %v2629
      %v2642 = vsel %vm951, %v2615, %v2631
      %v2643 = vsel %vm951, %v2617, %v2633
      %v2644 = vsel %vm951, %v2619, %v2635
      %v2645 = vsel %vm951, %v2621, %v2637
      %v2646 = vsel %vm951, %v2623, %v2607
      %v2647 = vsel %vm951, %v2625, %v2609
      %v2648 = vsel %vm951, %v2627, %v2611
      %v2649 = vsel %vm951, %v2629, %v2613
      %v2650 = vsel %vm951, %v2631, %v2615
      %v2651 = vsel %vm951, %v2633, %v2617
      %v2652 = vsel %vm951, %v2635, %v2619
      %v2653 = vsel %vm951, %v2637, %v2621
      %v2654 = vmul.f32 %v2646, %v968
      %v2655 = vmul.f32 %v2638, %v969
      %v2656 = vmul.f32 %v2647, %v968
      %v2657 = vmul.f32 %v2639, %v969
      %v2658 = vmul.f32 %v2648, %v968
      %v2659 = vmul.f32 %v2640, %v969
      %v2660 = vmul.f32 %v2649, %v968
      %v2661 = vmul.f32 %v2641, %v969
      %v2662 = vmul.f32 %v2650, %v968
      %v2663 = vmul.f32 %v2642, %v969
      %v2664 = vmul.f32 %v2651, %v968
      %v2665 = vmul.f32 %v2643, %v969
      %v2666 = vmul.f32 %v2652, %v968
      %v2667 = vmul.f32 %v2644, %v969
      %v2668 = vmul.f32 %v2653, %v968
      %v2669 = vmul.f32 %v2645, %v969
      %v2670 = vpack.c.bf16 %v2656, %v2654
      %v2671 = vpack.c.bf16 %v2657, %v2655
      %v2672 = vpack.c.bf16 %v2660, %v2658
      %v2673 = vpack.c.bf16 %v2661, %v2659
      %v2674 = vpack.c.bf16 %v2664, %v2662
      %v2675 = vpack.c.bf16 %v2665, %v2663
      %v2676 = vpack.c.bf16 %v2668, %v2666
      %v2677 = vpack.c.bf16 %v2669, %v2667
      %v2686 = vunpack.c.l.b16 %v2598
      %v2687 = vunpack.c.l.b16 %v2599
      %v2688 = vunpack.c.l.b16 %v2600
      %v2689 = vunpack.c.l.b16 %v2601
      %v2690 = vunpack.c.l.b16 %v2602
      %v2691 = vunpack.c.l.b16 %v2603
      %v2692 = vunpack.c.l.b16 %v2604
      %v2693 = vunpack.c.l.b16 %v2605
      %v2694 = vpack.c.b16 %v2687, %v2686
      %v2695 = vpack.c.b16 %v2689, %v2688
      %v2696 = vpack.c.b16 %v2691, %v2690
      %v2697 = vpack.c.b16 %v2693, %v2692
      %v2699 = vsel %vm541, %v2694, 0
      %v2702 = vsel %vm541, %v2695, 0
      %v2705 = vsel %vm541, %v2696, 0
      %v2708 = vsel %vm541, %v2697, 0
      %2710 = vmatpush.bf16.msra.mxu0 0
      %2711 = vmatpush.bf16.msra.mxu0 0
      %2712 = vmatpush.bf16.msra.mxu0 0
      %2713 = vmatpush.bf16.msra.mxu0 0
      %2714 = vmatpush.bf16.msra.mxu0 %v2676
      %2715 = vmatpush.bf16.msra.mxu0 %v2674
      %2716 = vmatpush.bf16.msra.mxu0 %v2672
      %2717 = vmatpush.bf16.msra.mxu0 %v2670
      %2718 = vmatmul.bf16.gmra.mxu0 %v2699
      %v2719 = vpop.f32.mrf.mxu0
      %v2720 = vadd.f32 0.0, %v2719
      %v2721 = vpop.f32.mrf.mxu0
      %v2722 = vadd.f32 0.0, %v2721
      %2723 = vmatmul.bf16.gmra.mxu0 %v2702
      %v2724 = vpop.f32.mrf.mxu0
      %v2725 = vadd.f32 0.0, %v2724
      %v2726 = vpop.f32.mrf.mxu0
      %v2727 = vadd.f32 0.0, %v2726
      %2728 = vmatmul.bf16.gmra.mxu0 %v2705
      %v2729 = vpop.f32.mrf.mxu0
      %v2730 = vadd.f32 0.0, %v2729
      %v2731 = vpop.f32.mrf.mxu0
      %v2732 = vadd.f32 0.0, %v2731
      %2733 = vmatmul.bf16.gmra.mxu0 %v2708
      %v2734 = vpop.f32.mrf.mxu0
      %v2735 = vadd.f32 0.0, %v2734
      %v2736 = vpop.f32.mrf.mxu0
      %v2737 = vadd.f32 0.0, %v2736
      %2738 = vdwg.mxu0
      %2739 = vmatpush.bf16.msra.mxu0 0
      %2740 = vmatpush.bf16.msra.mxu0 0
      %2741 = vmatpush.bf16.msra.mxu0 0
      %2742 = vmatpush.bf16.msra.mxu0 0
      %2743 = vmatpush.bf16.msra.mxu0 %v2677
      %2744 = vmatpush.bf16.msra.mxu0 %v2675
      %2745 = vmatpush.bf16.msra.mxu0 %v2673
      %2746 = vmatpush.bf16.msra.mxu0 %v2671
      %2747 = vmatmul.bf16.gmra.mxu0 %v2699
      %v2748 = vpop.f32.mrf.mxu0
      %v2749 = vadd.f32 0.0, %v2748
      %v2750 = vpop.f32.mrf.mxu0
      %v2751 = vadd.f32 0.0, %v2750
      %2752 = vmatmul.bf16.gmra.mxu0 %v2702
      %v2753 = vpop.f32.mrf.mxu0
      %v2754 = vadd.f32 0.0, %v2753
      %v2755 = vpop.f32.mrf.mxu0
      %v2756 = vadd.f32 0.0, %v2755
      %2757 = vmatmul.bf16.gmra.mxu0 %v2705
      %v2758 = vpop.f32.mrf.mxu0
      %v2759 = vadd.f32 0.0, %v2758
      %v2760 = vpop.f32.mrf.mxu0
      %v2761 = vadd.f32 0.0, %v2760
      %2762 = vmatmul.bf16.gmra.mxu0 %v2708
      %v2763 = vpop.f32.mrf.mxu0
      %v2764 = vadd.f32 0.0, %v2763
      %v2765 = vpop.f32.mrf.mxu0
      %v2766 = vadd.f32 0.0, %v2765
      %2767 = vdwg.mxu0
      %v2768 = vadd.f32 %v2549, %v2720
      %v2769 = vadd.f32 %v2578, %v2749
      %v2770 = vadd.f32 %v2551, %v2722
      %v2771 = vadd.f32 %v2580, %v2751
      %v2772 = vadd.f32 %v2554, %v2725
      %v2773 = vadd.f32 %v2583, %v2754
      %v2774 = vadd.f32 %v2556, %v2727
      %v2775 = vadd.f32 %v2585, %v2756
      %v2776 = vadd.f32 %v2559, %v2730
      %v2777 = vadd.f32 %v2588, %v2759
      %v2778 = vadd.f32 %v2561, %v2732
      %v2779 = vadd.f32 %v2590, %v2761
      %v2780 = vadd.f32 %v2564, %v2735
      %v2781 = vadd.f32 %v2593, %v2764
      %v2782 = vadd.f32 %v2566, %v2737
      %v2783 = vadd.f32 %v2595, %v2766
      %s2784 = scalar_lea.vmem %s6, 64
      %v2785 = vld [vmem:[%s2784] sm:$0xf]
      %v2786 = vld [vmem:[%s2784 + $0x4] sm:$0xf]
      %v2787 = vld [vmem:[%s2784 + $0x8] sm:$0xf]
      %v2788 = vld [vmem:[%s2784 + $0xc] sm:$0xf]
      %v2789 = vld [vmem:[%s2784 + $0x10] sm:$0xf]
      %v2790 = vld [vmem:[%s2784 + $0x14] sm:$0xf]
      %v2791 = vld [vmem:[%s2784 + $0x18] sm:$0xf]
      %v2792 = vld [vmem:[%s2784 + $0x1c] sm:$0xf]
      %2793 = vrot.lane.b32.xlu0 %v2304, 15
      %v2794 = vpop.permute.xlu0 %2793
      %2795 = vrot.lane.b32.xlu0 %v2306, 15
      %v2796 = vpop.permute.xlu0 %2795
      %2797 = vrot.lane.b32.xlu0 %v2308, 15
      %v2798 = vpop.permute.xlu0 %2797
      %2799 = vrot.lane.b32.xlu0 %v2310, 15
      %v2800 = vpop.permute.xlu0 %2799
      %2801 = vrot.lane.b32.xlu0 %v2312, 15
      %v2802 = vpop.permute.xlu0 %2801
      %2803 = vrot.lane.b32.xlu0 %v2314, 15
      %v2804 = vpop.permute.xlu0 %2803
      %2805 = vrot.lane.b32.xlu0 %v2316, 15
      %v2806 = vpop.permute.xlu0 %2805
      %2807 = vrot.lane.b32.xlu0 %v2318, 15
      %v2808 = vpop.permute.xlu0 %2807
      %2809 = vrot.lane.b32.xlu0 %v2305, 15
      %v2810 = vpop.permute.xlu0 %2809
      %2811 = vrot.lane.b32.xlu0 %v2307, 15
      %v2812 = vpop.permute.xlu0 %2811
      %2813 = vrot.lane.b32.xlu0 %v2309, 15
      %v2814 = vpop.permute.xlu0 %2813
      %2815 = vrot.lane.b32.xlu0 %v2311, 15
      %v2816 = vpop.permute.xlu0 %2815
      %2817 = vrot.lane.b32.xlu0 %v2313, 15
      %v2818 = vpop.permute.xlu0 %2817
      %2819 = vrot.lane.b32.xlu0 %v2315, 15
      %v2820 = vpop.permute.xlu0 %2819
      %2821 = vrot.lane.b32.xlu0 %v2317, 15
      %v2822 = vpop.permute.xlu0 %2821
      %2823 = vrot.lane.b32.xlu0 %v2319, 15
      %v2824 = vpop.permute.xlu0 %2823
      %v2825 = vsel %vm1141, %v2794, %v2810
      %v2826 = vsel %vm1141, %v2796, %v2812
      %v2827 = vsel %vm1141, %v2798, %v2814
      %v2828 = vsel %vm1141, %v2800, %v2816
      %v2829 = vsel %vm1141, %v2802, %v2818
      %v2830 = vsel %vm1141, %v2804, %v2820
      %v2831 = vsel %vm1141, %v2806, %v2822
      %v2832 = vsel %vm1141, %v2808, %v2824
      %v2833 = vsel %vm1141, %v2810, %v2794
      %v2834 = vsel %vm1141, %v2812, %v2796
      %v2835 = vsel %vm1141, %v2814, %v2798
      %v2836 = vsel %vm1141, %v2816, %v2800
      %v2837 = vsel %vm1141, %v2818, %v2802
      %v2838 = vsel %vm1141, %v2820, %v2804
      %v2839 = vsel %vm1141, %v2822, %v2806
      %v2840 = vsel %vm1141, %v2824, %v2808
      %v2841 = vmul.f32 %v2833, %v1158
      %v2842 = vmul.f32 %v2825, %v1159
      %v2843 = vmul.f32 %v2834, %v1158
      %v2844 = vmul.f32 %v2826, %v1159
      %v2845 = vmul.f32 %v2835, %v1158
      %v2846 = vmul.f32 %v2827, %v1159
      %v2847 = vmul.f32 %v2836, %v1158
      %v2848 = vmul.f32 %v2828, %v1159
      %v2849 = vmul.f32 %v2837, %v1158
      %v2850 = vmul.f32 %v2829, %v1159
      %v2851 = vmul.f32 %v2838, %v1158
      %v2852 = vmul.f32 %v2830, %v1159
      %v2853 = vmul.f32 %v2839, %v1158
      %v2854 = vmul.f32 %v2831, %v1159
      %v2855 = vmul.f32 %v2840, %v1158
      %v2856 = vmul.f32 %v2832, %v1159
      %v2857 = vpack.c.bf16 %v2843, %v2841
      %v2858 = vpack.c.bf16 %v2844, %v2842
      %v2859 = vpack.c.bf16 %v2847, %v2845
      %v2860 = vpack.c.bf16 %v2848, %v2846
      %v2861 = vpack.c.bf16 %v2851, %v2849
      %v2862 = vpack.c.bf16 %v2852, %v2850
      %v2863 = vpack.c.bf16 %v2855, %v2853
      %v2864 = vpack.c.bf16 %v2856, %v2854
      %v2873 = vunpack.c.l.b16 %v2785
      %v2874 = vunpack.c.l.b16 %v2786
      %v2875 = vunpack.c.l.b16 %v2787
      %v2876 = vunpack.c.l.b16 %v2788
      %v2877 = vunpack.c.l.b16 %v2789
      %v2878 = vunpack.c.l.b16 %v2790
      %v2879 = vunpack.c.l.b16 %v2791
      %v2880 = vunpack.c.l.b16 %v2792
      %v2881 = vpack.c.b16 %v2874, %v2873
      %v2882 = vpack.c.b16 %v2876, %v2875
      %v2883 = vpack.c.b16 %v2878, %v2877
      %v2884 = vpack.c.b16 %v2880, %v2879
      %v2886 = vsel %vm541, %v2881, 0
      %v2889 = vsel %vm541, %v2882, 0
      %v2892 = vsel %vm541, %v2883, 0
      %v2895 = vsel %vm541, %v2884, 0
      %2897 = vmatpush.bf16.msra.mxu0 0
      %2898 = vmatpush.bf16.msra.mxu0 0
      %2899 = vmatpush.bf16.msra.mxu0 0
      %2900 = vmatpush.bf16.msra.mxu0 0
      %2901 = vmatpush.bf16.msra.mxu0 %v2863
      %2902 = vmatpush.bf16.msra.mxu0 %v2861
      %2903 = vmatpush.bf16.msra.mxu0 %v2859
      %2904 = vmatpush.bf16.msra.mxu0 %v2857
      %2905 = vmatmul.bf16.gmra.mxu0 %v2886
      %v2906 = vpop.f32.mrf.mxu0
      %v2907 = vadd.f32 0.0, %v2906
      %v2908 = vpop.f32.mrf.mxu0
      %v2909 = vadd.f32 0.0, %v2908
      %2910 = vmatmul.bf16.gmra.mxu0 %v2889
      %v2911 = vpop.f32.mrf.mxu0
      %v2912 = vadd.f32 0.0, %v2911
      %v2913 = vpop.f32.mrf.mxu0
      %v2914 = vadd.f32 0.0, %v2913
      %2915 = vmatmul.bf16.gmra.mxu0 %v2892
      %v2916 = vpop.f32.mrf.mxu0
      %v2917 = vadd.f32 0.0, %v2916
      %v2918 = vpop.f32.mrf.mxu0
      %v2919 = vadd.f32 0.0, %v2918
      %2920 = vmatmul.bf16.gmra.mxu0 %v2895
      %v2921 = vpop.f32.mrf.mxu0
      %v2922 = vadd.f32 0.0, %v2921
      %v2923 = vpop.f32.mrf.mxu0
      %v2924 = vadd.f32 0.0, %v2923
      %2925 = vdwg.mxu0
      %2926 = vmatpush.bf16.msra.mxu0 0
      %2927 = vmatpush.bf16.msra.mxu0 0
      %2928 = vmatpush.bf16.msra.mxu0 0
      %2929 = vmatpush.bf16.msra.mxu0 0
      %2930 = vmatpush.bf16.msra.mxu0 %v2864
      %2931 = vmatpush.bf16.msra.mxu0 %v2862
      %2932 = vmatpush.bf16.msra.mxu0 %v2860
      %2933 = vmatpush.bf16.msra.mxu0 %v2858
      %2934 = vmatmul.bf16.gmra.mxu0 %v2886
      %v2935 = vpop.f32.mrf.mxu0
      %v2936 = vadd.f32 0.0, %v2935
      %v2937 = vpop.f32.mrf.mxu0
      %v2938 = vadd.f32 0.0, %v2937
      %2939 = vmatmul.bf16.gmra.mxu0 %v2889
      %v2940 = vpop.f32.mrf.mxu0
      %v2941 = vadd.f32 0.0, %v2940
      %v2942 = vpop.f32.mrf.mxu0
      %v2943 = vadd.f32 0.0, %v2942
      %2944 = vmatmul.bf16.gmra.mxu0 %v2892
      %v2945 = vpop.f32.mrf.mxu0
      %v2946 = vadd.f32 0.0, %v2945
      %v2947 = vpop.f32.mrf.mxu0
      %v2948 = vadd.f32 0.0, %v2947
      %2949 = vmatmul.bf16.gmra.mxu0 %v2895
      %v2950 = vpop.f32.mrf.mxu0
      %v2951 = vadd.f32 0.0, %v2950
      %v2952 = vpop.f32.mrf.mxu0
      %v2953 = vadd.f32 0.0, %v2952
      %2954 = vdwg.mxu0
      %v2955 = vadd.f32 %v2768, %v2907
      %v2956 = vadd.f32 %v2769, %v2936
      %v2957 = vadd.f32 %v2770, %v2909
      %v2958 = vadd.f32 %v2771, %v2938
      %v2959 = vadd.f32 %v2772, %v2912
      %v2960 = vadd.f32 %v2773, %v2941
      %v2961 = vadd.f32 %v2774, %v2914
      %v2962 = vadd.f32 %v2775, %v2943
      %v2963 = vadd.f32 %v2776, %v2917
      %v2964 = vadd.f32 %v2777, %v2946
      %v2965 = vadd.f32 %v2778, %v2919
      %v2966 = vadd.f32 %v2779, %v2948
      %v2967 = vadd.f32 %v2780, %v2922
      %v2968 = vadd.f32 %v2781, %v2951
      %v2969 = vadd.f32 %v2782, %v2924
      %v2970 = vadd.f32 %v2783, %v2953
      %s2971 = scalar_lea.vmem %s6, 96
      %v2972 = vld [vmem:[%s2971] sm:$0xf]
      %v2973 = vld [vmem:[%s2971 + $0x4] sm:$0xf]
      %v2974 = vld [vmem:[%s2971 + $0x8] sm:$0xf]
      %v2975 = vld [vmem:[%s2971 + $0xc] sm:$0xf]
      %v2976 = vld [vmem:[%s2971 + $0x10] sm:$0xf]
      %v2977 = vld [vmem:[%s2971 + $0x14] sm:$0xf]
      %v2978 = vld [vmem:[%s2971 + $0x18] sm:$0xf]
      %v2979 = vld [vmem:[%s2971 + $0x1c] sm:$0xf]
      %2980 = vrot.lane.b32.xlu0 %v2304, 1
      %v2981 = vpop.permute.xlu0 %2980
      %2982 = vrot.lane.b32.xlu0 %v2306, 1
      %v2983 = vpop.permute.xlu0 %2982
      %2984 = vrot.lane.b32.xlu0 %v2308, 1
      %v2985 = vpop.permute.xlu0 %2984
      %2986 = vrot.lane.b32.xlu0 %v2310, 1
      %v2987 = vpop.permute.xlu0 %2986
      %2988 = vrot.lane.b32.xlu0 %v2312, 1
      %v2989 = vpop.permute.xlu0 %2988
      %2990 = vrot.lane.b32.xlu0 %v2314, 1
      %v2991 = vpop.permute.xlu0 %2990
      %2992 = vrot.lane.b32.xlu0 %v2316, 1
      %v2993 = vpop.permute.xlu0 %2992
      %2994 = vrot.lane.b32.xlu0 %v2318, 1
      %v2995 = vpop.permute.xlu0 %2994
      %2996 = vrot.lane.b32.xlu0 %v2305, 1
      %v2997 = vpop.permute.xlu0 %2996
      %2998 = vrot.lane.b32.xlu0 %v2307, 1
      %v2999 = vpop.permute.xlu0 %2998
      %3000 = vrot.lane.b32.xlu0 %v2309, 1
      %v3001 = vpop.permute.xlu0 %3000
      %3002 = vrot.lane.b32.xlu0 %v2311, 1
      %v3003 = vpop.permute.xlu0 %3002
      %3004 = vrot.lane.b32.xlu0 %v2313, 1
      %v3005 = vpop.permute.xlu0 %3004
      %3006 = vrot.lane.b32.xlu0 %v2315, 1
      %v3007 = vpop.permute.xlu0 %3006
      %3008 = vrot.lane.b32.xlu0 %v2317, 1
      %v3009 = vpop.permute.xlu0 %3008
      %3010 = vrot.lane.b32.xlu0 %v2319, 1
      %v3011 = vpop.permute.xlu0 %3010
      %v3012 = vsel %vm1331, %v2981, %v2997
      %v3013 = vsel %vm1331, %v2983, %v2999
      %v3014 = vsel %vm1331, %v2985, %v3001
      %v3015 = vsel %vm1331, %v2987, %v3003
      %v3016 = vsel %vm1331, %v2989, %v3005
      %v3017 = vsel %vm1331, %v2991, %v3007
      %v3018 = vsel %vm1331, %v2993, %v3009
      %v3019 = vsel %vm1331, %v2995, %v3011
      %v3020 = vsel %vm1331, %v2997, %v2981
      %v3021 = vsel %vm1331, %v2999, %v2983
      %v3022 = vsel %vm1331, %v3001, %v2985
      %v3023 = vsel %vm1331, %v3003, %v2987
      %v3024 = vsel %vm1331, %v3005, %v2989
      %v3025 = vsel %vm1331, %v3007, %v2991
      %v3026 = vsel %vm1331, %v3009, %v2993
      %v3027 = vsel %vm1331, %v3011, %v2995
      %v3028 = vmul.f32 %v3020, %v1348
      %v3029 = vmul.f32 %v3012, %v1349
      %v3030 = vmul.f32 %v3021, %v1348
      %v3031 = vmul.f32 %v3013, %v1349
      %v3032 = vmul.f32 %v3022, %v1348
      %v3033 = vmul.f32 %v3014, %v1349
      %v3034 = vmul.f32 %v3023, %v1348
      %v3035 = vmul.f32 %v3015, %v1349
      %v3036 = vmul.f32 %v3024, %v1348
      %v3037 = vmul.f32 %v3016, %v1349
      %v3038 = vmul.f32 %v3025, %v1348
      %v3039 = vmul.f32 %v3017, %v1349
      %v3040 = vmul.f32 %v3026, %v1348
      %v3041 = vmul.f32 %v3018, %v1349
      %v3042 = vmul.f32 %v3027, %v1348
      %v3043 = vmul.f32 %v3019, %v1349
      %v3044 = vpack.c.bf16 %v3030, %v3028
      %v3045 = vpack.c.bf16 %v3031, %v3029
      %v3046 = vpack.c.bf16 %v3034, %v3032
      %v3047 = vpack.c.bf16 %v3035, %v3033
      %v3048 = vpack.c.bf16 %v3038, %v3036
      %v3049 = vpack.c.bf16 %v3039, %v3037
      %v3050 = vpack.c.bf16 %v3042, %v3040
      %v3051 = vpack.c.bf16 %v3043, %v3041
      %v3060 = vunpack.c.l.b16 %v2972
      %v3061 = vunpack.c.l.b16 %v2973
      %v3062 = vunpack.c.l.b16 %v2974
      %v3063 = vunpack.c.l.b16 %v2975
      %v3064 = vunpack.c.l.b16 %v2976
      %v3065 = vunpack.c.l.b16 %v2977
      %v3066 = vunpack.c.l.b16 %v2978
      %v3067 = vunpack.c.l.b16 %v2979
      %v3068 = vpack.c.b16 %v3061, %v3060
      %v3069 = vpack.c.b16 %v3063, %v3062
      %v3070 = vpack.c.b16 %v3065, %v3064
      %v3071 = vpack.c.b16 %v3067, %v3066
      %v3073 = vsel %vm541, %v3068, 0
      %v3076 = vsel %vm541, %v3069, 0
      %v3079 = vsel %vm541, %v3070, 0
      %v3082 = vsel %vm541, %v3071, 0
      %3084 = vmatpush.bf16.msra.mxu0 0
      %3085 = vmatpush.bf16.msra.mxu0 0
      %3086 = vmatpush.bf16.msra.mxu0 0
      %3087 = vmatpush.bf16.msra.mxu0 0
      %3088 = vmatpush.bf16.msra.mxu0 %v3050
      %3089 = vmatpush.bf16.msra.mxu0 %v3048
      %3090 = vmatpush.bf16.msra.mxu0 %v3046
      %3091 = vmatpush.bf16.msra.mxu0 %v3044
      %3092 = vmatmul.bf16.gmra.mxu0 %v3073
      %v3093 = vpop.f32.mrf.mxu0
      %v3094 = vadd.f32 0.0, %v3093
      %v3095 = vpop.f32.mrf.mxu0
      %v3096 = vadd.f32 0.0, %v3095
      %3097 = vmatmul.bf16.gmra.mxu0 %v3076
      %v3098 = vpop.f32.mrf.mxu0
      %v3099 = vadd.f32 0.0, %v3098
      %v3100 = vpop.f32.mrf.mxu0
      %v3101 = vadd.f32 0.0, %v3100
      %3102 = vmatmul.bf16.gmra.mxu0 %v3079
      %v3103 = vpop.f32.mrf.mxu0
      %v3104 = vadd.f32 0.0, %v3103
      %v3105 = vpop.f32.mrf.mxu0
      %v3106 = vadd.f32 0.0, %v3105
      %3107 = vmatmul.bf16.gmra.mxu0 %v3082
      %v3108 = vpop.f32.mrf.mxu0
      %v3109 = vadd.f32 0.0, %v3108
      %v3110 = vpop.f32.mrf.mxu0
      %v3111 = vadd.f32 0.0, %v3110
      %3112 = vdwg.mxu0
      %3113 = vmatpush.bf16.msra.mxu0 0
      %3114 = vmatpush.bf16.msra.mxu0 0
      %3115 = vmatpush.bf16.msra.mxu0 0
      %3116 = vmatpush.bf16.msra.mxu0 0
      %3117 = vmatpush.bf16.msra.mxu0 %v3051
      %3118 = vmatpush.bf16.msra.mxu0 %v3049
      %3119 = vmatpush.bf16.msra.mxu0 %v3047
      %3120 = vmatpush.bf16.msra.mxu0 %v3045
      %3121 = vmatmul.bf16.gmra.mxu0 %v3073
      %v3122 = vpop.f32.mrf.mxu0
      %v3123 = vadd.f32 0.0, %v3122
      %v3124 = vpop.f32.mrf.mxu0
      %v3125 = vadd.f32 0.0, %v3124
      %3126 = vmatmul.bf16.gmra.mxu0 %v3076
      %v3127 = vpop.f32.mrf.mxu0
      %v3128 = vadd.f32 0.0, %v3127
      %v3129 = vpop.f32.mrf.mxu0
      %v3130 = vadd.f32 0.0, %v3129
      %3131 = vmatmul.bf16.gmra.mxu0 %v3079
      %v3132 = vpop.f32.mrf.mxu0
      %v3133 = vadd.f32 0.0, %v3132
      %v3134 = vpop.f32.mrf.mxu0
      %v3135 = vadd.f32 0.0, %v3134
      %3136 = vmatmul.bf16.gmra.mxu0 %v3082
      %v3137 = vpop.f32.mrf.mxu0
      %v3138 = vadd.f32 0.0, %v3137
      %v3139 = vpop.f32.mrf.mxu0
      %v3140 = vadd.f32 0.0, %v3139
      %3141 = vdwg.mxu0
      %v3142 = vadd.f32 %v2955, %v3094
      %v3143 = vadd.f32 %v2956, %v3123
      %v3144 = vadd.f32 %v2957, %v3096
      %v3145 = vadd.f32 %v2958, %v3125
      %v3146 = vadd.f32 %v2959, %v3099
      %v3147 = vadd.f32 %v2960, %v3128
      %v3148 = vadd.f32 %v2961, %v3101
      %v3149 = vadd.f32 %v2962, %v3130
      %v3150 = vadd.f32 %v2963, %v3104
      %v3151 = vadd.f32 %v2964, %v3133
      %v3152 = vadd.f32 %v2965, %v3106
      %v3153 = vadd.f32 %v2966, %v3135
      %v3154 = vadd.f32 %v2967, %v3109
      %v3155 = vadd.f32 %v2968, %v3138
      %v3156 = vadd.f32 %v2969, %v3111
      %v3157 = vadd.f32 %v2970, %v3140
      %s3158 = scalar_lea.vmem %s6, 160
      %v3159 = vld [vmem:[%s3158] sm:$0xf]
      %v3160 = vld [vmem:[%s3158 + $0x4] sm:$0xf]
      %v3161 = vld [vmem:[%s3158 + $0x8] sm:$0xf]
      %v3162 = vld [vmem:[%s3158 + $0xc] sm:$0xf]
      %v3163 = vld [vmem:[%s3158 + $0x10] sm:$0xf]
      %v3164 = vld [vmem:[%s3158 + $0x14] sm:$0xf]
      %v3165 = vld [vmem:[%s3158 + $0x18] sm:$0xf]
      %v3166 = vld [vmem:[%s3158 + $0x1c] sm:$0xf]
      %3167 = vrot.lane.b32.xlu0 %v2304, 127
      %v3168 = vpop.permute.xlu0 %3167
      %3169 = vrot.lane.b32.xlu0 %v2306, 127
      %v3170 = vpop.permute.xlu0 %3169
      %3171 = vrot.lane.b32.xlu0 %v2308, 127
      %v3172 = vpop.permute.xlu0 %3171
      %3173 = vrot.lane.b32.xlu0 %v2310, 127
      %v3174 = vpop.permute.xlu0 %3173
      %3175 = vrot.lane.b32.xlu0 %v2312, 127
      %v3176 = vpop.permute.xlu0 %3175
      %3177 = vrot.lane.b32.xlu0 %v2314, 127
      %v3178 = vpop.permute.xlu0 %3177
      %3179 = vrot.lane.b32.xlu0 %v2316, 127
      %v3180 = vpop.permute.xlu0 %3179
      %3181 = vrot.lane.b32.xlu0 %v2318, 127
      %v3182 = vpop.permute.xlu0 %3181
      %3183 = vrot.lane.b32.xlu0 %v2305, 127
      %v3184 = vpop.permute.xlu0 %3183
      %3185 = vrot.lane.b32.xlu0 %v2307, 127
      %v3186 = vpop.permute.xlu0 %3185
      %3187 = vrot.lane.b32.xlu0 %v2309, 127
      %v3188 = vpop.permute.xlu0 %3187
      %3189 = vrot.lane.b32.xlu0 %v2311, 127
      %v3190 = vpop.permute.xlu0 %3189
      %3191 = vrot.lane.b32.xlu0 %v2313, 127
      %v3192 = vpop.permute.xlu0 %3191
      %3193 = vrot.lane.b32.xlu0 %v2315, 127
      %v3194 = vpop.permute.xlu0 %3193
      %3195 = vrot.lane.b32.xlu0 %v2317, 127
      %v3196 = vpop.permute.xlu0 %3195
      %3197 = vrot.lane.b32.xlu0 %v2319, 127
      %v3198 = vpop.permute.xlu0 %3197
      %v3199 = vsel %vm1521, %v3168, %v3184
      %v3200 = vsel %vm1521, %v3170, %v3186
      %v3201 = vsel %vm1521, %v3172, %v3188
      %v3202 = vsel %vm1521, %v3174, %v3190
      %v3203 = vsel %vm1521, %v3176, %v3192
      %v3204 = vsel %vm1521, %v3178, %v3194
      %v3205 = vsel %vm1521, %v3180, %v3196
      %v3206 = vsel %vm1521, %v3182, %v3198
      %v3207 = vsel %vm1521, %v3184, %v3168
      %v3208 = vsel %vm1521, %v3186, %v3170
      %v3209 = vsel %vm1521, %v3188, %v3172
      %v3210 = vsel %vm1521, %v3190, %v3174
      %v3211 = vsel %vm1521, %v3192, %v3176
      %v3212 = vsel %vm1521, %v3194, %v3178
      %v3213 = vsel %vm1521, %v3196, %v3180
      %v3214 = vsel %vm1521, %v3198, %v3182
      %v3215 = vmul.f32 %v3199, %v1538
      %v3216 = vmul.f32 %v3207, %v1539
      %v3217 = vmul.f32 %v3200, %v1538
      %v3218 = vmul.f32 %v3208, %v1539
      %v3219 = vmul.f32 %v3201, %v1538
      %v3220 = vmul.f32 %v3209, %v1539
      %v3221 = vmul.f32 %v3202, %v1538
      %v3222 = vmul.f32 %v3210, %v1539
      %v3223 = vmul.f32 %v3203, %v1538
      %v3224 = vmul.f32 %v3211, %v1539
      %v3225 = vmul.f32 %v3204, %v1538
      %v3226 = vmul.f32 %v3212, %v1539
      %v3227 = vmul.f32 %v3205, %v1538
      %v3228 = vmul.f32 %v3213, %v1539
      %v3229 = vmul.f32 %v3206, %v1538
      %v3230 = vmul.f32 %v3214, %v1539
      %v3231 = vpack.c.bf16 %v3217, %v3215
      %v3232 = vpack.c.bf16 %v3218, %v3216
      %v3233 = vpack.c.bf16 %v3221, %v3219
      %v3234 = vpack.c.bf16 %v3222, %v3220
      %v3235 = vpack.c.bf16 %v3225, %v3223
      %v3236 = vpack.c.bf16 %v3226, %v3224
      %v3237 = vpack.c.bf16 %v3229, %v3227
      %v3238 = vpack.c.bf16 %v3230, %v3228
      %v3247 = vunpack.c.l.b16 %v3159
      %v3248 = vunpack.c.l.b16 %v3160
      %v3249 = vunpack.c.l.b16 %v3161
      %v3250 = vunpack.c.l.b16 %v3162
      %v3251 = vunpack.c.l.b16 %v3163
      %v3252 = vunpack.c.l.b16 %v3164
      %v3253 = vunpack.c.l.b16 %v3165
      %v3254 = vunpack.c.l.b16 %v3166
      %v3255 = vpack.c.b16 %v3248, %v3247
      %v3256 = vpack.c.b16 %v3250, %v3249
      %v3257 = vpack.c.b16 %v3252, %v3251
      %v3258 = vpack.c.b16 %v3254, %v3253
      %v3260 = vsel %vm541, %v3255, 0
      %v3263 = vsel %vm541, %v3256, 0
      %v3266 = vsel %vm541, %v3257, 0
      %v3269 = vsel %vm541, %v3258, 0
      %3271 = vmatpush.bf16.msra.mxu0 0
      %3272 = vmatpush.bf16.msra.mxu0 0
      %3273 = vmatpush.bf16.msra.mxu0 0
      %3274 = vmatpush.bf16.msra.mxu0 0
      %3275 = vmatpush.bf16.msra.mxu0 %v3237
      %3276 = vmatpush.bf16.msra.mxu0 %v3235
      %3277 = vmatpush.bf16.msra.mxu0 %v3233
      %3278 = vmatpush.bf16.msra.mxu0 %v3231
      %3279 = vmatmul.bf16.gmra.mxu0 %v3260
      %v3280 = vpop.f32.mrf.mxu0
      %v3281 = vadd.f32 0.0, %v3280
      %v3282 = vpop.f32.mrf.mxu0
      %v3283 = vadd.f32 0.0, %v3282
      %3284 = vmatmul.bf16.gmra.mxu0 %v3263
      %v3285 = vpop.f32.mrf.mxu0
      %v3286 = vadd.f32 0.0, %v3285
      %v3287 = vpop.f32.mrf.mxu0
      %v3288 = vadd.f32 0.0, %v3287
      %3289 = vmatmul.bf16.gmra.mxu0 %v3266
      %v3290 = vpop.f32.mrf.mxu0
      %v3291 = vadd.f32 0.0, %v3290
      %v3292 = vpop.f32.mrf.mxu0
      %v3293 = vadd.f32 0.0, %v3292
      %3294 = vmatmul.bf16.gmra.mxu0 %v3269
      %v3295 = vpop.f32.mrf.mxu0
      %v3296 = vadd.f32 0.0, %v3295
      %v3297 = vpop.f32.mrf.mxu0
      %v3298 = vadd.f32 0.0, %v3297
      %3299 = vdwg.mxu0
      %3300 = vmatpush.bf16.msra.mxu0 0
      %3301 = vmatpush.bf16.msra.mxu0 0
      %3302 = vmatpush.bf16.msra.mxu0 0
      %3303 = vmatpush.bf16.msra.mxu0 0
      %3304 = vmatpush.bf16.msra.mxu0 %v3238
      %3305 = vmatpush.bf16.msra.mxu0 %v3236
      %3306 = vmatpush.bf16.msra.mxu0 %v3234
      %3307 = vmatpush.bf16.msra.mxu0 %v3232
      %3308 = vmatmul.bf16.gmra.mxu0 %v3260
      %v3309 = vpop.f32.mrf.mxu0
      %v3310 = vadd.f32 0.0, %v3309
      %v3311 = vpop.f32.mrf.mxu0
      %v3312 = vadd.f32 0.0, %v3311
      %3313 = vmatmul.bf16.gmra.mxu0 %v3263
      %v3314 = vpop.f32.mrf.mxu0
      %v3315 = vadd.f32 0.0, %v3314
      %v3316 = vpop.f32.mrf.mxu0
      %v3317 = vadd.f32 0.0, %v3316
      %3318 = vmatmul.bf16.gmra.mxu0 %v3266
      %v3319 = vpop.f32.mrf.mxu0
      %v3320 = vadd.f32 0.0, %v3319
      %v3321 = vpop.f32.mrf.mxu0
      %v3322 = vadd.f32 0.0, %v3321
      %3323 = vmatmul.bf16.gmra.mxu0 %v3269
      %v3324 = vpop.f32.mrf.mxu0
      %v3325 = vadd.f32 0.0, %v3324
      %v3326 = vpop.f32.mrf.mxu0
      %v3327 = vadd.f32 0.0, %v3326
      %3328 = vdwg.mxu0
      %v3329 = vadd.f32 %v3142, %v3281
      %v3330 = vadd.f32 %v3143, %v3310
      %v3331 = vadd.f32 %v3144, %v3283
      %v3332 = vadd.f32 %v3145, %v3312
      %v3333 = vadd.f32 %v3146, %v3286
      %v3334 = vadd.f32 %v3147, %v3315
      %v3335 = vadd.f32 %v3148, %v3288
      %v3336 = vadd.f32 %v3149, %v3317
      %v3337 = vadd.f32 %v3150, %v3291
      %v3338 = vadd.f32 %v3151, %v3320
      %v3339 = vadd.f32 %v3152, %v3293
      %v3340 = vadd.f32 %v3153, %v3322
      %v3341 = vadd.f32 %v3154, %v3296
      %v3342 = vadd.f32 %v3155, %v3325
      %v3343 = vadd.f32 %v3156, %v3298
      %v3344 = vadd.f32 %v3157, %v3327
      %s3345 = scalar_lea.vmem %s6, 192
      %v3346 = vld [vmem:[%s3345] sm:$0xf]
      %v3347 = vld [vmem:[%s3345 + $0x4] sm:$0xf]
      %v3348 = vld [vmem:[%s3345 + $0x8] sm:$0xf]
      %v3349 = vld [vmem:[%s3345 + $0xc] sm:$0xf]
      %v3350 = vld [vmem:[%s3345 + $0x10] sm:$0xf]
      %v3351 = vld [vmem:[%s3345 + $0x14] sm:$0xf]
      %v3352 = vld [vmem:[%s3345 + $0x18] sm:$0xf]
      %v3353 = vld [vmem:[%s3345 + $0x1c] sm:$0xf]
      %3354 = vrot.lane.b32.xlu0 %v2304, 113
      %v3355 = vpop.permute.xlu0 %3354
      %3356 = vrot.lane.b32.xlu0 %v2306, 113
      %v3357 = vpop.permute.xlu0 %3356
      %3358 = vrot.lane.b32.xlu0 %v2308, 113
      %v3359 = vpop.permute.xlu0 %3358
      %3360 = vrot.lane.b32.xlu0 %v2310, 113
      %v3361 = vpop.permute.xlu0 %3360
      %3362 = vrot.lane.b32.xlu0 %v2312, 113
      %v3363 = vpop.permute.xlu0 %3362
      %3364 = vrot.lane.b32.xlu0 %v2314, 113
      %v3365 = vpop.permute.xlu0 %3364
      %3366 = vrot.lane.b32.xlu0 %v2316, 113
      %v3367 = vpop.permute.xlu0 %3366
      %3368 = vrot.lane.b32.xlu0 %v2318, 113
      %v3369 = vpop.permute.xlu0 %3368
      %3370 = vrot.lane.b32.xlu0 %v2305, 113
      %v3371 = vpop.permute.xlu0 %3370
      %3372 = vrot.lane.b32.xlu0 %v2307, 113
      %v3373 = vpop.permute.xlu0 %3372
      %3374 = vrot.lane.b32.xlu0 %v2309, 113
      %v3375 = vpop.permute.xlu0 %3374
      %3376 = vrot.lane.b32.xlu0 %v2311, 113
      %v3377 = vpop.permute.xlu0 %3376
      %3378 = vrot.lane.b32.xlu0 %v2313, 113
      %v3379 = vpop.permute.xlu0 %3378
      %3380 = vrot.lane.b32.xlu0 %v2315, 113
      %v3381 = vpop.permute.xlu0 %3380
      %3382 = vrot.lane.b32.xlu0 %v2317, 113
      %v3383 = vpop.permute.xlu0 %3382
      %3384 = vrot.lane.b32.xlu0 %v2319, 113
      %v3385 = vpop.permute.xlu0 %3384
      %v3386 = vsel %vm1711, %v3355, %v3371
      %v3387 = vsel %vm1711, %v3357, %v3373
      %v3388 = vsel %vm1711, %v3359, %v3375
      %v3389 = vsel %vm1711, %v3361, %v3377
      %v3390 = vsel %vm1711, %v3363, %v3379
      %v3391 = vsel %vm1711, %v3365, %v3381
      %v3392 = vsel %vm1711, %v3367, %v3383
      %v3393 = vsel %vm1711, %v3369, %v3385
      %v3394 = vsel %vm1711, %v3371, %v3355
      %v3395 = vsel %vm1711, %v3373, %v3357
      %v3396 = vsel %vm1711, %v3375, %v3359
      %v3397 = vsel %vm1711, %v3377, %v3361
      %v3398 = vsel %vm1711, %v3379, %v3363
      %v3399 = vsel %vm1711, %v3381, %v3365
      %v3400 = vsel %vm1711, %v3383, %v3367
      %v3401 = vsel %vm1711, %v3385, %v3369
      %v3402 = vmul.f32 %v3386, %v1728
      %v3403 = vmul.f32 %v3394, %v1729
      %v3404 = vmul.f32 %v3387, %v1728
      %v3405 = vmul.f32 %v3395, %v1729
      %v3406 = vmul.f32 %v3388, %v1728
      %v3407 = vmul.f32 %v3396, %v1729
      %v3408 = vmul.f32 %v3389, %v1728
      %v3409 = vmul.f32 %v3397, %v1729
      %v3410 = vmul.f32 %v3390, %v1728
      %v3411 = vmul.f32 %v3398, %v1729
      %v3412 = vmul.f32 %v3391, %v1728
      %v3413 = vmul.f32 %v3399, %v1729
      %v3414 = vmul.f32 %v3392, %v1728
      %v3415 = vmul.f32 %v3400, %v1729
      %v3416 = vmul.f32 %v3393, %v1728
      %v3417 = vmul.f32 %v3401, %v1729
      %v3418 = vpack.c.bf16 %v3404, %v3402
      %v3419 = vpack.c.bf16 %v3405, %v3403
      %v3420 = vpack.c.bf16 %v3408, %v3406
      %v3421 = vpack.c.bf16 %v3409, %v3407
      %v3422 = vpack.c.bf16 %v3412, %v3410
      %v3423 = vpack.c.bf16 %v3413, %v3411
      %v3424 = vpack.c.bf16 %v3416, %v3414
      %v3425 = vpack.c.bf16 %v3417, %v3415
      %v3434 = vunpack.c.l.b16 %v3346
      %v3435 = vunpack.c.l.b16 %v3347
      %v3436 = vunpack.c.l.b16 %v3348
      %v3437 = vunpack.c.l.b16 %v3349
      %v3438 = vunpack.c.l.b16 %v3350
      %v3439 = vunpack.c.l.b16 %v3351
      %v3440 = vunpack.c.l.b16 %v3352
      %v3441 = vunpack.c.l.b16 %v3353
      %v3442 = vpack.c.b16 %v3435, %v3434
      %v3443 = vpack.c.b16 %v3437, %v3436
      %v3444 = vpack.c.b16 %v3439, %v3438
      %v3445 = vpack.c.b16 %v3441, %v3440
      %v3447 = vsel %vm541, %v3442, 0
      %v3450 = vsel %vm541, %v3443, 0
      %v3453 = vsel %vm541, %v3444, 0
      %v3456 = vsel %vm541, %v3445, 0
      %3458 = vmatpush.bf16.msra.mxu0 0
      %3459 = vmatpush.bf16.msra.mxu0 0
      %3460 = vmatpush.bf16.msra.mxu0 0
      %3461 = vmatpush.bf16.msra.mxu0 0
      %3462 = vmatpush.bf16.msra.mxu0 %v3424
      %3463 = vmatpush.bf16.msra.mxu0 %v3422
      %3464 = vmatpush.bf16.msra.mxu0 %v3420
      %3465 = vmatpush.bf16.msra.mxu0 %v3418
      %3466 = vmatmul.bf16.gmra.mxu0 %v3447
      %v3467 = vpop.f32.mrf.mxu0
      %v3468 = vadd.f32 0.0, %v3467
      %v3469 = vpop.f32.mrf.mxu0
      %v3470 = vadd.f32 0.0, %v3469
      %3471 = vmatmul.bf16.gmra.mxu0 %v3450
      %v3472 = vpop.f32.mrf.mxu0
      %v3473 = vadd.f32 0.0, %v3472
      %v3474 = vpop.f32.mrf.mxu0
      %v3475 = vadd.f32 0.0, %v3474
      %3476 = vmatmul.bf16.gmra.mxu0 %v3453
      %v3477 = vpop.f32.mrf.mxu0
      %v3478 = vadd.f32 0.0, %v3477
      %v3479 = vpop.f32.mrf.mxu0
      %v3480 = vadd.f32 0.0, %v3479
      %3481 = vmatmul.bf16.gmra.mxu0 %v3456
      %v3482 = vpop.f32.mrf.mxu0
      %v3483 = vadd.f32 0.0, %v3482
      %v3484 = vpop.f32.mrf.mxu0
      %v3485 = vadd.f32 0.0, %v3484
      %3486 = vdwg.mxu0
      %3487 = vmatpush.bf16.msra.mxu0 0
      %3488 = vmatpush.bf16.msra.mxu0 0
      %3489 = vmatpush.bf16.msra.mxu0 0
      %3490 = vmatpush.bf16.msra.mxu0 0
      %3491 = vmatpush.bf16.msra.mxu0 %v3425
      %3492 = vmatpush.bf16.msra.mxu0 %v3423
      %3493 = vmatpush.bf16.msra.mxu0 %v3421
      %3494 = vmatpush.bf16.msra.mxu0 %v3419
      %3495 = vmatmul.bf16.gmra.mxu0 %v3447
      %v3496 = vpop.f32.mrf.mxu0
      %v3497 = vadd.f32 0.0, %v3496
      %v3498 = vpop.f32.mrf.mxu0
      %v3499 = vadd.f32 0.0, %v3498
      %3500 = vmatmul.bf16.gmra.mxu0 %v3450
      %v3501 = vpop.f32.mrf.mxu0
      %v3502 = vadd.f32 0.0, %v3501
      %v3503 = vpop.f32.mrf.mxu0
      %v3504 = vadd.f32 0.0, %v3503
      %3505 = vmatmul.bf16.gmra.mxu0 %v3453
      %v3506 = vpop.f32.mrf.mxu0
      %v3507 = vadd.f32 0.0, %v3506
      %v3508 = vpop.f32.mrf.mxu0
      %v3509 = vadd.f32 0.0, %v3508
      %3510 = vmatmul.bf16.gmra.mxu0 %v3456
      %v3511 = vpop.f32.mrf.mxu0
      %v3512 = vadd.f32 0.0, %v3511
      %v3513 = vpop.f32.mrf.mxu0
      %v3514 = vadd.f32 0.0, %v3513
      %3515 = vdwg.mxu0
      %v3516 = vadd.f32 %v3329, %v3468
      %v3517 = vadd.f32 %v3330, %v3497
      %v3518 = vadd.f32 %v3331, %v3470
      %v3519 = vadd.f32 %v3332, %v3499
      %v3520 = vadd.f32 %v3333, %v3473
      %v3521 = vadd.f32 %v3334, %v3502
      %v3522 = vadd.f32 %v3335, %v3475
      %v3523 = vadd.f32 %v3336, %v3504
      %v3524 = vadd.f32 %v3337, %v3478
      %v3525 = vadd.f32 %v3338, %v3507
      %v3526 = vadd.f32 %v3339, %v3480
      %v3527 = vadd.f32 %v3340, %v3509
      %v3528 = vadd.f32 %v3341, %v3483
      %v3529 = vadd.f32 %v3342, %v3512
      %v3530 = vadd.f32 %v3343, %v3485
      %v3531 = vadd.f32 %v3344, %v3514
      %s3532 = scalar_lea.vmem %s6, 224
      %v3533 = vld [vmem:[%s3532] sm:$0xf]
      %v3534 = vld [vmem:[%s3532 + $0x4] sm:$0xf]
      %v3535 = vld [vmem:[%s3532 + $0x8] sm:$0xf]
      %v3536 = vld [vmem:[%s3532 + $0xc] sm:$0xf]
      %v3537 = vld [vmem:[%s3532 + $0x10] sm:$0xf]
      %v3538 = vld [vmem:[%s3532 + $0x14] sm:$0xf]
      %v3539 = vld [vmem:[%s3532 + $0x18] sm:$0xf]
      %v3540 = vld [vmem:[%s3532 + $0x1c] sm:$0xf]
      %3541 = vrot.lane.b32.xlu0 %v2304, 112
      %v3542 = vpop.permute.xlu0 %3541
      %3543 = vrot.lane.b32.xlu0 %v2306, 112
      %v3544 = vpop.permute.xlu0 %3543
      %3545 = vrot.lane.b32.xlu0 %v2308, 112
      %v3546 = vpop.permute.xlu0 %3545
      %3547 = vrot.lane.b32.xlu0 %v2310, 112
      %v3548 = vpop.permute.xlu0 %3547
      %3549 = vrot.lane.b32.xlu0 %v2312, 112
      %v3550 = vpop.permute.xlu0 %3549
      %3551 = vrot.lane.b32.xlu0 %v2314, 112
      %v3552 = vpop.permute.xlu0 %3551
      %3553 = vrot.lane.b32.xlu0 %v2316, 112
      %v3554 = vpop.permute.xlu0 %3553
      %3555 = vrot.lane.b32.xlu0 %v2318, 112
      %v3556 = vpop.permute.xlu0 %3555
      %3557 = vrot.lane.b32.xlu0 %v2305, 112
      %v3558 = vpop.permute.xlu0 %3557
      %3559 = vrot.lane.b32.xlu0 %v2307, 112
      %v3560 = vpop.permute.xlu0 %3559
      %3561 = vrot.lane.b32.xlu0 %v2309, 112
      %v3562 = vpop.permute.xlu0 %3561
      %3563 = vrot.lane.b32.xlu0 %v2311, 112
      %v3564 = vpop.permute.xlu0 %3563
      %3565 = vrot.lane.b32.xlu0 %v2313, 112
      %v3566 = vpop.permute.xlu0 %3565
      %3567 = vrot.lane.b32.xlu0 %v2315, 112
      %v3568 = vpop.permute.xlu0 %3567
      %3569 = vrot.lane.b32.xlu0 %v2317, 112
      %v3570 = vpop.permute.xlu0 %3569
      %3571 = vrot.lane.b32.xlu0 %v2319, 112
      %v3572 = vpop.permute.xlu0 %3571
      %v3573 = vsel %vm1901, %v3542, %v3558
      %v3574 = vsel %vm1901, %v3544, %v3560
      %v3575 = vsel %vm1901, %v3546, %v3562
      %v3576 = vsel %vm1901, %v3548, %v3564
      %v3577 = vsel %vm1901, %v3550, %v3566
      %v3578 = vsel %vm1901, %v3552, %v3568
      %v3579 = vsel %vm1901, %v3554, %v3570
      %v3580 = vsel %vm1901, %v3556, %v3572
      %v3581 = vsel %vm1901, %v3558, %v3542
      %v3582 = vsel %vm1901, %v3560, %v3544
      %v3583 = vsel %vm1901, %v3562, %v3546
      %v3584 = vsel %vm1901, %v3564, %v3548
      %v3585 = vsel %vm1901, %v3566, %v3550
      %v3586 = vsel %vm1901, %v3568, %v3552
      %v3587 = vsel %vm1901, %v3570, %v3554
      %v3588 = vsel %vm1901, %v3572, %v3556
      %v3589 = vmul.f32 %v3573, %v1918
      %v3590 = vmul.f32 %v3581, %v1919
      %v3591 = vmul.f32 %v3574, %v1918
      %v3592 = vmul.f32 %v3582, %v1919
      %v3593 = vmul.f32 %v3575, %v1918
      %v3594 = vmul.f32 %v3583, %v1919
      %v3595 = vmul.f32 %v3576, %v1918
      %v3596 = vmul.f32 %v3584, %v1919
      %v3597 = vmul.f32 %v3577, %v1918
      %v3598 = vmul.f32 %v3585, %v1919
      %v3599 = vmul.f32 %v3578, %v1918
      %v3600 = vmul.f32 %v3586, %v1919
      %v3601 = vmul.f32 %v3579, %v1918
      %v3602 = vmul.f32 %v3587, %v1919
      %v3603 = vmul.f32 %v3580, %v1918
      %v3604 = vmul.f32 %v3588, %v1919
      %v3605 = vpack.c.bf16 %v3591, %v3589
      %v3606 = vpack.c.bf16 %v3592, %v3590
      %v3607 = vpack.c.bf16 %v3595, %v3593
      %v3608 = vpack.c.bf16 %v3596, %v3594
      %v3609 = vpack.c.bf16 %v3599, %v3597
      %v3610 = vpack.c.bf16 %v3600, %v3598
      %v3611 = vpack.c.bf16 %v3603, %v3601
      %v3612 = vpack.c.bf16 %v3604, %v3602
      %v3621 = vunpack.c.l.b16 %v3533
      %v3622 = vunpack.c.l.b16 %v3534
      %v3623 = vunpack.c.l.b16 %v3535
      %v3624 = vunpack.c.l.b16 %v3536
      %v3625 = vunpack.c.l.b16 %v3537
      %v3626 = vunpack.c.l.b16 %v3538
      %v3627 = vunpack.c.l.b16 %v3539
      %v3628 = vunpack.c.l.b16 %v3540
      %v3629 = vpack.c.b16 %v3622, %v3621
      %v3630 = vpack.c.b16 %v3624, %v3623
      %v3631 = vpack.c.b16 %v3626, %v3625
      %v3632 = vpack.c.b16 %v3628, %v3627
      %v3634 = vsel %vm541, %v3629, 0
      %v3637 = vsel %vm541, %v3630, 0
      %v3640 = vsel %vm541, %v3631, 0
      %v3643 = vsel %vm541, %v3632, 0
      %3645 = vmatpush.bf16.msra.mxu0 0
      %3646 = vmatpush.bf16.msra.mxu0 0
      %3647 = vmatpush.bf16.msra.mxu0 0
      %3648 = vmatpush.bf16.msra.mxu0 0
      %3649 = vmatpush.bf16.msra.mxu0 %v3611
      %3650 = vmatpush.bf16.msra.mxu0 %v3609
      %3651 = vmatpush.bf16.msra.mxu0 %v3607
      %3652 = vmatpush.bf16.msra.mxu0 %v3605
      %3653 = vmatmul.bf16.gmra.mxu0 %v3634
      %v3654 = vpop.f32.mrf.mxu0
      %v3655 = vadd.f32 0.0, %v3654
      %v3656 = vpop.f32.mrf.mxu0
      %v3657 = vadd.f32 0.0, %v3656
      %3658 = vmatmul.bf16.gmra.mxu0 %v3637
      %v3659 = vpop.f32.mrf.mxu0
      %v3660 = vadd.f32 0.0, %v3659
      %v3661 = vpop.f32.mrf.mxu0
      %v3662 = vadd.f32 0.0, %v3661
      %3663 = vmatmul.bf16.gmra.mxu0 %v3640
      %v3664 = vpop.f32.mrf.mxu0
      %v3665 = vadd.f32 0.0, %v3664
      %v3666 = vpop.f32.mrf.mxu0
      %v3667 = vadd.f32 0.0, %v3666
      %3668 = vmatmul.bf16.gmra.mxu0 %v3643
      %v3669 = vpop.f32.mrf.mxu0
      %v3670 = vadd.f32 0.0, %v3669
      %v3671 = vpop.f32.mrf.mxu0
      %v3672 = vadd.f32 0.0, %v3671
      %3673 = vdwg.mxu0
      %3674 = vmatpush.bf16.msra.mxu0 0
      %3675 = vmatpush.bf16.msra.mxu0 0
      %3676 = vmatpush.bf16.msra.mxu0 0
      %3677 = vmatpush.bf16.msra.mxu0 0
      %3678 = vmatpush.bf16.msra.mxu0 %v3612
      %3679 = vmatpush.bf16.msra.mxu0 %v3610
      %3680 = vmatpush.bf16.msra.mxu0 %v3608
      %3681 = vmatpush.bf16.msra.mxu0 %v3606
      %3682 = vmatmul.bf16.gmra.mxu0 %v3634
      %v3683 = vpop.f32.mrf.mxu0
      %v3684 = vadd.f32 0.0, %v3683
      %v3685 = vpop.f32.mrf.mxu0
      %v3686 = vadd.f32 0.0, %v3685
      %3687 = vmatmul.bf16.gmra.mxu0 %v3637
      %v3688 = vpop.f32.mrf.mxu0
      %v3689 = vadd.f32 0.0, %v3688
      %v3690 = vpop.f32.mrf.mxu0
      %v3691 = vadd.f32 0.0, %v3690
      %3692 = vmatmul.bf16.gmra.mxu0 %v3640
      %v3693 = vpop.f32.mrf.mxu0
      %v3694 = vadd.f32 0.0, %v3693
      %v3695 = vpop.f32.mrf.mxu0
      %v3696 = vadd.f32 0.0, %v3695
      %3697 = vmatmul.bf16.gmra.mxu0 %v3643
      %v3698 = vpop.f32.mrf.mxu0
      %v3699 = vadd.f32 0.0, %v3698
      %v3700 = vpop.f32.mrf.mxu0
      %v3701 = vadd.f32 0.0, %v3700
      %3702 = vdwg.mxu0
      %v3703 = vadd.f32 %v3516, %v3655
      %v3704 = vadd.f32 %v3517, %v3684
      %v3705 = vadd.f32 %v3518, %v3657
      %v3706 = vadd.f32 %v3519, %v3686
      %v3707 = vadd.f32 %v3520, %v3660
      %v3708 = vadd.f32 %v3521, %v3689
      %v3709 = vadd.f32 %v3522, %v3662
      %v3710 = vadd.f32 %v3523, %v3691
      %v3711 = vadd.f32 %v3524, %v3665
      %v3712 = vadd.f32 %v3525, %v3694
      %v3713 = vadd.f32 %v3526, %v3667
      %v3714 = vadd.f32 %v3527, %v3696
      %v3715 = vadd.f32 %v3528, %v3670
      %v3716 = vadd.f32 %v3529, %v3699
      %v3717 = vadd.f32 %v3530, %v3672
      %v3718 = vadd.f32 %v3531, %v3701
      %s3719 = scalar_lea.vmem %s6, 256
      %v3720 = vld [vmem:[%s3719] sm:$0xf]
      %v3721 = vld [vmem:[%s3719 + $0x4] sm:$0xf]
      %v3722 = vld [vmem:[%s3719 + $0x8] sm:$0xf]
      %v3723 = vld [vmem:[%s3719 + $0xc] sm:$0xf]
      %v3724 = vld [vmem:[%s3719 + $0x10] sm:$0xf]
      %v3725 = vld [vmem:[%s3719 + $0x14] sm:$0xf]
      %v3726 = vld [vmem:[%s3719 + $0x18] sm:$0xf]
      %v3727 = vld [vmem:[%s3719 + $0x1c] sm:$0xf]
      %3728 = vrot.lane.b32.xlu0 %v2304, 111
      %v3729 = vpop.permute.xlu0 %3728
      %3730 = vrot.lane.b32.xlu0 %v2306, 111
      %v3731 = vpop.permute.xlu0 %3730
      %3732 = vrot.lane.b32.xlu0 %v2308, 111
      %v3733 = vpop.permute.xlu0 %3732
      %3734 = vrot.lane.b32.xlu0 %v2310, 111
      %v3735 = vpop.permute.xlu0 %3734
      %3736 = vrot.lane.b32.xlu0 %v2312, 111
      %v3737 = vpop.permute.xlu0 %3736
      %3738 = vrot.lane.b32.xlu0 %v2314, 111
      %v3739 = vpop.permute.xlu0 %3738
      %3740 = vrot.lane.b32.xlu0 %v2316, 111
      %v3741 = vpop.permute.xlu0 %3740
      %3742 = vrot.lane.b32.xlu0 %v2318, 111
      %v3743 = vpop.permute.xlu0 %3742
      %3744 = vrot.lane.b32.xlu0 %v2305, 111
      %v3745 = vpop.permute.xlu0 %3744
      %3746 = vrot.lane.b32.xlu0 %v2307, 111
      %v3747 = vpop.permute.xlu0 %3746
      %3748 = vrot.lane.b32.xlu0 %v2309, 111
      %v3749 = vpop.permute.xlu0 %3748
      %3750 = vrot.lane.b32.xlu0 %v2311, 111
      %v3751 = vpop.permute.xlu0 %3750
      %3752 = vrot.lane.b32.xlu0 %v2313, 111
      %v3753 = vpop.permute.xlu0 %3752
      %3754 = vrot.lane.b32.xlu0 %v2315, 111
      %v3755 = vpop.permute.xlu0 %3754
      %3756 = vrot.lane.b32.xlu0 %v2317, 111
      %v3757 = vpop.permute.xlu0 %3756
      %3758 = vrot.lane.b32.xlu0 %v2319, 111
      %v3759 = vpop.permute.xlu0 %3758
      %v3760 = vsel %vm2091, %v3729, %v3745
      %v3761 = vsel %vm2091, %v3731, %v3747
      %v3762 = vsel %vm2091, %v3733, %v3749
      %v3763 = vsel %vm2091, %v3735, %v3751
      %v3764 = vsel %vm2091, %v3737, %v3753
      %v3765 = vsel %vm2091, %v3739, %v3755
      %v3766 = vsel %vm2091, %v3741, %v3757
      %v3767 = vsel %vm2091, %v3743, %v3759
      %v3768 = vsel %vm2091, %v3745, %v3729
      %v3769 = vsel %vm2091, %v3747, %v3731
      %v3770 = vsel %vm2091, %v3749, %v3733
      %v3771 = vsel %vm2091, %v3751, %v3735
      %v3772 = vsel %vm2091, %v3753, %v3737
      %v3773 = vsel %vm2091, %v3755, %v3739
      %v3774 = vsel %vm2091, %v3757, %v3741
      %v3775 = vsel %vm2091, %v3759, %v3743
      %v3776 = vmul.f32 %v3760, %v2108
      %v3777 = vmul.f32 %v3768, %v2109
      %v3778 = vmul.f32 %v3761, %v2108
      %v3779 = vmul.f32 %v3769, %v2109
      %v3780 = vmul.f32 %v3762, %v2108
      %v3781 = vmul.f32 %v3770, %v2109
      %v3782 = vmul.f32 %v3763, %v2108
      %v3783 = vmul.f32 %v3771, %v2109
      %v3784 = vmul.f32 %v3764, %v2108
      %v3785 = vmul.f32 %v3772, %v2109
      %v3786 = vmul.f32 %v3765, %v2108
      %v3787 = vmul.f32 %v3773, %v2109
      %v3788 = vmul.f32 %v3766, %v2108
      %v3789 = vmul.f32 %v3774, %v2109
      %v3790 = vmul.f32 %v3767, %v2108
      %v3791 = vmul.f32 %v3775, %v2109
      %v3792 = vpack.c.bf16 %v3778, %v3776
      %v3793 = vpack.c.bf16 %v3779, %v3777
      %v3794 = vpack.c.bf16 %v3782, %v3780
      %v3795 = vpack.c.bf16 %v3783, %v3781
      %v3796 = vpack.c.bf16 %v3786, %v3784
      %v3797 = vpack.c.bf16 %v3787, %v3785
      %v3798 = vpack.c.bf16 %v3790, %v3788
      %v3799 = vpack.c.bf16 %v3791, %v3789
      %v3808 = vunpack.c.l.b16 %v3720
      %v3809 = vunpack.c.l.b16 %v3721
      %v3810 = vunpack.c.l.b16 %v3722
      %v3811 = vunpack.c.l.b16 %v3723
      %v3812 = vunpack.c.l.b16 %v3724
      %v3813 = vunpack.c.l.b16 %v3725
      %v3814 = vunpack.c.l.b16 %v3726
      %v3815 = vunpack.c.l.b16 %v3727
      %v3816 = vpack.c.b16 %v3809, %v3808
      %v3817 = vpack.c.b16 %v3811, %v3810
      %v3818 = vpack.c.b16 %v3813, %v3812
      %v3819 = vpack.c.b16 %v3815, %v3814
      %v3821 = vsel %vm541, %v3816, 0
      %v3824 = vsel %vm541, %v3817, 0
      %v3827 = vsel %vm541, %v3818, 0
      %v3830 = vsel %vm541, %v3819, 0
      %3832 = vmatpush.bf16.msra.mxu0 0
      %3833 = vmatpush.bf16.msra.mxu0 0
      %3834 = vmatpush.bf16.msra.mxu0 0
      %3835 = vmatpush.bf16.msra.mxu0 0
      %3836 = vmatpush.bf16.msra.mxu0 %v3798
      %3837 = vmatpush.bf16.msra.mxu0 %v3796
      %3838 = vmatpush.bf16.msra.mxu0 %v3794
      %3839 = vmatpush.bf16.msra.mxu0 %v3792
      %3840 = vmatmul.bf16.gmra.mxu0 %v3821
      %v3841 = vpop.f32.mrf.mxu0
      %v3842 = vadd.f32 0.0, %v3841
      %v3843 = vpop.f32.mrf.mxu0
      %v3844 = vadd.f32 0.0, %v3843
      %3845 = vmatmul.bf16.gmra.mxu0 %v3824
      %v3846 = vpop.f32.mrf.mxu0
      %v3847 = vadd.f32 0.0, %v3846
      %v3848 = vpop.f32.mrf.mxu0
      %v3849 = vadd.f32 0.0, %v3848
      %3850 = vmatmul.bf16.gmra.mxu0 %v3827
      %v3851 = vpop.f32.mrf.mxu0
      %v3852 = vadd.f32 0.0, %v3851
      %v3853 = vpop.f32.mrf.mxu0
      %v3854 = vadd.f32 0.0, %v3853
      %3855 = vmatmul.bf16.gmra.mxu0 %v3830
      %v3856 = vpop.f32.mrf.mxu0
      %v3857 = vadd.f32 0.0, %v3856
      %v3858 = vpop.f32.mrf.mxu0
      %v3859 = vadd.f32 0.0, %v3858
      %3860 = vdwg.mxu0
      %3861 = vmatpush.bf16.msra.mxu0 0
      %3862 = vmatpush.bf16.msra.mxu0 0
      %3863 = vmatpush.bf16.msra.mxu0 0
      %3864 = vmatpush.bf16.msra.mxu0 0
      %3865 = vmatpush.bf16.msra.mxu0 %v3799
      %3866 = vmatpush.bf16.msra.mxu0 %v3797
      %3867 = vmatpush.bf16.msra.mxu0 %v3795
      %3868 = vmatpush.bf16.msra.mxu0 %v3793
      %3869 = vmatmul.bf16.gmra.mxu0 %v3821
      %v3870 = vpop.f32.mrf.mxu0
      %v3871 = vadd.f32 0.0, %v3870
      %v3872 = vpop.f32.mrf.mxu0
      %v3873 = vadd.f32 0.0, %v3872
      %3874 = vmatmul.bf16.gmra.mxu0 %v3824
      %v3875 = vpop.f32.mrf.mxu0
      %v3876 = vadd.f32 0.0, %v3875
      %v3877 = vpop.f32.mrf.mxu0
      %v3878 = vadd.f32 0.0, %v3877
      %3879 = vmatmul.bf16.gmra.mxu0 %v3827
      %v3880 = vpop.f32.mrf.mxu0
      %v3881 = vadd.f32 0.0, %v3880
      %v3882 = vpop.f32.mrf.mxu0
      %v3883 = vadd.f32 0.0, %v3882
      %3884 = vmatmul.bf16.gmra.mxu0 %v3830
      %v3885 = vpop.f32.mrf.mxu0
      %v3886 = vadd.f32 0.0, %v3885
      %v3887 = vpop.f32.mrf.mxu0
      %v3888 = vadd.f32 0.0, %v3887
      %3889 = vdwg.mxu0
      %v3890 = vadd.f32 %v3703, %v3842
      %v3891 = vadd.f32 %v3704, %v3871
      %v3892 = vadd.f32 %v3705, %v3844
      %v3893 = vadd.f32 %v3706, %v3873
      %v3894 = vadd.f32 %v3707, %v3847
      %v3895 = vadd.f32 %v3708, %v3876
      %v3896 = vadd.f32 %v3709, %v3849
      %v3897 = vadd.f32 %v3710, %v3878
      %v3898 = vadd.f32 %v3711, %v3852
      %v3899 = vadd.f32 %v3712, %v3881
      %v3900 = vadd.f32 %v3713, %v3854
      %v3901 = vadd.f32 %v3714, %v3883
      %v3902 = vadd.f32 %v3715, %v3857
      %v3903 = vadd.f32 %v3716, %v3886
      %v3904 = vadd.f32 %v3717, %v3859
      %v3905 = vadd.f32 %v3718, %v3888
      %v3906 = vld [vmem:[%s7] sm:$0xff]
      %v3907 = vld [vmem:[%s7 + $0x8] sm:$0xff]
      %v3908 = vld [vmem:[%s7 + $0x10] sm:$0xff]
      %v3909 = vld [vmem:[%s7 + $0x18] sm:$0xff]
      %v3910 = vld [vmem:[%s7 + $0x20] sm:$0xff]
      %v3911 = vld [vmem:[%s7 + $0x28] sm:$0xff]
      %v3912 = vld [vmem:[%s7 + $0x30] sm:$0xff]
      %v3913 = vld [vmem:[%s7 + $0x38] sm:$0xff]
      %3915 = vset.pattern.permute.xlu0 0
      %3916 = vperm.xlu0 %3915, %v3906
      %v3917 = vpop.permute.xlu0 %3916
      %3920 = vset.pattern.permute.xlu0 0
      %3921 = vperm.xlu0 %3920, %v3907
      %v3922 = vpop.permute.xlu0 %3921
      %3925 = vset.pattern.permute.xlu0 0
      %3926 = vperm.xlu0 %3925, %v3908
      %v3927 = vpop.permute.xlu0 %3926
      %3930 = vset.pattern.permute.xlu0 0
      %3931 = vperm.xlu0 %3930, %v3909
      %v3932 = vpop.permute.xlu0 %3931
      %3935 = vset.pattern.permute.xlu0 0
      %3936 = vperm.xlu0 %3935, %v3910
      %v3937 = vpop.permute.xlu0 %3936
      %3940 = vset.pattern.permute.xlu0 0
      %3941 = vperm.xlu0 %3940, %v3911
      %v3942 = vpop.permute.xlu0 %3941
      %3945 = vset.pattern.permute.xlu0 0
      %3946 = vperm.xlu0 %3945, %v3912
      %v3947 = vpop.permute.xlu0 %3946
      %3950 = vset.pattern.permute.xlu0 0
      %3951 = vperm.xlu0 %3950, %v3913
      %v3952 = vpop.permute.xlu0 %3951
      %v3954 = vadd.f32 %v3890, %v3917
      %v3955 = vadd.f32 %v3891, %v3917
      %v3956 = vadd.f32 %v3892, %v3922
      %v3957 = vadd.f32 %v3893, %v3922
      %v3958 = vadd.f32 %v3894, %v3927
      %v3959 = vadd.f32 %v3895, %v3927
      %v3960 = vadd.f32 %v3896, %v3932
      %v3961 = vadd.f32 %v3897, %v3932
      %v3962 = vadd.f32 %v3898, %v3937
      %v3963 = vadd.f32 %v3899, %v3937
      %v3964 = vadd.f32 %v3900, %v3942
      %v3965 = vadd.f32 %v3901, %v3942
      %v3966 = vadd.f32 %v3902, %v3947
      %v3967 = vadd.f32 %v3903, %v3947
      %v3968 = vadd.f32 %v3904, %v3952
      %v3969 = vadd.f32 %v3905, %v3952
      %v3970 = vmax.f32 %v3954, 0.0
      %v3971 = vmax.f32 %v3955, 0.0
      %v3972 = vmax.f32 %v3956, 0.0
      %v3973 = vmax.f32 %v3957, 0.0
      %v3974 = vmax.f32 %v3958, 0.0
      %v3975 = vmax.f32 %v3959, 0.0
      %v3976 = vmax.f32 %v3960, 0.0
      %v3977 = vmax.f32 %v3961, 0.0
      %v3978 = vmax.f32 %v3962, 0.0
      %v3979 = vmax.f32 %v3963, 0.0
      %v3980 = vmax.f32 %v3964, 0.0
      %v3981 = vmax.f32 %v3965, 0.0
      %v3982 = vmax.f32 %v3966, 0.0
      %v3983 = vmax.f32 %v3967, 0.0
      %v3984 = vmax.f32 %v3968, 0.0
      %v3985 = vmax.f32 %v3969, 0.0
      %v3986 = vpack.c.bf16 %v3971, %v3970
      %v3987 = vpack.c.bf16 %v3973, %v3972
      %v3988 = vpack.c.bf16 %v3975, %v3974
      %v3989 = vpack.c.bf16 %v3977, %v3976
      %v3990 = vpack.c.bf16 %v3979, %v3978
      %v3991 = vpack.c.bf16 %v3981, %v3980
      %v3992 = vpack.c.bf16 %v3983, %v3982
      %v3993 = vpack.c.bf16 %v3985, %v3984
      %3994 = vrot.lane.b32.xlu0 %v3970, 127
      %v3995 = vpop.permute.xlu0 %3994
      %3996 = vrot.lane.b32.xlu0 %v3972, 127
      %v3997 = vpop.permute.xlu0 %3996
      %3998 = vrot.lane.b32.xlu0 %v3974, 127
      %v3999 = vpop.permute.xlu0 %3998
      %4000 = vrot.lane.b32.xlu0 %v3976, 127
      %v4001 = vpop.permute.xlu0 %4000
      %4002 = vrot.lane.b32.xlu0 %v3978, 127
      %v4003 = vpop.permute.xlu0 %4002
      %4004 = vrot.lane.b32.xlu0 %v3980, 127
      %v4005 = vpop.permute.xlu0 %4004
      %4006 = vrot.lane.b32.xlu0 %v3982, 127
      %v4007 = vpop.permute.xlu0 %4006
      %4008 = vrot.lane.b32.xlu0 %v3984, 127
      %v4009 = vpop.permute.xlu0 %4008
      %4010 = vrot.lane.b32.xlu0 %v3971, 127
      %v4011 = vpop.permute.xlu0 %4010
      %4012 = vrot.lane.b32.xlu0 %v3973, 127
      %v4013 = vpop.permute.xlu0 %4012
      %4014 = vrot.lane.b32.xlu0 %v3975, 127
      %v4015 = vpop.permute.xlu0 %4014
      %4016 = vrot.lane.b32.xlu0 %v3977, 127
      %v4017 = vpop.permute.xlu0 %4016
      %4018 = vrot.lane.b32.xlu0 %v3979, 127
      %v4019 = vpop.permute.xlu0 %4018
      %4020 = vrot.lane.b32.xlu0 %v3981, 127
      %v4021 = vpop.permute.xlu0 %4020
      %4022 = vrot.lane.b32.xlu0 %v3983, 127
      %v4023 = vpop.permute.xlu0 %4022
      %4024 = vrot.lane.b32.xlu0 %v3985, 127
      %v4025 = vpop.permute.xlu0 %4024
      %v4026 = vsel %vm1521, %v3995, %v4011
      %v4027 = vsel %vm1521, %v3997, %v4013
      %v4028 = vsel %vm1521, %v3999, %v4015
      %v4029 = vsel %vm1521, %v4001, %v4017
      %v4030 = vsel %vm1521, %v4003, %v4019
      %v4031 = vsel %vm1521, %v4005, %v4021
      %v4032 = vsel %vm1521, %v4007, %v4023
      %v4033 = vsel %vm1521, %v4009, %v4025
      %v4034 = vsel %vm1521, %v4011, %v3995
      %v4035 = vsel %vm1521, %v4013, %v3997
      %v4036 = vsel %vm1521, %v4015, %v3999
      %v4037 = vsel %vm1521, %v4017, %v4001
      %v4038 = vsel %vm1521, %v4019, %v4003
      %v4039 = vsel %vm1521, %v4021, %v4005
      %v4040 = vsel %vm1521, %v4023, %v4007
      %v4041 = vsel %vm1521, %v4025, %v4009
      %v4042 = vmul.f32 %v4026, %v1538
      %v4043 = vmul.f32 %v4034, %v1539
      %v4044 = vmul.f32 %v4027, %v1538
      %v4045 = vmul.f32 %v4035, %v1539
      %v4046 = vmul.f32 %v4028, %v1538
      %v4047 = vmul.f32 %v4036, %v1539
      %v4048 = vmul.f32 %v4029, %v1538
      %v4049 = vmul.f32 %v4037, %v1539
      %v4050 = vmul.f32 %v4030, %v1538
      %v4051 = vmul.f32 %v4038, %v1539
      %v4052 = vmul.f32 %v4031, %v1538
      %v4053 = vmul.f32 %v4039, %v1539
      %v4054 = vmul.f32 %v4032, %v1538
      %v4055 = vmul.f32 %v4040, %v1539
      %v4056 = vmul.f32 %v4033, %v1538
      %v4057 = vmul.f32 %v4041, %v1539
      %v4058 = vpack.c.bf16 %v4043, %v4042
      %v4059 = vpack.c.bf16 %v4045, %v4044
      %v4060 = vpack.c.bf16 %v4047, %v4046
      %v4061 = vpack.c.bf16 %v4049, %v4048
      %v4062 = vpack.c.bf16 %v4051, %v4050
      %v4063 = vpack.c.bf16 %v4053, %v4052
      %v4064 = vpack.c.bf16 %v4055, %v4054
      %v4065 = vpack.c.bf16 %v4057, %v4056
      %4066 = vrot.lane.b32.xlu0 %v3970, 112
      %v4067 = vpop.permute.xlu0 %4066
      %4068 = vrot.lane.b32.xlu0 %v3972, 112
      %v4069 = vpop.permute.xlu0 %4068
      %4070 = vrot.lane.b32.xlu0 %v3974, 112
      %v4071 = vpop.permute.xlu0 %4070
      %4072 = vrot.lane.b32.xlu0 %v3976, 112
      %v4073 = vpop.permute.xlu0 %4072
      %4074 = vrot.lane.b32.xlu0 %v3978, 112
      %v4075 = vpop.permute.xlu0 %4074
      %4076 = vrot.lane.b32.xlu0 %v3980, 112
      %v4077 = vpop.permute.xlu0 %4076
      %4078 = vrot.lane.b32.xlu0 %v3982, 112
      %v4079 = vpop.permute.xlu0 %4078
      %4080 = vrot.lane.b32.xlu0 %v3984, 112
      %v4081 = vpop.permute.xlu0 %4080
      %4082 = vrot.lane.b32.xlu0 %v3971, 112
      %v4083 = vpop.permute.xlu0 %4082
      %4084 = vrot.lane.b32.xlu0 %v3973, 112
      %v4085 = vpop.permute.xlu0 %4084
      %4086 = vrot.lane.b32.xlu0 %v3975, 112
      %v4087 = vpop.permute.xlu0 %4086
      %4088 = vrot.lane.b32.xlu0 %v3977, 112
      %v4089 = vpop.permute.xlu0 %4088
      %4090 = vrot.lane.b32.xlu0 %v3979, 112
      %v4091 = vpop.permute.xlu0 %4090
      %4092 = vrot.lane.b32.xlu0 %v3981, 112
      %v4093 = vpop.permute.xlu0 %4092
      %4094 = vrot.lane.b32.xlu0 %v3983, 112
      %v4095 = vpop.permute.xlu0 %4094
      %4096 = vrot.lane.b32.xlu0 %v3985, 112
      %v4097 = vpop.permute.xlu0 %4096
      %v4098 = vsel %vm1901, %v4067, %v4083
      %v4099 = vsel %vm1901, %v4069, %v4085
      %v4100 = vsel %vm1901, %v4071, %v4087
      %v4101 = vsel %vm1901, %v4073, %v4089
      %v4102 = vsel %vm1901, %v4075, %v4091
      %v4103 = vsel %vm1901, %v4077, %v4093
      %v4104 = vsel %vm1901, %v4079, %v4095
      %v4105 = vsel %vm1901, %v4081, %v4097
      %v4106 = vsel %vm1901, %v4083, %v4067
      %v4107 = vsel %vm1901, %v4085, %v4069
      %v4108 = vsel %vm1901, %v4087, %v4071
      %v4109 = vsel %vm1901, %v4089, %v4073
      %v4110 = vsel %vm1901, %v4091, %v4075
      %v4111 = vsel %vm1901, %v4093, %v4077
      %v4112 = vsel %vm1901, %v4095, %v4079
      %v4113 = vsel %vm1901, %v4097, %v4081
      %v4114 = vmul.f32 %v4098, %v1918
      %v4115 = vmul.f32 %v4106, %v1919
      %v4116 = vmul.f32 %v4099, %v1918
      %v4117 = vmul.f32 %v4107, %v1919
      %v4118 = vmul.f32 %v4100, %v1918
      %v4119 = vmul.f32 %v4108, %v1919
      %v4120 = vmul.f32 %v4101, %v1918
      %v4121 = vmul.f32 %v4109, %v1919
      %v4122 = vmul.f32 %v4102, %v1918
      %v4123 = vmul.f32 %v4110, %v1919
      %v4124 = vmul.f32 %v4103, %v1918
      %v4125 = vmul.f32 %v4111, %v1919
      %v4126 = vmul.f32 %v4104, %v1918
      %v4127 = vmul.f32 %v4112, %v1919
      %v4128 = vmul.f32 %v4105, %v1918
      %v4129 = vmul.f32 %v4113, %v1919
      %v4130 = vpack.c.bf16 %v4115, %v4114
      %v4131 = vpack.c.bf16 %v4117, %v4116
      %v4132 = vpack.c.bf16 %v4119, %v4118
      %v4133 = vpack.c.bf16 %v4121, %v4120
      %v4134 = vpack.c.bf16 %v4123, %v4122
      %v4135 = vpack.c.bf16 %v4125, %v4124
      %v4136 = vpack.c.bf16 %v4127, %v4126
      %v4137 = vpack.c.bf16 %v4129, %v4128
      %4138 = vrot.lane.b32.xlu0 %v3970, 111
      %v4139 = vpop.permute.xlu0 %4138
      %4140 = vrot.lane.b32.xlu0 %v3972, 111
      %v4141 = vpop.permute.xlu0 %4140
      %4142 = vrot.lane.b32.xlu0 %v3974, 111
      %v4143 = vpop.permute.xlu0 %4142
      %4144 = vrot.lane.b32.xlu0 %v3976, 111
      %v4145 = vpop.permute.xlu0 %4144
      %4146 = vrot.lane.b32.xlu0 %v3978, 111
      %v4147 = vpop.permute.xlu0 %4146
      %4148 = vrot.lane.b32.xlu0 %v3980, 111
      %v4149 = vpop.permute.xlu0 %4148
      %4150 = vrot.lane.b32.xlu0 %v3982, 111
      %v4151 = vpop.permute.xlu0 %4150
      %4152 = vrot.lane.b32.xlu0 %v3984, 111
      %v4153 = vpop.permute.xlu0 %4152
      %4154 = vrot.lane.b32.xlu0 %v3971, 111
      %v4155 = vpop.permute.xlu0 %4154
      %4156 = vrot.lane.b32.xlu0 %v3973, 111
      %v4157 = vpop.permute.xlu0 %4156
      %4158 = vrot.lane.b32.xlu0 %v3975, 111
      %v4159 = vpop.permute.xlu0 %4158
      %4160 = vrot.lane.b32.xlu0 %v3977, 111
      %v4161 = vpop.permute.xlu0 %4160
      %4162 = vrot.lane.b32.xlu0 %v3979, 111
      %v4163 = vpop.permute.xlu0 %4162
      %4164 = vrot.lane.b32.xlu0 %v3981, 111
      %v4165 = vpop.permute.xlu0 %4164
      %4166 = vrot.lane.b32.xlu0 %v3983, 111
      %v4167 = vpop.permute.xlu0 %4166
      %4168 = vrot.lane.b32.xlu0 %v3985, 111
      %v4169 = vpop.permute.xlu0 %4168
      %v4170 = vsel %vm2091, %v4139, %v4155
      %v4171 = vsel %vm2091, %v4141, %v4157
      %v4172 = vsel %vm2091, %v4143, %v4159
      %v4173 = vsel %vm2091, %v4145, %v4161
      %v4174 = vsel %vm2091, %v4147, %v4163
      %v4175 = vsel %vm2091, %v4149, %v4165
      %v4176 = vsel %vm2091, %v4151, %v4167
      %v4177 = vsel %vm2091, %v4153, %v4169
      %v4178 = vsel %vm2091, %v4155, %v4139
      %v4179 = vsel %vm2091, %v4157, %v4141
      %v4180 = vsel %vm2091, %v4159, %v4143
      %v4181 = vsel %vm2091, %v4161, %v4145
      %v4182 = vsel %vm2091, %v4163, %v4147
      %v4183 = vsel %vm2091, %v4165, %v4149
      %v4184 = vsel %vm2091, %v4167, %v4151
      %v4185 = vsel %vm2091, %v4169, %v4153
      %v4186 = vmul.f32 %v4170, %v2108
      %v4187 = vmul.f32 %v4178, %v2109
      %v4188 = vmul.f32 %v4171, %v2108
      %v4189 = vmul.f32 %v4179, %v2109
      %v4190 = vmul.f32 %v4172, %v2108
      %v4191 = vmul.f32 %v4180, %v2109
      %v4192 = vmul.f32 %v4173, %v2108
      %v4193 = vmul.f32 %v4181, %v2109
      %v4194 = vmul.f32 %v4174, %v2108
      %v4195 = vmul.f32 %v4182, %v2109
      %v4196 = vmul.f32 %v4175, %v2108
      %v4197 = vmul.f32 %v4183, %v2109
      %v4198 = vmul.f32 %v4176, %v2108
      %v4199 = vmul.f32 %v4184, %v2109
      %v4200 = vmul.f32 %v4177, %v2108
      %v4201 = vmul.f32 %v4185, %v2109
      %v4202 = vpack.c.bf16 %v4187, %v4186
      %v4203 = vpack.c.bf16 %v4189, %v4188
      %v4204 = vpack.c.bf16 %v4191, %v4190
      %v4205 = vpack.c.bf16 %v4193, %v4192
      %v4206 = vpack.c.bf16 %v4195, %v4194
      %v4207 = vpack.c.bf16 %v4197, %v4196
      %v4208 = vpack.c.bf16 %v4199, %v4198
      %v4209 = vpack.c.bf16 %v4201, %v4200
      %v4218 = vunpack.c.l.b16 %v3986
      %v4219 = vunpack.c.h.b16 %v3986
      %v4220 = vunpack.c.l.b16 %v3987
      %v4221 = vunpack.c.h.b16 %v3987
      %v4222 = vunpack.c.l.b16 %v3988
      %v4223 = vunpack.c.h.b16 %v3988
      %v4224 = vunpack.c.l.b16 %v3989
      %v4225 = vunpack.c.h.b16 %v3989
      %v4226 = vunpack.c.l.b16 %v3990
      %v4227 = vunpack.c.h.b16 %v3990
      %v4228 = vunpack.c.l.b16 %v3991
      %v4229 = vunpack.c.h.b16 %v3991
      %v4230 = vunpack.c.l.b16 %v3992
      %v4231 = vunpack.c.h.b16 %v3992
      %v4232 = vunpack.c.l.b16 %v3993
      %v4233 = vunpack.c.h.b16 %v3993
      %v4234 = vpack.c.b16 %v4220, %v4218
      %v4235 = vpack.c.b16 %v4221, %v4219
      %v4236 = vpack.c.b16 %v4224, %v4222
      %v4237 = vpack.c.b16 %v4225, %v4223
      %v4238 = vpack.c.b16 %v4228, %v4226
      %v4239 = vpack.c.b16 %v4229, %v4227
      %v4240 = vpack.c.b16 %v4232, %v4230
      %v4241 = vpack.c.b16 %v4233, %v4231
      %v4258 = vunpack.c.l.b16 %v4058
      %v4259 = vunpack.c.h.b16 %v4058
      %v4260 = vunpack.c.l.b16 %v4059
      %v4261 = vunpack.c.h.b16 %v4059
      %v4262 = vunpack.c.l.b16 %v4060
      %v4263 = vunpack.c.h.b16 %v4060
      %v4264 = vunpack.c.l.b16 %v4061
      %v4265 = vunpack.c.h.b16 %v4061
      %v4266 = vunpack.c.l.b16 %v4062
      %v4267 = vunpack.c.h.b16 %v4062
      %v4268 = vunpack.c.l.b16 %v4063
      %v4269 = vunpack.c.h.b16 %v4063
      %v4270 = vunpack.c.l.b16 %v4064
      %v4271 = vunpack.c.h.b16 %v4064
      %v4272 = vunpack.c.l.b16 %v4065
      %v4273 = vunpack.c.h.b16 %v4065
      %v4274 = vpack.c.b16 %v4260, %v4258
      %v4275 = vpack.c.b16 %v4261, %v4259
      %v4276 = vpack.c.b16 %v4264, %v4262
      %v4277 = vpack.c.b16 %v4265, %v4263
      %v4278 = vpack.c.b16 %v4268, %v4266
      %v4279 = vpack.c.b16 %v4269, %v4267
      %v4280 = vpack.c.b16 %v4272, %v4270
      %v4281 = vpack.c.b16 %v4273, %v4271
      %v4298 = vunpack.c.l.b16 %v4130
      %v4299 = vunpack.c.h.b16 %v4130
      %v4300 = vunpack.c.l.b16 %v4131
      %v4301 = vunpack.c.h.b16 %v4131
      %v4302 = vunpack.c.l.b16 %v4132
      %v4303 = vunpack.c.h.b16 %v4132
      %v4304 = vunpack.c.l.b16 %v4133
      %v4305 = vunpack.c.h.b16 %v4133
      %v4306 = vunpack.c.l.b16 %v4134
      %v4307 = vunpack.c.h.b16 %v4134
      %v4308 = vunpack.c.l.b16 %v4135
      %v4309 = vunpack.c.h.b16 %v4135
      %v4310 = vunpack.c.l.b16 %v4136
      %v4311 = vunpack.c.h.b16 %v4136
      %v4312 = vunpack.c.l.b16 %v4137
      %v4313 = vunpack.c.h.b16 %v4137
      %v4314 = vpack.c.b16 %v4300, %v4298
      %v4315 = vpack.c.b16 %v4301, %v4299
      %v4316 = vpack.c.b16 %v4304, %v4302
      %v4317 = vpack.c.b16 %v4305, %v4303
      %v4318 = vpack.c.b16 %v4308, %v4306
      %v4319 = vpack.c.b16 %v4309, %v4307
      %v4320 = vpack.c.b16 %v4312, %v4310
      %v4321 = vpack.c.b16 %v4313, %v4311
      %v4338 = vunpack.c.l.b16 %v4202
      %v4339 = vunpack.c.h.b16 %v4202
      %v4340 = vunpack.c.l.b16 %v4203
      %v4341 = vunpack.c.h.b16 %v4203
      %v4342 = vunpack.c.l.b16 %v4204
      %v4343 = vunpack.c.h.b16 %v4204
      %v4344 = vunpack.c.l.b16 %v4205
      %v4345 = vunpack.c.h.b16 %v4205
      %v4346 = vunpack.c.l.b16 %v4206
      %v4347 = vunpack.c.h.b16 %v4206
      %v4348 = vunpack.c.l.b16 %v4207
      %v4349 = vunpack.c.h.b16 %v4207
      %v4350 = vunpack.c.l.b16 %v4208
      %v4351 = vunpack.c.h.b16 %v4208
      %v4352 = vunpack.c.l.b16 %v4209
      %v4353 = vunpack.c.h.b16 %v4209
      %v4354 = vpack.c.b16 %v4340, %v4338
      %v4355 = vpack.c.b16 %v4341, %v4339
      %v4356 = vpack.c.b16 %v4344, %v4342
      %v4357 = vpack.c.b16 %v4345, %v4343
      %v4358 = vpack.c.b16 %v4348, %v4346
      %v4359 = vpack.c.b16 %v4349, %v4347
      %v4360 = vpack.c.b16 %v4352, %v4350
      %v4361 = vpack.c.b16 %v4353, %v4351
      %v4370 = vld [vmem:[%s8] sm:$0xff]
      %v4371 = vld [vmem:[%s8 + $0x8] sm:$0xff]
      %v4372 = vld [vmem:[%s8 + $0x10] sm:$0xff]
      %v4373 = vld [vmem:[%s8 + $0x18] sm:$0xff]
      %v4374 = vld [vmem:[%s8 + $0x20] sm:$0xff]
      %v4375 = vld [vmem:[%s8 + $0x28] sm:$0xff]
      %v4376 = vld [vmem:[%s8 + $0x30] sm:$0xff]
      %v4377 = vld [vmem:[%s8 + $0x38] sm:$0xff]
      %v4378 = vld [vmem:[%s8 + $0x40] sm:$0xff]
      %v4379 = vld [vmem:[%s8 + $0x48] sm:$0xff]
      %v4380 = vld [vmem:[%s8 + $0x50] sm:$0xff]
      %v4381 = vld [vmem:[%s8 + $0x58] sm:$0xff]
      %v4382 = vld [vmem:[%s8 + $0x60] sm:$0xff]
      %v4383 = vld [vmem:[%s8 + $0x68] sm:$0xff]
      %v4384 = vld [vmem:[%s8 + $0x70] sm:$0xff]
      %v4385 = vld [vmem:[%s8 + $0x78] sm:$0xff]
      %v4386 = vld [vmem:[%s8 + $0x80] sm:$0xff]
      %v4387 = vld [vmem:[%s8 + $0x88] sm:$0xff]
      %v4388 = vld [vmem:[%s8 + $0x90] sm:$0xff]
      %v4389 = vld [vmem:[%s8 + $0x98] sm:$0xff]
      %v4390 = vld [vmem:[%s8 + $0xa0] sm:$0xff]
      %v4391 = vld [vmem:[%s8 + $0xa8] sm:$0xff]
      %v4392 = vld [vmem:[%s8 + $0xb0] sm:$0xff]
      %v4393 = vld [vmem:[%s8 + $0xb8] sm:$0xff]
      %v4394 = vld [vmem:[%s8 + $0xc0] sm:$0xff]
      %v4395 = vld [vmem:[%s8 + $0xc8] sm:$0xff]
      %v4396 = vld [vmem:[%s8 + $0xd0] sm:$0xff]
      %v4397 = vld [vmem:[%s8 + $0xd8] sm:$0xff]
      %v4398 = vld [vmem:[%s8 + $0xe0] sm:$0xff]
      %v4399 = vld [vmem:[%s8 + $0xe8] sm:$0xff]
      %v4400 = vld [vmem:[%s8 + $0xf0] sm:$0xff]
      %v4401 = vld [vmem:[%s8 + $0xf8] sm:$0xff]
      %v4402 = vld [vmem:[%s9] sm:$0xff]
      %v4403 = vld [vmem:[%s9 + $0x8] sm:$0xff]
      %v4404 = vld [vmem:[%s9 + $0x10] sm:$0xff]
      %v4405 = vld [vmem:[%s9 + $0x18] sm:$0xff]
      %v4406 = vld [vmem:[%s9 + $0x20] sm:$0xff]
      %v4407 = vld [vmem:[%s9 + $0x28] sm:$0xff]
      %v4408 = vld [vmem:[%s9 + $0x30] sm:$0xff]
      %v4409 = vld [vmem:[%s9 + $0x38] sm:$0xff]
      %v4410 = vld [vmem:[%s9 + $0x40] sm:$0xff]
      %v4411 = vld [vmem:[%s9 + $0x48] sm:$0xff]
      %v4412 = vld [vmem:[%s9 + $0x50] sm:$0xff]
      %v4413 = vld [vmem:[%s9 + $0x58] sm:$0xff]
      %v4414 = vld [vmem:[%s9 + $0x60] sm:$0xff]
      %v4415 = vld [vmem:[%s9 + $0x68] sm:$0xff]
      %v4416 = vld [vmem:[%s9 + $0x70] sm:$0xff]
      %v4417 = vld [vmem:[%s9 + $0x78] sm:$0xff]
      %v4418 = vld [vmem:[%s9 + $0x80] sm:$0xff]
      %v4419 = vld [vmem:[%s9 + $0x88] sm:$0xff]
      %v4420 = vld [vmem:[%s9 + $0x90] sm:$0xff]
      %v4421 = vld [vmem:[%s9 + $0x98] sm:$0xff]
      %v4422 = vld [vmem:[%s9 + $0xa0] sm:$0xff]
      %v4423 = vld [vmem:[%s9 + $0xa8] sm:$0xff]
      %v4424 = vld [vmem:[%s9 + $0xb0] sm:$0xff]
      %v4425 = vld [vmem:[%s9 + $0xb8] sm:$0xff]
      %v4426 = vld [vmem:[%s9 + $0xc0] sm:$0xff]
      %v4427 = vld [vmem:[%s9 + $0xc8] sm:$0xff]
      %v4428 = vld [vmem:[%s9 + $0xd0] sm:$0xff]
      %v4429 = vld [vmem:[%s9 + $0xd8] sm:$0xff]
      %v4430 = vld [vmem:[%s9 + $0xe0] sm:$0xff]
      %v4431 = vld [vmem:[%s9 + $0xe8] sm:$0xff]
      %v4432 = vld [vmem:[%s9 + $0xf0] sm:$0xff]
      %v4433 = vld [vmem:[%s9 + $0xf8] sm:$0xff]
      %4435 = vset.pattern.permute.xlu0 0
      %4436 = vperm.xlu0 %4435, %v4402
      %v4437 = vpop.permute.xlu0 %4436
      %4440 = vset.pattern.permute.xlu0 0
      %4441 = vperm.xlu0 %4440, %v4403
      %v4442 = vpop.permute.xlu0 %4441
      %4445 = vset.pattern.permute.xlu0 0
      %4446 = vperm.xlu0 %4445, %v4404
      %v4447 = vpop.permute.xlu0 %4446
      %4450 = vset.pattern.permute.xlu0 0
      %4451 = vperm.xlu0 %4450, %v4405
      %v4452 = vpop.permute.xlu0 %4451
      %4455 = vset.pattern.permute.xlu0 0
      %4456 = vperm.xlu0 %4455, %v4406
      %v4457 = vpop.permute.xlu0 %4456
      %4460 = vset.pattern.permute.xlu0 0
      %4461 = vperm.xlu0 %4460, %v4407
      %v4462 = vpop.permute.xlu0 %4461
      %4465 = vset.pattern.permute.xlu0 0
      %4466 = vperm.xlu0 %4465, %v4408
      %v4467 = vpop.permute.xlu0 %4466
      %4470 = vset.pattern.permute.xlu0 0
      %4471 = vperm.xlu0 %4470, %v4409
      %v4472 = vpop.permute.xlu0 %4471
      %4475 = vset.pattern.permute.xlu0 0
      %4476 = vperm.xlu0 %4475, %v4410
      %v4477 = vpop.permute.xlu0 %4476
      %4480 = vset.pattern.permute.xlu0 0
      %4481 = vperm.xlu0 %4480, %v4411
      %v4482 = vpop.permute.xlu0 %4481
      %4485 = vset.pattern.permute.xlu0 0
      %4486 = vperm.xlu0 %4485, %v4412
      %v4487 = vpop.permute.xlu0 %4486
      %4490 = vset.pattern.permute.xlu0 0
      %4491 = vperm.xlu0 %4490, %v4413
      %v4492 = vpop.permute.xlu0 %4491
      %4495 = vset.pattern.permute.xlu0 0
      %4496 = vperm.xlu0 %4495, %v4414
      %v4497 = vpop.permute.xlu0 %4496
      %4500 = vset.pattern.permute.xlu0 0
      %4501 = vperm.xlu0 %4500, %v4415
      %v4502 = vpop.permute.xlu0 %4501
      %4505 = vset.pattern.permute.xlu0 0
      %4506 = vperm.xlu0 %4505, %v4416
      %v4507 = vpop.permute.xlu0 %4506
      %4510 = vset.pattern.permute.xlu0 0
      %4511 = vperm.xlu0 %4510, %v4417
      %v4512 = vpop.permute.xlu0 %4511
      %4515 = vset.pattern.permute.xlu0 0
      %4516 = vperm.xlu0 %4515, %v4418
      %v4517 = vpop.permute.xlu0 %4516
      %4520 = vset.pattern.permute.xlu0 0
      %4521 = vperm.xlu0 %4520, %v4419
      %v4522 = vpop.permute.xlu0 %4521
      %4525 = vset.pattern.permute.xlu0 0
      %4526 = vperm.xlu0 %4525, %v4420
      %v4527 = vpop.permute.xlu0 %4526
      %4530 = vset.pattern.permute.xlu0 0
      %4531 = vperm.xlu0 %4530, %v4421
      %v4532 = vpop.permute.xlu0 %4531
      %4535 = vset.pattern.permute.xlu0 0
      %4536 = vperm.xlu0 %4535, %v4422
      %v4537 = vpop.permute.xlu0 %4536
      %4540 = vset.pattern.permute.xlu0 0
      %4541 = vperm.xlu0 %4540, %v4423
      %v4542 = vpop.permute.xlu0 %4541
      %4545 = vset.pattern.permute.xlu0 0
      %4546 = vperm.xlu0 %4545, %v4424
      %v4547 = vpop.permute.xlu0 %4546
      %4550 = vset.pattern.permute.xlu0 0
      %4551 = vperm.xlu0 %4550, %v4425
      %v4552 = vpop.permute.xlu0 %4551
      %4555 = vset.pattern.permute.xlu0 0
      %4556 = vperm.xlu0 %4555, %v4426
      %v4557 = vpop.permute.xlu0 %4556
      %4560 = vset.pattern.permute.xlu0 0
      %4561 = vperm.xlu0 %4560, %v4427
      %v4562 = vpop.permute.xlu0 %4561
      %4565 = vset.pattern.permute.xlu0 0
      %4566 = vperm.xlu0 %4565, %v4428
      %v4567 = vpop.permute.xlu0 %4566
      %4570 = vset.pattern.permute.xlu0 0
      %4571 = vperm.xlu0 %4570, %v4429
      %v4572 = vpop.permute.xlu0 %4571
      %4575 = vset.pattern.permute.xlu0 0
      %4576 = vperm.xlu0 %4575, %v4430
      %v4577 = vpop.permute.xlu0 %4576
      %4580 = vset.pattern.permute.xlu0 0
      %4581 = vperm.xlu0 %4580, %v4431
      %v4582 = vpop.permute.xlu0 %4581
      %4585 = vset.pattern.permute.xlu0 0
      %4586 = vperm.xlu0 %4585, %v4432
      %v4587 = vpop.permute.xlu0 %4586
      %4590 = vset.pattern.permute.xlu0 0
      %4591 = vperm.xlu0 %4590, %v4433
      %v4592 = vpop.permute.xlu0 %4591
      %v4626 = vunpack.c.l.b16 %v4370
      %v4627 = vunpack.c.h.b16 %v4370
      %v4628 = vunpack.c.l.b16 %v4371
      %v4629 = vunpack.c.h.b16 %v4371
      %v4630 = vunpack.c.l.b16 %v4372
      %v4631 = vunpack.c.h.b16 %v4372
      %v4632 = vunpack.c.l.b16 %v4373
      %v4633 = vunpack.c.h.b16 %v4373
      %v4634 = vunpack.c.l.b16 %v4374
      %v4635 = vunpack.c.h.b16 %v4374
      %v4636 = vunpack.c.l.b16 %v4375
      %v4637 = vunpack.c.h.b16 %v4375
      %v4638 = vunpack.c.l.b16 %v4376
      %v4639 = vunpack.c.h.b16 %v4376
      %v4640 = vunpack.c.l.b16 %v4377
      %v4641 = vunpack.c.h.b16 %v4377
      %v4642 = vunpack.c.l.b16 %v4378
      %v4643 = vunpack.c.h.b16 %v4378
      %v4644 = vunpack.c.l.b16 %v4379
      %v4645 = vunpack.c.h.b16 %v4379
      %v4646 = vunpack.c.l.b16 %v4380
      %v4647 = vunpack.c.h.b16 %v4380
      %v4648 = vunpack.c.l.b16 %v4381
      %v4649 = vunpack.c.h.b16 %v4381
      %v4650 = vunpack.c.l.b16 %v4382
      %v4651 = vunpack.c.h.b16 %v4382
      %v4652 = vunpack.c.l.b16 %v4383
      %v4653 = vunpack.c.h.b16 %v4383
      %v4654 = vunpack.c.l.b16 %v4384
      %v4655 = vunpack.c.h.b16 %v4384
      %v4656 = vunpack.c.l.b16 %v4385
      %v4657 = vunpack.c.h.b16 %v4385
      %v4658 = vunpack.c.l.b16 %v4386
      %v4659 = vunpack.c.h.b16 %v4386
      %v4660 = vunpack.c.l.b16 %v4387
      %v4661 = vunpack.c.h.b16 %v4387
      %v4662 = vunpack.c.l.b16 %v4388
      %v4663 = vunpack.c.h.b16 %v4388
      %v4664 = vunpack.c.l.b16 %v4389
      %v4665 = vunpack.c.h.b16 %v4389
      %v4666 = vunpack.c.l.b16 %v4390
      %v4667 = vunpack.c.h.b16 %v4390
      %v4668 = vunpack.c.l.b16 %v4391
      %v4669 = vunpack.c.h.b16 %v4391
      %v4670 = vunpack.c.l.b16 %v4392
      %v4671 = vunpack.c.h.b16 %v4392
      %v4672 = vunpack.c.l.b16 %v4393
      %v4673 = vunpack.c.h.b16 %v4393
      %v4674 = vunpack.c.l.b16 %v4394
      %v4675 = vunpack.c.h.b16 %v4394
      %v4676 = vunpack.c.l.b16 %v4395
      %v4677 = vunpack.c.h.b16 %v4395
      %v4678 = vunpack.c.l.b16 %v4396
      %v4679 = vunpack.c.h.b16 %v4396
      %v4680 = vunpack.c.l.b16 %v4397
      %v4681 = vunpack.c.h.b16 %v4397
      %v4682 = vunpack.c.l.b16 %v4398
      %v4683 = vunpack.c.h.b16 %v4398
      %v4684 = vunpack.c.l.b16 %v4399
      %v4685 = vunpack.c.h.b16 %v4399
      %v4686 = vunpack.c.l.b16 %v4400
      %v4687 = vunpack.c.h.b16 %v4400
      %v4688 = vunpack.c.l.b16 %v4401
      %v4689 = vunpack.c.h.b16 %v4401
      %v4690 = vpack.c.b16 %v4628, %v4626
      %v4691 = vpack.c.b16 %v4629, %v4627
      %v4692 = vpack.c.b16 %v4632, %v4630
      %v4693 = vpack.c.b16 %v4633, %v4631
      %v4694 = vpack.c.b16 %v4636, %v4634
      %v4695 = vpack.c.b16 %v4637, %v4635
      %v4696 = vpack.c.b16 %v4640, %v4638
      %v4697 = vpack.c.b16 %v4641, %v4639
      %v4698 = vpack.c.b16 %v4644, %v4642
      %v4699 = vpack.c.b16 %v4645, %v4643
      %v4700 = vpack.c.b16 %v4648, %v4646
      %v4701 = vpack.c.b16 %v4649, %v4647
      %v4702 = vpack.c.b16 %v4652, %v4650
      %v4703 = vpack.c.b16 %v4653, %v4651
      %v4704 = vpack.c.b16 %v4656, %v4654
      %v4705 = vpack.c.b16 %v4657, %v4655
      %v4706 = vpack.c.b16 %v4660, %v4658
      %v4707 = vpack.c.b16 %v4661, %v4659
      %v4708 = vpack.c.b16 %v4664, %v4662
      %v4709 = vpack.c.b16 %v4665, %v4663
      %v4710 = vpack.c.b16 %v4668, %v4666
      %v4711 = vpack.c.b16 %v4669, %v4667
      %v4712 = vpack.c.b16 %v4672, %v4670
      %v4713 = vpack.c.b16 %v4673, %v4671
      %v4714 = vpack.c.b16 %v4676, %v4674
      %v4715 = vpack.c.b16 %v4677, %v4675
      %v4716 = vpack.c.b16 %v4680, %v4678
      %v4717 = vpack.c.b16 %v4681, %v4679
      %v4718 = vpack.c.b16 %v4684, %v4682
      %v4719 = vpack.c.b16 %v4685, %v4683
      %v4720 = vpack.c.b16 %v4688, %v4686
      %v4721 = vpack.c.b16 %v4689, %v4687
      %4754 = vmatpush.bf16.msra.mxu0 %v4280
      %4755 = vmatpush.bf16.msra.mxu0 %v4278
      %4756 = vmatpush.bf16.msra.mxu0 %v4276
      %4757 = vmatpush.bf16.msra.mxu0 %v4274
      %4758 = vmatpush.bf16.msra.mxu0 %v4240
      %4759 = vmatpush.bf16.msra.mxu0 %v4238
      %4760 = vmatpush.bf16.msra.mxu0 %v4236
      %4761 = vmatpush.bf16.msra.mxu0 %v4234
      %4762 = vmatmul.bf16.gmra.mxu0 %v4690
      %v4763 = vpop.f32.mrf.mxu0
      %v4764 = vadd.f32 %v4437, %v4763
      %v4765 = vpop.f32.mrf.mxu0
      %v4766 = vadd.f32 %v4442, %v4765
      %4767 = vmatmul.bf16.gmra.mxu0 %v4692
      %v4768 = vpop.f32.mrf.mxu0
      %v4769 = vadd.f32 %v4447, %v4768
      %v4770 = vpop.f32.mrf.mxu0
      %v4771 = vadd.f32 %v4452, %v4770
      %4772 = vmatmul.bf16.gmra.mxu0 %v4694
      %v4773 = vpop.f32.mrf.mxu0
      %v4774 = vadd.f32 %v4457, %v4773
      %v4775 = vpop.f32.mrf.mxu0
      %v4776 = vadd.f32 %v4462, %v4775
      %4777 = vmatmul.bf16.gmra.mxu0 %v4696
      %v4778 = vpop.f32.mrf.mxu0
      %v4779 = vadd.f32 %v4467, %v4778
      %v4780 = vpop.f32.mrf.mxu0
      %v4781 = vadd.f32 %v4472, %v4780
      %4782 = vmatmul.bf16.gmra.mxu0 %v4698
      %v4783 = vpop.f32.mrf.mxu0
      %v4784 = vadd.f32 %v4477, %v4783
      %v4785 = vpop.f32.mrf.mxu0
      %v4786 = vadd.f32 %v4482, %v4785
      %4787 = vmatmul.bf16.gmra.mxu0 %v4700
      %v4788 = vpop.f32.mrf.mxu0
      %v4789 = vadd.f32 %v4487, %v4788
      %v4790 = vpop.f32.mrf.mxu0
      %v4791 = vadd.f32 %v4492, %v4790
      %4792 = vmatmul.bf16.gmra.mxu0 %v4702
      %v4793 = vpop.f32.mrf.mxu0
      %v4794 = vadd.f32 %v4497, %v4793
      %v4795 = vpop.f32.mrf.mxu0
      %v4796 = vadd.f32 %v4502, %v4795
      %4797 = vmatmul.bf16.gmra.mxu0 %v4704
      %v4798 = vpop.f32.mrf.mxu0
      %v4799 = vadd.f32 %v4507, %v4798
      %v4800 = vpop.f32.mrf.mxu0
      %v4801 = vadd.f32 %v4512, %v4800
      %4802 = vmatmul.bf16.gmra.mxu0 %v4706
      %v4803 = vpop.f32.mrf.mxu0
      %v4804 = vadd.f32 %v4517, %v4803
      %v4805 = vpop.f32.mrf.mxu0
      %v4806 = vadd.f32 %v4522, %v4805
      %4807 = vmatmul.bf16.gmra.mxu0 %v4708
      %v4808 = vpop.f32.mrf.mxu0
      %v4809 = vadd.f32 %v4527, %v4808
      %v4810 = vpop.f32.mrf.mxu0
      %v4811 = vadd.f32 %v4532, %v4810
      %4812 = vmatmul.bf16.gmra.mxu0 %v4710
      %v4813 = vpop.f32.mrf.mxu0
      %v4814 = vadd.f32 %v4537, %v4813
      %v4815 = vpop.f32.mrf.mxu0
      %v4816 = vadd.f32 %v4542, %v4815
      %4817 = vmatmul.bf16.gmra.mxu0 %v4712
      %v4818 = vpop.f32.mrf.mxu0
      %v4819 = vadd.f32 %v4547, %v4818
      %v4820 = vpop.f32.mrf.mxu0
      %v4821 = vadd.f32 %v4552, %v4820
      %4822 = vmatmul.bf16.gmra.mxu0 %v4714
      %v4823 = vpop.f32.mrf.mxu0
      %v4824 = vadd.f32 %v4557, %v4823
      %v4825 = vpop.f32.mrf.mxu0
      %v4826 = vadd.f32 %v4562, %v4825
      %4827 = vmatmul.bf16.gmra.mxu0 %v4716
      %v4828 = vpop.f32.mrf.mxu0
      %v4829 = vadd.f32 %v4567, %v4828
      %v4830 = vpop.f32.mrf.mxu0
      %v4831 = vadd.f32 %v4572, %v4830
      %4832 = vmatmul.bf16.gmra.mxu0 %v4718
      %v4833 = vpop.f32.mrf.mxu0
      %v4834 = vadd.f32 %v4577, %v4833
      %v4835 = vpop.f32.mrf.mxu0
      %v4836 = vadd.f32 %v4582, %v4835
      %4837 = vmatmul.bf16.gmra.mxu0 %v4720
      %v4838 = vpop.f32.mrf.mxu0
      %v4839 = vadd.f32 %v4587, %v4838
      %v4840 = vpop.f32.mrf.mxu0
      %v4841 = vadd.f32 %v4592, %v4840
      %4842 = vdwg.mxu0
      %4843 = vmatpush.bf16.msra.mxu0 %v4360
      %4844 = vmatpush.bf16.msra.mxu0 %v4358
      %4845 = vmatpush.bf16.msra.mxu0 %v4356
      %4846 = vmatpush.bf16.msra.mxu0 %v4354
      %4847 = vmatpush.bf16.msra.mxu0 %v4320
      %4848 = vmatpush.bf16.msra.mxu0 %v4318
      %4849 = vmatpush.bf16.msra.mxu0 %v4316
      %4850 = vmatpush.bf16.msra.mxu0 %v4314
      %4851 = vmatmul.bf16.gmra.mxu0 %v4691
      %v4852 = vpop.f32.mrf.mxu0
      %v4853 = vadd.f32 %v4764, %v4852
      %v4854 = vpop.f32.mrf.mxu0
      %v4855 = vadd.f32 %v4766, %v4854
      %4856 = vmatmul.bf16.gmra.mxu0 %v4693
      %v4857 = vpop.f32.mrf.mxu0
      %v4858 = vadd.f32 %v4769, %v4857
      %v4859 = vpop.f32.mrf.mxu0
      %v4860 = vadd.f32 %v4771, %v4859
      %4861 = vmatmul.bf16.gmra.mxu0 %v4695
      %v4862 = vpop.f32.mrf.mxu0
      %v4863 = vadd.f32 %v4774, %v4862
      %v4864 = vpop.f32.mrf.mxu0
      %v4865 = vadd.f32 %v4776, %v4864
      %4866 = vmatmul.bf16.gmra.mxu0 %v4697
      %v4867 = vpop.f32.mrf.mxu0
      %v4868 = vadd.f32 %v4779, %v4867
      %v4869 = vpop.f32.mrf.mxu0
      %v4870 = vadd.f32 %v4781, %v4869
      %4871 = vmatmul.bf16.gmra.mxu0 %v4699
      %v4872 = vpop.f32.mrf.mxu0
      %v4873 = vadd.f32 %v4784, %v4872
      %v4874 = vpop.f32.mrf.mxu0
      %v4875 = vadd.f32 %v4786, %v4874
      %4876 = vmatmul.bf16.gmra.mxu0 %v4701
      %v4877 = vpop.f32.mrf.mxu0
      %v4878 = vadd.f32 %v4789, %v4877
      %v4879 = vpop.f32.mrf.mxu0
      %v4880 = vadd.f32 %v4791, %v4879
      %4881 = vmatmul.bf16.gmra.mxu0 %v4703
      %v4882 = vpop.f32.mrf.mxu0
      %v4883 = vadd.f32 %v4794, %v4882
      %v4884 = vpop.f32.mrf.mxu0
      %v4885 = vadd.f32 %v4796, %v4884
      %4886 = vmatmul.bf16.gmra.mxu0 %v4705
      %v4887 = vpop.f32.mrf.mxu0
      %v4888 = vadd.f32 %v4799, %v4887
      %v4889 = vpop.f32.mrf.mxu0
      %v4890 = vadd.f32 %v4801, %v4889
      %4891 = vmatmul.bf16.gmra.mxu0 %v4707
      %v4892 = vpop.f32.mrf.mxu0
      %v4893 = vadd.f32 %v4804, %v4892
      %v4894 = vpop.f32.mrf.mxu0
      %v4895 = vadd.f32 %v4806, %v4894
      %4896 = vmatmul.bf16.gmra.mxu0 %v4709
      %v4897 = vpop.f32.mrf.mxu0
      %v4898 = vadd.f32 %v4809, %v4897
      %v4899 = vpop.f32.mrf.mxu0
      %v4900 = vadd.f32 %v4811, %v4899
      %4901 = vmatmul.bf16.gmra.mxu0 %v4711
      %v4902 = vpop.f32.mrf.mxu0
      %v4903 = vadd.f32 %v4814, %v4902
      %v4904 = vpop.f32.mrf.mxu0
      %v4905 = vadd.f32 %v4816, %v4904
      %4906 = vmatmul.bf16.gmra.mxu0 %v4713
      %v4907 = vpop.f32.mrf.mxu0
      %v4908 = vadd.f32 %v4819, %v4907
      %v4909 = vpop.f32.mrf.mxu0
      %v4910 = vadd.f32 %v4821, %v4909
      %4911 = vmatmul.bf16.gmra.mxu0 %v4715
      %v4912 = vpop.f32.mrf.mxu0
      %v4913 = vadd.f32 %v4824, %v4912
      %v4914 = vpop.f32.mrf.mxu0
      %v4915 = vadd.f32 %v4826, %v4914
      %4916 = vmatmul.bf16.gmra.mxu0 %v4717
      %v4917 = vpop.f32.mrf.mxu0
      %v4918 = vadd.f32 %v4829, %v4917
      %v4919 = vpop.f32.mrf.mxu0
      %v4920 = vadd.f32 %v4831, %v4919
      %4921 = vmatmul.bf16.gmra.mxu0 %v4719
      %v4922 = vpop.f32.mrf.mxu0
      %v4923 = vadd.f32 %v4834, %v4922
      %v4924 = vpop.f32.mrf.mxu0
      %v4925 = vadd.f32 %v4836, %v4924
      %4926 = vmatmul.bf16.gmra.mxu0 %v4721
      %v4927 = vpop.f32.mrf.mxu0
      %v4928 = vadd.f32 %v4839, %v4927
      %v4929 = vpop.f32.mrf.mxu0
      %v4930 = vadd.f32 %v4841, %v4929
      %4931 = vdwg.mxu0
      %4932 = vmatpush.bf16.msra.mxu0 %v4281
      %4933 = vmatpush.bf16.msra.mxu0 %v4279
      %4934 = vmatpush.bf16.msra.mxu0 %v4277
      %4935 = vmatpush.bf16.msra.mxu0 %v4275
      %4936 = vmatpush.bf16.msra.mxu0 %v4241
      %4937 = vmatpush.bf16.msra.mxu0 %v4239
      %4938 = vmatpush.bf16.msra.mxu0 %v4237
      %4939 = vmatpush.bf16.msra.mxu0 %v4235
      %4940 = vmatmul.bf16.gmra.mxu0 %v4690
      %v4941 = vpop.f32.mrf.mxu0
      %v4942 = vadd.f32 %v4437, %v4941
      %v4943 = vpop.f32.mrf.mxu0
      %v4944 = vadd.f32 %v4442, %v4943
      %4945 = vmatmul.bf16.gmra.mxu0 %v4692
      %v4946 = vpop.f32.mrf.mxu0
      %v4947 = vadd.f32 %v4447, %v4946
      %v4948 = vpop.f32.mrf.mxu0
      %v4949 = vadd.f32 %v4452, %v4948
      %4950 = vmatmul.bf16.gmra.mxu0 %v4694
      %v4951 = vpop.f32.mrf.mxu0
      %v4952 = vadd.f32 %v4457, %v4951
      %v4953 = vpop.f32.mrf.mxu0
      %v4954 = vadd.f32 %v4462, %v4953
      %4955 = vmatmul.bf16.gmra.mxu0 %v4696
      %v4956 = vpop.f32.mrf.mxu0
      %v4957 = vadd.f32 %v4467, %v4956
      %v4958 = vpop.f32.mrf.mxu0
      %v4959 = vadd.f32 %v4472, %v4958
      %4960 = vmatmul.bf16.gmra.mxu0 %v4698
      %v4961 = vpop.f32.mrf.mxu0
      %v4962 = vadd.f32 %v4477, %v4961
      %v4963 = vpop.f32.mrf.mxu0
      %v4964 = vadd.f32 %v4482, %v4963
      %4965 = vmatmul.bf16.gmra.mxu0 %v4700
      %v4966 = vpop.f32.mrf.mxu0
      %v4967 = vadd.f32 %v4487, %v4966
      %v4968 = vpop.f32.mrf.mxu0
      %v4969 = vadd.f32 %v4492, %v4968
      %4970 = vmatmul.bf16.gmra.mxu0 %v4702
      %v4971 = vpop.f32.mrf.mxu0
      %v4972 = vadd.f32 %v4497, %v4971
      %v4973 = vpop.f32.mrf.mxu0
      %v4974 = vadd.f32 %v4502, %v4973
      %4975 = vmatmul.bf16.gmra.mxu0 %v4704
      %v4976 = vpop.f32.mrf.mxu0
      %v4977 = vadd.f32 %v4507, %v4976
      %v4978 = vpop.f32.mrf.mxu0
      %v4979 = vadd.f32 %v4512, %v4978
      %4980 = vmatmul.bf16.gmra.mxu0 %v4706
      %v4981 = vpop.f32.mrf.mxu0
      %v4982 = vadd.f32 %v4517, %v4981
      %v4983 = vpop.f32.mrf.mxu0
      %v4984 = vadd.f32 %v4522, %v4983
      %4985 = vmatmul.bf16.gmra.mxu0 %v4708
      %v4986 = vpop.f32.mrf.mxu0
      %v4987 = vadd.f32 %v4527, %v4986
      %v4988 = vpop.f32.mrf.mxu0
      %v4989 = vadd.f32 %v4532, %v4988
      %4990 = vmatmul.bf16.gmra.mxu0 %v4710
      %v4991 = vpop.f32.mrf.mxu0
      %v4992 = vadd.f32 %v4537, %v4991
      %v4993 = vpop.f32.mrf.mxu0
      %v4994 = vadd.f32 %v4542, %v4993
      %4995 = vmatmul.bf16.gmra.mxu0 %v4712
      %v4996 = vpop.f32.mrf.mxu0
      %v4997 = vadd.f32 %v4547, %v4996
      %v4998 = vpop.f32.mrf.mxu0
      %v4999 = vadd.f32 %v4552, %v4998
      %5000 = vmatmul.bf16.gmra.mxu0 %v4714
      %v5001 = vpop.f32.mrf.mxu0
      %v5002 = vadd.f32 %v4557, %v5001
      %v5003 = vpop.f32.mrf.mxu0
      %v5004 = vadd.f32 %v4562, %v5003
      %5005 = vmatmul.bf16.gmra.mxu0 %v4716
      %v5006 = vpop.f32.mrf.mxu0
      %v5007 = vadd.f32 %v4567, %v5006
      %v5008 = vpop.f32.mrf.mxu0
      %v5009 = vadd.f32 %v4572, %v5008
      %5010 = vmatmul.bf16.gmra.mxu0 %v4718
      %v5011 = vpop.f32.mrf.mxu0
      %v5012 = vadd.f32 %v4577, %v5011
      %v5013 = vpop.f32.mrf.mxu0
      %v5014 = vadd.f32 %v4582, %v5013
      %5015 = vmatmul.bf16.gmra.mxu0 %v4720
      %v5016 = vpop.f32.mrf.mxu0
      %v5017 = vadd.f32 %v4587, %v5016
      %v5018 = vpop.f32.mrf.mxu0
      %v5019 = vadd.f32 %v4592, %v5018
      %5020 = vdwg.mxu0
      %5021 = vmatpush.bf16.msra.mxu0 %v4361
      %5022 = vmatpush.bf16.msra.mxu0 %v4359
      %5023 = vmatpush.bf16.msra.mxu0 %v4357
      %5024 = vmatpush.bf16.msra.mxu0 %v4355
      %5025 = vmatpush.bf16.msra.mxu0 %v4321
      %5026 = vmatpush.bf16.msra.mxu0 %v4319
      %5027 = vmatpush.bf16.msra.mxu0 %v4317
      %5028 = vmatpush.bf16.msra.mxu0 %v4315
      %5029 = vmatmul.bf16.gmra.mxu0 %v4691
      %v5030 = vpop.f32.mrf.mxu0
      %v5031 = vadd.f32 %v4942, %v5030
      %v5032 = vpop.f32.mrf.mxu0
      %v5033 = vadd.f32 %v4944, %v5032
      %5034 = vmatmul.bf16.gmra.mxu0 %v4693
      %v5035 = vpop.f32.mrf.mxu0
      %v5036 = vadd.f32 %v4947, %v5035
      %v5037 = vpop.f32.mrf.mxu0
      %v5038 = vadd.f32 %v4949, %v5037
      %5039 = vmatmul.bf16.gmra.mxu0 %v4695
      %v5040 = vpop.f32.mrf.mxu0
      %v5041 = vadd.f32 %v4952, %v5040
      %v5042 = vpop.f32.mrf.mxu0
      %v5043 = vadd.f32 %v4954, %v5042
      %5044 = vmatmul.bf16.gmra.mxu0 %v4697
      %v5045 = vpop.f32.mrf.mxu0
      %v5046 = vadd.f32 %v4957, %v5045
      %v5047 = vpop.f32.mrf.mxu0
      %v5048 = vadd.f32 %v4959, %v5047
      %5049 = vmatmul.bf16.gmra.mxu0 %v4699
      %v5050 = vpop.f32.mrf.mxu0
      %v5051 = vadd.f32 %v4962, %v5050
      %v5052 = vpop.f32.mrf.mxu0
      %v5053 = vadd.f32 %v4964, %v5052
      %5054 = vmatmul.bf16.gmra.mxu0 %v4701
      %v5055 = vpop.f32.mrf.mxu0
      %v5056 = vadd.f32 %v4967, %v5055
      %v5057 = vpop.f32.mrf.mxu0
      %v5058 = vadd.f32 %v4969, %v5057
      %5059 = vmatmul.bf16.gmra.mxu0 %v4703
      %v5060 = vpop.f32.mrf.mxu0
      %v5061 = vadd.f32 %v4972, %v5060
      %v5062 = vpop.f32.mrf.mxu0
      %v5063 = vadd.f32 %v4974, %v5062
      %5064 = vmatmul.bf16.gmra.mxu0 %v4705
      %v5065 = vpop.f32.mrf.mxu0
      %v5066 = vadd.f32 %v4977, %v5065
      %v5067 = vpop.f32.mrf.mxu0
      %v5068 = vadd.f32 %v4979, %v5067
      %5069 = vmatmul.bf16.gmra.mxu0 %v4707
      %v5070 = vpop.f32.mrf.mxu0
      %v5071 = vadd.f32 %v4982, %v5070
      %v5072 = vpop.f32.mrf.mxu0
      %v5073 = vadd.f32 %v4984, %v5072
      %5074 = vmatmul.bf16.gmra.mxu0 %v4709
      %v5075 = vpop.f32.mrf.mxu0
      %v5076 = vadd.f32 %v4987, %v5075
      %v5077 = vpop.f32.mrf.mxu0
      %v5078 = vadd.f32 %v4989, %v5077
      %5079 = vmatmul.bf16.gmra.mxu0 %v4711
      %v5080 = vpop.f32.mrf.mxu0
      %v5081 = vadd.f32 %v4992, %v5080
      %v5082 = vpop.f32.mrf.mxu0
      %v5083 = vadd.f32 %v4994, %v5082
      %5084 = vmatmul.bf16.gmra.mxu0 %v4713
      %v5085 = vpop.f32.mrf.mxu0
      %v5086 = vadd.f32 %v4997, %v5085
      %v5087 = vpop.f32.mrf.mxu0
      %v5088 = vadd.f32 %v4999, %v5087
      %5089 = vmatmul.bf16.gmra.mxu0 %v4715
      %v5090 = vpop.f32.mrf.mxu0
      %v5091 = vadd.f32 %v5002, %v5090
      %v5092 = vpop.f32.mrf.mxu0
      %v5093 = vadd.f32 %v5004, %v5092
      %5094 = vmatmul.bf16.gmra.mxu0 %v4717
      %v5095 = vpop.f32.mrf.mxu0
      %v5096 = vadd.f32 %v5007, %v5095
      %v5097 = vpop.f32.mrf.mxu0
      %v5098 = vadd.f32 %v5009, %v5097
      %5099 = vmatmul.bf16.gmra.mxu0 %v4719
      %v5100 = vpop.f32.mrf.mxu0
      %v5101 = vadd.f32 %v5012, %v5100
      %v5102 = vpop.f32.mrf.mxu0
      %v5103 = vadd.f32 %v5014, %v5102
      %5104 = vmatmul.bf16.gmra.mxu0 %v4721
      %v5105 = vpop.f32.mrf.mxu0
      %v5106 = vadd.f32 %v5017, %v5105
      %v5107 = vpop.f32.mrf.mxu0
      %v5108 = vadd.f32 %v5019, %v5107
      %5109 = vdwg.mxu0
      %5110 = vrot.lane.b32.xlu0 %v4913, 17
      %v5111 = vpop.permute.xlu0 %5110
      %5112 = vrot.lane.b32.xlu0 %v4915, 17
      %v5113 = vpop.permute.xlu0 %5112
      %5114 = vrot.lane.b32.xlu0 %v4918, 17
      %v5115 = vpop.permute.xlu0 %5114
      %5116 = vrot.lane.b32.xlu0 %v4920, 17
      %v5117 = vpop.permute.xlu0 %5116
      %5118 = vrot.lane.b32.xlu0 %v4923, 17
      %v5119 = vpop.permute.xlu0 %5118
      %5120 = vrot.lane.b32.xlu0 %v4925, 17
      %v5121 = vpop.permute.xlu0 %5120
      %5122 = vrot.lane.b32.xlu0 %v4928, 17
      %v5123 = vpop.permute.xlu0 %5122
      %5124 = vrot.lane.b32.xlu0 %v4930, 17
      %v5125 = vpop.permute.xlu0 %5124
      %5126 = vrot.lane.b32.xlu0 %v5091, 17
      %v5127 = vpop.permute.xlu0 %5126
      %5128 = vrot.lane.b32.xlu0 %v5093, 17
      %v5129 = vpop.permute.xlu0 %5128
      %5130 = vrot.lane.b32.xlu0 %v5096, 17
      %v5131 = vpop.permute.xlu0 %5130
      %5132 = vrot.lane.b32.xlu0 %v5098, 17
      %v5133 = vpop.permute.xlu0 %5132
      %5134 = vrot.lane.b32.xlu0 %v5101, 17
      %v5135 = vpop.permute.xlu0 %5134
      %5136 = vrot.lane.b32.xlu0 %v5103, 17
      %v5137 = vpop.permute.xlu0 %5136
      %5138 = vrot.lane.b32.xlu0 %v5106, 17
      %v5139 = vpop.permute.xlu0 %5138
      %5140 = vrot.lane.b32.xlu0 %v5108, 17
      %v5141 = vpop.permute.xlu0 %5140
      %v5142 = vsel %vm687, %v5111, %v5127
      %v5143 = vsel %vm687, %v5113, %v5129
      %v5144 = vsel %vm687, %v5115, %v5131
      %v5145 = vsel %vm687, %v5117, %v5133
      %v5146 = vsel %vm687, %v5119, %v5135
      %v5147 = vsel %vm687, %v5121, %v5137
      %v5148 = vsel %vm687, %v5123, %v5139
      %v5149 = vsel %vm687, %v5125, %v5141
      %v5150 = vsel %vm687, %v5127, %v5111
      %v5151 = vsel %vm687, %v5129, %v5113
      %v5152 = vsel %vm687, %v5131, %v5115
      %v5153 = vsel %vm687, %v5133, %v5117
      %v5154 = vsel %vm687, %v5135, %v5119
      %v5155 = vsel %vm687, %v5137, %v5121
      %v5156 = vsel %vm687, %v5139, %v5123
      %v5157 = vsel %vm687, %v5141, %v5125
      %v5158 = vmul.f32 %v5150, %v704
      %v5159 = vmul.f32 %v5142, %v705
      %v5160 = vmul.f32 %v5151, %v704
      %v5161 = vmul.f32 %v5143, %v705
      %v5162 = vmul.f32 %v5152, %v704
      %v5163 = vmul.f32 %v5144, %v705
      %v5164 = vmul.f32 %v5153, %v704
      %v5165 = vmul.f32 %v5145, %v705
      %v5166 = vmul.f32 %v5154, %v704
      %v5167 = vmul.f32 %v5146, %v705
      %v5168 = vmul.f32 %v5155, %v704
      %v5169 = vmul.f32 %v5147, %v705
      %v5170 = vmul.f32 %v5156, %v704
      %v5171 = vmul.f32 %v5148, %v705
      %v5172 = vmul.f32 %v5157, %v704
      %v5173 = vmul.f32 %v5149, %v705
      %v5174 = vpack.c.bf16 %v5160, %v5158
      %v5175 = vpack.c.bf16 %v5161, %v5159
      %v5176 = vpack.c.bf16 %v5164, %v5162
      %v5177 = vpack.c.bf16 %v5165, %v5163
      %v5178 = vpack.c.bf16 %v5168, %v5166
      %v5179 = vpack.c.bf16 %v5169, %v5167
      %v5180 = vpack.c.bf16 %v5172, %v5170
      %v5181 = vpack.c.bf16 %v5173, %v5171
      %v5182 = vld [vmem:[%s10] sm:$0xf]
      %v5183 = vld [vmem:[%s10 + $0x4] sm:$0xf]
      %5184 = vrot.lane.b32.xlu0 %v4893, 16
      %v5185 = vpop.permute.xlu0 %5184
      %5186 = vrot.lane.b32.xlu0 %v4895, 16
      %v5187 = vpop.permute.xlu0 %5186
      %5188 = vrot.lane.b32.xlu0 %v4898, 16
      %v5189 = vpop.permute.xlu0 %5188
      %5190 = vrot.lane.b32.xlu0 %v4900, 16
      %v5191 = vpop.permute.xlu0 %5190
      %5192 = vrot.lane.b32.xlu0 %v4903, 16
      %v5193 = vpop.permute.xlu0 %5192
      %5194 = vrot.lane.b32.xlu0 %v4905, 16
      %v5195 = vpop.permute.xlu0 %5194
      %5196 = vrot.lane.b32.xlu0 %v4908, 16
      %v5197 = vpop.permute.xlu0 %5196
      %5198 = vrot.lane.b32.xlu0 %v4910, 16
      %v5199 = vpop.permute.xlu0 %5198
      %5200 = vrot.lane.b32.xlu0 %v5071, 16
      %v5201 = vpop.permute.xlu0 %5200
      %5202 = vrot.lane.b32.xlu0 %v5073, 16
      %v5203 = vpop.permute.xlu0 %5202
      %5204 = vrot.lane.b32.xlu0 %v5076, 16
      %v5205 = vpop.permute.xlu0 %5204
      %5206 = vrot.lane.b32.xlu0 %v5078, 16
      %v5207 = vpop.permute.xlu0 %5206
      %5208 = vrot.lane.b32.xlu0 %v5081, 16
      %v5209 = vpop.permute.xlu0 %5208
      %5210 = vrot.lane.b32.xlu0 %v5083, 16
      %v5211 = vpop.permute.xlu0 %5210
      %5212 = vrot.lane.b32.xlu0 %v5086, 16
      %v5213 = vpop.permute.xlu0 %5212
      %5214 = vrot.lane.b32.xlu0 %v5088, 16
      %v5215 = vpop.permute.xlu0 %5214
      %v5216 = vsel %vm951, %v5185, %v5201
      %v5217 = vsel %vm951, %v5187, %v5203
      %v5218 = vsel %vm951, %v5189, %v5205
      %v5219 = vsel %vm951, %v5191, %v5207
      %v5220 = vsel %vm951, %v5193, %v5209
      %v5221 = vsel %vm951, %v5195, %v5211
      %v5222 = vsel %vm951, %v5197, %v5213
      %v5223 = vsel %vm951, %v5199, %v5215
      %v5224 = vsel %vm951, %v5201, %v5185
      %v5225 = vsel %vm951, %v5203, %v5187
      %v5226 = vsel %vm951, %v5205, %v5189
      %v5227 = vsel %vm951, %v5207, %v5191
      %v5228 = vsel %vm951, %v5209, %v5193
      %v5229 = vsel %vm951, %v5211, %v5195
      %v5230 = vsel %vm951, %v5213, %v5197
      %v5231 = vsel %vm951, %v5215, %v5199
      %v5232 = vmul.f32 %v5224, %v968
      %v5233 = vmul.f32 %v5216, %v969
      %v5234 = vmul.f32 %v5225, %v968
      %v5235 = vmul.f32 %v5217, %v969
      %v5236 = vmul.f32 %v5226, %v968
      %v5237 = vmul.f32 %v5218, %v969
      %v5238 = vmul.f32 %v5227, %v968
      %v5239 = vmul.f32 %v5219, %v969
      %v5240 = vmul.f32 %v5228, %v968
      %v5241 = vmul.f32 %v5220, %v969
      %v5242 = vmul.f32 %v5229, %v968
      %v5243 = vmul.f32 %v5221, %v969
      %v5244 = vmul.f32 %v5230, %v968
      %v5245 = vmul.f32 %v5222, %v969
      %v5246 = vmul.f32 %v5231, %v968
      %v5247 = vmul.f32 %v5223, %v969
      %v5248 = vpack.c.bf16 %v5234, %v5232
      %v5249 = vpack.c.bf16 %v5235, %v5233
      %v5250 = vpack.c.bf16 %v5238, %v5236
      %v5251 = vpack.c.bf16 %v5239, %v5237
      %v5252 = vpack.c.bf16 %v5242, %v5240
      %v5253 = vpack.c.bf16 %v5243, %v5241
      %v5254 = vpack.c.bf16 %v5246, %v5244
      %v5255 = vpack.c.bf16 %v5247, %v5245
      %s5256 = scalar_lea.vmem %s10, 8
      %v5257 = vld [vmem:[%s5256] sm:$0xf]
      %v5258 = vld [vmem:[%s5256 + $0x4] sm:$0xf]
      %v5261 = vunpack.c.l.b16 %v5257
      %v5262 = vunpack.c.l.b16 %v5258
      %v5263 = vpack.c.b16 %v5262, %v5261
      %v5265 = vsel %vm541, %v5263, 0
      %5267 = vmatpush.bf16.msra.mxu0 0
      %5268 = vmatpush.bf16.msra.mxu0 0
      %5269 = vmatpush.bf16.msra.mxu0 0
      %5270 = vmatpush.bf16.msra.mxu0 0
      %5271 = vmatpush.bf16.msra.mxu0 %v5254
      %5272 = vmatpush.bf16.msra.mxu0 %v5252
      %5273 = vmatpush.bf16.msra.mxu0 %v5250
      %5274 = vmatpush.bf16.msra.mxu0 %v5248
      %5275 = vmatmul.bf16.gmra.mxu0 %v5265
      %v5276 = vpop.f32.mrf.mxu0
      %v5277 = vadd.f32 0.0, %v5276
      %v5278 = vpop.f32.mrf.mxu0
      %v5279 = vadd.f32 0.0, %v5278
      %5280 = vdwg.mxu0
      %5281 = vmatpush.bf16.msra.mxu0 0
      %5282 = vmatpush.bf16.msra.mxu0 0
      %5283 = vmatpush.bf16.msra.mxu0 0
      %5284 = vmatpush.bf16.msra.mxu0 0
      %5285 = vmatpush.bf16.msra.mxu0 %v5255
      %5286 = vmatpush.bf16.msra.mxu0 %v5253
      %5287 = vmatpush.bf16.msra.mxu0 %v5251
      %5288 = vmatpush.bf16.msra.mxu0 %v5249
      %5289 = vmatmul.bf16.gmra.mxu0 %v5265
      %v5290 = vpop.f32.mrf.mxu0
      %v5291 = vadd.f32 0.0, %v5290
      %v5292 = vpop.f32.mrf.mxu0
      %v5293 = vadd.f32 0.0, %v5292
      %5294 = vdwg.mxu0
      %v5297 = vunpack.c.l.b16 %v5182
      %v5298 = vunpack.c.l.b16 %v5183
      %v5299 = vpack.c.b16 %v5298, %v5297
      %v5301 = vsel %vm541, %v5299, 0
      %5303 = vmatpush.bf16.msra.mxu0 0
      %5304 = vmatpush.bf16.msra.mxu0 0
      %5305 = vmatpush.bf16.msra.mxu0 0
      %5306 = vmatpush.bf16.msra.mxu0 0
      %5307 = vmatpush.bf16.msra.mxu0 %v5180
      %5308 = vmatpush.bf16.msra.mxu0 %v5178
      %5309 = vmatpush.bf16.msra.mxu0 %v5176
      %5310 = vmatpush.bf16.msra.mxu0 %v5174
      %5311 = vmatmul.bf16.gmra.mxu0 %v5301
      %v5312 = vpop.f32.mrf.mxu0
      %v5313 = vadd.f32 %v5277, %v5312
      %v5314 = vpop.f32.mrf.mxu0
      %v5315 = vadd.f32 %v5279, %v5314
      %5316 = vdwg.mxu0
      %5317 = vmatpush.bf16.msra.mxu0 0
      %5318 = vmatpush.bf16.msra.mxu0 0
      %5319 = vmatpush.bf16.msra.mxu0 0
      %5320 = vmatpush.bf16.msra.mxu0 0
      %5321 = vmatpush.bf16.msra.mxu0 %v5181
      %5322 = vmatpush.bf16.msra.mxu0 %v5179
      %5323 = vmatpush.bf16.msra.mxu0 %v5177
      %5324 = vmatpush.bf16.msra.mxu0 %v5175
      %5325 = vmatmul.bf16.gmra.mxu0 %v5301
      %v5326 = vpop.f32.mrf.mxu0
      %v5327 = vadd.f32 %v5291, %v5326
      %v5328 = vpop.f32.mrf.mxu0
      %v5329 = vadd.f32 %v5293, %v5328
      %5330 = vdwg.mxu0
      %5331 = vrot.lane.b32.xlu0 %v4913, 16
      %v5332 = vpop.permute.xlu0 %5331
      %5333 = vrot.lane.b32.xlu0 %v4915, 16
      %v5334 = vpop.permute.xlu0 %5333
      %5335 = vrot.lane.b32.xlu0 %v4918, 16
      %v5336 = vpop.permute.xlu0 %5335
      %5337 = vrot.lane.b32.xlu0 %v4920, 16
      %v5338 = vpop.permute.xlu0 %5337
      %5339 = vrot.lane.b32.xlu0 %v4923, 16
      %v5340 = vpop.permute.xlu0 %5339
      %5341 = vrot.lane.b32.xlu0 %v4925, 16
      %v5342 = vpop.permute.xlu0 %5341
      %5343 = vrot.lane.b32.xlu0 %v4928, 16
      %v5344 = vpop.permute.xlu0 %5343
      %5345 = vrot.lane.b32.xlu0 %v4930, 16
      %v5346 = vpop.permute.xlu0 %5345
      %5347 = vrot.lane.b32.xlu0 %v5091, 16
      %v5348 = vpop.permute.xlu0 %5347
      %5349 = vrot.lane.b32.xlu0 %v5093, 16
      %v5350 = vpop.permute.xlu0 %5349
      %5351 = vrot.lane.b32.xlu0 %v5096, 16
      %v5352 = vpop.permute.xlu0 %5351
      %5353 = vrot.lane.b32.xlu0 %v5098, 16
      %v5354 = vpop.permute.xlu0 %5353
      %5355 = vrot.lane.b32.xlu0 %v5101, 16
      %v5356 = vpop.permute.xlu0 %5355
      %5357 = vrot.lane.b32.xlu0 %v5103, 16
      %v5358 = vpop.permute.xlu0 %5357
      %5359 = vrot.lane.b32.xlu0 %v5106, 16
      %v5360 = vpop.permute.xlu0 %5359
      %5361 = vrot.lane.b32.xlu0 %v5108, 16
      %v5362 = vpop.permute.xlu0 %5361
      %v5363 = vsel %vm951, %v5332, %v5348
      %v5364 = vsel %vm951, %v5334, %v5350
      %v5365 = vsel %vm951, %v5336, %v5352
      %v5366 = vsel %vm951, %v5338, %v5354
      %v5367 = vsel %vm951, %v5340, %v5356
      %v5368 = vsel %vm951, %v5342, %v5358
      %v5369 = vsel %vm951, %v5344, %v5360
      %v5370 = vsel %vm951, %v5346, %v5362
      %v5371 = vsel %vm951, %v5348, %v5332
      %v5372 = vsel %vm951, %v5350, %v5334
      %v5373 = vsel %vm951, %v5352, %v5336
      %v5374 = vsel %vm951, %v5354, %v5338
      %v5375 = vsel %vm951, %v5356, %v5340
      %v5376 = vsel %vm951, %v5358, %v5342
      %v5377 = vsel %vm951, %v5360, %v5344
      %v5378 = vsel %vm951, %v5362, %v5346
      %v5379 = vmul.f32 %v5371, %v968
      %v5380 = vmul.f32 %v5363, %v969
      %v5381 = vmul.f32 %v5372, %v968
      %v5382 = vmul.f32 %v5364, %v969
      %v5383 = vmul.f32 %v5373, %v968
      %v5384 = vmul.f32 %v5365, %v969
      %v5385 = vmul.f32 %v5374, %v968
      %v5386 = vmul.f32 %v5366, %v969
      %v5387 = vmul.f32 %v5375, %v968
      %v5388 = vmul.f32 %v5367, %v969
      %v5389 = vmul.f32 %v5376, %v968
      %v5390 = vmul.f32 %v5368, %v969
      %v5391 = vmul.f32 %v5377, %v968
      %v5392 = vmul.f32 %v5369, %v969
      %v5393 = vmul.f32 %v5378, %v968
      %v5394 = vmul.f32 %v5370, %v969
      %v5395 = vpack.c.bf16 %v5381, %v5379
      %v5396 = vpack.c.bf16 %v5382, %v5380
      %v5397 = vpack.c.bf16 %v5385, %v5383
      %v5398 = vpack.c.bf16 %v5386, %v5384
      %v5399 = vpack.c.bf16 %v5389, %v5387
      %v5400 = vpack.c.bf16 %v5390, %v5388
      %v5401 = vpack.c.bf16 %v5393, %v5391
      %v5402 = vpack.c.bf16 %v5394, %v5392
      %s5403 = scalar_lea.vmem %s10, 16
      %v5404 = vld [vmem:[%s5403] sm:$0xf]
      %v5405 = vld [vmem:[%s5403 + $0x4] sm:$0xf]
      %v5408 = vunpack.c.l.b16 %v5404
      %v5409 = vunpack.c.l.b16 %v5405
      %v5410 = vpack.c.b16 %v5409, %v5408
      %v5412 = vsel %vm541, %v5410, 0
      %5414 = vmatpush.bf16.msra.mxu0 0
      %5415 = vmatpush.bf16.msra.mxu0 0
      %5416 = vmatpush.bf16.msra.mxu0 0
      %5417 = vmatpush.bf16.msra.mxu0 0
      %5418 = vmatpush.bf16.msra.mxu0 %v5401
      %5419 = vmatpush.bf16.msra.mxu0 %v5399
      %5420 = vmatpush.bf16.msra.mxu0 %v5397
      %5421 = vmatpush.bf16.msra.mxu0 %v5395
      %5422 = vmatmul.bf16.gmra.mxu0 %v5412
      %v5423 = vpop.f32.mrf.mxu0
      %v5424 = vadd.f32 0.0, %v5423
      %v5425 = vpop.f32.mrf.mxu0
      %v5426 = vadd.f32 0.0, %v5425
      %5427 = vdwg.mxu0
      %5428 = vmatpush.bf16.msra.mxu0 0
      %5429 = vmatpush.bf16.msra.mxu0 0
      %5430 = vmatpush.bf16.msra.mxu0 0
      %5431 = vmatpush.bf16.msra.mxu0 0
      %5432 = vmatpush.bf16.msra.mxu0 %v5402
      %5433 = vmatpush.bf16.msra.mxu0 %v5400
      %5434 = vmatpush.bf16.msra.mxu0 %v5398
      %5435 = vmatpush.bf16.msra.mxu0 %v5396
      %5436 = vmatmul.bf16.gmra.mxu0 %v5412
      %v5437 = vpop.f32.mrf.mxu0
      %v5438 = vadd.f32 0.0, %v5437
      %v5439 = vpop.f32.mrf.mxu0
      %v5440 = vadd.f32 0.0, %v5439
      %5441 = vdwg.mxu0
      %v5442 = vadd.f32 %v5313, %v5424
      %v5443 = vadd.f32 %v5327, %v5438
      %v5444 = vadd.f32 %v5315, %v5426
      %v5445 = vadd.f32 %v5329, %v5440
      %5446 = vrot.lane.b32.xlu0 %v4893, 15
      %v5447 = vpop.permute.xlu0 %5446
      %5448 = vrot.lane.b32.xlu0 %v4895, 15
      %v5449 = vpop.permute.xlu0 %5448
      %5450 = vrot.lane.b32.xlu0 %v4898, 15
      %v5451 = vpop.permute.xlu0 %5450
      %5452 = vrot.lane.b32.xlu0 %v4900, 15
      %v5453 = vpop.permute.xlu0 %5452
      %5454 = vrot.lane.b32.xlu0 %v4903, 15
      %v5455 = vpop.permute.xlu0 %5454
      %5456 = vrot.lane.b32.xlu0 %v4905, 15
      %v5457 = vpop.permute.xlu0 %5456
      %5458 = vrot.lane.b32.xlu0 %v4908, 15
      %v5459 = vpop.permute.xlu0 %5458
      %5460 = vrot.lane.b32.xlu0 %v4910, 15
      %v5461 = vpop.permute.xlu0 %5460
      %5462 = vrot.lane.b32.xlu0 %v5071, 15
      %v5463 = vpop.permute.xlu0 %5462
      %5464 = vrot.lane.b32.xlu0 %v5073, 15
      %v5465 = vpop.permute.xlu0 %5464
      %5466 = vrot.lane.b32.xlu0 %v5076, 15
      %v5467 = vpop.permute.xlu0 %5466
      %5468 = vrot.lane.b32.xlu0 %v5078, 15
      %v5469 = vpop.permute.xlu0 %5468
      %5470 = vrot.lane.b32.xlu0 %v5081, 15
      %v5471 = vpop.permute.xlu0 %5470
      %5472 = vrot.lane.b32.xlu0 %v5083, 15
      %v5473 = vpop.permute.xlu0 %5472
      %5474 = vrot.lane.b32.xlu0 %v5086, 15
      %v5475 = vpop.permute.xlu0 %5474
      %5476 = vrot.lane.b32.xlu0 %v5088, 15
      %v5477 = vpop.permute.xlu0 %5476
      %v5478 = vsel %vm1141, %v5447, %v5463
      %v5479 = vsel %vm1141, %v5449, %v5465
      %v5480 = vsel %vm1141, %v5451, %v5467
      %v5481 = vsel %vm1141, %v5453, %v5469
      %v5482 = vsel %vm1141, %v5455, %v5471
      %v5483 = vsel %vm1141, %v5457, %v5473
      %v5484 = vsel %vm1141, %v5459, %v5475
      %v5485 = vsel %vm1141, %v5461, %v5477
      %v5486 = vsel %vm1141, %v5463, %v5447
      %v5487 = vsel %vm1141, %v5465, %v5449
      %v5488 = vsel %vm1141, %v5467, %v5451
      %v5489 = vsel %vm1141, %v5469, %v5453
      %v5490 = vsel %vm1141, %v5471, %v5455
      %v5491 = vsel %vm1141, %v5473, %v5457
      %v5492 = vsel %vm1141, %v5475, %v5459
      %v5493 = vsel %vm1141, %v5477, %v5461
      %v5494 = vmul.f32 %v5486, %v1158
      %v5495 = vmul.f32 %v5478, %v1159
      %v5496 = vmul.f32 %v5487, %v1158
      %v5497 = vmul.f32 %v5479, %v1159
      %v5498 = vmul.f32 %v5488, %v1158
      %v5499 = vmul.f32 %v5480, %v1159
      %v5500 = vmul.f32 %v5489, %v1158
      %v5501 = vmul.f32 %v5481, %v1159
      %v5502 = vmul.f32 %v5490, %v1158
      %v5503 = vmul.f32 %v5482, %v1159
      %v5504 = vmul.f32 %v5491, %v1158
      %v5505 = vmul.f32 %v5483, %v1159
      %v5506 = vmul.f32 %v5492, %v1158
      %v5507 = vmul.f32 %v5484, %v1159
      %v5508 = vmul.f32 %v5493, %v1158
      %v5509 = vmul.f32 %v5485, %v1159
      %v5510 = vpack.c.bf16 %v5496, %v5494
      %v5511 = vpack.c.bf16 %v5497, %v5495
      %v5512 = vpack.c.bf16 %v5500, %v5498
      %v5513 = vpack.c.bf16 %v5501, %v5499
      %v5514 = vpack.c.bf16 %v5504, %v5502
      %v5515 = vpack.c.bf16 %v5505, %v5503
      %v5516 = vpack.c.bf16 %v5508, %v5506
      %v5517 = vpack.c.bf16 %v5509, %v5507
      %s5518 = scalar_lea.vmem %s10, 24
      %v5519 = vld [vmem:[%s5518] sm:$0xf]
      %v5520 = vld [vmem:[%s5518 + $0x4] sm:$0xf]
      %v5523 = vunpack.c.l.b16 %v5519
      %v5524 = vunpack.c.l.b16 %v5520
      %v5525 = vpack.c.b16 %v5524, %v5523
      %v5527 = vsel %vm541, %v5525, 0
      %5529 = vmatpush.bf16.msra.mxu0 0
      %5530 = vmatpush.bf16.msra.mxu0 0
      %5531 = vmatpush.bf16.msra.mxu0 0
      %5532 = vmatpush.bf16.msra.mxu0 0
      %5533 = vmatpush.bf16.msra.mxu0 %v5516
      %5534 = vmatpush.bf16.msra.mxu0 %v5514
      %5535 = vmatpush.bf16.msra.mxu0 %v5512
      %5536 = vmatpush.bf16.msra.mxu0 %v5510
      %5537 = vmatmul.bf16.gmra.mxu0 %v5527
      %v5538 = vpop.f32.mrf.mxu0
      %v5539 = vadd.f32 0.0, %v5538
      %v5540 = vpop.f32.mrf.mxu0
      %v5541 = vadd.f32 0.0, %v5540
      %5542 = vdwg.mxu0
      %5543 = vmatpush.bf16.msra.mxu0 0
      %5544 = vmatpush.bf16.msra.mxu0 0
      %5545 = vmatpush.bf16.msra.mxu0 0
      %5546 = vmatpush.bf16.msra.mxu0 0
      %5547 = vmatpush.bf16.msra.mxu0 %v5517
      %5548 = vmatpush.bf16.msra.mxu0 %v5515
      %5549 = vmatpush.bf16.msra.mxu0 %v5513
      %5550 = vmatpush.bf16.msra.mxu0 %v5511
      %5551 = vmatmul.bf16.gmra.mxu0 %v5527
      %v5552 = vpop.f32.mrf.mxu0
      %v5553 = vadd.f32 0.0, %v5552
      %v5554 = vpop.f32.mrf.mxu0
      %v5555 = vadd.f32 0.0, %v5554
      %5556 = vdwg.mxu0
      %v5557 = vadd.f32 %v5442, %v5539
      %v5558 = vadd.f32 %v5443, %v5553
      %v5559 = vadd.f32 %v5444, %v5541
      %v5560 = vadd.f32 %v5445, %v5555
      %5561 = vrot.lane.b32.xlu0 %v4873, 1
      %v5562 = vpop.permute.xlu0 %5561
      %5563 = vrot.lane.b32.xlu0 %v4875, 1
      %v5564 = vpop.permute.xlu0 %5563
      %5565 = vrot.lane.b32.xlu0 %v4878, 1
      %v5566 = vpop.permute.xlu0 %5565
      %5567 = vrot.lane.b32.xlu0 %v4880, 1
      %v5568 = vpop.permute.xlu0 %5567
      %5569 = vrot.lane.b32.xlu0 %v4883, 1
      %v5570 = vpop.permute.xlu0 %5569
      %5571 = vrot.lane.b32.xlu0 %v4885, 1
      %v5572 = vpop.permute.xlu0 %5571
      %5573 = vrot.lane.b32.xlu0 %v4888, 1
      %v5574 = vpop.permute.xlu0 %5573
      %5575 = vrot.lane.b32.xlu0 %v4890, 1
      %v5576 = vpop.permute.xlu0 %5575
      %5577 = vrot.lane.b32.xlu0 %v5051, 1
      %v5578 = vpop.permute.xlu0 %5577
      %5579 = vrot.lane.b32.xlu0 %v5053, 1
      %v5580 = vpop.permute.xlu0 %5579
      %5581 = vrot.lane.b32.xlu0 %v5056, 1
      %v5582 = vpop.permute.xlu0 %5581
      %5583 = vrot.lane.b32.xlu0 %v5058, 1
      %v5584 = vpop.permute.xlu0 %5583
      %5585 = vrot.lane.b32.xlu0 %v5061, 1
      %v5586 = vpop.permute.xlu0 %5585
      %5587 = vrot.lane.b32.xlu0 %v5063, 1
      %v5588 = vpop.permute.xlu0 %5587
      %5589 = vrot.lane.b32.xlu0 %v5066, 1
      %v5590 = vpop.permute.xlu0 %5589
      %5591 = vrot.lane.b32.xlu0 %v5068, 1
      %v5592 = vpop.permute.xlu0 %5591
      %v5593 = vsel %vm1331, %v5562, %v5578
      %v5594 = vsel %vm1331, %v5564, %v5580
      %v5595 = vsel %vm1331, %v5566, %v5582
      %v5596 = vsel %vm1331, %v5568, %v5584
      %v5597 = vsel %vm1331, %v5570, %v5586
      %v5598 = vsel %vm1331, %v5572, %v5588
      %v5599 = vsel %vm1331, %v5574, %v5590
      %v5600 = vsel %vm1331, %v5576, %v5592
      %v5601 = vsel %vm1331, %v5578, %v5562
      %v5602 = vsel %vm1331, %v5580, %v5564
      %v5603 = vsel %vm1331, %v5582, %v5566
      %v5604 = vsel %vm1331, %v5584, %v5568
      %v5605 = vsel %vm1331, %v5586, %v5570
      %v5606 = vsel %vm1331, %v5588, %v5572
      %v5607 = vsel %vm1331, %v5590, %v5574
      %v5608 = vsel %vm1331, %v5592, %v5576
      %v5609 = vmul.f32 %v5601, %v1348
      %v5610 = vmul.f32 %v5593, %v1349
      %v5611 = vmul.f32 %v5602, %v1348
      %v5612 = vmul.f32 %v5594, %v1349
      %v5613 = vmul.f32 %v5603, %v1348
      %v5614 = vmul.f32 %v5595, %v1349
      %v5615 = vmul.f32 %v5604, %v1348
      %v5616 = vmul.f32 %v5596, %v1349
      %v5617 = vmul.f32 %v5605, %v1348
      %v5618 = vmul.f32 %v5597, %v1349
      %v5619 = vmul.f32 %v5606, %v1348
      %v5620 = vmul.f32 %v5598, %v1349
      %v5621 = vmul.f32 %v5607, %v1348
      %v5622 = vmul.f32 %v5599, %v1349
      %v5623 = vmul.f32 %v5608, %v1348
      %v5624 = vmul.f32 %v5600, %v1349
      %v5625 = vpack.c.bf16 %v5611, %v5609
      %v5626 = vpack.c.bf16 %v5612, %v5610
      %v5627 = vpack.c.bf16 %v5615, %v5613
      %v5628 = vpack.c.bf16 %v5616, %v5614
      %v5629 = vpack.c.bf16 %v5619, %v5617
      %v5630 = vpack.c.bf16 %v5620, %v5618
      %v5631 = vpack.c.bf16 %v5623, %v5621
      %v5632 = vpack.c.bf16 %v5624, %v5622
      %s5633 = scalar_lea.vmem %s10, 32
      %v5634 = vld [vmem:[%s5633] sm:$0xf]
      %v5635 = vld [vmem:[%s5633 + $0x4] sm:$0xf]
      %v5638 = vunpack.c.l.b16 %v5634
      %v5639 = vunpack.c.l.b16 %v5635
      %v5640 = vpack.c.b16 %v5639, %v5638
      %v5642 = vsel %vm541, %v5640, 0
      %5644 = vmatpush.bf16.msra.mxu0 0
      %5645 = vmatpush.bf16.msra.mxu0 0
      %5646 = vmatpush.bf16.msra.mxu0 0
      %5647 = vmatpush.bf16.msra.mxu0 0
      %5648 = vmatpush.bf16.msra.mxu0 %v5631
      %5649 = vmatpush.bf16.msra.mxu0 %v5629
      %5650 = vmatpush.bf16.msra.mxu0 %v5627
      %5651 = vmatpush.bf16.msra.mxu0 %v5625
      %5652 = vmatmul.bf16.gmra.mxu0 %v5642
      %v5653 = vpop.f32.mrf.mxu0
      %v5654 = vadd.f32 0.0, %v5653
      %v5655 = vpop.f32.mrf.mxu0
      %v5656 = vadd.f32 0.0, %v5655
      %5657 = vdwg.mxu0
      %5658 = vmatpush.bf16.msra.mxu0 0
      %5659 = vmatpush.bf16.msra.mxu0 0
      %5660 = vmatpush.bf16.msra.mxu0 0
      %5661 = vmatpush.bf16.msra.mxu0 0
      %5662 = vmatpush.bf16.msra.mxu0 %v5632
      %5663 = vmatpush.bf16.msra.mxu0 %v5630
      %5664 = vmatpush.bf16.msra.mxu0 %v5628
      %5665 = vmatpush.bf16.msra.mxu0 %v5626
      %5666 = vmatmul.bf16.gmra.mxu0 %v5642
      %v5667 = vpop.f32.mrf.mxu0
      %v5668 = vadd.f32 0.0, %v5667
      %v5669 = vpop.f32.mrf.mxu0
      %v5670 = vadd.f32 0.0, %v5669
      %5671 = vdwg.mxu0
      %v5672 = vadd.f32 %v5557, %v5654
      %v5673 = vadd.f32 %v5558, %v5668
      %v5674 = vadd.f32 %v5559, %v5656
      %v5675 = vadd.f32 %v5560, %v5670
      %v5676 = vpack.c.bf16 %v4855, %v4853
      %v5677 = vpack.c.bf16 %v5033, %v5031
      %v5678 = vpack.c.bf16 %v4860, %v4858
      %v5679 = vpack.c.bf16 %v5038, %v5036
      %v5680 = vpack.c.bf16 %v4865, %v4863
      %v5681 = vpack.c.bf16 %v5043, %v5041
      %v5682 = vpack.c.bf16 %v4870, %v4868
      %v5683 = vpack.c.bf16 %v5048, %v5046
      %s5684 = scalar_lea.vmem %s10, 40
      %v5685 = vld [vmem:[%s5684] sm:$0xf]
      %v5686 = vld [vmem:[%s5684 + $0x4] sm:$0xf]
      %v5689 = vunpack.c.l.b16 %v5685
      %v5690 = vunpack.c.l.b16 %v5686
      %v5691 = vpack.c.b16 %v5690, %v5689
      %v5693 = vsel %vm541, %v5691, 0
      %5695 = vmatpush.bf16.msra.mxu0 0
      %5696 = vmatpush.bf16.msra.mxu0 0
      %5697 = vmatpush.bf16.msra.mxu0 0
      %5698 = vmatpush.bf16.msra.mxu0 0
      %5699 = vmatpush.bf16.msra.mxu0 %v5682
      %5700 = vmatpush.bf16.msra.mxu0 %v5680
      %5701 = vmatpush.bf16.msra.mxu0 %v5678
      %5702 = vmatpush.bf16.msra.mxu0 %v5676
      %5703 = vmatmul.bf16.gmra.mxu0 %v5693
      %v5704 = vpop.f32.mrf.mxu0
      %v5705 = vadd.f32 0.0, %v5704
      %v5706 = vpop.f32.mrf.mxu0
      %v5707 = vadd.f32 0.0, %v5706
      %5708 = vdwg.mxu0
      %5709 = vmatpush.bf16.msra.mxu0 0
      %5710 = vmatpush.bf16.msra.mxu0 0
      %5711 = vmatpush.bf16.msra.mxu0 0
      %5712 = vmatpush.bf16.msra.mxu0 0
      %5713 = vmatpush.bf16.msra.mxu0 %v5683
      %5714 = vmatpush.bf16.msra.mxu0 %v5681
      %5715 = vmatpush.bf16.msra.mxu0 %v5679
      %5716 = vmatpush.bf16.msra.mxu0 %v5677
      %5717 = vmatmul.bf16.gmra.mxu0 %v5693
      %v5718 = vpop.f32.mrf.mxu0
      %v5719 = vadd.f32 0.0, %v5718
      %v5720 = vpop.f32.mrf.mxu0
      %v5721 = vadd.f32 0.0, %v5720
      %5722 = vdwg.mxu0
      %v5723 = vadd.f32 %v5672, %v5705
      %v5724 = vadd.f32 %v5673, %v5719
      %v5725 = vadd.f32 %v5674, %v5707
      %v5726 = vadd.f32 %v5675, %v5721
      %v5727 = vpack.c.bf16 %v4875, %v4873
      %v5728 = vpack.c.bf16 %v5053, %v5051
      %v5729 = vpack.c.bf16 %v4880, %v4878
      %v5730 = vpack.c.bf16 %v5058, %v5056
      %v5731 = vpack.c.bf16 %v4885, %v4883
      %v5732 = vpack.c.bf16 %v5063, %v5061
      %v5733 = vpack.c.bf16 %v4890, %v4888
      %v5734 = vpack.c.bf16 %v5068, %v5066
      %s5735 = scalar_lea.vmem %s10, 48
      %v5736 = vld [vmem:[%s5735] sm:$0xf]
      %v5737 = vld [vmem:[%s5735 + $0x4] sm:$0xf]
      %v5740 = vunpack.c.l.b16 %v5736
      %v5741 = vunpack.c.l.b16 %v5737
      %v5742 = vpack.c.b16 %v5741, %v5740
      %v5744 = vsel %vm541, %v5742, 0
      %5746 = vmatpush.bf16.msra.mxu0 0
      %5747 = vmatpush.bf16.msra.mxu0 0
      %5748 = vmatpush.bf16.msra.mxu0 0
      %5749 = vmatpush.bf16.msra.mxu0 0
      %5750 = vmatpush.bf16.msra.mxu0 %v5733
      %5751 = vmatpush.bf16.msra.mxu0 %v5731
      %5752 = vmatpush.bf16.msra.mxu0 %v5729
      %5753 = vmatpush.bf16.msra.mxu0 %v5727
      %5754 = vmatmul.bf16.gmra.mxu0 %v5744
      %v5755 = vpop.f32.mrf.mxu0
      %v5756 = vadd.f32 0.0, %v5755
      %v5757 = vpop.f32.mrf.mxu0
      %v5758 = vadd.f32 0.0, %v5757
      %5759 = vdwg.mxu0
      %5760 = vmatpush.bf16.msra.mxu0 0
      %5761 = vmatpush.bf16.msra.mxu0 0
      %5762 = vmatpush.bf16.msra.mxu0 0
      %5763 = vmatpush.bf16.msra.mxu0 0
      %5764 = vmatpush.bf16.msra.mxu0 %v5734
      %5765 = vmatpush.bf16.msra.mxu0 %v5732
      %5766 = vmatpush.bf16.msra.mxu0 %v5730
      %5767 = vmatpush.bf16.msra.mxu0 %v5728
      %5768 = vmatmul.bf16.gmra.mxu0 %v5744
      %v5769 = vpop.f32.mrf.mxu0
      %v5770 = vadd.f32 0.0, %v5769
      %v5771 = vpop.f32.mrf.mxu0
      %v5772 = vadd.f32 0.0, %v5771
      %5773 = vdwg.mxu0
      %v5774 = vadd.f32 %v5723, %v5756
      %v5775 = vadd.f32 %v5724, %v5770
      %v5776 = vadd.f32 %v5725, %v5758
      %v5777 = vadd.f32 %v5726, %v5772
      %5778 = vrot.lane.b32.xlu0 %v4853, 127
      %v5779 = vpop.permute.xlu0 %5778
      %5780 = vrot.lane.b32.xlu0 %v4855, 127
      %v5781 = vpop.permute.xlu0 %5780
      %5782 = vrot.lane.b32.xlu0 %v4858, 127
      %v5783 = vpop.permute.xlu0 %5782
      %5784 = vrot.lane.b32.xlu0 %v4860, 127
      %v5785 = vpop.permute.xlu0 %5784
      %5786 = vrot.lane.b32.xlu0 %v4863, 127
      %v5787 = vpop.permute.xlu0 %5786
      %5788 = vrot.lane.b32.xlu0 %v4865, 127
      %v5789 = vpop.permute.xlu0 %5788
      %5790 = vrot.lane.b32.xlu0 %v4868, 127
      %v5791 = vpop.permute.xlu0 %5790
      %5792 = vrot.lane.b32.xlu0 %v4870, 127
      %v5793 = vpop.permute.xlu0 %5792
      %5794 = vrot.lane.b32.xlu0 %v5031, 127
      %v5795 = vpop.permute.xlu0 %5794
      %5796 = vrot.lane.b32.xlu0 %v5033, 127
      %v5797 = vpop.permute.xlu0 %5796
      %5798 = vrot.lane.b32.xlu0 %v5036, 127
      %v5799 = vpop.permute.xlu0 %5798
      %5800 = vrot.lane.b32.xlu0 %v5038, 127
      %v5801 = vpop.permute.xlu0 %5800
      %5802 = vrot.lane.b32.xlu0 %v5041, 127
      %v5803 = vpop.permute.xlu0 %5802
      %5804 = vrot.lane.b32.xlu0 %v5043, 127
      %v5805 = vpop.permute.xlu0 %5804
      %5806 = vrot.lane.b32.xlu0 %v5046, 127
      %v5807 = vpop.permute.xlu0 %5806
      %5808 = vrot.lane.b32.xlu0 %v5048, 127
      %v5809 = vpop.permute.xlu0 %5808
      %v5810 = vsel %vm1521, %v5779, %v5795
      %v5811 = vsel %vm1521, %v5781, %v5797
      %v5812 = vsel %vm1521, %v5783, %v5799
      %v5813 = vsel %vm1521, %v5785, %v5801
      %v5814 = vsel %vm1521, %v5787, %v5803
      %v5815 = vsel %vm1521, %v5789, %v5805
      %v5816 = vsel %vm1521, %v5791, %v5807
      %v5817 = vsel %vm1521, %v5793, %v5809
      %v5818 = vsel %vm1521, %v5795, %v5779
      %v5819 = vsel %vm1521, %v5797, %v5781
      %v5820 = vsel %vm1521, %v5799, %v5783
      %v5821 = vsel %vm1521, %v5801, %v5785
      %v5822 = vsel %vm1521, %v5803, %v5787
      %v5823 = vsel %vm1521, %v5805, %v5789
      %v5824 = vsel %vm1521, %v5807, %v5791
      %v5825 = vsel %vm1521, %v5809, %v5793
      %v5826 = vmul.f32 %v5810, %v1538
      %v5827 = vmul.f32 %v5818, %v1539
      %v5828 = vmul.f32 %v5811, %v1538
      %v5829 = vmul.f32 %v5819, %v1539
      %v5830 = vmul.f32 %v5812, %v1538
      %v5831 = vmul.f32 %v5820, %v1539
      %v5832 = vmul.f32 %v5813, %v1538
      %v5833 = vmul.f32 %v5821, %v1539
      %v5834 = vmul.f32 %v5814, %v1538
      %v5835 = vmul.f32 %v5822, %v1539
      %v5836 = vmul.f32 %v5815, %v1538
      %v5837 = vmul.f32 %v5823, %v1539
      %v5838 = vmul.f32 %v5816, %v1538
      %v5839 = vmul.f32 %v5824, %v1539
      %v5840 = vmul.f32 %v5817, %v1538
      %v5841 = vmul.f32 %v5825, %v1539
      %v5842 = vpack.c.bf16 %v5828, %v5826
      %v5843 = vpack.c.bf16 %v5829, %v5827
      %v5844 = vpack.c.bf16 %v5832, %v5830
      %v5845 = vpack.c.bf16 %v5833, %v5831
      %v5846 = vpack.c.bf16 %v5836, %v5834
      %v5847 = vpack.c.bf16 %v5837, %v5835
      %v5848 = vpack.c.bf16 %v5840, %v5838
      %v5849 = vpack.c.bf16 %v5841, %v5839
      %s5850 = scalar_lea.vmem %s10, 56
      %v5851 = vld [vmem:[%s5850] sm:$0xf]
      %v5852 = vld [vmem:[%s5850 + $0x4] sm:$0xf]
      %v5855 = vunpack.c.l.b16 %v5851
      %v5856 = vunpack.c.l.b16 %v5852
      %v5857 = vpack.c.b16 %v5856, %v5855
      %v5859 = vsel %vm541, %v5857, 0
      %5861 = vmatpush.bf16.msra.mxu0 0
      %5862 = vmatpush.bf16.msra.mxu0 0
      %5863 = vmatpush.bf16.msra.mxu0 0
      %5864 = vmatpush.bf16.msra.mxu0 0
      %5865 = vmatpush.bf16.msra.mxu0 %v5848
      %5866 = vmatpush.bf16.msra.mxu0 %v5846
      %5867 = vmatpush.bf16.msra.mxu0 %v5844
      %5868 = vmatpush.bf16.msra.mxu0 %v5842
      %5869 = vmatmul.bf16.gmra.mxu0 %v5859
      %v5870 = vpop.f32.mrf.mxu0
      %v5871 = vadd.f32 0.0, %v5870
      %v5872 = vpop.f32.mrf.mxu0
      %v5873 = vadd.f32 0.0, %v5872
      %5874 = vdwg.mxu0
      %5875 = vmatpush.bf16.msra.mxu0 0
      %5876 = vmatpush.bf16.msra.mxu0 0
      %5877 = vmatpush.bf16.msra.mxu0 0
      %5878 = vmatpush.bf16.msra.mxu0 0
      %5879 = vmatpush.bf16.msra.mxu0 %v5849
      %5880 = vmatpush.bf16.msra.mxu0 %v5847
      %5881 = vmatpush.bf16.msra.mxu0 %v5845
      %5882 = vmatpush.bf16.msra.mxu0 %v5843
      %5883 = vmatmul.bf16.gmra.mxu0 %v5859
      %v5884 = vpop.f32.mrf.mxu0
      %v5885 = vadd.f32 0.0, %v5884
      %v5886 = vpop.f32.mrf.mxu0
      %v5887 = vadd.f32 0.0, %v5886
      %5888 = vdwg.mxu0
      %v5889 = vadd.f32 %v5774, %v5871
      %v5890 = vadd.f32 %v5775, %v5885
      %v5891 = vadd.f32 %v5776, %v5873
      %v5892 = vadd.f32 %v5777, %v5887
      %5893 = vrot.lane.b32.xlu0 %v4913, 1
      %v5894 = vpop.permute.xlu0 %5893
      %5895 = vrot.lane.b32.xlu0 %v4915, 1
      %v5896 = vpop.permute.xlu0 %5895
      %5897 = vrot.lane.b32.xlu0 %v4918, 1
      %v5898 = vpop.permute.xlu0 %5897
      %5899 = vrot.lane.b32.xlu0 %v4920, 1
      %v5900 = vpop.permute.xlu0 %5899
      %5901 = vrot.lane.b32.xlu0 %v4923, 1
      %v5902 = vpop.permute.xlu0 %5901
      %5903 = vrot.lane.b32.xlu0 %v4925, 1
      %v5904 = vpop.permute.xlu0 %5903
      %5905 = vrot.lane.b32.xlu0 %v4928, 1
      %v5906 = vpop.permute.xlu0 %5905
      %5907 = vrot.lane.b32.xlu0 %v4930, 1
      %v5908 = vpop.permute.xlu0 %5907
      %5909 = vrot.lane.b32.xlu0 %v5091, 1
      %v5910 = vpop.permute.xlu0 %5909
      %5911 = vrot.lane.b32.xlu0 %v5093, 1
      %v5912 = vpop.permute.xlu0 %5911
      %5913 = vrot.lane.b32.xlu0 %v5096, 1
      %v5914 = vpop.permute.xlu0 %5913
      %5915 = vrot.lane.b32.xlu0 %v5098, 1
      %v5916 = vpop.permute.xlu0 %5915
      %5917 = vrot.lane.b32.xlu0 %v5101, 1
      %v5918 = vpop.permute.xlu0 %5917
      %5919 = vrot.lane.b32.xlu0 %v5103, 1
      %v5920 = vpop.permute.xlu0 %5919
      %5921 = vrot.lane.b32.xlu0 %v5106, 1
      %v5922 = vpop.permute.xlu0 %5921
      %5923 = vrot.lane.b32.xlu0 %v5108, 1
      %v5924 = vpop.permute.xlu0 %5923
      %v5925 = vsel %vm1331, %v5894, %v5910
      %v5926 = vsel %vm1331, %v5896, %v5912
      %v5927 = vsel %vm1331, %v5898, %v5914
      %v5928 = vsel %vm1331, %v5900, %v5916
      %v5929 = vsel %vm1331, %v5902, %v5918
      %v5930 = vsel %vm1331, %v5904, %v5920
      %v5931 = vsel %vm1331, %v5906, %v5922
      %v5932 = vsel %vm1331, %v5908, %v5924
      %v5933 = vsel %vm1331, %v5910, %v5894
      %v5934 = vsel %vm1331, %v5912, %v5896
      %v5935 = vsel %vm1331, %v5914, %v5898
      %v5936 = vsel %vm1331, %v5916, %v5900
      %v5937 = vsel %vm1331, %v5918, %v5902
      %v5938 = vsel %vm1331, %v5920, %v5904
      %v5939 = vsel %vm1331, %v5922, %v5906
      %v5940 = vsel %vm1331, %v5924, %v5908
      %v5941 = vmul.f32 %v5933, %v1348
      %v5942 = vmul.f32 %v5925, %v1349
      %v5943 = vmul.f32 %v5934, %v1348
      %v5944 = vmul.f32 %v5926, %v1349
      %v5945 = vmul.f32 %v5935, %v1348
      %v5946 = vmul.f32 %v5927, %v1349
      %v5947 = vmul.f32 %v5936, %v1348
      %v5948 = vmul.f32 %v5928, %v1349
      %v5949 = vmul.f32 %v5937, %v1348
      %v5950 = vmul.f32 %v5929, %v1349
      %v5951 = vmul.f32 %v5938, %v1348
      %v5952 = vmul.f32 %v5930, %v1349
      %v5953 = vmul.f32 %v5939, %v1348
      %v5954 = vmul.f32 %v5931, %v1349
      %v5955 = vmul.f32 %v5940, %v1348
      %v5956 = vmul.f32 %v5932, %v1349
      %v5957 = vpack.c.bf16 %v5943, %v5941
      %v5958 = vpack.c.bf16 %v5944, %v5942
      %v5959 = vpack.c.bf16 %v5947, %v5945
      %v5960 = vpack.c.bf16 %v5948, %v5946
      %v5961 = vpack.c.bf16 %v5951, %v5949
      %v5962 = vpack.c.bf16 %v5952, %v5950
      %v5963 = vpack.c.bf16 %v5955, %v5953
      %v5964 = vpack.c.bf16 %v5956, %v5954
      %s5965 = scalar_lea.vmem %s10, 64
      %v5966 = vld [vmem:[%s5965] sm:$0xf]
      %v5967 = vld [vmem:[%s5965 + $0x4] sm:$0xf]
      %v5970 = vunpack.c.l.b16 %v5966
      %v5971 = vunpack.c.l.b16 %v5967
      %v5972 = vpack.c.b16 %v5971, %v5970
      %v5974 = vsel %vm541, %v5972, 0
      %5976 = vmatpush.bf16.msra.mxu0 0
      %5977 = vmatpush.bf16.msra.mxu0 0
      %5978 = vmatpush.bf16.msra.mxu0 0
      %5979 = vmatpush.bf16.msra.mxu0 0
      %5980 = vmatpush.bf16.msra.mxu0 %v5963
      %5981 = vmatpush.bf16.msra.mxu0 %v5961
      %5982 = vmatpush.bf16.msra.mxu0 %v5959
      %5983 = vmatpush.bf16.msra.mxu0 %v5957
      %5984 = vmatmul.bf16.gmra.mxu0 %v5974
      %v5985 = vpop.f32.mrf.mxu0
      %v5986 = vadd.f32 0.0, %v5985
      %v5987 = vpop.f32.mrf.mxu0
      %v5988 = vadd.f32 0.0, %v5987
      %5989 = vdwg.mxu0
      %5990 = vmatpush.bf16.msra.mxu0 0
      %5991 = vmatpush.bf16.msra.mxu0 0
      %5992 = vmatpush.bf16.msra.mxu0 0
      %5993 = vmatpush.bf16.msra.mxu0 0
      %5994 = vmatpush.bf16.msra.mxu0 %v5964
      %5995 = vmatpush.bf16.msra.mxu0 %v5962
      %5996 = vmatpush.bf16.msra.mxu0 %v5960
      %5997 = vmatpush.bf16.msra.mxu0 %v5958
      %5998 = vmatmul.bf16.gmra.mxu0 %v5974
      %v5999 = vpop.f32.mrf.mxu0
      %v6000 = vadd.f32 0.0, %v5999
      %v6001 = vpop.f32.mrf.mxu0
      %v6002 = vadd.f32 0.0, %v6001
      %6003 = vdwg.mxu0
      %v6004 = vadd.f32 %v5889, %v5986
      %v6005 = vadd.f32 %v5890, %v6000
      %v6006 = vadd.f32 %v5891, %v5988
      %v6007 = vadd.f32 %v5892, %v6002
      %v6008 = vpack.c.bf16 %v4895, %v4893
      %v6009 = vpack.c.bf16 %v5073, %v5071
      %v6010 = vpack.c.bf16 %v4900, %v4898
      %v6011 = vpack.c.bf16 %v5078, %v5076
      %v6012 = vpack.c.bf16 %v4905, %v4903
      %v6013 = vpack.c.bf16 %v5083, %v5081
      %v6014 = vpack.c.bf16 %v4910, %v4908
      %v6015 = vpack.c.bf16 %v5088, %v5086
      %s6016 = scalar_lea.vmem %s10, 72
      %v6017 = vld [vmem:[%s6016] sm:$0xf]
      %v6018 = vld [vmem:[%s6016 + $0x4] sm:$0xf]
      %v6021 = vunpack.c.l.b16 %v6017
      %v6022 = vunpack.c.l.b16 %v6018
      %v6023 = vpack.c.b16 %v6022, %v6021
      %v6025 = vsel %vm541, %v6023, 0
      %6027 = vmatpush.bf16.msra.mxu0 0
      %6028 = vmatpush.bf16.msra.mxu0 0
      %6029 = vmatpush.bf16.msra.mxu0 0
      %6030 = vmatpush.bf16.msra.mxu0 0
      %6031 = vmatpush.bf16.msra.mxu0 %v6014
      %6032 = vmatpush.bf16.msra.mxu0 %v6012
      %6033 = vmatpush.bf16.msra.mxu0 %v6010
      %6034 = vmatpush.bf16.msra.mxu0 %v6008
      %6035 = vmatmul.bf16.gmra.mxu0 %v6025
      %v6036 = vpop.f32.mrf.mxu0
      %v6037 = vadd.f32 0.0, %v6036
      %v6038 = vpop.f32.mrf.mxu0
      %v6039 = vadd.f32 0.0, %v6038
      %6040 = vdwg.mxu0
      %6041 = vmatpush.bf16.msra.mxu0 0
      %6042 = vmatpush.bf16.msra.mxu0 0
      %6043 = vmatpush.bf16.msra.mxu0 0
      %6044 = vmatpush.bf16.msra.mxu0 0
      %6045 = vmatpush.bf16.msra.mxu0 %v6015
      %6046 = vmatpush.bf16.msra.mxu0 %v6013
      %6047 = vmatpush.bf16.msra.mxu0 %v6011
      %6048 = vmatpush.bf16.msra.mxu0 %v6009
      %6049 = vmatmul.bf16.gmra.mxu0 %v6025
      %v6050 = vpop.f32.mrf.mxu0
      %v6051 = vadd.f32 0.0, %v6050
      %v6052 = vpop.f32.mrf.mxu0
      %v6053 = vadd.f32 0.0, %v6052
      %6054 = vdwg.mxu0
      %v6055 = vadd.f32 %v6004, %v6037
      %v6056 = vadd.f32 %v6005, %v6051
      %v6057 = vadd.f32 %v6006, %v6039
      %v6058 = vadd.f32 %v6007, %v6053
      %v6059 = vpack.c.bf16 %v4915, %v4913
      %v6060 = vpack.c.bf16 %v5093, %v5091
      %v6061 = vpack.c.bf16 %v4920, %v4918
      %v6062 = vpack.c.bf16 %v5098, %v5096
      %v6063 = vpack.c.bf16 %v4925, %v4923
      %v6064 = vpack.c.bf16 %v5103, %v5101
      %v6065 = vpack.c.bf16 %v4930, %v4928
      %v6066 = vpack.c.bf16 %v5108, %v5106
      %s6067 = scalar_lea.vmem %s10, 80
      %v6068 = vld [vmem:[%s6067] sm:$0xf]
      %v6069 = vld [vmem:[%s6067 + $0x4] sm:$0xf]
      %v6072 = vunpack.c.l.b16 %v6068
      %v6073 = vunpack.c.l.b16 %v6069
      %v6074 = vpack.c.b16 %v6073, %v6072
      %v6076 = vsel %vm541, %v6074, 0
      %6078 = vmatpush.bf16.msra.mxu0 0
      %6079 = vmatpush.bf16.msra.mxu0 0
      %6080 = vmatpush.bf16.msra.mxu0 0
      %6081 = vmatpush.bf16.msra.mxu0 0
      %6082 = vmatpush.bf16.msra.mxu0 %v6065
      %6083 = vmatpush.bf16.msra.mxu0 %v6063
      %6084 = vmatpush.bf16.msra.mxu0 %v6061
      %6085 = vmatpush.bf16.msra.mxu0 %v6059
      %6086 = vmatmul.bf16.gmra.mxu0 %v6076
      %v6087 = vpop.f32.mrf.mxu0
      %v6088 = vadd.f32 0.0, %v6087
      %v6089 = vpop.f32.mrf.mxu0
      %v6090 = vadd.f32 0.0, %v6089
      %6091 = vdwg.mxu0
      %6092 = vmatpush.bf16.msra.mxu0 0
      %6093 = vmatpush.bf16.msra.mxu0 0
      %6094 = vmatpush.bf16.msra.mxu0 0
      %6095 = vmatpush.bf16.msra.mxu0 0
      %6096 = vmatpush.bf16.msra.mxu0 %v6066
      %6097 = vmatpush.bf16.msra.mxu0 %v6064
      %6098 = vmatpush.bf16.msra.mxu0 %v6062
      %6099 = vmatpush.bf16.msra.mxu0 %v6060
      %6100 = vmatmul.bf16.gmra.mxu0 %v6076
      %v6101 = vpop.f32.mrf.mxu0
      %v6102 = vadd.f32 0.0, %v6101
      %v6103 = vpop.f32.mrf.mxu0
      %v6104 = vadd.f32 0.0, %v6103
      %6105 = vdwg.mxu0
      %v6106 = vadd.f32 %v6055, %v6088
      %v6107 = vadd.f32 %v6056, %v6102
      %v6108 = vadd.f32 %v6057, %v6090
      %v6109 = vadd.f32 %v6058, %v6104
      %6110 = vrot.lane.b32.xlu0 %v4893, 127
      %v6111 = vpop.permute.xlu0 %6110
      %6112 = vrot.lane.b32.xlu0 %v4895, 127
      %v6113 = vpop.permute.xlu0 %6112
      %6114 = vrot.lane.b32.xlu0 %v4898, 127
      %v6115 = vpop.permute.xlu0 %6114
      %6116 = vrot.lane.b32.xlu0 %v4900, 127
      %v6117 = vpop.permute.xlu0 %6116
      %6118 = vrot.lane.b32.xlu0 %v4903, 127
      %v6119 = vpop.permute.xlu0 %6118
      %6120 = vrot.lane.b32.xlu0 %v4905, 127
      %v6121 = vpop.permute.xlu0 %6120
      %6122 = vrot.lane.b32.xlu0 %v4908, 127
      %v6123 = vpop.permute.xlu0 %6122
      %6124 = vrot.lane.b32.xlu0 %v4910, 127
      %v6125 = vpop.permute.xlu0 %6124
      %6126 = vrot.lane.b32.xlu0 %v5071, 127
      %v6127 = vpop.permute.xlu0 %6126
      %6128 = vrot.lane.b32.xlu0 %v5073, 127
      %v6129 = vpop.permute.xlu0 %6128
      %6130 = vrot.lane.b32.xlu0 %v5076, 127
      %v6131 = vpop.permute.xlu0 %6130
      %6132 = vrot.lane.b32.xlu0 %v5078, 127
      %v6133 = vpop.permute.xlu0 %6132
      %6134 = vrot.lane.b32.xlu0 %v5081, 127
      %v6135 = vpop.permute.xlu0 %6134
      %6136 = vrot.lane.b32.xlu0 %v5083, 127
      %v6137 = vpop.permute.xlu0 %6136
      %6138 = vrot.lane.b32.xlu0 %v5086, 127
      %v6139 = vpop.permute.xlu0 %6138
      %6140 = vrot.lane.b32.xlu0 %v5088, 127
      %v6141 = vpop.permute.xlu0 %6140
      %v6142 = vsel %vm1521, %v6111, %v6127
      %v6143 = vsel %vm1521, %v6113, %v6129
      %v6144 = vsel %vm1521, %v6115, %v6131
      %v6145 = vsel %vm1521, %v6117, %v6133
      %v6146 = vsel %vm1521, %v6119, %v6135
      %v6147 = vsel %vm1521, %v6121, %v6137
      %v6148 = vsel %vm1521, %v6123, %v6139
      %v6149 = vsel %vm1521, %v6125, %v6141
      %v6150 = vsel %vm1521, %v6127, %v6111
      %v6151 = vsel %vm1521, %v6129, %v6113
      %v6152 = vsel %vm1521, %v6131, %v6115
      %v6153 = vsel %vm1521, %v6133, %v6117
      %v6154 = vsel %vm1521, %v6135, %v6119
      %v6155 = vsel %vm1521, %v6137, %v6121
      %v6156 = vsel %vm1521, %v6139, %v6123
      %v6157 = vsel %vm1521, %v6141, %v6125
      %v6158 = vmul.f32 %v6142, %v1538
      %v6159 = vmul.f32 %v6150, %v1539
      %v6160 = vmul.f32 %v6143, %v1538
      %v6161 = vmul.f32 %v6151, %v1539
      %v6162 = vmul.f32 %v6144, %v1538
      %v6163 = vmul.f32 %v6152, %v1539
      %v6164 = vmul.f32 %v6145, %v1538
      %v6165 = vmul.f32 %v6153, %v1539
      %v6166 = vmul.f32 %v6146, %v1538
      %v6167 = vmul.f32 %v6154, %v1539
      %v6168 = vmul.f32 %v6147, %v1538
      %v6169 = vmul.f32 %v6155, %v1539
      %v6170 = vmul.f32 %v6148, %v1538
      %v6171 = vmul.f32 %v6156, %v1539
      %v6172 = vmul.f32 %v6149, %v1538
      %v6173 = vmul.f32 %v6157, %v1539
      %v6174 = vpack.c.bf16 %v6160, %v6158
      %v6175 = vpack.c.bf16 %v6161, %v6159
      %v6176 = vpack.c.bf16 %v6164, %v6162
      %v6177 = vpack.c.bf16 %v6165, %v6163
      %v6178 = vpack.c.bf16 %v6168, %v6166
      %v6179 = vpack.c.bf16 %v6169, %v6167
      %v6180 = vpack.c.bf16 %v6172, %v6170
      %v6181 = vpack.c.bf16 %v6173, %v6171
      %s6182 = scalar_lea.vmem %s10, 88
      %v6183 = vld [vmem:[%s6182] sm:$0xf]
      %v6184 = vld [vmem:[%s6182 + $0x4] sm:$0xf]
      %v6187 = vunpack.c.l.b16 %v6183
      %v6188 = vunpack.c.l.b16 %v6184
      %v6189 = vpack.c.b16 %v6188, %v6187
      %v6191 = vsel %vm541, %v6189, 0
      %6193 = vmatpush.bf16.msra.mxu0 0
      %6194 = vmatpush.bf16.msra.mxu0 0
      %6195 = vmatpush.bf16.msra.mxu0 0
      %6196 = vmatpush.bf16.msra.mxu0 0
      %6197 = vmatpush.bf16.msra.mxu0 %v6180
      %6198 = vmatpush.bf16.msra.mxu0 %v6178
      %6199 = vmatpush.bf16.msra.mxu0 %v6176
      %6200 = vmatpush.bf16.msra.mxu0 %v6174
      %6201 = vmatmul.bf16.gmra.mxu0 %v6191
      %v6202 = vpop.f32.mrf.mxu0
      %v6203 = vadd.f32 0.0, %v6202
      %v6204 = vpop.f32.mrf.mxu0
      %v6205 = vadd.f32 0.0, %v6204
      %6206 = vdwg.mxu0
      %6207 = vmatpush.bf16.msra.mxu0 0
      %6208 = vmatpush.bf16.msra.mxu0 0
      %6209 = vmatpush.bf16.msra.mxu0 0
      %6210 = vmatpush.bf16.msra.mxu0 0
      %6211 = vmatpush.bf16.msra.mxu0 %v6181
      %6212 = vmatpush.bf16.msra.mxu0 %v6179
      %6213 = vmatpush.bf16.msra.mxu0 %v6177
      %6214 = vmatpush.bf16.msra.mxu0 %v6175
      %6215 = vmatmul.bf16.gmra.mxu0 %v6191
      %v6216 = vpop.f32.mrf.mxu0
      %v6217 = vadd.f32 0.0, %v6216
      %v6218 = vpop.f32.mrf.mxu0
      %v6219 = vadd.f32 0.0, %v6218
      %6220 = vdwg.mxu0
      %v6221 = vadd.f32 %v6106, %v6203
      %v6222 = vadd.f32 %v6107, %v6217
      %v6223 = vadd.f32 %v6108, %v6205
      %v6224 = vadd.f32 %v6109, %v6219
      %6225 = vrot.lane.b32.xlu0 %v4873, 113
      %v6226 = vpop.permute.xlu0 %6225
      %6227 = vrot.lane.b32.xlu0 %v4875, 113
      %v6228 = vpop.permute.xlu0 %6227
      %6229 = vrot.lane.b32.xlu0 %v4878, 113
      %v6230 = vpop.permute.xlu0 %6229
      %6231 = vrot.lane.b32.xlu0 %v4880, 113
      %v6232 = vpop.permute.xlu0 %6231
      %6233 = vrot.lane.b32.xlu0 %v4883, 113
      %v6234 = vpop.permute.xlu0 %6233
      %6235 = vrot.lane.b32.xlu0 %v4885, 113
      %v6236 = vpop.permute.xlu0 %6235
      %6237 = vrot.lane.b32.xlu0 %v4888, 113
      %v6238 = vpop.permute.xlu0 %6237
      %6239 = vrot.lane.b32.xlu0 %v4890, 113
      %v6240 = vpop.permute.xlu0 %6239
      %6241 = vrot.lane.b32.xlu0 %v5051, 113
      %v6242 = vpop.permute.xlu0 %6241
      %6243 = vrot.lane.b32.xlu0 %v5053, 113
      %v6244 = vpop.permute.xlu0 %6243
      %6245 = vrot.lane.b32.xlu0 %v5056, 113
      %v6246 = vpop.permute.xlu0 %6245
      %6247 = vrot.lane.b32.xlu0 %v5058, 113
      %v6248 = vpop.permute.xlu0 %6247
      %6249 = vrot.lane.b32.xlu0 %v5061, 113
      %v6250 = vpop.permute.xlu0 %6249
      %6251 = vrot.lane.b32.xlu0 %v5063, 113
      %v6252 = vpop.permute.xlu0 %6251
      %6253 = vrot.lane.b32.xlu0 %v5066, 113
      %v6254 = vpop.permute.xlu0 %6253
      %6255 = vrot.lane.b32.xlu0 %v5068, 113
      %v6256 = vpop.permute.xlu0 %6255
      %v6257 = vsel %vm1711, %v6226, %v6242
      %v6258 = vsel %vm1711, %v6228, %v6244
      %v6259 = vsel %vm1711, %v6230, %v6246
      %v6260 = vsel %vm1711, %v6232, %v6248
      %v6261 = vsel %vm1711, %v6234, %v6250
      %v6262 = vsel %vm1711, %v6236, %v6252
      %v6263 = vsel %vm1711, %v6238, %v6254
      %v6264 = vsel %vm1711, %v6240, %v6256
      %v6265 = vsel %vm1711, %v6242, %v6226
      %v6266 = vsel %vm1711, %v6244, %v6228
      %v6267 = vsel %vm1711, %v6246, %v6230
      %v6268 = vsel %vm1711, %v6248, %v6232
      %v6269 = vsel %vm1711, %v6250, %v6234
      %v6270 = vsel %vm1711, %v6252, %v6236
      %v6271 = vsel %vm1711, %v6254, %v6238
      %v6272 = vsel %vm1711, %v6256, %v6240
      %v6273 = vmul.f32 %v6257, %v1728
      %v6274 = vmul.f32 %v6265, %v1729
      %v6275 = vmul.f32 %v6258, %v1728
      %v6276 = vmul.f32 %v6266, %v1729
      %v6277 = vmul.f32 %v6259, %v1728
      %v6278 = vmul.f32 %v6267, %v1729
      %v6279 = vmul.f32 %v6260, %v1728
      %v6280 = vmul.f32 %v6268, %v1729
      %v6281 = vmul.f32 %v6261, %v1728
      %v6282 = vmul.f32 %v6269, %v1729
      %v6283 = vmul.f32 %v6262, %v1728
      %v6284 = vmul.f32 %v6270, %v1729
      %v6285 = vmul.f32 %v6263, %v1728
      %v6286 = vmul.f32 %v6271, %v1729
      %v6287 = vmul.f32 %v6264, %v1728
      %v6288 = vmul.f32 %v6272, %v1729
      %v6289 = vpack.c.bf16 %v6275, %v6273
      %v6290 = vpack.c.bf16 %v6276, %v6274
      %v6291 = vpack.c.bf16 %v6279, %v6277
      %v6292 = vpack.c.bf16 %v6280, %v6278
      %v6293 = vpack.c.bf16 %v6283, %v6281
      %v6294 = vpack.c.bf16 %v6284, %v6282
      %v6295 = vpack.c.bf16 %v6287, %v6285
      %v6296 = vpack.c.bf16 %v6288, %v6286
      %s6297 = scalar_lea.vmem %s10, 96
      %v6298 = vld [vmem:[%s6297] sm:$0xf]
      %v6299 = vld [vmem:[%s6297 + $0x4] sm:$0xf]
      %v6302 = vunpack.c.l.b16 %v6298
      %v6303 = vunpack.c.l.b16 %v6299
      %v6304 = vpack.c.b16 %v6303, %v6302
      %v6306 = vsel %vm541, %v6304, 0
      %6308 = vmatpush.bf16.msra.mxu0 0
      %6309 = vmatpush.bf16.msra.mxu0 0
      %6310 = vmatpush.bf16.msra.mxu0 0
      %6311 = vmatpush.bf16.msra.mxu0 0
      %6312 = vmatpush.bf16.msra.mxu0 %v6295
      %6313 = vmatpush.bf16.msra.mxu0 %v6293
      %6314 = vmatpush.bf16.msra.mxu0 %v6291
      %6315 = vmatpush.bf16.msra.mxu0 %v6289
      %6316 = vmatmul.bf16.gmra.mxu0 %v6306
      %v6317 = vpop.f32.mrf.mxu0
      %v6318 = vadd.f32 0.0, %v6317
      %v6319 = vpop.f32.mrf.mxu0
      %v6320 = vadd.f32 0.0, %v6319
      %6321 = vdwg.mxu0
      %6322 = vmatpush.bf16.msra.mxu0 0
      %6323 = vmatpush.bf16.msra.mxu0 0
      %6324 = vmatpush.bf16.msra.mxu0 0
      %6325 = vmatpush.bf16.msra.mxu0 0
      %6326 = vmatpush.bf16.msra.mxu0 %v6296
      %6327 = vmatpush.bf16.msra.mxu0 %v6294
      %6328 = vmatpush.bf16.msra.mxu0 %v6292
      %6329 = vmatpush.bf16.msra.mxu0 %v6290
      %6330 = vmatmul.bf16.gmra.mxu0 %v6306
      %v6331 = vpop.f32.mrf.mxu0
      %v6332 = vadd.f32 0.0, %v6331
      %v6333 = vpop.f32.mrf.mxu0
      %v6334 = vadd.f32 0.0, %v6333
      %6335 = vdwg.mxu0
      %v6336 = vadd.f32 %v6221, %v6318
      %v6337 = vadd.f32 %v6222, %v6332
      %v6338 = vadd.f32 %v6223, %v6320
      %v6339 = vadd.f32 %v6224, %v6334
      %6340 = vrot.lane.b32.xlu0 %v4853, 112
      %v6341 = vpop.permute.xlu0 %6340
      %6342 = vrot.lane.b32.xlu0 %v4855, 112
      %v6343 = vpop.permute.xlu0 %6342
      %6344 = vrot.lane.b32.xlu0 %v4858, 112
      %v6345 = vpop.permute.xlu0 %6344
      %6346 = vrot.lane.b32.xlu0 %v4860, 112
      %v6347 = vpop.permute.xlu0 %6346
      %6348 = vrot.lane.b32.xlu0 %v4863, 112
      %v6349 = vpop.permute.xlu0 %6348
      %6350 = vrot.lane.b32.xlu0 %v4865, 112
      %v6351 = vpop.permute.xlu0 %6350
      %6352 = vrot.lane.b32.xlu0 %v4868, 112
      %v6353 = vpop.permute.xlu0 %6352
      %6354 = vrot.lane.b32.xlu0 %v4870, 112
      %v6355 = vpop.permute.xlu0 %6354
      %6356 = vrot.lane.b32.xlu0 %v5031, 112
      %v6357 = vpop.permute.xlu0 %6356
      %6358 = vrot.lane.b32.xlu0 %v5033, 112
      %v6359 = vpop.permute.xlu0 %6358
      %6360 = vrot.lane.b32.xlu0 %v5036, 112
      %v6361 = vpop.permute.xlu0 %6360
      %6362 = vrot.lane.b32.xlu0 %v5038, 112
      %v6363 = vpop.permute.xlu0 %6362
      %6364 = vrot.lane.b32.xlu0 %v5041, 112
      %v6365 = vpop.permute.xlu0 %6364
      %6366 = vrot.lane.b32.xlu0 %v5043, 112
      %v6367 = vpop.permute.xlu0 %6366
      %6368 = vrot.lane.b32.xlu0 %v5046, 112
      %v6369 = vpop.permute.xlu0 %6368
      %6370 = vrot.lane.b32.xlu0 %v5048, 112
      %v6371 = vpop.permute.xlu0 %6370
      %v6372 = vsel %vm1901, %v6341, %v6357
      %v6373 = vsel %vm1901, %v6343, %v6359
      %v6374 = vsel %vm1901, %v6345, %v6361
      %v6375 = vsel %vm1901, %v6347, %v6363
      %v6376 = vsel %vm1901, %v6349, %v6365
      %v6377 = vsel %vm1901, %v6351, %v6367
      %v6378 = vsel %vm1901, %v6353, %v6369
      %v6379 = vsel %vm1901, %v6355, %v6371
      %v6380 = vsel %vm1901, %v6357, %v6341
      %v6381 = vsel %vm1901, %v6359, %v6343
      %v6382 = vsel %vm1901, %v6361, %v6345
      %v6383 = vsel %vm1901, %v6363, %v6347
      %v6384 = vsel %vm1901, %v6365, %v6349
      %v6385 = vsel %vm1901, %v6367, %v6351
      %v6386 = vsel %vm1901, %v6369, %v6353
      %v6387 = vsel %vm1901, %v6371, %v6355
      %v6388 = vmul.f32 %v6372, %v1918
      %v6389 = vmul.f32 %v6380, %v1919
      %v6390 = vmul.f32 %v6373, %v1918
      %v6391 = vmul.f32 %v6381, %v1919
      %v6392 = vmul.f32 %v6374, %v1918
      %v6393 = vmul.f32 %v6382, %v1919
      %v6394 = vmul.f32 %v6375, %v1918
      %v6395 = vmul.f32 %v6383, %v1919
      %v6396 = vmul.f32 %v6376, %v1918
      %v6397 = vmul.f32 %v6384, %v1919
      %v6398 = vmul.f32 %v6377, %v1918
      %v6399 = vmul.f32 %v6385, %v1919
      %v6400 = vmul.f32 %v6378, %v1918
      %v6401 = vmul.f32 %v6386, %v1919
      %v6402 = vmul.f32 %v6379, %v1918
      %v6403 = vmul.f32 %v6387, %v1919
      %v6404 = vpack.c.bf16 %v6390, %v6388
      %v6405 = vpack.c.bf16 %v6391, %v6389
      %v6406 = vpack.c.bf16 %v6394, %v6392
      %v6407 = vpack.c.bf16 %v6395, %v6393
      %v6408 = vpack.c.bf16 %v6398, %v6396
      %v6409 = vpack.c.bf16 %v6399, %v6397
      %v6410 = vpack.c.bf16 %v6402, %v6400
      %v6411 = vpack.c.bf16 %v6403, %v6401
      %s6412 = scalar_lea.vmem %s10, 104
      %v6413 = vld [vmem:[%s6412] sm:$0xf]
      %v6414 = vld [vmem:[%s6412 + $0x4] sm:$0xf]
      %v6417 = vunpack.c.l.b16 %v6413
      %v6418 = vunpack.c.l.b16 %v6414
      %v6419 = vpack.c.b16 %v6418, %v6417
      %v6421 = vsel %vm541, %v6419, 0
      %6423 = vmatpush.bf16.msra.mxu0 0
      %6424 = vmatpush.bf16.msra.mxu0 0
      %6425 = vmatpush.bf16.msra.mxu0 0
      %6426 = vmatpush.bf16.msra.mxu0 0
      %6427 = vmatpush.bf16.msra.mxu0 %v6410
      %6428 = vmatpush.bf16.msra.mxu0 %v6408
      %6429 = vmatpush.bf16.msra.mxu0 %v6406
      %6430 = vmatpush.bf16.msra.mxu0 %v6404
      %6431 = vmatmul.bf16.gmra.mxu0 %v6421
      %v6432 = vpop.f32.mrf.mxu0
      %v6433 = vadd.f32 0.0, %v6432
      %v6434 = vpop.f32.mrf.mxu0
      %v6435 = vadd.f32 0.0, %v6434
      %6436 = vdwg.mxu0
      %6437 = vmatpush.bf16.msra.mxu0 0
      %6438 = vmatpush.bf16.msra.mxu0 0
      %6439 = vmatpush.bf16.msra.mxu0 0
      %6440 = vmatpush.bf16.msra.mxu0 0
      %6441 = vmatpush.bf16.msra.mxu0 %v6411
      %6442 = vmatpush.bf16.msra.mxu0 %v6409
      %6443 = vmatpush.bf16.msra.mxu0 %v6407
      %6444 = vmatpush.bf16.msra.mxu0 %v6405
      %6445 = vmatmul.bf16.gmra.mxu0 %v6421
      %v6446 = vpop.f32.mrf.mxu0
      %v6447 = vadd.f32 0.0, %v6446
      %v6448 = vpop.f32.mrf.mxu0
      %v6449 = vadd.f32 0.0, %v6448
      %6450 = vdwg.mxu0
      %v6451 = vadd.f32 %v6336, %v6433
      %v6452 = vadd.f32 %v6337, %v6447
      %v6453 = vadd.f32 %v6338, %v6435
      %v6454 = vadd.f32 %v6339, %v6449
      %6455 = vrot.lane.b32.xlu0 %v4873, 112
      %v6456 = vpop.permute.xlu0 %6455
      %6457 = vrot.lane.b32.xlu0 %v4875, 112
      %v6458 = vpop.permute.xlu0 %6457
      %6459 = vrot.lane.b32.xlu0 %v4878, 112
      %v6460 = vpop.permute.xlu0 %6459
      %6461 = vrot.lane.b32.xlu0 %v4880, 112
      %v6462 = vpop.permute.xlu0 %6461
      %6463 = vrot.lane.b32.xlu0 %v4883, 112
      %v6464 = vpop.permute.xlu0 %6463
      %6465 = vrot.lane.b32.xlu0 %v4885, 112
      %v6466 = vpop.permute.xlu0 %6465
      %6467 = vrot.lane.b32.xlu0 %v4888, 112
      %v6468 = vpop.permute.xlu0 %6467
      %6469 = vrot.lane.b32.xlu0 %v4890, 112
      %v6470 = vpop.permute.xlu0 %6469
      %6471 = vrot.lane.b32.xlu0 %v5051, 112
      %v6472 = vpop.permute.xlu0 %6471
      %6473 = vrot.lane.b32.xlu0 %v5053, 112
      %v6474 = vpop.permute.xlu0 %6473
      %6475 = vrot.lane.b32.xlu0 %v5056, 112
      %v6476 = vpop.permute.xlu0 %6475
      %6477 = vrot.lane.b32.xlu0 %v5058, 112
      %v6478 = vpop.permute.xlu0 %6477
      %6479 = vrot.lane.b32.xlu0 %v5061, 112
      %v6480 = vpop.permute.xlu0 %6479
      %6481 = vrot.lane.b32.xlu0 %v5063, 112
      %v6482 = vpop.permute.xlu0 %6481
      %6483 = vrot.lane.b32.xlu0 %v5066, 112
      %v6484 = vpop.permute.xlu0 %6483
      %6485 = vrot.lane.b32.xlu0 %v5068, 112
      %v6486 = vpop.permute.xlu0 %6485
      %v6487 = vsel %vm1901, %v6456, %v6472
      %v6488 = vsel %vm1901, %v6458, %v6474
      %v6489 = vsel %vm1901, %v6460, %v6476
      %v6490 = vsel %vm1901, %v6462, %v6478
      %v6491 = vsel %vm1901, %v6464, %v6480
      %v6492 = vsel %vm1901, %v6466, %v6482
      %v6493 = vsel %vm1901, %v6468, %v6484
      %v6494 = vsel %vm1901, %v6470, %v6486
      %v6495 = vsel %vm1901, %v6472, %v6456
      %v6496 = vsel %vm1901, %v6474, %v6458
      %v6497 = vsel %vm1901, %v6476, %v6460
      %v6498 = vsel %vm1901, %v6478, %v6462
      %v6499 = vsel %vm1901, %v6480, %v6464
      %v6500 = vsel %vm1901, %v6482, %v6466
      %v6501 = vsel %vm1901, %v6484, %v6468
      %v6502 = vsel %vm1901, %v6486, %v6470
      %v6503 = vmul.f32 %v6487, %v1918
      %v6504 = vmul.f32 %v6495, %v1919
      %v6505 = vmul.f32 %v6488, %v1918
      %v6506 = vmul.f32 %v6496, %v1919
      %v6507 = vmul.f32 %v6489, %v1918
      %v6508 = vmul.f32 %v6497, %v1919
      %v6509 = vmul.f32 %v6490, %v1918
      %v6510 = vmul.f32 %v6498, %v1919
      %v6511 = vmul.f32 %v6491, %v1918
      %v6512 = vmul.f32 %v6499, %v1919
      %v6513 = vmul.f32 %v6492, %v1918
      %v6514 = vmul.f32 %v6500, %v1919
      %v6515 = vmul.f32 %v6493, %v1918
      %v6516 = vmul.f32 %v6501, %v1919
      %v6517 = vmul.f32 %v6494, %v1918
      %v6518 = vmul.f32 %v6502, %v1919
      %v6519 = vpack.c.bf16 %v6505, %v6503
      %v6520 = vpack.c.bf16 %v6506, %v6504
      %v6521 = vpack.c.bf16 %v6509, %v6507
      %v6522 = vpack.c.bf16 %v6510, %v6508
      %v6523 = vpack.c.bf16 %v6513, %v6511
      %v6524 = vpack.c.bf16 %v6514, %v6512
      %v6525 = vpack.c.bf16 %v6517, %v6515
      %v6526 = vpack.c.bf16 %v6518, %v6516
      %s6527 = scalar_lea.vmem %s10, 112
      %v6528 = vld [vmem:[%s6527] sm:$0xf]
      %v6529 = vld [vmem:[%s6527 + $0x4] sm:$0xf]
      %v6532 = vunpack.c.l.b16 %v6528
      %v6533 = vunpack.c.l.b16 %v6529
      %v6534 = vpack.c.b16 %v6533, %v6532
      %v6536 = vsel %vm541, %v6534, 0
      %6538 = vmatpush.bf16.msra.mxu0 0
      %6539 = vmatpush.bf16.msra.mxu0 0
      %6540 = vmatpush.bf16.msra.mxu0 0
      %6541 = vmatpush.bf16.msra.mxu0 0
      %6542 = vmatpush.bf16.msra.mxu0 %v6525
      %6543 = vmatpush.bf16.msra.mxu0 %v6523
      %6544 = vmatpush.bf16.msra.mxu0 %v6521
      %6545 = vmatpush.bf16.msra.mxu0 %v6519
      %6546 = vmatmul.bf16.gmra.mxu0 %v6536
      %v6547 = vpop.f32.mrf.mxu0
      %v6548 = vadd.f32 0.0, %v6547
      %v6549 = vpop.f32.mrf.mxu0
      %v6550 = vadd.f32 0.0, %v6549
      %6551 = vdwg.mxu0
      %6552 = vmatpush.bf16.msra.mxu0 0
      %6553 = vmatpush.bf16.msra.mxu0 0
      %6554 = vmatpush.bf16.msra.mxu0 0
      %6555 = vmatpush.bf16.msra.mxu0 0
      %6556 = vmatpush.bf16.msra.mxu0 %v6526
      %6557 = vmatpush.bf16.msra.mxu0 %v6524
      %6558 = vmatpush.bf16.msra.mxu0 %v6522
      %6559 = vmatpush.bf16.msra.mxu0 %v6520
      %6560 = vmatmul.bf16.gmra.mxu0 %v6536
      %v6561 = vpop.f32.mrf.mxu0
      %v6562 = vadd.f32 0.0, %v6561
      %v6563 = vpop.f32.mrf.mxu0
      %v6564 = vadd.f32 0.0, %v6563
      %6565 = vdwg.mxu0
      %v6566 = vadd.f32 %v6451, %v6548
      %v6567 = vadd.f32 %v6452, %v6562
      %v6568 = vadd.f32 %v6453, %v6550
      %v6569 = vadd.f32 %v6454, %v6564
      %6570 = vrot.lane.b32.xlu0 %v4853, 111
      %v6571 = vpop.permute.xlu0 %6570
      %6572 = vrot.lane.b32.xlu0 %v4855, 111
      %v6573 = vpop.permute.xlu0 %6572
      %6574 = vrot.lane.b32.xlu0 %v4858, 111
      %v6575 = vpop.permute.xlu0 %6574
      %6576 = vrot.lane.b32.xlu0 %v4860, 111
      %v6577 = vpop.permute.xlu0 %6576
      %6578 = vrot.lane.b32.xlu0 %v4863, 111
      %v6579 = vpop.permute.xlu0 %6578
      %6580 = vrot.lane.b32.xlu0 %v4865, 111
      %v6581 = vpop.permute.xlu0 %6580
      %6582 = vrot.lane.b32.xlu0 %v4868, 111
      %v6583 = vpop.permute.xlu0 %6582
      %6584 = vrot.lane.b32.xlu0 %v4870, 111
      %v6585 = vpop.permute.xlu0 %6584
      %6586 = vrot.lane.b32.xlu0 %v5031, 111
      %v6587 = vpop.permute.xlu0 %6586
      %6588 = vrot.lane.b32.xlu0 %v5033, 111
      %v6589 = vpop.permute.xlu0 %6588
      %6590 = vrot.lane.b32.xlu0 %v5036, 111
      %v6591 = vpop.permute.xlu0 %6590
      %6592 = vrot.lane.b32.xlu0 %v5038, 111
      %v6593 = vpop.permute.xlu0 %6592
      %6594 = vrot.lane.b32.xlu0 %v5041, 111
      %v6595 = vpop.permute.xlu0 %6594
      %6596 = vrot.lane.b32.xlu0 %v5043, 111
      %v6597 = vpop.permute.xlu0 %6596
      %6598 = vrot.lane.b32.xlu0 %v5046, 111
      %v6599 = vpop.permute.xlu0 %6598
      %6600 = vrot.lane.b32.xlu0 %v5048, 111
      %v6601 = vpop.permute.xlu0 %6600
      %v6602 = vsel %vm2091, %v6571, %v6587
      %v6603 = vsel %vm2091, %v6573, %v6589
      %v6604 = vsel %vm2091, %v6575, %v6591
      %v6605 = vsel %vm2091, %v6577, %v6593
      %v6606 = vsel %vm2091, %v6579, %v6595
      %v6607 = vsel %vm2091, %v6581, %v6597
      %v6608 = vsel %vm2091, %v6583, %v6599
      %v6609 = vsel %vm2091, %v6585, %v6601
      %v6610 = vsel %vm2091, %v6587, %v6571
      %v6611 = vsel %vm2091, %v6589, %v6573
      %v6612 = vsel %vm2091, %v6591, %v6575
      %v6613 = vsel %vm2091, %v6593, %v6577
      %v6614 = vsel %vm2091, %v6595, %v6579
      %v6615 = vsel %vm2091, %v6597, %v6581
      %v6616 = vsel %vm2091, %v6599, %v6583
      %v6617 = vsel %vm2091, %v6601, %v6585
      %v6618 = vmul.f32 %v6602, %v2108
      %v6619 = vmul.f32 %v6610, %v2109
      %v6620 = vmul.f32 %v6603, %v2108
      %v6621 = vmul.f32 %v6611, %v2109
      %v6622 = vmul.f32 %v6604, %v2108
      %v6623 = vmul.f32 %v6612, %v2109
      %v6624 = vmul.f32 %v6605, %v2108
      %v6625 = vmul.f32 %v6613, %v2109
      %v6626 = vmul.f32 %v6606, %v2108
      %v6627 = vmul.f32 %v6614, %v2109
      %v6628 = vmul.f32 %v6607, %v2108
      %v6629 = vmul.f32 %v6615, %v2109
      %v6630 = vmul.f32 %v6608, %v2108
      %v6631 = vmul.f32 %v6616, %v2109
      %v6632 = vmul.f32 %v6609, %v2108
      %v6633 = vmul.f32 %v6617, %v2109
      %v6634 = vpack.c.bf16 %v6620, %v6618
      %v6635 = vpack.c.bf16 %v6621, %v6619
      %v6636 = vpack.c.bf16 %v6624, %v6622
      %v6637 = vpack.c.bf16 %v6625, %v6623
      %v6638 = vpack.c.bf16 %v6628, %v6626
      %v6639 = vpack.c.bf16 %v6629, %v6627
      %v6640 = vpack.c.bf16 %v6632, %v6630
      %v6641 = vpack.c.bf16 %v6633, %v6631
      %s6642 = scalar_lea.vmem %s10, 120
      %v6643 = vld [vmem:[%s6642] sm:$0xf]
      %v6644 = vld [vmem:[%s6642 + $0x4] sm:$0xf]
      %v6647 = vunpack.c.l.b16 %v6643
      %v6648 = vunpack.c.l.b16 %v6644
      %v6649 = vpack.c.b16 %v6648, %v6647
      %v6651 = vsel %vm541, %v6649, 0
      %6653 = vmatpush.bf16.msra.mxu0 0
      %6654 = vmatpush.bf16.msra.mxu0 0
      %6655 = vmatpush.bf16.msra.mxu0 0
      %6656 = vmatpush.bf16.msra.mxu0 0
      %6657 = vmatpush.bf16.msra.mxu0 %v6640
      %6658 = vmatpush.bf16.msra.mxu0 %v6638
      %6659 = vmatpush.bf16.msra.mxu0 %v6636
      %6660 = vmatpush.bf16.msra.mxu0 %v6634
      %6661 = vmatmul.bf16.gmra.mxu0 %v6651
      %v6662 = vpop.f32.mrf.mxu0
      %v6663 = vadd.f32 0.0, %v6662
      %v6664 = vpop.f32.mrf.mxu0
      %v6665 = vadd.f32 0.0, %v6664
      %6666 = vdwg.mxu0
      %6667 = vmatpush.bf16.msra.mxu0 0
      %6668 = vmatpush.bf16.msra.mxu0 0
      %6669 = vmatpush.bf16.msra.mxu0 0
      %6670 = vmatpush.bf16.msra.mxu0 0
      %6671 = vmatpush.bf16.msra.mxu0 %v6641
      %6672 = vmatpush.bf16.msra.mxu0 %v6639
      %6673 = vmatpush.bf16.msra.mxu0 %v6637
      %6674 = vmatpush.bf16.msra.mxu0 %v6635
      %6675 = vmatmul.bf16.gmra.mxu0 %v6651
      %v6676 = vpop.f32.mrf.mxu0
      %v6677 = vadd.f32 0.0, %v6676
      %v6678 = vpop.f32.mrf.mxu0
      %v6679 = vadd.f32 0.0, %v6678
      %6680 = vdwg.mxu0
      %v6681 = vadd.f32 %v6566, %v6663
      %v6682 = vadd.f32 %v6567, %v6677
      %v6683 = vadd.f32 %v6568, %v6665
      %v6684 = vadd.f32 %v6569, %v6679
      %v6685 = vld [vmem:[%s11] sm:$0xff]
      %v6686 = vld [vmem:[%s11 + $0x8] sm:$0xff]
      %6688 = vset.pattern.permute.xlu0 0
      %6689 = vperm.xlu0 %6688, %v6685
      %v6690 = vpop.permute.xlu0 %6689
      %6693 = vset.pattern.permute.xlu0 0
      %6694 = vperm.xlu0 %6693, %v6686
      %v6695 = vpop.permute.xlu0 %6694
      %v6697 = vadd.f32 %v6681, %v6690
      %v6698 = vadd.f32 %v6682, %v6690
      %v6699 = vadd.f32 %v6683, %v6695
      %v6700 = vadd.f32 %v6684, %v6695
      %6701 = vst [vmem:[%s413] sm:$0xff] %v6697
      %6702 = vst [vmem:[%s413 + $0x8] sm:$0xff] %v6698
      %6703 = vst [vmem:[%s413 + $0x10] sm:$0xff] %v6699
      %6704 = vst [vmem:[%s413 + $0x18] sm:$0xff] %v6700
      %p6705 = scmp.lt.s32.totalorder %s23, 1
      %s6706 = scalar_select %p6705, %s23, 1
      %s6707 = smul.addr %s6706, 4
      %s6708 = smul.addr %s6707, 8
      %s6709 = scalar_lea.vmem %s12, %s6708
      // Predicated region
      $region69: #{conv_up_forward.1} parent=67 // pred_check
        %p6710 = pneg %p298
      $region70: #{conv_up_forward.1} parent=67 // pred_check_branch
        %6712 = sbr.rel (%p6710) target = $region72
      $region71: #{conv_up_forward.1} parent=67 // pred_region
        _
      $region72: #{conv_up_forward.1} parent=67 // pred_fallthru
        _
    $region68: #{conv_up_forward.1} parent=5 // pred_fallthru
      _
    %p6713 = scmp.le.s32.totalorder 2, %s18
    // Predicated region
    $region73: #{conv_up_forward.1} parent=5 // pred_check
      %p6714 = pneg %p6713
    $region74: #{conv_up_forward.1} parent=5 // pred_check_branch
      %6716 = sbr.rel (%p6714) target = $region76
    $region75: #{conv_up_forward.1} parent=5 // pred_region
      %s6717 = ssub.s32 %s18, 2
      // Predicated region
      $region77: #{conv_up_forward.1} parent=75 // pred_check
        %p6718 = pneg %p304
      $region78: #{conv_up_forward.1} parent=75 // pred_check_branch
        %6720 = sbr.rel (%p6718) target = $region80
      $region79: #{conv_up_forward.1} parent=75 // pred_region
        %p6721 = scmp.lt.s32.totalorder %s24, 1
        %s6722 = scalar_select %p6721, %s24, 1
        %s6723 = smul.addr %s6722, 4
        %s6724 = smul.addr %s6723, 8
        %s6725 = scalar_lea.vmem %s12, %s6724
      $region80: #{conv_up_forward.1} parent=75 // pred_fallthru
        _
    $region76: #{conv_up_forward.1} parent=5 // pred_fallthru
      _
  $region6: #{conv_up_forward.1} parent=0 // loop_footer
    %s22 = sadd.s32 1, %s18
  $region7: #{conv_up_forward.1} parent=0 // loop_footer_branch
    %17 = sbr.rel target = $region3
  $region8: #{conv_up_forward.1} parent=0 // loop_exit
    _

</llo_original>
